<compile_context>
chip_gen: v7x
topology: tpu7x:2x2x1
jax: 0.10.0
libtpu: 0.0.40
codegen_flags: <defaults>
</compile_context>

<pallas_src>
import math
from functools import partial

import jax
import jax.numpy as jnp
from jax.experimental import pallas as pl
from jax.experimental.pallas import tpu as pltpu


# ---------------------------------------------------------------------------
# helpers
# ---------------------------------------------------------------------------
_INV_SQRT2 = 1.0 / math.sqrt(2.0)
_NEG_BIG = -1e30          # finite "minus infinity" (avoids inf-inf NaNs)
_VMEM_LIMIT_CACHE = [None]


def _gelu_erf(x):
    # exact GELU (matches PyTorch _gelu_python): x * 0.5 * (1 + erf(x/sqrt(2)))
    return x * 0.5 * (1.0 + jax.lax.erf(x * _INV_SQRT2))


def _vmem_limit_bytes():
    """Scoped-VMEM request with headroom (v7x only has 64 MiB physical)."""
    if _VMEM_LIMIT_CACHE[0] is None:
        cap = None
        try:
            cap = getattr(pltpu.get_tpu_info(), "vmem_capacity_bytes", None)
        except Exception:
            cap = None
        if not cap:
            cap = 64 * 1024 * 1024            # conservative default (v7x)
        _VMEM_LIMIT_CACHE[0] = int(min(cap * 3 // 4, 100 * 1024 * 1024))
    return _VMEM_LIMIT_CACHE[0]


def _row_align(dtype):
    # sublane packing: 8 rows for 4-byte, 16 rows for 2-byte dtypes
    return 8 if jnp.dtype(dtype).itemsize >= 4 else 16


def _tile(dim, target, align):
    """Largest tile <= target, multiple of `align`, dividing `dim`.
    Falls back to the full dim (full-extent blocks are always legal)."""
    if dim <= target or dim % align != 0:
        return dim
    t = (target // align) * align
    while dim % t != 0:
        t -= align
    return max(t, align)


def _row_tile(m, target, align, min_steps=4):
    """Row tile <= target dividing m; prefer >= min_steps grid steps so both
    v7x TensorCores stay busy and per-step overhead amortizes."""
    if m % align != 0:
        return m                      # full-extent fallback (pad M upstream)
    cap = min(target, m)
    if m >= min_steps * align:
        cap = min(cap, max(align, m // min_steps))
    cap = max(align, (cap // align) * align)
    t = cap
    while m % t != 0:
        t -= align
    return t


# ---------------------------------------------------------------------------
# kernel 1: tiled linear (fused QKV projection)
# ---------------------------------------------------------------------------
def _linear_kernel(x_ref, wt_ref, b_ref, o_ref, acc_ref):
    k = pl.program_id(2)

    @pl.when(k == 0)
    def _():
        acc_ref[...] = jnp.zeros_like(acc_ref)

    acc_ref[...] += jnp.dot(x_ref[...], wt_ref[...],
                            preferred_element_type=jnp.float32)

    @pl.when(k == pl.num_programs(2) - 1)
    def _():
        o_ref[...] = (acc_ref[...]
                      + b_ref[...].astype(jnp.float32)).astype(o_ref.dtype)


def linear(x2d, wt, b2d, *, tm=512, tn=256, tk=1024):
    """y = x2d @ wt + b2d.   x2d:(M,K)  wt:(K,N) pre-transposed  b2d:(1,N) f32."""
    M, K = x2d.shape
    N = wt.shape[1]
    TM = _tile(M, tm, _row_align(x2d.dtype))
    TN = _tile(N, tn, 128)
    TK = _tile(K, tk, 128)
    grid = (M // TM, N // TN, K // TK)
    isz = jnp.dtype(x2d.dtype).itemsize

    return pl.pallas_call(
        _linear_kernel,
        out_shape=jax.ShapeDtypeStruct((M, N), x2d.dtype),
        grid_spec=pltpu.PrefetchScalarGridSpec(
            num_scalar_prefetch=0,
            grid=grid,
            in_specs=[
                pl.BlockSpec((TM, TK), lambda i, j, k: (i, k)),
                pl.BlockSpec((TK, TN), lambda i, j, k: (k, j)),
                pl.BlockSpec((1, TN), lambda i, j, k: (0, j)),
            ],
            out_specs=pl.BlockSpec((TM, TN), lambda i, j, k: (i, j)),
            scratch_shapes=[pltpu.VMEM((TM, TN), jnp.float32)],
        ),
        compiler_params=pltpu.CompilerParams(
            dimension_semantics=("parallel", "parallel", "arbitrary"),
            vmem_limit_bytes=_vmem_limit_bytes(),
        ),
        cost_estimate=pl.CostEstimate(
            flops=int(2 * M * K * N),
            transcendentals=0,
            bytes_accessed=int(isz * (M * K + K * N + M * N) + 4 * N)),
    )(x2d, wt, b2d)


# ---------------------------------------------------------------------------
# kernel 2: packed-qkv, multi-head-per-step, online-softmax attention
# ---------------------------------------------------------------------------
def _attn_kernel(*refs, scale, head_dim, hpg, bases, use_mask, approx):
    *data_refs, o_ref, m_sc, l_sc, acc_sc = refs
    if use_mask:
        mask_ref = data_refs[-1]
        data_refs = data_refs[:-1]
    else:
        mask_ref = None
    if len(data_refs) == 3:
        q_ref, k_ref, v_ref = data_refs
    else:                                   # tiny unaligned fallback: one ref
        q_ref = k_ref = v_ref = data_refs[0]
    q_base, k_base, v_base = bases
    D = head_dim

    kv = pl.program_id(2)

    @pl.when(kv == 0)
    def _():
        m_sc[...] = jnp.full_like(m_sc, _NEG_BIG)
        l_sc[...] = jnp.zeros_like(l_sc)
        acc_sc[...] = jnp.zeros_like(acc_sc)

    if use_mask:
        mrow = mask_ref[0].astype(jnp.float32)            # (1, TKV)

    for h in range(hpg):
        q = q_ref[:, q_base + h * D:q_base + (h + 1) * D] * scale   # (S, D)
        k = k_ref[:, k_base + h * D:k_base + (h + 1) * D]           # (TKV, D)
        v = v_ref[:, v_base + h * D:v_base + (h + 1) * D]           # (TKV, D)
        # QK^T without transposing K: contract dim 1 of both operands.
        s = jax.lax.dot_general(q, k, (((1,), (1,)), ((), ())),
                                preferred_element_type=jnp.float32)  # (S, TKV)
        if use_mask:
            s = s + mrow
        m_prev = m_sc[h]                                             # (S, 1)
        m_new = jnp.maximum(m_prev, jnp.max(s, axis=-1, keepdims=True))
        alpha = jnp.exp(m_prev - m_new)
        p = jnp.exp(s - m_new)
        l_sc[h] = alpha * l_sc[h] + jnp.sum(p, axis=-1, keepdims=True)
        acc_sc[h] = alpha * acc_sc[h] + jnp.dot(
            p.astype(v.dtype), v, preferred_element_type=jnp.float32)
        m_sc[h] = m_new

    @pl.when(kv == pl.num_programs(2) - 1)
    def _():
        for h in range(hpg):
            inv = pl.reciprocal(l_sc[h], approx=approx)              # (S, 1)
            o_ref[:, h * D:(h + 1) * D] = (acc_sc[h] * inv).astype(o_ref.dtype)


def attention(qkv, mask, *, batch, seq, num_heads, head_dim, approx_recip):
    """qkv: packed (M, 3H) projection, column layout [Q | K | V], each section
    split into heads of width D.  mask: optional additive (B, 1, S) f32.
    Returns the context in (M, H) layout (heads concatenated along columns)."""
    M, three_h = qkv.shape
    H = num_heads * head_dim
    assert three_h == 3 * H and M == batch * seq
    assert seq % 8 == 0, "seq must be a multiple of 8 (pad the sequence)"
    scale = 1.0 / math.sqrt(head_dim)
    use_mask = mask is not None

    # heads per grid step: smallest group whose lane width is a multiple of 128
    hpg = None
    for h in range(1, num_heads + 1):
        if num_heads % h == 0 and (h * head_dim) % 128 == 0:
            hpg = h
            break

    if hpg is not None:
        cw = hpg * head_dim                       # column block width (>=128)
        nhg = num_heads // hpg
        tkv = seq if seq <= 512 else _tile(seq, 512, 128)   # KV flash tiling
        skv = seq // tkv
        grid = (batch, nhg, skv)
        in_specs = [
            pl.BlockSpec((seq, cw), lambda b, g, kv: (b, g)),                    # Q
            pl.BlockSpec((tkv, cw), lambda b, g, kv: (b * skv + kv, nhg + g)),   # K
            pl.BlockSpec((tkv, cw), lambda b, g, kv: (b * skv + kv, 2 * nhg + g)),  # V
        ]
        operands = [qkv, qkv, qkv]
        out_spec = pl.BlockSpec((seq, cw), lambda b, g, kv: (b, g))
        bases = (0, 0, 0)
        heads_in_block = hpg
    else:
        # tiny / unaligned configs: one full-width (S, 3H) block per batch
        tkv, skv = seq, 1
        grid = (batch, 1, 1)
        in_specs = [pl.BlockSpec((seq, 3 * H), lambda b, g, kv: (b, 0))]
        operands = [qkv]
        out_spec = pl.BlockSpec((seq, H), lambda b, g, kv: (b, 0))
        bases = (0, H, 2 * H)
        heads_in_block = num_heads

    if use_mask:
        in_specs.append(pl.BlockSpec((1, 1, tkv), lambda b, g, kv: (b, 0, kv)))
        operands.append(mask)

    scratch = [pltpu.VMEM((heads_in_block, seq, 1), jnp.float32),          # m
               pltpu.VMEM((heads_in_block, seq, 1), jnp.float32),          # l
               pltpu.VMEM((heads_in_block, seq, head_dim), jnp.float32)]   # acc

    isz = jnp.dtype(qkv.dtype).itemsize
    kernel = partial(_attn_kernel, scale=scale, head_dim=head_dim,
                     hpg=heads_in_block, bases=bases, use_mask=use_mask,
                     approx=approx_recip)

    return pl.pallas_call(
        kernel,
        out_shape=jax.ShapeDtypeStruct((M, H), qkv.dtype),
        grid_spec=pltpu.PrefetchScalarGridSpec(
            num_scalar_prefetch=0,
            grid=grid,
            in_specs=in_specs,
            out_specs=out_spec,
            scratch_shapes=scratch,
        ),
        compiler_params=pltpu.CompilerParams(
            dimension_semantics=("parallel", "parallel", "arbitrary"),
            vmem_limit_bytes=_vmem_limit_bytes(),
        ),
        cost_estimate=pl.CostEstimate(
            flops=int(4 * batch * num_heads * seq * seq * head_dim),
            transcendentals=int(batch * num_heads * seq * seq),
            bytes_accessed=int(isz * 4 * M * H
                               + (4 * batch * seq if use_mask else 0))),
    )(*operands)


# ---------------------------------------------------------------------------
# kernel 3: dense + residual + LayerNorm  (BertSelfOutput)
# ---------------------------------------------------------------------------
def _dense_res_ln_kernel(x_ref, wt_ref, b_ref, res_ref, g_ref, bt_ref, o_ref,
                         *, eps):
    y = jnp.dot(x_ref[...], wt_ref[...], preferred_element_type=jnp.float32)
    y = y + b_ref[...].astype(jnp.float32) + res_ref[...].astype(jnp.float32)
    mu = jnp.mean(y, axis=-1, keepdims=True)
    yc = y - mu
    var = jnp.mean(yc * yc, axis=-1, keepdims=True)
    yn = yc * jax.lax.rsqrt(var + eps)
    o_ref[...] = (yn * g_ref[...].astype(jnp.float32)
                  + bt_ref[...].astype(jnp.float32)).astype(o_ref.dtype)


def dense_residual_layernorm(x2d, wt, b2d, res2d, gamma, beta, *, eps, tm=512):
    M, K = x2d.shape
    N = wt.shape[1]
    TM = _row_tile(M, tm, _row_align(x2d.dtype))
    isz = jnp.dtype(x2d.dtype).itemsize
    return pl.pallas_call(
        partial(_dense_res_ln_kernel, eps=eps),
        out_shape=jax.ShapeDtypeStruct((M, N), x2d.dtype),
        grid_spec=pltpu.PrefetchScalarGridSpec(
            num_scalar_prefetch=0,
            grid=(M // TM,),
            in_specs=[
                pl.BlockSpec((TM, K), lambda i: (i, 0)),
                pl.BlockSpec((K, N), lambda i: (0, 0)),
                pl.BlockSpec((1, N), lambda i: (0, 0)),
                pl.BlockSpec((TM, N), lambda i: (i, 0)),
                pl.BlockSpec((1, N), lambda i: (0, 0)),
                pl.BlockSpec((1, N), lambda i: (0, 0)),
            ],
            out_specs=pl.BlockSpec((TM, N), lambda i: (i, 0)),
        ),
        compiler_params=pltpu.CompilerParams(
            dimension_semantics=("parallel",),
            vmem_limit_bytes=_vmem_limit_bytes(),
        ),
        cost_estimate=pl.CostEstimate(
            flops=int(2 * M * K * N + 10 * M * N),
            transcendentals=int(M),
            bytes_accessed=int(isz * (M * K + K * N + 2 * M * N) + 4 * 3 * N)),
    )(x2d, wt, b2d, res2d, gamma, beta)


# ---------------------------------------------------------------------------
# kernel 4: fused FFN with I-tiled reduction  (BertIntermediate + BertOutput)
#   y = LayerNorm( gelu(x @ W1t + b1) @ W2t + b2 + x )
# ---------------------------------------------------------------------------
def _ffn_kernel(x_ref, w1t_ref, b1_ref, w2t_ref, b2_ref, g_ref, bt_ref,
                o_ref, acc_ref, *, eps):
    ki = pl.program_id(1)

    @pl.when(ki == 0)
    def _():
        acc_ref[...] = jnp.zeros_like(acc_ref)

    h = jnp.dot(x_ref[...], w1t_ref[...], preferred_element_type=jnp.float32)
    h = _gelu_erf(h + b1_ref[...].astype(jnp.float32))
    # NOTE: with bf16 weights the GELU output is quantized to bf16 for the
    # second matmul (deliberate inference precision choice).
    acc_ref[...] += jnp.dot(h.astype(w2t_ref.dtype), w2t_ref[...],
                            preferred_element_type=jnp.float32)

    @pl.when(ki == pl.num_programs(1) - 1)
    def _():
        y = (acc_ref[...] + b2_ref[...].astype(jnp.float32)
             + x_ref[...].astype(jnp.float32))
        mu = jnp.mean(y, axis=-1, keepdims=True)
        yc = y - mu
        var = jnp.mean(yc * yc, axis=-1, keepdims=True)
        yn = yc * jax.lax.rsqrt(var + eps)
        o_ref[...] = (yn * g_ref[...].astype(jnp.float32)
                      + bt_ref[...].astype(jnp.float32)).astype(o_ref.dtype)


def ffn(x2d, w1t, b1, w2t, b2, gamma, beta, *, eps, tm=256, ti=1024):
    M, H = x2d.shape
    I = w1t.shape[1]
    TM = _row_tile(M, tm, _row_align(x2d.dtype))
    TI = _tile(I, ti, 128)
    grid = (M // TM, I // TI)
    isz = jnp.dtype(x2d.dtype).itemsize
    return pl.pallas_call(
        partial(_ffn_kernel, eps=eps),
        out_shape=jax.ShapeDtypeStruct((M, H), x2d.dtype),
        grid_spec=pltpu.PrefetchScalarGridSpec(
            num_scalar_prefetch=0,
            grid=grid,
            in_specs=[
                pl.BlockSpec((TM, H), lambda i, k: (i, 0)),
                pl.BlockSpec((H, TI), lambda i, k: (0, k)),
                pl.BlockSpec((1, TI), lambda i, k: (0, k)),
                pl.BlockSpec((TI, H), lambda i, k: (k, 0)),
                pl.BlockSpec((1, H), lambda i, k: (0, 0)),
                pl.BlockSpec((1, H), lambda i, k: (0, 0)),
                pl.BlockSpec((1, H), lambda i, k: (0, 0)),
            ],
            out_specs=pl.BlockSpec((TM, H), lambda i, k: (i, 0)),
            scratch_shapes=[pltpu.VMEM((TM, H), jnp.float32)],
        ),
        compiler_params=pltpu.CompilerParams(
            dimension_semantics=("parallel", "arbitrary"),
            vmem_limit_bytes=_vmem_limit_bytes(),
        ),
        cost_estimate=pl.CostEstimate(
            flops=int(4 * M * H * I + 12 * M * H),
            transcendentals=int(M * I + M),
            bytes_accessed=int(isz * (2 * M * H + 2 * H * I) + 4 * (I + 3 * H))),
    )(x2d, w1t, b1, w2t, b2, gamma, beta)


# ---------------------------------------------------------------------------
# encoder forward (Pallas) and parameter preparation
# ---------------------------------------------------------------------------
def prepare_params(raw_layers, dtype=jnp.float32):
    """Done ONCE at parameter-load time: transpose (out,in) nn.Linear weights
    to (in,out) MXU layout, fuse Q/K/V into one projection, cast weights to the
    compute dtype (bf16 recommended), keep biases / LN params in f32."""
    prepared = []
    for p in raw_layers:
        wqkv = jnp.concatenate([p["wq"], p["wk"], p["wv"]], axis=0)   # (3H, H)
        bqkv = jnp.concatenate([p["bq"], p["bk"], p["bv"]]).reshape(1, -1)
        prepared.append(dict(
            wqkv_t=jnp.asarray(wqkv.T, dtype=dtype),                  # (H, 3H)
            bqkv=jnp.asarray(bqkv, jnp.float32),
            wo_t=jnp.asarray(p["wo"].T, dtype=dtype),
            bo=jnp.asarray(p["bo"].reshape(1, -1), jnp.float32),
            w1_t=jnp.asarray(p["w1"].T, dtype=dtype),
            b1=jnp.asarray(p["b1"].reshape(1, -1), jnp.float32),
            w2_t=jnp.asarray(p["w2"].T, dtype=dtype),
            b2=jnp.asarray(p["b2"].reshape(1, -1), jnp.float32),
            ln1_g=jnp.asarray(p["ln1_g"].reshape(1, -1), jnp.float32),
            ln1_b=jnp.asarray(p["ln1_b"].reshape(1, -1), jnp.float32),
            ln2_g=jnp.asarray(p["ln2_g"].reshape(1, -1), jnp.float32),
            ln2_b=jnp.asarray(p["ln2_b"].reshape(1, -1), jnp.float32),
        ))
    return jax.tree_util.tree_map(jax.device_put, prepared)


def bert_encoder_forward(hidden_states, layers, attention_mask=None, *,
                         num_heads, eps, compute_dtype=None):
    B, S, H = hidden_states.shape
    assert H % num_heads == 0
    D = H // num_heads
    M = B * S
    dtype = jnp.dtype(compute_dtype) if compute_dtype is not None \
        else hidden_states.dtype
    approx = (dtype == jnp.bfloat16)

    mask = None
    if attention_mask is not None:
        am = jnp.asarray(attention_mask)
        if am.ndim == 4:                      # HF extended mask (B,1,1,S)
            assert am.shape[1] == 1 and am.shape[2] == 1, \
                "only (B,1,1,S) additive masks are supported"
            am = am[:, 0, 0, :]
        elif am.ndim == 3:
            am = am.reshape(B, S)
        assert am.shape == (B, S)
        mask = am.reshape(B, 1, S).astype(jnp.float32)

    x = hidden_states.astype(dtype).reshape(M, H)
    for p in layers:
        # fused Q/K/V projection: one tiled MXU matmul, stays packed (M, 3H)
        qkv = linear(x, p["wqkv_t"], p["bqkv"])
        # packed-qkv attention writes directly into (M, H) head-column slices
        ctx = attention(qkv, mask, batch=B, seq=S, num_heads=num_heads,
                        head_dim=D, approx_recip=approx)
        # BertSelfOutput: dense + residual + LayerNorm, fused
        attn_out = dense_residual_layernorm(
            ctx, p["wo_t"], p["bo"], x, p["ln1_g"], p["ln1_b"], eps=eps)
        # BertIntermediate + BertOutput: fused FFN (+ residual + LayerNorm)
        x = ffn(attn_out, p["w1_t"], p["b1"], p["w2_t"], p["b2"],
                p["ln2_g"], p["ln2_b"], eps=eps)

    return (x.reshape(B, S, H),)


# ---------------------------------------------------------------------------
# pure-JAX reference (raw PyTorch-layout params) for correctness checking
# ---------------------------------------------------------------------------
def _layernorm_ref(x, g, b, eps):
    mu = jnp.mean(x, axis=-1, keepdims=True)
    var = jnp.mean((x - mu) ** 2, axis=-1, keepdims=True)
    return (x - mu) * jax.lax.rsqrt(var + eps) * g + b


def bert_encoder_reference(hidden_states, raw_layers, *, num_heads, eps,
                           attention_mask=None):
    B, S, H = hidden_states.shape
    D = H // num_heads
    x = hidden_states
    for p in raw_layers:
        q = x @ p["wq"].T + p["bq"]
        k = x @ p["wk"].T + p["bk"]
        v = x @ p["wv"].T + p["bv"]

        def heads(t):
            return t.reshape(B, S, num_heads, D).transpose(0, 2, 1, 3)

        qh, kh, vh = heads(q), heads(k), heads(v)
        scores = (qh @ kh.transpose(0, 1, 3, 2)) / math.sqrt(D)
        if attention_mask is not None:
            scores = scores + attention_mask
        probs = jax.nn.softmax(scores, axis=-1)
        ctx = (probs @ vh).transpose(0, 2, 1, 3).reshape(B, S, H)

        a = _layernorm_ref(ctx @ p["wo"].T + p["bo"] + x,
                           p["ln1_g"], p["ln1_b"], eps)
        h = _gelu_erf(a @ p["w1"].T + p["b1"])
        x = _layernorm_ref(h @ p["w2"].T + p["b2"] + a,
                           p["ln2_g"], p["ln2_b"], eps)
    return x


# ---------------------------------------------------------------------------
def make_raw_params(key, num_layers, H, I):
    layers = []
    for _ in range(num_layers):
        keys = jax.random.split(key, 17)
        key = keys[0]

        def lin(kw, kb, out_dim, in_dim):
            w = jax.random.normal(kw, (out_dim, in_dim), jnp.float32) * 0.02
            b = jax.random.normal(kb, (out_dim,), jnp.float32) * 0.02
            return w, b

        wq, bq = lin(keys[1], keys[2], H, H)
        wk, bk = lin(keys[3], keys[4], H, H)
        wv, bv = lin(keys[5], keys[6], H, H)
        wo, bo = lin(keys[7], keys[8], H, H)
        w1, b1 = lin(keys[9], keys[10], I, H)
        w2, b2 = lin(keys[11], keys[12], H, I)
        layers.append(dict(
            wq=wq, bq=bq, wk=wk, bk=bk, wv=wv, bv=bv, wo=wo, bo=bo,
            w1=w1, b1=b1, w2=w2, b2=b2,
            ln1_g=1.0 + 0.1 * jax.random.normal(keys[13], (H,), jnp.float32),
            ln1_b=0.1 * jax.random.normal(keys[14], (H,), jnp.float32),
            ln2_g=1.0 + 0.1 * jax.random.normal(keys[15], (H,), jnp.float32),
            ln2_b=0.1 * jax.random.normal(keys[16], (H,), jnp.float32),
        ))
    return layers


if __name__ == "__main__":
    # small but lane-friendly config: hidden=128, intermediate=512,
    # 2 heads (head_dim=64 -> 2 heads/step = 128 lanes), 2 layers, B=2, S=16
    batch, seq = 2, 16
    hidden, intermediate = 128, 512
    num_heads, num_layers = 2, 2
    eps = 1e-12

    key = jax.random.PRNGKey(0)
    kx, kp = jax.random.split(key)
    hidden_states = jax.random.normal(kx, (batch, seq, hidden), jnp.float32)

    raw = make_raw_params(kp, num_layers, hidden, intermediate)

    # additive padding mask: last 4 key positions of batch 1 masked out
    pad = jnp.zeros((batch, seq), jnp.float32).at[1, -4:].set(-10000.0)
    mask4d = pad[:, None, None, :]                       # HF-style (B,1,1,S)

    # ---------------- f32 path: tight correctness check ----------------
    params_f32 = prepare_params(raw, dtype=jnp.float32)
    fwd_f32 = jax.jit(partial(bert_encoder_forward,
                              num_heads=num_heads, eps=eps))
    out_nm, = fwd_f32(hidden_states, params_f32)
    out_nm = jax.block_until_ready(out_nm)
    out_m, = fwd_f32(hidden_states, params_f32, attention_mask=mask4d)
    out_m = jax.block_until_ready(out_m)

    ref_nm = bert_encoder_reference(hidden_states, raw,
                                    num_heads=num_heads, eps=eps)
    ref_m = bert_encoder_reference(hidden_states, raw, num_heads=num_heads,
                                   eps=eps, attention_mask=mask4d)
    assert out_nm.shape == (batch, seq, hidden)
    err_nm = float(jnp.max(jnp.abs(out_nm - ref_nm)))
    err_m = float(jnp.max(jnp.abs(out_m - ref_m)))
    assert jnp.allclose(out_nm, ref_nm, atol=1e-4, rtol=1e-4), \
        f"f32 no-mask max abs err {err_nm}"
    assert jnp.allclose(out_m, ref_m, atol=1e-4, rtol=1e-4), \
        f"f32 masked max abs err {err_m}"

    # ---------------- bf16 path: performance dtype, loose check --------
    params_bf16 = prepare_params(raw, dtype=jnp.bfloat16)
    fwd_bf16 = jax.jit(partial(bert_encoder_forward, num_heads=num_heads,
                               eps=eps, compute_dtype=jnp.bfloat16))
    out_bf16, = fwd_bf16(hidden_states, params_bf16)
    out_bf16 = jax.block_until_ready(out_bf16)
    err_bf16 = float(jnp.max(jnp.abs(out_bf16.astype(jnp.float32) - ref_nm)))
    assert jnp.all(jnp.isfinite(out_bf16.astype(jnp.float32)))
    assert err_bf16 < 0.3, f"bf16 max abs err {err_bf16}"

    print("KERNEL_OK")
</pallas_src>

<mosaic_0001>
module attributes {stable_mosaic.version = 11 : i64} {
  func.func @_ffn_kernel(%arg0: i32, %arg1: i32, %arg2: memref<8x128xf32, #tpu.memory_space<vmem>>, %arg3: memref<128x512xf32, #tpu.memory_space<vmem>>, %arg4: memref<1x512xf32, #tpu.memory_space<vmem>>, %arg5: memref<512x128xf32, #tpu.memory_space<vmem>>, %arg6: memref<1x128xf32, #tpu.memory_space<vmem>>, %arg7: memref<1x128xf32, #tpu.memory_space<vmem>>, %arg8: memref<1x128xf32, #tpu.memory_space<vmem>>, %arg9: memref<8x128xf32, #tpu.memory_space<vmem>>, %arg10: memref<8x128xf32, #tpu.memory_space<vmem>>) attributes {dimension_semantics = [#tpu.dimension_semantics<parallel>, #tpu.dimension_semantics<arbitrary>], iteration_bounds = array<i64: 4, 1>, scalar_prefetch = 0 : i64, scratch_operands = 1 : i64, tpu.core_type = #tpu.core_type<tc>, window_params = [{transform_indices = @transform_0, window_bounds = array<i64: 8, 128>}, {transform_indices = @transform_1, window_bounds = array<i64: 128, 512>}, {transform_indices = @transform_2, window_bounds = array<i64: 1, 512>}, {transform_indices = @transform_3, window_bounds = array<i64: 512, 128>}, {pipeline_mode = #tpu.pipeline_mode<synchronous>, transform_indices = @transform_4, window_bounds = array<i64: 1, 128>}, {pipeline_mode = #tpu.pipeline_mode<synchronous>, transform_indices = @transform_5, window_bounds = array<i64: 1, 128>}, {pipeline_mode = #tpu.pipeline_mode<synchronous>, transform_indices = @transform_6, window_bounds = array<i64: 1, 128>}, {transform_indices = @transform_7, window_bounds = array<i64: 8, 128>}]} {
    %c0_i32 = arith.constant 0 : i32
    %0 = arith.cmpi eq, %arg1, %c0_i32 : i32
    %1 = arith.extui %0 : i1 to i32
    %c0_i32_0 = arith.constant 0 : i32
    %2 = arith.cmpi ne, %1, %c0_i32_0 : i32
    scf.if %2 {
      %cst_18 = arith.constant 0.000000e+00 : f32
      %25 = vector.broadcast %cst_18 : f32 to vector<8x128xf32>
      %c0_19 = arith.constant 0 : index
      %c0_20 = arith.constant 0 : index
      %26 = vector.load %arg10[%c0_19, %c0_20] : memref<8x128xf32, #tpu.memory_space<vmem>>, vector<8x128xf32>
      tpu.vector_store %arg10[%c0_19, %c0_20], %25 {strides = array<i32>} : memref<8x128xf32, #tpu.memory_space<vmem>>, vector<8x128xf32>,
    } else {
    }
    %c0 = arith.constant 0 : index
    %c0_1 = arith.constant 0 : index
    %3 = vector.load %arg2[%c0, %c0_1] : memref<8x128xf32, #tpu.memory_space<vmem>>, vector<8x128xf32>
    %c0_2 = arith.constant 0 : index
    %c0_3 = arith.constant 0 : index
    %4 = vector.load %arg3[%c0_2, %c0_3] : memref<128x512xf32, #tpu.memory_space<vmem>>, vector<128x512xf32>
    %cst = arith.constant dense<0.000000e+00> : vector<8x512xf32>
    %5 = tpu.matmul %3, %4, %cst {dimension_numbers = #tpu.dot_dimension_numbers<[1], [0], [0], [1], [0, 0, 1, 1], [], []>} : vector<8x128xf32>, vector<128x512xf32>, vector<8x512xf32> -> vector<8x512xf32>
    %c0_4 = arith.constant 0 : index
    %c0_5 = arith.constant 0 : index
    %6 = vector.load %arg4[%c0_4, %c0_5] : memref<1x512xf32, #tpu.memory_space<vmem>>, vector<1x512xf32>
    %7 = vector.broadcast %6 : vector<1x512xf32> to vector<8x512xf32>
    %8 = arith.addf %5, %7 : vector<8x512xf32>
    %cst_6 = arith.constant 5.000000e-01 : f32
    %9 = vector.broadcast %cst_6 : f32 to vector<8x512xf32>
    %10 = arith.mulf %8, %9 : vector<8x512xf32>
    %cst_7 = arith.constant 0.707106769 : f32
    %11 = vector.broadcast %cst_7 : f32 to vector<8x512xf32>
    %12 = arith.mulf %8, %11 : vector<8x512xf32>
    %13 = math.erf %12 : vector<8x512xf32>
    %cst_8 = arith.constant 1.000000e+00 : f32
    %14 = vector.broadcast %cst_8 : f32 to vector<8x512xf32>
    %15 = arith.addf %14, %13 : vector<8x512xf32>
    %16 = arith.mulf %10, %15 : vector<8x512xf32>
    %c0_9 = arith.constant 0 : index
    %c0_10 = arith.constant 0 : index
    %17 = vector.load %arg10[%c0_9, %c0_10] : memref<8x128xf32, #tpu.memory_space<vmem>>, vector<8x128xf32>
    %c0_11 = arith.constant 0 : index
    %c0_12 = arith.constant 0 : index
    %18 = vector.load %arg5[%c0_11, %c0_12] : memref<512x128xf32, #tpu.memory_space<vmem>>, vector<512x128xf32>
    %cst_13 = arith.constant dense<0.000000e+00> : vector<8x128xf32>
    %19 = tpu.matmul %16, %18, %cst_13 {dimension_numbers = #tpu.dot_dimension_numbers<[1], [0], [0], [1], [0, 0, 1, 1], [], []>} : vector<8x512xf32>, vector<512x128xf32>, vector<8x128xf32> -> vector<8x128xf32>
    %20 = arith.addf %17, %19 : vector<8x128xf32>
    %c0_14 = arith.constant 0 : index
    %c0_15 = arith.constant 0 : index
    %21 = vector.load %arg10[%c0_14, %c0_15] : memref<8x128xf32, #tpu.memory_space<vmem>>, vector<8x128xf32>
    tpu.vector_store %arg10[%c0_14, %c0_15], %20 {strides = array<i32>} : memref<8x128xf32, #tpu.memory_space<vmem>>, vector<8x128xf32>,
    %c0_i32_16 = arith.constant 0 : i32
    %22 = arith.cmpi eq, %arg1, %c0_i32_16 : i32
    %23 = arith.extui %22 : i1 to i32
    %c0_i32_17 = arith.constant 0 : i32
    %24 = arith.cmpi ne, %23, %c0_i32_17 : i32
    scf.if %24 {
      %c0_18 = arith.constant 0 : index
      %c0_19 = arith.constant 0 : index
      %25 = vector.load %arg10[%c0_18, %c0_19] : memref<8x128xf32, #tpu.memory_space<vmem>>, vector<8x128xf32>
      %c0_20 = arith.constant 0 : index
      %c0_21 = arith.constant 0 : index
      %26 = vector.load %arg6[%c0_20, %c0_21] : memref<1x128xf32, #tpu.memory_space<vmem>>, vector<1x128xf32>
      %27 = vector.broadcast %26 : vector<1x128xf32> to vector<8x128xf32>
      %28 = arith.addf %25, %27 : vector<8x128xf32>
      %c0_22 = arith.constant 0 : index
      %c0_23 = arith.constant 0 : index
      %29 = vector.load %arg2[%c0_22, %c0_23] : memref<8x128xf32, #tpu.memory_space<vmem>>, vector<8x128xf32>
      %30 = arith.addf %28, %29 : vector<8x128xf32>
      %cst_24 = arith.constant dense<0.000000e+00> : vector<8xf32>
      %31 = vector.multi_reduction <add>, %30, %cst_24 [1] : vector<8x128xf32> to vector<8xf32>
      %32 = vector.shape_cast %31 : vector<8xf32> to vector<8x1xf32>
      %cst_25 = arith.constant 1.280000e+02 : f32
      %33 = vector.broadcast %cst_25 : f32 to vector<8x1xf32>
      %34 = arith.divf %32, %33 : vector<8x1xf32>
      %35 = vector.broadcast %34 : vector<8x1xf32> to vector<8x128xf32>
      %36 = arith.subf %30, %35 : vector<8x128xf32>
      %37 = arith.mulf %36, %36 : vector<8x128xf32>
      %cst_26 = arith.constant dense<0.000000e+00> : vector<8xf32>
      %38 = vector.multi_reduction <add>, %37, %cst_26 [1] : vector<8x128xf32> to vector<8xf32>
      %39 = vector.shape_cast %38 : vector<8xf32> to vector<8x1xf32>
      %cst_27 = arith.constant 1.280000e+02 : f32
      %40 = vector.broadcast %cst_27 : f32 to vector<8x1xf32>
      %41 = arith.divf %39, %40 : vector<8x1xf32>
      %cst_28 = arith.constant 9.99999996E-13 : f32
      %42 = vector.broadcast %cst_28 : f32 to vector<8x1xf32>
      %43 = arith.addf %41, %42 : vector<8x1xf32>
      %44 = math.rsqrt %43 : vector<8x1xf32>
      %45 = vector.broadcast %44 : vector<8x1xf32> to vector<8x128xf32>
      %46 = arith.mulf %36, %45 : vector<8x128xf32>
      %c0_29 = arith.constant 0 : index
      %c0_30 = arith.constant 0 : index
      %47 = vector.load %arg7[%c0_29, %c0_30] : memref<1x128xf32, #tpu.memory_space<vmem>>, vector<1x128xf32>
      %48 = vector.broadcast %47 : vector<1x128xf32> to vector<8x128xf32>
      %49 = arith.mulf %46, %48 : vector<8x128xf32>
      %c0_31 = arith.constant 0 : index
      %c0_32 = arith.constant 0 : index
      %50 = vector.load %arg8[%c0_31, %c0_32] : memref<1x128xf32, #tpu.memory_space<vmem>>, vector<1x128xf32>
      %51 = vector.broadcast %50 : vector<1x128xf32> to vector<8x128xf32>
      %52 = arith.addf %49, %51 : vector<8x128xf32>
      %c0_33 = arith.constant 0 : index
      %c0_34 = arith.constant 0 : index
      %53 = vector.load %arg9[%c0_33, %c0_34] : memref<8x128xf32, #tpu.memory_space<vmem>>, vector<8x128xf32>
      tpu.vector_store %arg9[%c0_33, %c0_34], %52 {strides = array<i32>} : memref<8x128xf32, #tpu.memory_space<vmem>>, vector<8x128xf32>,
    } else {
    }
    return
  }
  func.func @transform_0(%arg0: i32, %arg1: i32) -> (i32, i32) {
    %c0_i32 = arith.constant 0 : i32
    %c0_i32_0 = arith.constant 0 : i32
    return %arg0, %c0_i32 : i32, i32
  }
  func.func @transform_1(%arg0: i32, %arg1: i32) -> (i32, i32) {
    %c0_i32 = arith.constant 0 : i32
    %c0_i32_0 = arith.constant 0 : i32
    return %c0_i32, %arg1 : i32, i32
  }
  func.func @transform_2(%arg0: i32, %arg1: i32) -> (i32, i32) {
    %c0_i32 = arith.constant 0 : i32
    %c0_i32_0 = arith.constant 0 : i32
    return %c0_i32, %arg1 : i32, i32
  }
  func.func @transform_3(%arg0: i32, %arg1: i32) -> (i32, i32) {
    %c0_i32 = arith.constant 0 : i32
    %c0_i32_0 = arith.constant 0 : i32
    return %arg1, %c0_i32 : i32, i32
  }
  func.func @transform_4(%arg0: i32, %arg1: i32) -> (i32, i32) {
    %c0_i32 = arith.constant 0 : i32
    %c0_i32_0 = arith.constant 0 : i32
    %c0_i32_1 = arith.constant 0 : i32
    return %c0_i32, %c0_i32_0 : i32, i32
  }
  func.func @transform_5(%arg0: i32, %arg1: i32) -> (i32, i32) {
    %c0_i32 = arith.constant 0 : i32
    %c0_i32_0 = arith.constant 0 : i32
    %c0_i32_1 = arith.constant 0 : i32
    return %c0_i32, %c0_i32_0 : i32, i32
  }
  func.func @transform_6(%arg0: i32, %arg1: i32) -> (i32, i32) {
    %c0_i32 = arith.constant 0 : i32
    %c0_i32_0 = arith.constant 0 : i32
    %c0_i32_1 = arith.constant 0 : i32
    return %c0_i32, %c0_i32_0 : i32, i32
  }
  func.func @transform_7(%arg0: i32, %arg1: i32) -> (i32, i32) {
    %c0_i32 = arith.constant 0 : i32
    %c0_i32_0 = arith.constant 0 : i32
    return %arg0, %c0_i32 : i32, i32
  }
}

module attributes {stable_mosaic.version = 11 : i64} {
  func.func @_dense_res_ln_kernel(%arg0: i32, %arg1: memref<8x128xf32, #tpu.memory_space<vmem>>, %arg2: memref<128x128xf32, #tpu.memory_space<vmem>>, %arg3: memref<1x128xf32, #tpu.memory_space<vmem>>, %arg4: memref<8x128xf32, #tpu.memory_space<vmem>>, %arg5: memref<1x128xf32, #tpu.memory_space<vmem>>, %arg6: memref<1x128xf32, #tpu.memory_space<vmem>>, %arg7: memref<8x128xf32, #tpu.memory_space<vmem>>) attributes {dimension_semantics = [#tpu.dimension_semantics<parallel>], iteration_bounds = array<i64: 4>, scalar_prefetch = 0 : i64, scratch_operands = 0 : i64, tpu.core_type = #tpu.core_type<tc>, window_params = [{transform_indices = @transform_0, window_bounds = array<i64: 8, 128>}, {pipeline_mode = #tpu.pipeline_mode<synchronous>, transform_indices = @transform_1, window_bounds = array<i64: 128, 128>}, {pipeline_mode = #tpu.pipeline_mode<synchronous>, transform_indices = @transform_2, window_bounds = array<i64: 1, 128>}, {transform_indices = @transform_3, window_bounds = array<i64: 8, 128>}, {pipeline_mode = #tpu.pipeline_mode<synchronous>, transform_indices = @transform_4, window_bounds = array<i64: 1, 128>}, {pipeline_mode = #tpu.pipeline_mode<synchronous>, transform_indices = @transform_5, window_bounds = array<i64: 1, 128>}, {transform_indices = @transform_6, window_bounds = array<i64: 8, 128>}]} {
    %c0 = arith.constant 0 : index
    %c0_0 = arith.constant 0 : index
    %0 = vector.load %arg1[%c0, %c0_0] : memref<8x128xf32, #tpu.memory_space<vmem>>, vector<8x128xf32>
    %c0_1 = arith.constant 0 : index
    %c0_2 = arith.constant 0 : index
    %1 = vector.load %arg2[%c0_1, %c0_2] : memref<128x128xf32, #tpu.memory_space<vmem>>, vector<128x128xf32>
    %cst = arith.constant dense<0.000000e+00> : vector<8x128xf32>
    %2 = tpu.matmul %0, %1, %cst {dimension_numbers = #tpu.dot_dimension_numbers<[1], [0], [0], [1], [0, 0, 1, 1], [], []>} : vector<8x128xf32>, vector<128x128xf32>, vector<8x128xf32> -> vector<8x128xf32>
    %c0_3 = arith.constant 0 : index
    %c0_4 = arith.constant 0 : index
    %3 = vector.load %arg3[%c0_3, %c0_4] : memref<1x128xf32, #tpu.memory_space<vmem>>, vector<1x128xf32>
    %4 = vector.broadcast %3 : vector<1x128xf32> to vector<8x128xf32>
    %5 = arith.addf %2, %4 : vector<8x128xf32>
    %c0_5 = arith.constant 0 : index
    %c0_6 = arith.constant 0 : index
    %6 = vector.load %arg4[%c0_5, %c0_6] : memref<8x128xf32, #tpu.memory_space<vmem>>, vector<8x128xf32>
    %7 = arith.addf %5, %6 : vector<8x128xf32>
    %cst_7 = arith.constant dense<0.000000e+00> : vector<8xf32>
    %8 = vector.multi_reduction <add>, %7, %cst_7 [1] : vector<8x128xf32> to vector<8xf32>
    %9 = vector.shape_cast %8 : vector<8xf32> to vector<8x1xf32>
    %cst_8 = arith.constant 1.280000e+02 : f32
    %10 = vector.broadcast %cst_8 : f32 to vector<8x1xf32>
    %11 = arith.divf %9, %10 : vector<8x1xf32>
    %12 = vector.broadcast %11 : vector<8x1xf32> to vector<8x128xf32>
    %13 = arith.subf %7, %12 : vector<8x128xf32>
    %14 = arith.mulf %13, %13 : vector<8x128xf32>
    %cst_9 = arith.constant dense<0.000000e+00> : vector<8xf32>
    %15 = vector.multi_reduction <add>, %14, %cst_9 [1] : vector<8x128xf32> to vector<8xf32>
    %16 = vector.shape_cast %15 : vector<8xf32> to vector<8x1xf32>
    %cst_10 = arith.constant 1.280000e+02 : f32
    %17 = vector.broadcast %cst_10 : f32 to vector<8x1xf32>
    %18 = arith.divf %16, %17 : vector<8x1xf32>
    %cst_11 = arith.constant 9.99999996E-13 : f32
    %19 = vector.broadcast %cst_11 : f32 to vector<8x1xf32>
    %20 = arith.addf %18, %19 : vector<8x1xf32>
    %21 = math.rsqrt %20 : vector<8x1xf32>
    %22 = vector.broadcast %21 : vector<8x1xf32> to vector<8x128xf32>
    %23 = arith.mulf %13, %22 : vector<8x128xf32>
    %c0_12 = arith.constant 0 : index
    %c0_13 = arith.constant 0 : index
    %24 = vector.load %arg5[%c0_12, %c0_13] : memref<1x128xf32, #tpu.memory_space<vmem>>, vector<1x128xf32>
    %25 = vector.broadcast %24 : vector<1x128xf32> to vector<8x128xf32>
    %26 = arith.mulf %23, %25 : vector<8x128xf32>
    %c0_14 = arith.constant 0 : index
    %c0_15 = arith.constant 0 : index
    %27 = vector.load %arg6[%c0_14, %c0_15] : memref<1x128xf32, #tpu.memory_space<vmem>>, vector<1x128xf32>
    %28 = vector.broadcast %27 : vector<1x128xf32> to vector<8x128xf32>
    %29 = arith.addf %26, %28 : vector<8x128xf32>
    %c0_16 = arith.constant 0 : index
    %c0_17 = arith.constant 0 : index
    %30 = vector.load %arg7[%c0_16, %c0_17] : memref<8x128xf32, #tpu.memory_space<vmem>>, vector<8x128xf32>
    tpu.vector_store %arg7[%c0_16, %c0_17], %29 {strides = array<i32>} : memref<8x128xf32, #tpu.memory_space<vmem>>, vector<8x128xf32>,
    return
  }
  func.func @transform_0(%arg0: i32) -> (i32, i32) {
    %c0_i32 = arith.constant 0 : i32
    %c0_i32_0 = arith.constant 0 : i32
    return %arg0, %c0_i32 : i32, i32
  }
  func.func @transform_1(%arg0: i32) -> (i32, i32) {
    %c0_i32 = arith.constant 0 : i32
    %c0_i32_0 = arith.constant 0 : i32
    %c0_i32_1 = arith.constant 0 : i32
    return %c0_i32, %c0_i32_0 : i32, i32
  }
  func.func @transform_2(%arg0: i32) -> (i32, i32) {
    %c0_i32 = arith.constant 0 : i32
    %c0_i32_0 = arith.constant 0 : i32
    %c0_i32_1 = arith.constant 0 : i32
    return %c0_i32, %c0_i32_0 : i32, i32
  }
  func.func @transform_3(%arg0: i32) -> (i32, i32) {
    %c0_i32 = arith.constant 0 : i32
    %c0_i32_0 = arith.constant 0 : i32
    return %arg0, %c0_i32 : i32, i32
  }
  func.func @transform_4(%arg0: i32) -> (i32, i32) {
    %c0_i32 = arith.constant 0 : i32
    %c0_i32_0 = arith.constant 0 : i32
    %c0_i32_1 = arith.constant 0 : i32
    return %c0_i32, %c0_i32_0 : i32, i32
  }
  func.func @transform_5(%arg0: i32) -> (i32, i32) {
    %c0_i32 = arith.constant 0 : i32
    %c0_i32_0 = arith.constant 0 : i32
    %c0_i32_1 = arith.constant 0 : i32
    return %c0_i32, %c0_i32_0 : i32, i32
  }
  func.func @transform_6(%arg0: i32) -> (i32, i32) {
    %c0_i32 = arith.constant 0 : i32
    %c0_i32_0 = arith.constant 0 : i32
    return %arg0, %c0_i32 : i32, i32
  }
}

module attributes {stable_mosaic.version = 11 : i64} {
  func.func @_attn_kernel(%arg0: i32, %arg1: i32, %arg2: i32, %arg3: memref<16x128xf32, #tpu.memory_space<vmem>>, %arg4: memref<16x128xf32, #tpu.memory_space<vmem>>, %arg5: memref<16x128xf32, #tpu.memory_space<vmem>>, %arg6: memref<16x128xf32, #tpu.memory_space<vmem>>, %arg7: memref<2x16x1xf32, #tpu.memory_space<vmem>>, %arg8: memref<2x16x1xf32, #tpu.memory_space<vmem>>, %arg9: memref<2x16x64xf32, #tpu.memory_space<vmem>>) attributes {dimension_semantics = [#tpu.dimension_semantics<parallel>, #tpu.dimension_semantics<parallel>, #tpu.dimension_semantics<arbitrary>], iteration_bounds = array<i64: 2, 1, 1>, scalar_prefetch = 0 : i64, scratch_operands = 3 : i64, tpu.core_type = #tpu.core_type<tc>, window_params = [{transform_indices = @transform_0, window_bounds = array<i64: 16, 128>}, {transform_indices = @transform_1, window_bounds = array<i64: 16, 128>}, {transform_indices = @transform_2, window_bounds = array<i64: 16, 128>}, {transform_indices = @transform_3, window_bounds = array<i64: 16, 128>}]} {
    %c0_i32 = arith.constant 0 : i32
    %0 = arith.cmpi eq, %arg2, %c0_i32 : i32
    %1 = arith.extui %0 : i1 to i32
    %c0_i32_0 = arith.constant 0 : i32
    %2 = arith.cmpi ne, %1, %c0_i32_0 : i32
    scf.if %2 {
      %cst_57 = arith.constant -1.000000e+30 : f32
      %80 = vector.broadcast %cst_57 : f32 to vector<2x16x1xf32>
      %c0_58 = arith.constant 0 : index
      %c0_59 = arith.constant 0 : index
      %c0_60 = arith.constant 0 : index
      %81 = vector.load %arg7[%c0_58, %c0_59, %c0_60] : memref<2x16x1xf32, #tpu.memory_space<vmem>>, vector<2x16x1xf32>
      tpu.vector_store %arg7[%c0_58, %c0_59, %c0_60], %80 {strides = array<i32>} : memref<2x16x1xf32, #tpu.memory_space<vmem>>, vector<2x16x1xf32>,
      %cst_61 = arith.constant 0.000000e+00 : f32
      %82 = vector.broadcast %cst_61 : f32 to vector<2x16x1xf32>
      %c0_62 = arith.constant 0 : index
      %c0_63 = arith.constant 0 : index
      %c0_64 = arith.constant 0 : index
      %83 = vector.load %arg8[%c0_62, %c0_63, %c0_64] : memref<2x16x1xf32, #tpu.memory_space<vmem>>, vector<2x16x1xf32>
      tpu.vector_store %arg8[%c0_62, %c0_63, %c0_64], %82 {strides = array<i32>} : memref<2x16x1xf32, #tpu.memory_space<vmem>>, vector<2x16x1xf32>,
      %cst_65 = arith.constant 0.000000e+00 : f32
      %84 = vector.broadcast %cst_65 : f32 to vector<2x16x64xf32>
      %c0_66 = arith.constant 0 : index
      %c0_67 = arith.constant 0 : index
      %c0_68 = arith.constant 0 : index
      %85 = vector.load %arg9[%c0_66, %c0_67, %c0_68] : memref<2x16x64xf32, #tpu.memory_space<vmem>>, vector<2x16x64xf32>
      tpu.vector_store %arg9[%c0_66, %c0_67, %c0_68], %84 {strides = array<i32>} : memref<2x16x64xf32, #tpu.memory_space<vmem>>, vector<2x16x64xf32>,
    } else {
    }
    %c0 = arith.constant 0 : index
    %c0_1 = arith.constant 0 : index
    %3 = vector.load %arg3[%c0, %c0_1] : memref<16x128xf32, #tpu.memory_space<vmem>>, vector<16x64xf32>
    %cst = arith.constant 1.250000e-01 : f32
    %4 = vector.broadcast %cst : f32 to vector<16x64xf32>
    %5 = arith.mulf %3, %4 : vector<16x64xf32>
    %c0_2 = arith.constant 0 : index
    %c0_3 = arith.constant 0 : index
    %6 = vector.load %arg4[%c0_2, %c0_3] : memref<16x128xf32, #tpu.memory_space<vmem>>, vector<16x64xf32>
    %c0_4 = arith.constant 0 : index
    %c0_5 = arith.constant 0 : index
    %7 = vector.load %arg5[%c0_4, %c0_5] : memref<16x128xf32, #tpu.memory_space<vmem>>, vector<16x64xf32>
    %cst_6 = arith.constant dense<0.000000e+00> : vector<16x16xf32>
    %8 = tpu.matmul %5, %6, %cst_6 {dimension_numbers = #tpu.dot_dimension_numbers<[1], [1], [0], [0], [0, 0, 1, 0], [], []>} : vector<16x64xf32>, vector<16x64xf32>, vector<16x16xf32> -> vector<16x16xf32>
    %c0_7 = arith.constant 0 : index
    %c0_8 = arith.constant 0 : index
    %c0_9 = arith.constant 0 : index
    %9 = vector.load %arg7[%c0_7, %c0_8, %c0_9] : memref<2x16x1xf32, #tpu.memory_space<vmem>>, vector<1x16x1xf32>
    %10 = vector.shape_cast %9 : vector<1x16x1xf32> to vector<16x1xf32>
    %cst_10 = arith.constant dense<0xFF800000> : vector<16xf32>
    %11 = vector.multi_reduction <maximumf>, %8, %cst_10 [1] : vector<16x16xf32> to vector<16xf32>
    %12 = vector.shape_cast %11 : vector<16xf32> to vector<16x1xf32>
    %13 = arith.maximumf %10, %12 : vector<16x1xf32>
    %14 = arith.subf %10, %13 : vector<16x1xf32>
    %15 = math.exp %14 : vector<16x1xf32>
    %16 = vector.broadcast %13 : vector<16x1xf32> to vector<16x16xf32>
    %17 = arith.subf %8, %16 : vector<16x16xf32>
    %18 = math.exp %17 : vector<16x16xf32>
    %c0_11 = arith.constant 0 : index
    %c0_12 = arith.constant 0 : index
    %c0_13 = arith.constant 0 : index
    %19 = vector.load %arg8[%c0_11, %c0_12, %c0_13] : memref<2x16x1xf32, #tpu.memory_space<vmem>>, vector<1x16x1xf32>
    %20 = vector.shape_cast %19 : vector<1x16x1xf32> to vector<16x1xf32>
    %21 = arith.mulf %15, %20 : vector<16x1xf32>
    %cst_14 = arith.constant dense<0.000000e+00> : vector<16xf32>
    %22 = vector.multi_reduction <add>, %18, %cst_14 [1] : vector<16x16xf32> to vector<16xf32>
    %23 = vector.shape_cast %22 : vector<16xf32> to vector<16x1xf32>
    %24 = arith.addf %21, %23 : vector<16x1xf32>
    %c0_15 = arith.constant 0 : index
    %c0_16 = arith.constant 0 : index
    %c0_17 = arith.constant 0 : index
    %25 = vector.load %arg8[%c0_15, %c0_16, %c0_17] : memref<2x16x1xf32, #tpu.memory_space<vmem>>, vector<1x16x1xf32>
    %26 = vector.shape_cast %25 : vector<1x16x1xf32> to vector<16x1xf32>
    %27 = vector.shape_cast %24 : vector<16x1xf32> to vector<1x16x1xf32>
    tpu.vector_store %arg8[%c0_15, %c0_16, %c0_17], %27 {strides = array<i32>} : memref<2x16x1xf32, #tpu.memory_space<vmem>>, vector<1x16x1xf32>,
    %c0_18 = arith.constant 0 : index
    %c0_19 = arith.constant 0 : index
    %c0_20 = arith.constant 0 : index
    %28 = vector.load %arg9[%c0_18, %c0_19, %c0_20] : memref<2x16x64xf32, #tpu.memory_space<vmem>>, vector<1x16x64xf32>
    %29 = vector.shape_cast %28 : vector<1x16x64xf32> to vector<16x64xf32>
    %30 = vector.broadcast %15 : vector<16x1xf32> to vector<16x64xf32>
    %31 = arith.mulf %30, %29 : vector<16x64xf32>
    %cst_21 = arith.constant dense<0.000000e+00> : vector<16x64xf32>
    %32 = tpu.matmul %18, %7, %cst_21 {dimension_numbers = #tpu.dot_dimension_numbers<[1], [0], [0], [1], [0, 0, 1, 1], [], []>} : vector<16x16xf32>, vector<16x64xf32>, vector<16x64xf32> -> vector<16x64xf32>
    %33 = arith.addf %31, %32 : vector<16x64xf32>
    %c0_22 = arith.constant 0 : index
    %c0_23 = arith.constant 0 : index
    %c0_24 = arith.constant 0 : index
    %34 = vector.load %arg9[%c0_22, %c0_23, %c0_24] : memref<2x16x64xf32, #tpu.memory_space<vmem>>, vector<1x16x64xf32>
    %35 = vector.shape_cast %34 : vector<1x16x64xf32> to vector<16x64xf32>
    %36 = vector.shape_cast %33 : vector<16x64xf32> to vector<1x16x64xf32>
    tpu.vector_store %arg9[%c0_22, %c0_23, %c0_24], %36 {strides = array<i32>} : memref<2x16x64xf32, #tpu.memory_space<vmem>>, vector<1x16x64xf32>,
    %c0_25 = arith.constant 0 : index
    %c0_26 = arith.constant 0 : index
    %c0_27 = arith.constant 0 : index
    %37 = vector.load %arg7[%c0_25, %c0_26, %c0_27] : memref<2x16x1xf32, #tpu.memory_space<vmem>>, vector<1x16x1xf32>
    %38 = vector.shape_cast %37 : vector<1x16x1xf32> to vector<16x1xf32>
    %39 = vector.shape_cast %13 : vector<16x1xf32> to vector<1x16x1xf32>
    tpu.vector_store %arg7[%c0_25, %c0_26, %c0_27], %39 {strides = array<i32>} : memref<2x16x1xf32, #tpu.memory_space<vmem>>, vector<1x16x1xf32>,
    %c0_28 = arith.constant 0 : index
    %c64 = arith.constant 64 : index
    %40 = vector.load %arg3[%c0_28, %c64] : memref<16x128xf32, #tpu.memory_space<vmem>>, vector<16x64xf32>
    %cst_29 = arith.constant 1.250000e-01 : f32
    %41 = vector.broadcast %cst_29 : f32 to vector<16x64xf32>
    %42 = arith.mulf %40, %41 : vector<16x64xf32>
    %c0_30 = arith.constant 0 : index
    %c64_31 = arith.constant 64 : index
    %43 = vector.load %arg4[%c0_30, %c64_31] : memref<16x128xf32, #tpu.memory_space<vmem>>, vector<16x64xf32>
    %c0_32 = arith.constant 0 : index
    %c64_33 = arith.constant 64 : index
    %44 = vector.load %arg5[%c0_32, %c64_33] : memref<16x128xf32, #tpu.memory_space<vmem>>, vector<16x64xf32>
    %cst_34 = arith.constant dense<0.000000e+00> : vector<16x16xf32>
    %45 = tpu.matmul %42, %43, %cst_34 {dimension_numbers = #tpu.dot_dimension_numbers<[1], [1], [0], [0], [0, 0, 1, 0], [], []>} : vector<16x64xf32>, vector<16x64xf32>, vector<16x16xf32> -> vector<16x16xf32>
    %c1 = arith.constant 1 : index
    %c0_35 = arith.constant 0 : index
    %c0_36 = arith.constant 0 : index
    %46 = vector.load %arg7[%c1, %c0_35, %c0_36] : memref<2x16x1xf32, #tpu.memory_space<vmem>>, vector<1x16x1xf32>
    %47 = vector.shape_cast %46 : vector<1x16x1xf32> to vector<16x1xf32>
    %cst_37 = arith.constant dense<0xFF800000> : vector<16xf32>
    %48 = vector.multi_reduction <maximumf>, %45, %cst_37 [1] : vector<16x16xf32> to vector<16xf32>
    %49 = vector.shape_cast %48 : vector<16xf32> to vector<16x1xf32>
    %50 = arith.maximumf %47, %49 : vector<16x1xf32>
    %51 = arith.subf %47, %50 : vector<16x1xf32>
    %52 = math.exp %51 : vector<16x1xf32>
    %53 = vector.broadcast %50 : vector<16x1xf32> to vector<16x16xf32>
    %54 = arith.subf %45, %53 : vector<16x16xf32>
    %55 = math.exp %54 : vector<16x16xf32>
    %c1_38 = arith.constant 1 : index
    %c0_39 = arith.constant 0 : index
    %c0_40 = arith.constant 0 : index
    %56 = vector.load %arg8[%c1_38, %c0_39, %c0_40] : memref<2x16x1xf32, #tpu.memory_space<vmem>>, vector<1x16x1xf32>
    %57 = vector.shape_cast %56 : vector<1x16x1xf32> to vector<16x1xf32>
    %58 = arith.mulf %52, %57 : vector<16x1xf32>
    %cst_41 = arith.constant dense<0.000000e+00> : vector<16xf32>
    %59 = vector.multi_reduction <add>, %55, %cst_41 [1] : vector<16x16xf32> to vector<16xf32>
    %60 = vector.shape_cast %59 : vector<16xf32> to vector<16x1xf32>
    %61 = arith.addf %58, %60 : vector<16x1xf32>
    %c1_42 = arith.constant 1 : index
    %c0_43 = arith.constant 0 : index
    %c0_44 = arith.constant 0 : index
    %62 = vector.load %arg8[%c1_42, %c0_43, %c0_44] : memref<2x16x1xf32, #tpu.memory_space<vmem>>, vector<1x16x1xf32>
    %63 = vector.shape_cast %62 : vector<1x16x1xf32> to vector<16x1xf32>
    %64 = vector.shape_cast %61 : vector<16x1xf32> to vector<1x16x1xf32>
    tpu.vector_store %arg8[%c1_42, %c0_43, %c0_44], %64 {strides = array<i32>} : memref<2x16x1xf32, #tpu.memory_space<vmem>>, vector<1x16x1xf32>,
    %c1_45 = arith.constant 1 : index
    %c0_46 = arith.constant 0 : index
    %c0_47 = arith.constant 0 : index
    %65 = vector.load %arg9[%c1_45, %c0_46, %c0_47] : memref<2x16x64xf32, #tpu.memory_space<vmem>>, vector<1x16x64xf32>
    %66 = vector.shape_cast %65 : vector<1x16x64xf32> to vector<16x64xf32>
    %67 = vector.broadcast %52 : vector<16x1xf32> to vector<16x64xf32>
    %68 = arith.mulf %67, %66 : vector<16x64xf32>
    %cst_48 = arith.constant dense<0.000000e+00> : vector<16x64xf32>
    %69 = tpu.matmul %55, %44, %cst_48 {dimension_numbers = #tpu.dot_dimension_numbers<[1], [0], [0], [1], [0, 0, 1, 1], [], []>} : vector<16x16xf32>, vector<16x64xf32>, vector<16x64xf32> -> vector<16x64xf32>
    %70 = arith.addf %68, %69 : vector<16x64xf32>
    %c1_49 = arith.constant 1 : index
    %c0_50 = arith.constant 0 : index
    %c0_51 = arith.constant 0 : index
    %71 = vector.load %arg9[%c1_49, %c0_50, %c0_51] : memref<2x16x64xf32, #tpu.memory_space<vmem>>, vector<1x16x64xf32>
    %72 = vector.shape_cast %71 : vector<1x16x64xf32> to vector<16x64xf32>
    %73 = vector.shape_cast %70 : vector<16x64xf32> to vector<1x16x64xf32>
    tpu.vector_store %arg9[%c1_49, %c0_50, %c0_51], %73 {strides = array<i32>} : memref<2x16x64xf32, #tpu.memory_space<vmem>>, vector<1x16x64xf32>,
    %c1_52 = arith.constant 1 : index
    %c0_53 = arith.constant 0 : index
    %c0_54 = arith.constant 0 : index
    %74 = vector.load %arg7[%c1_52, %c0_53, %c0_54] : memref<2x16x1xf32, #tpu.memory_space<vmem>>, vector<1x16x1xf32>
    %75 = vector.shape_cast %74 : vector<1x16x1xf32> to vector<16x1xf32>
    %76 = vector.shape_cast %50 : vector<16x1xf32> to vector<1x16x1xf32>
    tpu.vector_store %arg7[%c1_52, %c0_53, %c0_54], %76 {strides = array<i32>} : memref<2x16x1xf32, #tpu.memory_space<vmem>>, vector<1x16x1xf32>,
    %c0_i32_55 = arith.constant 0 : i32
    %77 = arith.cmpi eq, %arg2, %c0_i32_55 : i32
    %78 = arith.extui %77 : i1 to i32
    %c0_i32_56 = arith.constant 0 : i32
    %79 = arith.cmpi ne, %78, %c0_i32_56 : i32
    scf.if %79 {
      %c0_57 = arith.constant 0 : index
      %c0_58 = arith.constant 0 : index
      %c0_59 = arith.constant 0 : index
      %80 = vector.load %arg8[%c0_57, %c0_58, %c0_59] : memref<2x16x1xf32, #tpu.memory_space<vmem>>, vector<1x16x1xf32>
      %81 = vector.shape_cast %80 : vector<1x16x1xf32> to vector<16x1xf32>
      %82 = tpu.reciprocal %81 : vector<16x1xf32> -> vector<16x1xf32>
      %c0_60 = arith.constant 0 : index
      %c0_61 = arith.constant 0 : index
      %c0_62 = arith.constant 0 : index
      %83 = vector.load %arg9[%c0_60, %c0_61, %c0_62] : memref<2x16x64xf32, #tpu.memory_space<vmem>>, vector<1x16x64xf32>
      %84 = vector.shape_cast %83 : vector<1x16x64xf32> to vector<16x64xf32>
      %85 = vector.broadcast %82 : vector<16x1xf32> to vector<16x64xf32>
      %86 = arith.mulf %84, %85 : vector<16x64xf32>
      %c0_63 = arith.constant 0 : index
      %c0_64 = arith.constant 0 : index
      %87 = vector.load %arg6[%c0_63, %c0_64] : memref<16x128xf32, #tpu.memory_space<vmem>>, vector<16x64xf32>
      tpu.vector_store %arg6[%c0_63, %c0_64], %86 {strides = array<i32>} : memref<16x128xf32, #tpu.memory_space<vmem>>, vector<16x64xf32>,
      %c1_65 = arith.constant 1 : index
      %c0_66 = arith.constant 0 : index
      %c0_67 = arith.constant 0 : index
      %88 = vector.load %arg8[%c1_65, %c0_66, %c0_67] : memref<2x16x1xf32, #tpu.memory_space<vmem>>, vector<1x16x1xf32>
      %89 = vector.shape_cast %88 : vector<1x16x1xf32> to vector<16x1xf32>
      %90 = tpu.reciprocal %89 : vector<16x1xf32> -> vector<16x1xf32>
      %c1_68 = arith.constant 1 : index
      %c0_69 = arith.constant 0 : index
      %c0_70 = arith.constant 0 : index
      %91 = vector.load %arg9[%c1_68, %c0_69, %c0_70] : memref<2x16x64xf32, #tpu.memory_space<vmem>>, vector<1x16x64xf32>
      %92 = vector.shape_cast %91 : vector<1x16x64xf32> to vector<16x64xf32>
      %93 = vector.broadcast %90 : vector<16x1xf32> to vector<16x64xf32>
      %94 = arith.mulf %92, %93 : vector<16x64xf32>
      %c0_71 = arith.constant 0 : index
      %c64_72 = arith.constant 64 : index
      %95 = vector.load %arg6[%c0_71, %c64_72] : memref<16x128xf32, #tpu.memory_space<vmem>>, vector<16x64xf32>
      tpu.vector_store %arg6[%c0_71, %c64_72], %94 {strides = array<i32>} : memref<16x128xf32, #tpu.memory_space<vmem>>, vector<16x64xf32>,
    } else {
    }
    return
  }
  func.func @transform_0(%arg0: i32, %arg1: i32, %arg2: i32) -> (i32, i32) {
    %c0_i32 = arith.constant 0 : i32
    return %arg0, %arg1 : i32, i32
  }
  func.func @transform_1(%arg0: i32, %arg1: i32, %arg2: i32) -> (i32, i32) {
    %c1_i32 = arith.constant 1 : i32
    %0 = arith.muli %arg0, %c1_i32 : i32
    %1 = arith.addi %0, %arg2 : i32
    %c1_i32_0 = arith.constant 1 : i32
    %2 = arith.addi %c1_i32_0, %arg1 : i32
    %c0_i32 = arith.constant 0 : i32
    return %1, %2 : i32, i32
  }
  func.func @transform_2(%arg0: i32, %arg1: i32, %arg2: i32) -> (i32, i32) {
    %c1_i32 = arith.constant 1 : i32
    %0 = arith.muli %arg0, %c1_i32 : i32
    %1 = arith.addi %0, %arg2 : i32
    %c2_i32 = arith.constant 2 : i32
    %2 = arith.addi %c2_i32, %arg1 : i32
    %c0_i32 = arith.constant 0 : i32
    return %1, %2 : i32, i32
  }
  func.func @transform_3(%arg0: i32, %arg1: i32, %arg2: i32) -> (i32, i32) {
    %c0_i32 = arith.constant 0 : i32
    return %arg0, %arg1 : i32, i32
  }
}

module attributes {stable_mosaic.version = 11 : i64} {
  func.func @_linear_kernel(%arg0: i32, %arg1: i32, %arg2: i32, %arg3: memref<32x128xf32, #tpu.memory_space<vmem>>, %arg4: memref<128x128xf32, #tpu.memory_space<vmem>>, %arg5: memref<1x128xf32, #tpu.memory_space<vmem>>, %arg6: memref<32x128xf32, #tpu.memory_space<vmem>>, %arg7: memref<32x128xf32, #tpu.memory_space<vmem>>) attributes {dimension_semantics = [#tpu.dimension_semantics<parallel>, #tpu.dimension_semantics<parallel>, #tpu.dimension_semantics<arbitrary>], iteration_bounds = array<i64: 1, 3, 1>, scalar_prefetch = 0 : i64, scratch_operands = 1 : i64, tpu.core_type = #tpu.core_type<tc>, window_params = [{transform_indices = @transform_0, window_bounds = array<i64: 32, 128>}, {transform_indices = @transform_1, window_bounds = array<i64: 128, 128>}, {transform_indices = @transform_2, window_bounds = array<i64: 1, 128>}, {transform_indices = @transform_3, window_bounds = array<i64: 32, 128>}]} {
    %c0_i32 = arith.constant 0 : i32
    %0 = arith.cmpi eq, %arg2, %c0_i32 : i32
    %1 = arith.extui %0 : i1 to i32
    %c0_i32_0 = arith.constant 0 : i32
    %2 = arith.cmpi ne, %1, %c0_i32_0 : i32
    scf.if %2 {
      %cst_10 = arith.constant 0.000000e+00 : f32
      %12 = vector.broadcast %cst_10 : f32 to vector<32x128xf32>
      %c0_11 = arith.constant 0 : index
      %c0_12 = arith.constant 0 : index
      %13 = vector.load %arg7[%c0_11, %c0_12] : memref<32x128xf32, #tpu.memory_space<vmem>>, vector<32x128xf32>
      tpu.vector_store %arg7[%c0_11, %c0_12], %12 {strides = array<i32>} : memref<32x128xf32, #tpu.memory_space<vmem>>, vector<32x128xf32>,
    } else {
    }
    %c0 = arith.constant 0 : index
    %c0_1 = arith.constant 0 : index
    %3 = vector.load %arg7[%c0, %c0_1] : memref<32x128xf32, #tpu.memory_space<vmem>>, vector<32x128xf32>
    %c0_2 = arith.constant 0 : index
    %c0_3 = arith.constant 0 : index
    %4 = vector.load %arg3[%c0_2, %c0_3] : memref<32x128xf32, #tpu.memory_space<vmem>>, vector<32x128xf32>
    %c0_4 = arith.constant 0 : index
    %c0_5 = arith.constant 0 : index
    %5 = vector.load %arg4[%c0_4, %c0_5] : memref<128x128xf32, #tpu.memory_space<vmem>>, vector<128x128xf32>
    %cst = arith.constant dense<0.000000e+00> : vector<32x128xf32>
    %6 = tpu.matmul %4, %5, %cst {dimension_numbers = #tpu.dot_dimension_numbers<[1], [0], [0], [1], [0, 0, 1, 1], [], []>} : vector<32x128xf32>, vector<128x128xf32>, vector<32x128xf32> -> vector<32x128xf32>
    %7 = arith.addf %3, %6 : vector<32x128xf32>
    %c0_6 = arith.constant 0 : index
    %c0_7 = arith.constant 0 : index
    %8 = vector.load %arg7[%c0_6, %c0_7] : memref<32x128xf32, #tpu.memory_space<vmem>>, vector<32x128xf32>
    tpu.vector_store %arg7[%c0_6, %c0_7], %7 {strides = array<i32>} : memref<32x128xf32, #tpu.memory_space<vmem>>, vector<32x128xf32>,
    %c0_i32_8 = arith.constant 0 : i32
    %9 = arith.cmpi eq, %arg2, %c0_i32_8 : i32
    %10 = arith.extui %9 : i1 to i32
    %c0_i32_9 = arith.constant 0 : i32
    %11 = arith.cmpi ne, %10, %c0_i32_9 : i32
    scf.if %11 {
      %c0_10 = arith.constant 0 : index
      %c0_11 = arith.constant 0 : index
      %12 = vector.load %arg7[%c0_10, %c0_11] : memref<32x128xf32, #tpu.memory_space<vmem>>, vector<32x128xf32>
      %c0_12 = arith.constant 0 : index
      %c0_13 = arith.constant 0 : index
      %13 = vector.load %arg5[%c0_12, %c0_13] : memref<1x128xf32, #tpu.memory_space<vmem>>, vector<1x128xf32>
      %14 = vector.broadcast %13 : vector<1x128xf32> to vector<32x128xf32>
      %15 = arith.addf %12, %14 : vector<32x128xf32>
      %c0_14 = arith.constant 0 : index
      %c0_15 = arith.constant 0 : index
      %16 = vector.load %arg6[%c0_14, %c0_15] : memref<32x128xf32, #tpu.memory_space<vmem>>, vector<32x128xf32>
      tpu.vector_store %arg6[%c0_14, %c0_15], %15 {strides = array<i32>} : memref<32x128xf32, #tpu.memory_space<vmem>>, vector<32x128xf32>,
    } else {
    }
    return
  }
  func.func @transform_0(%arg0: i32, %arg1: i32, %arg2: i32) -> (i32, i32) {
    %c0_i32 = arith.constant 0 : i32
    return %arg0, %arg2 : i32, i32
  }
  func.func @transform_1(%arg0: i32, %arg1: i32, %arg2: i32) -> (i32, i32) {
    %c0_i32 = arith.constant 0 : i32
    return %arg2, %arg1 : i32, i32
  }
  func.func @transform_2(%arg0: i32, %arg1: i32, %arg2: i32) -> (i32, i32) {
    %c0_i32 = arith.constant 0 : i32
    %c0_i32_0 = arith.constant 0 : i32
    return %c0_i32, %arg1 : i32, i32
  }
  func.func @transform_3(%arg0: i32, %arg1: i32, %arg2: i32) -> (i32, i32) {
    %c0_i32 = arith.constant 0 : i32
    return %arg0, %arg1 : i32, i32
  }
}

module attributes {stable_mosaic.version = 11 : i64} {
  func.func @_linear_kernel(%arg0: i32, %arg1: i32, %arg2: i32, %arg3: memref<32x128xf32, #tpu.memory_space<vmem>>, %arg4: memref<128x128xf32, #tpu.memory_space<vmem>>, %arg5: memref<1x128xf32, #tpu.memory_space<vmem>>, %arg6: memref<32x128xf32, #tpu.memory_space<vmem>>, %arg7: memref<32x128xf32, #tpu.memory_space<vmem>>) attributes {dimension_semantics = [#tpu.dimension_semantics<parallel>, #tpu.dimension_semantics<parallel>, #tpu.dimension_semantics<arbitrary>], iteration_bounds = array<i64: 1, 3, 1>, scalar_prefetch = 0 : i64, scratch_operands = 1 : i64, tpu.core_type = #tpu.core_type<tc>, window_params = [{transform_indices = @transform_0, window_bounds = array<i64: 32, 128>}, {transform_indices = @transform_1, window_bounds = array<i64: 128, 128>}, {transform_indices = @transform_2, window_bounds = array<i64: 1, 128>}, {transform_indices = @transform_3, window_bounds = array<i64: 32, 128>}]} {
    %c0_i32 = arith.constant 0 : i32
    %0 = arith.cmpi eq, %arg2, %c0_i32 : i32
    %1 = arith.extui %0 : i1 to i32
    %c0_i32_0 = arith.constant 0 : i32
    %2 = arith.cmpi ne, %1, %c0_i32_0 : i32
    scf.if %2 {
      %cst_10 = arith.constant 0.000000e+00 : f32
      %12 = vector.broadcast %cst_10 : f32 to vector<32x128xf32>
      %c0_11 = arith.constant 0 : index
      %c0_12 = arith.constant 0 : index
      %13 = vector.load %arg7[%c0_11, %c0_12] : memref<32x128xf32, #tpu.memory_space<vmem>>, vector<32x128xf32>
      tpu.vector_store %arg7[%c0_11, %c0_12], %12 {strides = array<i32>} : memref<32x128xf32, #tpu.memory_space<vmem>>, vector<32x128xf32>,
    } else {
    }
    %c0 = arith.constant 0 : index
    %c0_1 = arith.constant 0 : index
    %3 = vector.load %arg7[%c0, %c0_1] : memref<32x128xf32, #tpu.memory_space<vmem>>, vector<32x128xf32>
    %c0_2 = arith.constant 0 : index
    %c0_3 = arith.constant 0 : index
    %4 = vector.load %arg3[%c0_2, %c0_3] : memref<32x128xf32, #tpu.memory_space<vmem>>, vector<32x128xf32>
    %c0_4 = arith.constant 0 : index
    %c0_5 = arith.constant 0 : index
    %5 = vector.load %arg4[%c0_4, %c0_5] : memref<128x128xf32, #tpu.memory_space<vmem>>, vector<128x128xf32>
    %cst = arith.constant dense<0.000000e+00> : vector<32x128xf32>
    %6 = tpu.matmul %4, %5, %cst {dimension_numbers = #tpu.dot_dimension_numbers<[1], [0], [0], [1], [0, 0, 1, 1], [], []>} : vector<32x128xf32>, vector<128x128xf32>, vector<32x128xf32> -> vector<32x128xf32>
    %7 = arith.addf %3, %6 : vector<32x128xf32>
    %c0_6 = arith.constant 0 : index
    %c0_7 = arith.constant 0 : index
    %8 = vector.load %arg7[%c0_6, %c0_7] : memref<32x128xf32, #tpu.memory_space<vmem>>, vector<32x128xf32>
    tpu.vector_store %arg7[%c0_6, %c0_7], %7 {strides = array<i32>} : memref<32x128xf32, #tpu.memory_space<vmem>>, vector<32x128xf32>,
    %c0_i32_8 = arith.constant 0 : i32
    %9 = arith.cmpi eq, %arg2, %c0_i32_8 : i32
    %10 = arith.extui %9 : i1 to i32
    %c0_i32_9 = arith.constant 0 : i32
    %11 = arith.cmpi ne, %10, %c0_i32_9 : i32
    scf.if %11 {
      %c0_10 = arith.constant 0 : index
      %c0_11 = arith.constant 0 : index
      %12 = vector.load %arg7[%c0_10, %c0_11] : memref<32x128xf32, #tpu.memory_space<vmem>>, vector<32x128xf32>
      %c0_12 = arith.constant 0 : index
      %c0_13 = arith.constant 0 : index
      %13 = vector.load %arg5[%c0_12, %c0_13] : memref<1x128xf32, #tpu.memory_space<vmem>>, vector<1x128xf32>
      %14 = vector.broadcast %13 : vector<1x128xf32> to vector<32x128xf32>
      %15 = arith.addf %12, %14 : vector<32x128xf32>
      %c0_14 = arith.constant 0 : index
      %c0_15 = arith.constant 0 : index
      %16 = vector.load %arg6[%c0_14, %c0_15] : memref<32x128xf32, #tpu.memory_space<vmem>>, vector<32x128xf32>
      tpu.vector_store %arg6[%c0_14, %c0_15], %15 {strides = array<i32>} : memref<32x128xf32, #tpu.memory_space<vmem>>, vector<32x128xf32>,
    } else {
    }
    return
  }
  func.func @transform_0(%arg0: i32, %arg1: i32, %arg2: i32) -> (i32, i32) {
    %c0_i32 = arith.constant 0 : i32
    return %arg0, %arg2 : i32, i32
  }
  func.func @transform_1(%arg0: i32, %arg1: i32, %arg2: i32) -> (i32, i32) {
    %c0_i32 = arith.constant 0 : i32
    return %arg2, %arg1 : i32, i32
  }
  func.func @transform_2(%arg0: i32, %arg1: i32, %arg2: i32) -> (i32, i32) {
    %c0_i32 = arith.constant 0 : i32
    %c0_i32_0 = arith.constant 0 : i32
    return %c0_i32, %arg1 : i32, i32
  }
  func.func @transform_3(%arg0: i32, %arg1: i32, %arg2: i32) -> (i32, i32) {
    %c0_i32 = arith.constant 0 : i32
    return %arg0, %arg1 : i32, i32
  }
}

module attributes {stable_mosaic.version = 11 : i64} {
  func.func @_dense_res_ln_kernel(%arg0: i32, %arg1: memref<8x128xf32, #tpu.memory_space<vmem>>, %arg2: memref<128x128xf32, #tpu.memory_space<vmem>>, %arg3: memref<1x128xf32, #tpu.memory_space<vmem>>, %arg4: memref<8x128xf32, #tpu.memory_space<vmem>>, %arg5: memref<1x128xf32, #tpu.memory_space<vmem>>, %arg6: memref<1x128xf32, #tpu.memory_space<vmem>>, %arg7: memref<8x128xf32, #tpu.memory_space<vmem>>) attributes {dimension_semantics = [#tpu.dimension_semantics<parallel>], iteration_bounds = array<i64: 4>, scalar_prefetch = 0 : i64, scratch_operands = 0 : i64, tpu.core_type = #tpu.core_type<tc>, window_params = [{transform_indices = @transform_0, window_bounds = array<i64: 8, 128>}, {pipeline_mode = #tpu.pipeline_mode<synchronous>, transform_indices = @transform_1, window_bounds = array<i64: 128, 128>}, {pipeline_mode = #tpu.pipeline_mode<synchronous>, transform_indices = @transform_2, window_bounds = array<i64: 1, 128>}, {transform_indices = @transform_3, window_bounds = array<i64: 8, 128>}, {pipeline_mode = #tpu.pipeline_mode<synchronous>, transform_indices = @transform_4, window_bounds = array<i64: 1, 128>}, {pipeline_mode = #tpu.pipeline_mode<synchronous>, transform_indices = @transform_5, window_bounds = array<i64: 1, 128>}, {transform_indices = @transform_6, window_bounds = array<i64: 8, 128>}]} {
    %c0 = arith.constant 0 : index
    %c0_0 = arith.constant 0 : index
    %0 = vector.load %arg1[%c0, %c0_0] : memref<8x128xf32, #tpu.memory_space<vmem>>, vector<8x128xf32>
    %c0_1 = arith.constant 0 : index
    %c0_2 = arith.constant 0 : index
    %1 = vector.load %arg2[%c0_1, %c0_2] : memref<128x128xf32, #tpu.memory_space<vmem>>, vector<128x128xf32>
    %cst = arith.constant dense<0.000000e+00> : vector<8x128xf32>
    %2 = tpu.matmul %0, %1, %cst {dimension_numbers = #tpu.dot_dimension_numbers<[1], [0], [0], [1], [0, 0, 1, 1], [], []>} : vector<8x128xf32>, vector<128x128xf32>, vector<8x128xf32> -> vector<8x128xf32>
    %c0_3 = arith.constant 0 : index
    %c0_4 = arith.constant 0 : index
    %3 = vector.load %arg3[%c0_3, %c0_4] : memref<1x128xf32, #tpu.memory_space<vmem>>, vector<1x128xf32>
    %4 = vector.broadcast %3 : vector<1x128xf32> to vector<8x128xf32>
    %5 = arith.addf %2, %4 : vector<8x128xf32>
    %c0_5 = arith.constant 0 : index
    %c0_6 = arith.constant 0 : index
    %6 = vector.load %arg4[%c0_5, %c0_6] : memref<8x128xf32, #tpu.memory_space<vmem>>, vector<8x128xf32>
    %7 = arith.addf %5, %6 : vector<8x128xf32>
    %cst_7 = arith.constant dense<0.000000e+00> : vector<8xf32>
    %8 = vector.multi_reduction <add>, %7, %cst_7 [1] : vector<8x128xf32> to vector<8xf32>
    %9 = vector.shape_cast %8 : vector<8xf32> to vector<8x1xf32>
    %cst_8 = arith.constant 1.280000e+02 : f32
    %10 = vector.broadcast %cst_8 : f32 to vector<8x1xf32>
    %11 = arith.divf %9, %10 : vector<8x1xf32>
    %12 = vector.broadcast %11 : vector<8x1xf32> to vector<8x128xf32>
    %13 = arith.subf %7, %12 : vector<8x128xf32>
    %14 = arith.mulf %13, %13 : vector<8x128xf32>
    %cst_9 = arith.constant dense<0.000000e+00> : vector<8xf32>
    %15 = vector.multi_reduction <add>, %14, %cst_9 [1] : vector<8x128xf32> to vector<8xf32>
    %16 = vector.shape_cast %15 : vector<8xf32> to vector<8x1xf32>
    %cst_10 = arith.constant 1.280000e+02 : f32
    %17 = vector.broadcast %cst_10 : f32 to vector<8x1xf32>
    %18 = arith.divf %16, %17 : vector<8x1xf32>
    %cst_11 = arith.constant 9.99999996E-13 : f32
    %19 = vector.broadcast %cst_11 : f32 to vector<8x1xf32>
    %20 = arith.addf %18, %19 : vector<8x1xf32>
    %21 = math.rsqrt %20 : vector<8x1xf32>
    %22 = vector.broadcast %21 : vector<8x1xf32> to vector<8x128xf32>
    %23 = arith.mulf %13, %22 : vector<8x128xf32>
    %c0_12 = arith.constant 0 : index
    %c0_13 = arith.constant 0 : index
    %24 = vector.load %arg5[%c0_12, %c0_13] : memref<1x128xf32, #tpu.memory_space<vmem>>, vector<1x128xf32>
    %25 = vector.broadcast %24 : vector<1x128xf32> to vector<8x128xf32>
    %26 = arith.mulf %23, %25 : vector<8x128xf32>
    %c0_14 = arith.constant 0 : index
    %c0_15 = arith.constant 0 : index
    %27 = vector.load %arg6[%c0_14, %c0_15] : memref<1x128xf32, #tpu.memory_space<vmem>>, vector<1x128xf32>
    %28 = vector.broadcast %27 : vector<1x128xf32> to vector<8x128xf32>
    %29 = arith.addf %26, %28 : vector<8x128xf32>
    %c0_16 = arith.constant 0 : index
    %c0_17 = arith.constant 0 : index
    %30 = vector.load %arg7[%c0_16, %c0_17] : memref<8x128xf32, #tpu.memory_space<vmem>>, vector<8x128xf32>
    tpu.vector_store %arg7[%c0_16, %c0_17], %29 {strides = array<i32>} : memref<8x128xf32, #tpu.memory_space<vmem>>, vector<8x128xf32>,
    return
  }
  func.func @transform_0(%arg0: i32) -> (i32, i32) {
    %c0_i32 = arith.constant 0 : i32
    %c0_i32_0 = arith.constant 0 : i32
    return %arg0, %c0_i32 : i32, i32
  }
  func.func @transform_1(%arg0: i32) -> (i32, i32) {
    %c0_i32 = arith.constant 0 : i32
    %c0_i32_0 = arith.constant 0 : i32
    %c0_i32_1 = arith.constant 0 : i32
    return %c0_i32, %c0_i32_0 : i32, i32
  }
  func.func @transform_2(%arg0: i32) -> (i32, i32) {
    %c0_i32 = arith.constant 0 : i32
    %c0_i32_0 = arith.constant 0 : i32
    %c0_i32_1 = arith.constant 0 : i32
    return %c0_i32, %c0_i32_0 : i32, i32
  }
  func.func @transform_3(%arg0: i32) -> (i32, i32) {
    %c0_i32 = arith.constant 0 : i32
    %c0_i32_0 = arith.constant 0 : i32
    return %arg0, %c0_i32 : i32, i32
  }
  func.func @transform_4(%arg0: i32) -> (i32, i32) {
    %c0_i32 = arith.constant 0 : i32
    %c0_i32_0 = arith.constant 0 : i32
    %c0_i32_1 = arith.constant 0 : i32
    return %c0_i32, %c0_i32_0 : i32, i32
  }
  func.func @transform_5(%arg0: i32) -> (i32, i32) {
    %c0_i32 = arith.constant 0 : i32
    %c0_i32_0 = arith.constant 0 : i32
    %c0_i32_1 = arith.constant 0 : i32
    return %c0_i32, %c0_i32_0 : i32, i32
  }
  func.func @transform_6(%arg0: i32) -> (i32, i32) {
    %c0_i32 = arith.constant 0 : i32
    %c0_i32_0 = arith.constant 0 : i32
    return %arg0, %c0_i32 : i32, i32
  }
}

module attributes {stable_mosaic.version = 11 : i64} {
  func.func @_ffn_kernel(%arg0: i32, %arg1: i32, %arg2: memref<8x128xf32, #tpu.memory_space<vmem>>, %arg3: memref<128x512xf32, #tpu.memory_space<vmem>>, %arg4: memref<1x512xf32, #tpu.memory_space<vmem>>, %arg5: memref<512x128xf32, #tpu.memory_space<vmem>>, %arg6: memref<1x128xf32, #tpu.memory_space<vmem>>, %arg7: memref<1x128xf32, #tpu.memory_space<vmem>>, %arg8: memref<1x128xf32, #tpu.memory_space<vmem>>, %arg9: memref<8x128xf32, #tpu.memory_space<vmem>>, %arg10: memref<8x128xf32, #tpu.memory_space<vmem>>) attributes {dimension_semantics = [#tpu.dimension_semantics<parallel>, #tpu.dimension_semantics<arbitrary>], iteration_bounds = array<i64: 4, 1>, scalar_prefetch = 0 : i64, scratch_operands = 1 : i64, tpu.core_type = #tpu.core_type<tc>, window_params = [{transform_indices = @transform_0, window_bounds = array<i64: 8, 128>}, {transform_indices = @transform_1, window_bounds = array<i64: 128, 512>}, {transform_indices = @transform_2, window_bounds = array<i64: 1, 512>}, {transform_indices = @transform_3, window_bounds = array<i64: 512, 128>}, {pipeline_mode = #tpu.pipeline_mode<synchronous>, transform_indices = @transform_4, window_bounds = array<i64: 1, 128>}, {pipeline_mode = #tpu.pipeline_mode<synchronous>, transform_indices = @transform_5, window_bounds = array<i64: 1, 128>}, {pipeline_mode = #tpu.pipeline_mode<synchronous>, transform_indices = @transform_6, window_bounds = array<i64: 1, 128>}, {transform_indices = @transform_7, window_bounds = array<i64: 8, 128>}]} {
    %c0_i32 = arith.constant 0 : i32
    %0 = arith.cmpi eq, %arg1, %c0_i32 : i32
    %1 = arith.extui %0 : i1 to i32
    %c0_i32_0 = arith.constant 0 : i32
    %2 = arith.cmpi ne, %1, %c0_i32_0 : i32
    scf.if %2 {
      %cst_18 = arith.constant 0.000000e+00 : f32
      %25 = vector.broadcast %cst_18 : f32 to vector<8x128xf32>
      %c0_19 = arith.constant 0 : index
      %c0_20 = arith.constant 0 : index
      %26 = vector.load %arg10[%c0_19, %c0_20] : memref<8x128xf32, #tpu.memory_space<vmem>>, vector<8x128xf32>
      tpu.vector_store %arg10[%c0_19, %c0_20], %25 {strides = array<i32>} : memref<8x128xf32, #tpu.memory_space<vmem>>, vector<8x128xf32>,
    } else {
    }
    %c0 = arith.constant 0 : index
    %c0_1 = arith.constant 0 : index
    %3 = vector.load %arg2[%c0, %c0_1] : memref<8x128xf32, #tpu.memory_space<vmem>>, vector<8x128xf32>
    %c0_2 = arith.constant 0 : index
    %c0_3 = arith.constant 0 : index
    %4 = vector.load %arg3[%c0_2, %c0_3] : memref<128x512xf32, #tpu.memory_space<vmem>>, vector<128x512xf32>
    %cst = arith.constant dense<0.000000e+00> : vector<8x512xf32>
    %5 = tpu.matmul %3, %4, %cst {dimension_numbers = #tpu.dot_dimension_numbers<[1], [0], [0], [1], [0, 0, 1, 1], [], []>} : vector<8x128xf32>, vector<128x512xf32>, vector<8x512xf32> -> vector<8x512xf32>
    %c0_4 = arith.constant 0 : index
    %c0_5 = arith.constant 0 : index
    %6 = vector.load %arg4[%c0_4, %c0_5] : memref<1x512xf32, #tpu.memory_space<vmem>>, vector<1x512xf32>
    %7 = vector.broadcast %6 : vector<1x512xf32> to vector<8x512xf32>
    %8 = arith.addf %5, %7 : vector<8x512xf32>
    %cst_6 = arith.constant 5.000000e-01 : f32
    %9 = vector.broadcast %cst_6 : f32 to vector<8x512xf32>
    %10 = arith.mulf %8, %9 : vector<8x512xf32>
    %cst_7 = arith.constant 0.707106769 : f32
    %11 = vector.broadcast %cst_7 : f32 to vector<8x512xf32>
    %12 = arith.mulf %8, %11 : vector<8x512xf32>
    %13 = math.erf %12 : vector<8x512xf32>
    %cst_8 = arith.constant 1.000000e+00 : f32
    %14 = vector.broadcast %cst_8 : f32 to vector<8x512xf32>
    %15 = arith.addf %14, %13 : vector<8x512xf32>
    %16 = arith.mulf %10, %15 : vector<8x512xf32>
    %c0_9 = arith.constant 0 : index
    %c0_10 = arith.constant 0 : index
    %17 = vector.load %arg10[%c0_9, %c0_10] : memref<8x128xf32, #tpu.memory_space<vmem>>, vector<8x128xf32>
    %c0_11 = arith.constant 0 : index
    %c0_12 = arith.constant 0 : index
    %18 = vector.load %arg5[%c0_11, %c0_12] : memref<512x128xf32, #tpu.memory_space<vmem>>, vector<512x128xf32>
    %cst_13 = arith.constant dense<0.000000e+00> : vector<8x128xf32>
    %19 = tpu.matmul %16, %18, %cst_13 {dimension_numbers = #tpu.dot_dimension_numbers<[1], [0], [0], [1], [0, 0, 1, 1], [], []>} : vector<8x512xf32>, vector<512x128xf32>, vector<8x128xf32> -> vector<8x128xf32>
    %20 = arith.addf %17, %19 : vector<8x128xf32>
    %c0_14 = arith.constant 0 : index
    %c0_15 = arith.constant 0 : index
    %21 = vector.load %arg10[%c0_14, %c0_15] : memref<8x128xf32, #tpu.memory_space<vmem>>, vector<8x128xf32>
    tpu.vector_store %arg10[%c0_14, %c0_15], %20 {strides = array<i32>} : memref<8x128xf32, #tpu.memory_space<vmem>>, vector<8x128xf32>,
    %c0_i32_16 = arith.constant 0 : i32
    %22 = arith.cmpi eq, %arg1, %c0_i32_16 : i32
    %23 = arith.extui %22 : i1 to i32
    %c0_i32_17 = arith.constant 0 : i32
    %24 = arith.cmpi ne, %23, %c0_i32_17 : i32
    scf.if %24 {
      %c0_18 = arith.constant 0 : index
      %c0_19 = arith.constant 0 : index
      %25 = vector.load %arg10[%c0_18, %c0_19] : memref<8x128xf32, #tpu.memory_space<vmem>>, vector<8x128xf32>
      %c0_20 = arith.constant 0 : index
      %c0_21 = arith.constant 0 : index
      %26 = vector.load %arg6[%c0_20, %c0_21] : memref<1x128xf32, #tpu.memory_space<vmem>>, vector<1x128xf32>
      %27 = vector.broadcast %26 : vector<1x128xf32> to vector<8x128xf32>
      %28 = arith.addf %25, %27 : vector<8x128xf32>
      %c0_22 = arith.constant 0 : index
      %c0_23 = arith.constant 0 : index
      %29 = vector.load %arg2[%c0_22, %c0_23] : memref<8x128xf32, #tpu.memory_space<vmem>>, vector<8x128xf32>
      %30 = arith.addf %28, %29 : vector<8x128xf32>
      %cst_24 = arith.constant dense<0.000000e+00> : vector<8xf32>
      %31 = vector.multi_reduction <add>, %30, %cst_24 [1] : vector<8x128xf32> to vector<8xf32>
      %32 = vector.shape_cast %31 : vector<8xf32> to vector<8x1xf32>
      %cst_25 = arith.constant 1.280000e+02 : f32
      %33 = vector.broadcast %cst_25 : f32 to vector<8x1xf32>
      %34 = arith.divf %32, %33 : vector<8x1xf32>
      %35 = vector.broadcast %34 : vector<8x1xf32> to vector<8x128xf32>
      %36 = arith.subf %30, %35 : vector<8x128xf32>
      %37 = arith.mulf %36, %36 : vector<8x128xf32>
      %cst_26 = arith.constant dense<0.000000e+00> : vector<8xf32>
      %38 = vector.multi_reduction <add>, %37, %cst_26 [1] : vector<8x128xf32> to vector<8xf32>
      %39 = vector.shape_cast %38 : vector<8xf32> to vector<8x1xf32>
      %cst_27 = arith.constant 1.280000e+02 : f32
      %40 = vector.broadcast %cst_27 : f32 to vector<8x1xf32>
      %41 = arith.divf %39, %40 : vector<8x1xf32>
      %cst_28 = arith.constant 9.99999996E-13 : f32
      %42 = vector.broadcast %cst_28 : f32 to vector<8x1xf32>
      %43 = arith.addf %41, %42 : vector<8x1xf32>
      %44 = math.rsqrt %43 : vector<8x1xf32>
      %45 = vector.broadcast %44 : vector<8x1xf32> to vector<8x128xf32>
      %46 = arith.mulf %36, %45 : vector<8x128xf32>
      %c0_29 = arith.constant 0 : index
      %c0_30 = arith.constant 0 : index
      %47 = vector.load %arg7[%c0_29, %c0_30] : memref<1x128xf32, #tpu.memory_space<vmem>>, vector<1x128xf32>
      %48 = vector.broadcast %47 : vector<1x128xf32> to vector<8x128xf32>
      %49 = arith.mulf %46, %48 : vector<8x128xf32>
      %c0_31 = arith.constant 0 : index
      %c0_32 = arith.constant 0 : index
      %50 = vector.load %arg8[%c0_31, %c0_32] : memref<1x128xf32, #tpu.memory_space<vmem>>, vector<1x128xf32>
      %51 = vector.broadcast %50 : vector<1x128xf32> to vector<8x128xf32>
      %52 = arith.addf %49, %51 : vector<8x128xf32>
      %c0_33 = arith.constant 0 : index
      %c0_34 = arith.constant 0 : index
      %53 = vector.load %arg9[%c0_33, %c0_34] : memref<8x128xf32, #tpu.memory_space<vmem>>, vector<8x128xf32>
      tpu.vector_store %arg9[%c0_33, %c0_34], %52 {strides = array<i32>} : memref<8x128xf32, #tpu.memory_space<vmem>>, vector<8x128xf32>,
    } else {
    }
    return
  }
  func.func @transform_0(%arg0: i32, %arg1: i32) -> (i32, i32) {
    %c0_i32 = arith.constant 0 : i32
    %c0_i32_0 = arith.constant 0 : i32
    return %arg0, %c0_i32 : i32, i32
  }
  func.func @transform_1(%arg0: i32, %arg1: i32) -> (i32, i32) {
    %c0_i32 = arith.constant 0 : i32
    %c0_i32_0 = arith.constant 0 : i32
    return %c0_i32, %arg1 : i32, i32
  }
  func.func @transform_2(%arg0: i32, %arg1: i32) -> (i32, i32) {
    %c0_i32 = arith.constant 0 : i32
    %c0_i32_0 = arith.constant 0 : i32
    return %c0_i32, %arg1 : i32, i32
  }
  func.func @transform_3(%arg0: i32, %arg1: i32) -> (i32, i32) {
    %c0_i32 = arith.constant 0 : i32
    %c0_i32_0 = arith.constant 0 : i32
    return %arg1, %c0_i32 : i32, i32
  }
  func.func @transform_4(%arg0: i32, %arg1: i32) -> (i32, i32) {
    %c0_i32 = arith.constant 0 : i32
    %c0_i32_0 = arith.constant 0 : i32
    %c0_i32_1 = arith.constant 0 : i32
    return %c0_i32, %c0_i32_0 : i32, i32
  }
  func.func @transform_5(%arg0: i32, %arg1: i32) -> (i32, i32) {
    %c0_i32 = arith.constant 0 : i32
    %c0_i32_0 = arith.constant 0 : i32
    %c0_i32_1 = arith.constant 0 : i32
    return %c0_i32, %c0_i32_0 : i32, i32
  }
  func.func @transform_6(%arg0: i32, %arg1: i32) -> (i32, i32) {
    %c0_i32 = arith.constant 0 : i32
    %c0_i32_0 = arith.constant 0 : i32
    %c0_i32_1 = arith.constant 0 : i32
    return %c0_i32, %c0_i32_0 : i32, i32
  }
  func.func @transform_7(%arg0: i32, %arg1: i32) -> (i32, i32) {
    %c0_i32 = arith.constant 0 : i32
    %c0_i32_0 = arith.constant 0 : i32
    return %arg0, %c0_i32 : i32, i32
  }
}

</mosaic_0001>

<llo_original>
// kernel: bert_encoder_forward.8
$region0: #{bert_encoder_forward.8}
  #allocation0 [shape = 'u32[]', space=smem, size = 0x4, offset = 0x4, fixed_abs, tag = 'smem constant byte address 0x4 - core index']
  #allocation1 [shape = 'u32[144,128]{1,0:T(1,128)}', space=vmem, size = 0x12000, scoped, tag = 'internal scratch']
  #allocation2 [shape = 'f32[32,128]{1,0:T(8,128)}', space=vmem, size = 0x4000, scoped, tag = 'scratch operand']
  %s0 = inlined_call_operand.hbm [shape: f32[32,128], index: 0, kind: input, shape index: {}]
  %s1 = inlined_call_operand.hbm [shape: f32[128,384], index: 1, kind: input, shape index: {}]
  %s2 = inlined_call_operand.vmem [shape: f32[1,384], index: 2, kind: input, shape index: {}]
  %s3 = inlined_call_operand.vmem [shape: f32[32,384], index: 3, kind: output, shape index: {}]
  %s4 = sld [smem:[#allocation0]]
  $region95: #{bert_encoder_forward.8} parent=0
    _
  %s6 = ssub.s32 1, %s4
  %s7 = scalar_select 0, %s6, %s4
  $region1: #{bert_encoder_forward.8} parent=0
    #allocation3 [shape = 'u8[16384]{0}', space=vmem, size = 0x4000, scoped, tag = 'input window, operand 0, single buffered']
    #allocation4 [shape = 's32[2]{0}', space=sflag, size = 0x8, scoped, tag = 'scoped memory for bert_encoder_forward.8']
    #allocation5 [shape = 'u8[131072]{0}', space=vmem, size = 0x20000, scoped, tag = 'input window, operand 1']
    #allocation6 [shape = 's32[2]{0}', space=sflag, size = 0x8, scoped, tag = 'scoped memory for bert_encoder_forward.8']
    #allocation7 [shape = 'u8[32768]{0}', space=vmem, size = 0x8000, scoped, tag = 'output window, operand 0']
    %8 = vsyncpa [#allocation4], 0
    %9 = vsyncpa [#allocation6], 0
    %s10 = scalar_lea.sflag [#allocation6], 1
    %11 = vsyncpa %s10, 0
    loop: start=0, step=1, limit=5
    $region2: #{bert_encoder_forward.8} parent=1 // loop_pre_header
      _
    $region3: #{bert_encoder_forward.8} parent=1 // loop_header
      %s13 = sphi 0, %s17
      %p14 = scmp.ge.s32.totalorder %s13, 5
      %s20 = sphi 0, %s39
      %s21 = sphi 0, %s35
      %s22 = sphi 0, %s31
      %s23 = sphi 0, %s20
      %s24 = sphi 0, %s21
      %s25 = sphi 0, %s22
      %s26 = sphi 0, %s23
      %s27 = sphi 0, %s24
      %s28 = sphi 0, %s25
      %s44 = sphi 0, %s46
      %s47 = sphi 0, %s44
      %s48 = sphi 0, %s47
      %s64 = sphi 0, %s48
      %s72 = sphi 0, %s74
      %s75 = sphi 0, %s72
      %s76 = sphi 0, %s75
      %s92 = sphi 0, %s76
      %s98 = sphi 0, %s100
      %s101 = sphi 0, %s98
      %s102 = sphi 0, %s101
      %s118 = sphi 0, %s102
      %s126 = sphi 0, %s128
      %s129 = sphi 0, %s126
      %s130 = sphi 0, %s129
      %s146 = sphi 0, %s130
    $region4: #{bert_encoder_forward.8} parent=1 // loop_header_branch
      %16 = sbr.rel (%p14) target = $region8
    $region5: #{bert_encoder_forward.8} parent=1 // loop_body
      %s18 = ssub.s32 %s13, 1
      %s19 = ssub.s32 %s13, 2
      %s29 = sadd.s32 1, %s22
      %p30 = scmp.ge.s32.totalorder %s29, 1
      %s31 = scalar_select %p30, 0, %s29
      %s32 = sadd.s32 1, %s21
      %s33 = scalar_select %p30, %s32, %s21
      %p34 = scmp.ge.s32.totalorder %s33, 3
      %s35 = scalar_select %p34, 0, %s33
      %s36 = sadd.s32 1, %s20
      %s37 = scalar_select %p34, %s36, %s20
      %p38 = scmp.ge.s32.totalorder %s37, 1
      %s39 = scalar_select %p38, 0, %s37
      %s40 = ssub.s32 %s20, %s39
      %s41 = ssub.s32 %s22, %s31
      %s42 = sor.u32 %s40, %s41
      %p43 = scmp.eq.s32.totalorder %s42, 0
      %s45 = sadd.s32 %s44, 1
      %s46 = scalar_select %p43, %s44, %s45
      %p49 = pneg %p43
      %p50 = scmp.eq.s32.totalorder %s13, 2
      %p51 = por %p49, %p50
      %p52 = scmp.ne.s32.totalorder %s44, %s47
      %p53 = scmp.eq.s32.totalorder %s13, 0
      %p54 = por %p52, %p53
      %p55 = scmp.ne.s32.totalorder %s44, %s47
      %p56 = scmp.eq.s32.totalorder %s18, 2
      %p57 = por %p55, %p56
      %p58 = scmp.ne.s32.totalorder %s47, %s48
      %p59 = scmp.eq.s32.totalorder %s18, 0
      %p60 = por %p58, %p59
      %p61 = scmp.ne.s32.totalorder %s47, %s48
      %p62 = scmp.eq.s32.totalorder %s19, 2
      %p63 = por %p61, %p62
      %p65 = scmp.ne.s32.totalorder %s48, %s64
      %p66 = scmp.eq.s32.totalorder %s19, 0
      %p67 = por %p65, %p66
      %s68 = ssub.s32 %s22, %s31
      %s69 = ssub.s32 %s21, %s35
      %s70 = sor.u32 %s68, %s69
      %p71 = scmp.eq.s32.totalorder %s70, 0
      %s73 = sadd.s32 %s72, 1
      %s74 = scalar_select %p71, %s72, %s73
      %p77 = pneg %p71
      %p78 = scmp.eq.s32.totalorder %s13, 2
      %p79 = por %p77, %p78
      %p80 = scmp.ne.s32.totalorder %s72, %s75
      %p81 = scmp.eq.s32.totalorder %s13, 0
      %p82 = por %p80, %p81
      %p83 = scmp.ne.s32.totalorder %s72, %s75
      %p84 = scmp.eq.s32.totalorder %s18, 2
      %p85 = por %p83, %p84
      %p86 = scmp.ne.s32.totalorder %s75, %s76
      %p87 = scmp.eq.s32.totalorder %s18, 0
      %p88 = por %p86, %p87
      %p89 = scmp.ne.s32.totalorder %s75, %s76
      %p90 = scmp.eq.s32.totalorder %s19, 2
      %p91 = por %p89, %p90
      %p93 = scmp.ne.s32.totalorder %s76, %s92
      %p94 = scmp.eq.s32.totalorder %s19, 0
      %p95 = por %p93, %p94
      %s96 = ssub.s32 %s21, %s35
      %p97 = scmp.eq.s32.totalorder %s96, 0
      %s99 = sadd.s32 %s98, 1
      %s100 = scalar_select %p97, %s98, %s99
      %p103 = pneg %p97
      %p104 = scmp.eq.s32.totalorder %s13, 2
      %p105 = por %p103, %p104
      %p106 = scmp.ne.s32.totalorder %s98, %s101
      %p107 = scmp.eq.s32.totalorder %s13, 0
      %p108 = por %p106, %p107
      %p109 = scmp.ne.s32.totalorder %s98, %s101
      %p110 = scmp.eq.s32.totalorder %s18, 2
      %p111 = por %p109, %p110
      %p112 = scmp.ne.s32.totalorder %s101, %s102
      %p113 = scmp.eq.s32.totalorder %s18, 0
      %p114 = por %p112, %p113
      %p115 = scmp.ne.s32.totalorder %s101, %s102
      %p116 = scmp.eq.s32.totalorder %s19, 2
      %p117 = por %p115, %p116
      %p119 = scmp.ne.s32.totalorder %s102, %s118
      %p120 = scmp.eq.s32.totalorder %s19, 0
      %p121 = por %p119, %p120
      %s122 = ssub.s32 %s20, %s39
      %s123 = ssub.s32 %s21, %s35
      %s124 = sor.u32 %s122, %s123
      %p125 = scmp.eq.s32.totalorder %s124, 0
      %s127 = sadd.s32 %s126, 1
      %s128 = scalar_select %p125, %s126, %s127
      %p131 = pneg %p125
      %p132 = scmp.eq.s32.totalorder %s13, 2
      %p133 = por %p131, %p132
      %p134 = scmp.ne.s32.totalorder %s126, %s129
      %p135 = scmp.eq.s32.totalorder %s13, 0
      %p136 = por %p134, %p135
      %p137 = scmp.ne.s32.totalorder %s126, %s129
      %p138 = scmp.eq.s32.totalorder %s18, 2
      %p139 = por %p137, %p138
      %p140 = scmp.ne.s32.totalorder %s129, %s130
      %p141 = scmp.eq.s32.totalorder %s18, 0
      %p142 = por %p140, %p141
      %p143 = scmp.ne.s32.totalorder %s129, %s130
      %p144 = scmp.eq.s32.totalorder %s19, 2
      %p145 = por %p143, %p144
      %p147 = scmp.ne.s32.totalorder %s130, %s146
      %p148 = scmp.eq.s32.totalorder %s19, 0
      %p149 = por %p147, %p148
      %p150 = scmp.le.s32.totalorder 1, %s13
      %p151 = scmp.lt.s32.totalorder %s13, 4
      %p152 = pnand %p150, %p151
      %p153 = pneg %p152
      // Predicated region
      $region9: #{bert_encoder_forward.8} parent=5 // pred_check
        _
      $region10: #{bert_encoder_forward.8} parent=5 // pred_check_branch
        %155 = sbr.rel (%p152) target = $region12
      $region11: #{bert_encoder_forward.8} parent=5 // pred_region
        %s156 = ssub.s32 %s13, 1
        // Predicated region
        $region13: #{bert_encoder_forward.8} parent=11 // pred_check
          %p157 = pneg %p60
        $region14: #{bert_encoder_forward.8} parent=11 // pred_check_branch
          %159 = sbr.rel (%p157) target = $region16
        $region15: #{bert_encoder_forward.8} parent=11 // pred_region
          %s160 = smul.u32 4, %s23
          %s162 = ssub.s32 512, 512
          %163 = vsyncadd [#allocation4], %s162
          %s164 = sadd.s32 %s25, %s160
          %s165 = smul.addr %s164, 128
          %s166 = scalar_lea.hbm %s0, %s165
          %s167 = sshll.u32 [#allocation3], 4
          %s168 = int_to_ptr.vmem [resolvable:$true] %s167
          %173 = dma.hbm_to_vmem [thread:$0]  %s166, 512, %s168, [#allocation4], 128, 128, 8
        $region16: #{bert_encoder_forward.8} parent=11 // pred_fallthru
          _
      $region12: #{bert_encoder_forward.8} parent=5 // pred_fallthru
        _
      %p174 = scmp.lt.s32.totalorder %s13, 3
      // Predicated region
      $region17: #{bert_encoder_forward.8} parent=5 // pred_check
        %p175 = pneg %p174
      $region18: #{bert_encoder_forward.8} parent=5 // pred_check_branch
        %177 = sbr.rel (%p175) target = $region20
      $region19: #{bert_encoder_forward.8} parent=5 // pred_region
        // Predicated region
        $region21: #{bert_encoder_forward.8} parent=19 // pred_check
          %p178 = pneg %p82
        $region22: #{bert_encoder_forward.8} parent=19 // pred_check_branch
          %180 = sbr.rel (%p178) target = $region24
        $region23: #{bert_encoder_forward.8} parent=19 // pred_region
          %s181 = sand.u32 %s72, 1
          %s182 = scalar_lea.sflag [#allocation6], %s181
          %s183 = sand.u32 %s72, 1
          %s184 = smul.addr %s183, 128
          %s185 = scalar_lea.vmem [#allocation5], %s184
          %s186 = smul.u32 16, %s22
          %s188 = ssub.s32 2048, 2048
          %189 = vsyncadd %s182, %s188
          %s190 = smul.addr %s186, 3
          %s191 = sadd.s32 %s21, %s190
          %s192 = smul.addr %s191, 128
          %s193 = scalar_lea.hbm %s1, %s192
          %s194 = sshll.u32 %s185, 4
          %s195 = int_to_ptr.vmem [resolvable:$true] %s194
          %200 = dma.hbm_to_vmem [thread:$0]  %s193, 2048, %s195, %s182, 384, 128, 8
        $region24: #{bert_encoder_forward.8} parent=19 // pred_fallthru
          _
        // Predicated region
        $region25: #{bert_encoder_forward.8} parent=19 // pred_check
          %p201 = pneg %p108
        $region26: #{bert_encoder_forward.8} parent=19 // pred_check_branch
          %203 = sbr.rel (%p201) target = $region28
        $region27: #{bert_encoder_forward.8} parent=19 // pred_region
          %p204 = scmp.lt.s32.totalorder %s21, 2
          %s205 = scalar_select %p204, %s21, 2
          %s206 = scalar_lea.vmem %s2, %s205
        $region28: #{bert_encoder_forward.8} parent=19 // pred_fallthru
          _
      $region20: #{bert_encoder_forward.8} parent=5 // pred_fallthru
        _
      %p207 = scmp.le.s32.totalorder 1, %s13
      %p208 = scmp.lt.s32.totalorder %s13, 4
      %p209 = pnand %p207, %p208
      %p210 = pneg %p209
      // Predicated region
      $region29: #{bert_encoder_forward.8} parent=5 // pred_check
        _
      $region30: #{bert_encoder_forward.8} parent=5 // pred_check_branch
        %212 = sbr.rel (%p209) target = $region32
      $region31: #{bert_encoder_forward.8} parent=5 // pred_region
        %s213 = ssub.s32 %s13, 1
        // Predicated region
        $region33: #{bert_encoder_forward.8} parent=31 // pred_check
          %p214 = pneg %p60
        $region34: #{bert_encoder_forward.8} parent=31 // pred_check_branch
          %216 = sbr.rel (%p214) target = $region36
        $region35: #{bert_encoder_forward.8} parent=31 // pred_region
          %217 = dma.done [#allocation4], 512
        $region36: #{bert_encoder_forward.8} parent=31 // pred_fallthru
          _
        %s218 = sand.u32 %s75, 1
        %s219 = scalar_lea.sflag [#allocation6], %s218
        %s220 = sand.u32 %s75, 1
        %s221 = smul.addr %s220, 128
        %s222 = scalar_lea.vmem [#allocation5], %s221
        // Predicated region
        $region37: #{bert_encoder_forward.8} parent=31 // pred_check
          %p223 = pneg %p88
        $region38: #{bert_encoder_forward.8} parent=31 // pred_check_branch
          %225 = sbr.rel (%p223) target = $region40
        $region39: #{bert_encoder_forward.8} parent=31 // pred_region
          %226 = dma.done %s219, 2048
        $region40: #{bert_encoder_forward.8} parent=31 // pred_fallthru
          _
        %p227 = pneg %p60
        %p228 = pneg %p57
        %s229 = sand.u32 %s75, 1
        %s230 = scalar_lea.sflag [#allocation6], %s229
        %s231 = sand.u32 %s75, 1
        %s232 = smul.addr %s231, 128
        %s233 = scalar_lea.vmem [#allocation5], %s232
        %p234 = pneg %p88
        %p235 = pneg %p85
        %p236 = scmp.lt.s32.totalorder %s24, 2
        %s237 = scalar_select %p236, %s24, 2
        %s238 = scalar_lea.vmem %s2, %s237
        %p239 = pneg %p114
        %p240 = pneg %p111
        %p241 = pneg %p142
        %p242 = pneg %p139
        %s243 = sand.u32 %s129, 1
        %s244 = sand.u32 %s129, 1
        %s245 = smul.addr %s244, 32
        %s246 = scalar_lea.vmem [#allocation7], %s245
        %s247 = smul.u32 4, %s23
        %s248 = smul.u32 16, %s25
        %p249 = scmp.lt.s32.totalorder %s24, 2
        %s250 = scalar_select %p249, %s24, 2
        %s251 = scalar_lea.vmem %s2, %s250
        %s252 = smul.u32 4, %s23
        %p253 = scmp.eq.s32.totalorder %s25, 0
        // Predicated region
        $region41: #{bert_encoder_forward.8} parent=31 // pred_check
          %p254 = pneg %p253
        $region42: #{bert_encoder_forward.8} parent=31 // pred_check_branch
          %256 = sbr.rel (%p254) target = $region44
        $region43: #{bert_encoder_forward.8} parent=31 // pred_region
          %257 = vst [vmem:[#allocation2] sm:$0xff] 0.0
          %258 = vst [vmem:[#allocation2 + $0x8] sm:$0xff] 0.0
          %259 = vst [vmem:[#allocation2 + $0x10] sm:$0xff] 0.0
          %260 = vst [vmem:[#allocation2 + $0x18] sm:$0xff] 0.0
        $region44: #{bert_encoder_forward.8} parent=31 // pred_fallthru
          _
        %v261 = vld [vmem:[#allocation2] sm:$0xff]
        %v262 = vld [vmem:[#allocation2 + $0x8] sm:$0xff]
        %v263 = vld [vmem:[#allocation2 + $0x10] sm:$0xff]
        %v264 = vld [vmem:[#allocation2 + $0x18] sm:$0xff]
        %v265 = vld [vmem:[#allocation3] sm:$0xff]
        %v266 = vld [vmem:[#allocation3 + $0x8] sm:$0xff]
        %v267 = vld [vmem:[#allocation3 + $0x10] sm:$0xff]
        %v268 = vld [vmem:[#allocation3 + $0x18] sm:$0xff]
        %v269 = vld [vmem:[%s222] sm:$0xff]
        %v270 = vld [vmem:[%s222 + $0x8] sm:$0xff]
        %v271 = vld [vmem:[%s222 + $0x10] sm:$0xff]
        %v272 = vld [vmem:[%s222 + $0x18] sm:$0xff]
        %v273 = vld [vmem:[%s222 + $0x20] sm:$0xff]
        %v274 = vld [vmem:[%s222 + $0x28] sm:$0xff]
        %v275 = vld [vmem:[%s222 + $0x30] sm:$0xff]
        %v276 = vld [vmem:[%s222 + $0x38] sm:$0xff]
        %v277 = vld [vmem:[%s222 + $0x40] sm:$0xff]
        %v278 = vld [vmem:[%s222 + $0x48] sm:$0xff]
        %v279 = vld [vmem:[%s222 + $0x50] sm:$0xff]
        %v280 = vld [vmem:[%s222 + $0x58] sm:$0xff]
        %v281 = vld [vmem:[%s222 + $0x60] sm:$0xff]
        %v282 = vld [vmem:[%s222 + $0x68] sm:$0xff]
        %v283 = vld [vmem:[%s222 + $0x70] sm:$0xff]
        %v284 = vld [vmem:[%s222 + $0x78] sm:$0xff]
        %285 = vmatprep.subr.mxu0 0.0
        %286 = vmatpush1.msra.mxu0 %v269
        %287 = vmatprep.subr.mxu0 0.0
        %288 = vmatpush1.msra.mxu0 %v270
        %289 = vmatprep.subr.mxu0 0.0
        %290 = vmatpush1.msra.mxu0 %v271
        %291 = vmatprep.subr.mxu0 0.0
        %292 = vmatpush1.msra.mxu0 %v272
        %293 = vmatprep.subr.mxu0 0.0
        %294 = vmatpush1.msra.mxu0 %v273
        %295 = vmatprep.subr.mxu0 0.0
        %296 = vmatpush1.msra.mxu0 %v274
        %297 = vmatprep.subr.mxu0 0.0
        %298 = vmatpush1.msra.mxu0 %v275
        %299 = vmatprep.subr.mxu0 0.0
        %300 = vmatpush1.msra.mxu0 %v276
        %301 = vmatprep.subr.mxu0 0.0
        %302 = vmatpush1.msra.mxu0 %v277
        %303 = vmatprep.subr.mxu0 0.0
        %304 = vmatpush1.msra.mxu0 %v278
        %305 = vmatprep.subr.mxu0 0.0
        %306 = vmatpush1.msra.mxu0 %v279
        %307 = vmatprep.subr.mxu0 0.0
        %308 = vmatpush1.msra.mxu0 %v280
        %309 = vmatprep.subr.mxu0 0.0
        %310 = vmatpush1.msra.mxu0 %v281
        %311 = vmatprep.subr.mxu0 0.0
        %312 = vmatpush1.msra.mxu0 %v282
        %313 = vmatprep.subr.mxu0 0.0
        %314 = vmatpush1.msra.mxu0 %v283
        %315 = vmatprep.subr.mxu0 0.0
        %316 = vmatpush1.msra.mxu0 %v284
        %317 = vmatprep.subr.mxu0 0.0
        %318 = vmatpush1.msra.mxu0 0.0
        %319 = vmatprep.subr.mxu0 0.0
        %320 = vmatpush1.msra.mxu0 0.0
        %321 = vmatprep.subr.mxu0 0.0
        %322 = vmatpush1.msra.mxu0 0.0
        %323 = vmatprep.subr.mxu0 0.0
        %324 = vmatpush1.msra.mxu0 0.0
        %325 = vmatprep.subr.mxu0 0.0
        %326 = vmatpush1.msra.mxu0 0.0
        %327 = vmatprep.subr.mxu0 0.0
        %328 = vmatpush1.msra.mxu0 0.0
        %329 = vmatprep.subr.mxu0 0.0
        %330 = vmatpush1.msra.mxu0 0.0
        %331 = vmatprep.subr.mxu0 0.0
        %332 = vmatpush1.msra.mxu0 0.0
        %333 = vmatprep.subr.mxu0 0.0
        %334 = vmatpush1.msra.mxu0 0.0
        %335 = vmatprep.subr.mxu0 0.0
        %336 = vmatpush1.msra.mxu0 0.0
        %337 = vmatprep.subr.mxu0 0.0
        %338 = vmatpush1.msra.mxu0 0.0
        %339 = vmatprep.subr.mxu0 0.0
        %340 = vmatpush1.msra.mxu0 0.0
        %341 = vmatprep.subr.mxu0 0.0
        %342 = vmatpush1.msra.mxu0 0.0
        %343 = vmatprep.subr.mxu0 0.0
        %344 = vmatpush1.msra.mxu0 0.0
        %345 = vmatprep.subr.mxu0 0.0
        %346 = vmatpush1.msra.mxu0 0.0
        %347 = vmatprep.subr.mxu0 0.0
        %348 = vmatpush1.msra.mxu0 0.0
        %349 = vmatprep.mubr.f32.mxu0 0.0
        %350 = vmatmul.mubr.f32.gmra.mrb[0].mxu0 %v265
        %v351 = vpop.f32.mrb[0].mxu0
        %v352 = vadd.f32 0.0, %v351
        %v353 = vpop.f32.mrb[0].mxu0
        %354 = vmatprep.mubr.f32.mxu0 0.0
        %355 = vmatmul.mubr.f32.gmra.mrb[0].mxu0 %v266
        %v356 = vpop.f32.mrb[0].mxu0
        %v357 = vadd.f32 0.0, %v356
        %v358 = vpop.f32.mrb[0].mxu0
        %359 = vmatprep.mubr.f32.mxu0 0.0
        %360 = vmatmul.mubr.f32.gmra.mrb[0].mxu0 %v267
        %v361 = vpop.f32.mrb[0].mxu0
        %v362 = vadd.f32 0.0, %v361
        %v363 = vpop.f32.mrb[0].mxu0
        %364 = vmatprep.mubr.f32.mxu0 0.0
        %365 = vmatmul.mubr.f32.gmra.mrb[0].mxu0 %v268
        %v366 = vpop.f32.mrb[0].mxu0
        %v367 = vadd.f32 0.0, %v366
        %v368 = vpop.f32.mrb[0].mxu0
        %369 = vdwg.mxu0
        %v370 = vadd.f32 %v261, %v352
        %v371 = vadd.f32 %v262, %v357
        %v372 = vadd.f32 %v263, %v362
        %v373 = vadd.f32 %v264, %v367
        %374 = vst [vmem:[#allocation2] sm:$0xff] %v370
        %375 = vst [vmem:[#allocation2 + $0x8] sm:$0xff] %v371
        %376 = vst [vmem:[#allocation2 + $0x10] sm:$0xff] %v372
        %377 = vst [vmem:[#allocation2 + $0x18] sm:$0xff] %v373
        // Predicated region
        $region45: #{bert_encoder_forward.8} parent=31 // pred_check
          %p378 = pneg %p253
        $region46: #{bert_encoder_forward.8} parent=31 // pred_check_branch
          %380 = sbr.rel (%p378) target = $region48
        $region47: #{bert_encoder_forward.8} parent=31 // pred_region
          %v381 = vld [vmem:[#allocation2] sm:$0xff]
          %v382 = vld [vmem:[#allocation2 + $0x8] sm:$0xff]
          %v383 = vld [vmem:[#allocation2 + $0x10] sm:$0xff]
          %v384 = vld [vmem:[#allocation2 + $0x18] sm:$0xff]
          %v385 = vld [vmem:[%s251] sm:$0x1]
          %v387 = vlaneseq
          %v388 = vshrl.u32 %v387, 7
          %v389 = vsub.s32 0, %v388
          %v390 = vrot.slane %v385, %v389
          %v392 = vadd.f32 %v381, %v390
          %v393 = vadd.f32 %v382, %v390
          %v394 = vadd.f32 %v383, %v390
          %v395 = vadd.f32 %v384, %v390
          %396 = vst [vmem:[%s246] sm:$0xff] %v392
          %397 = vst [vmem:[%s246 + $0x8] sm:$0xff] %v393
          %398 = vst [vmem:[%s246 + $0x10] sm:$0xff] %v394
          %399 = vst [vmem:[%s246 + $0x18] sm:$0xff] %v395
        $region48: #{bert_encoder_forward.8} parent=31 // pred_fallthru
          _
        %s400 = sand.u32 %s129, 1
        %s401 = sand.u32 %s129, 1
        %s402 = smul.addr %s401, 32
        %s403 = scalar_lea.vmem [#allocation7], %s402
        // Predicated region
        $region49: #{bert_encoder_forward.8} parent=31 // pred_check
          %p404 = pneg %p139
        $region50: #{bert_encoder_forward.8} parent=31 // pred_check_branch
          %406 = sbr.rel (%p404) target = $region52
        $region51: #{bert_encoder_forward.8} parent=31 // pred_region
          %s407 = smul.u32 4, %s23
          %s408 = smul.addr %s407, 3
          %s409 = sadd.s32 %s24, %s408
          %s410 = smul.addr %s409, 8
          %s411 = scalar_lea.vmem %s3, %s410
          // Predicated region
          $region53: #{bert_encoder_forward.8} parent=51 // pred_check
            _
          $region54: #{bert_encoder_forward.8} parent=51 // pred_check_branch
            %413 = sbr.rel (0) target = $region56
          $region55: #{bert_encoder_forward.8} parent=51 // pred_region
            // Predicated region
            $region57: #{bert_encoder_forward.8} parent=55 // pred_check
              _
            $region58: #{bert_encoder_forward.8} parent=55 // pred_check_branch
              %415 = sbr.rel (0) target = $region60
            $region59: #{bert_encoder_forward.8} parent=55 // pred_region
              // Predicated region
              $region72: #{bert_encoder_forward.8} parent=59 // pred_check
                _
              $region73: #{bert_encoder_forward.8} parent=59 // pred_check_branch
                %436 = sbr.rel (0) target = $region75
              $region74: #{bert_encoder_forward.8} parent=59 // pred_region
                loop: start=0, step=1, limit=1
                $region76: #{bert_encoder_forward.8} parent=74 // loop_pre_header
                  _
                $region77: #{bert_encoder_forward.8} parent=74 // loop_header
                  %s438 = sphi 0, %s442
                  %p439 = scmp.ge.s32.totalorder %s438, 1
                  %s443 = sphi %s403, %s403
                  %s444 = sphi %s411, %s411
                $region78: #{bert_encoder_forward.8} parent=74 // loop_header_branch
                  %441 = sbr.rel (%p439) target = $region82
                $region79: #{bert_encoder_forward.8} parent=74 // loop_body
                  %v445 = vld [vmem:[%s443] sm:$0xff]
                  %446 = vst [vmem:[%s444] sm:$0xff] %v445
                  %v447 = vld [vmem:[%s443 + $0x8] sm:$0xff]
                  %448 = vst [vmem:[%s444 + $0x18] sm:$0xff] %v447
                  %v449 = vld [vmem:[%s443 + $0x10] sm:$0xff]
                  %450 = vst [vmem:[%s444 + $0x30] sm:$0xff] %v449
                  %v451 = vld [vmem:[%s443 + $0x18] sm:$0xff]
                  %452 = vst [vmem:[%s444 + $0x48] sm:$0xff] %v451
                $region80: #{bert_encoder_forward.8} parent=74 // loop_footer
                  %s442 = sadd.s32 1, %s438
                $region81: #{bert_encoder_forward.8} parent=74 // loop_footer_branch
                  %437 = sbr.rel target = $region77
                $region82: #{bert_encoder_forward.8} parent=74 // loop_exit
                  _
              $region75: #{bert_encoder_forward.8} parent=59 // pred_fallthru
                _
              // Predicated region
              $region83: #{bert_encoder_forward.8} parent=59 // pred_check
                _
              $region84: #{bert_encoder_forward.8} parent=59 // pred_check_branch
                %454 = sbr.rel target = $region86
              $region85: #{bert_encoder_forward.8} parent=59 // pred_region
                _
              $region86: #{bert_encoder_forward.8} parent=59 // pred_fallthru
                _
            $region60: #{bert_encoder_forward.8} parent=55 // pred_fallthru
              _
            // Predicated region
            $region61: #{bert_encoder_forward.8} parent=55 // pred_check
              _
            $region62: #{bert_encoder_forward.8} parent=55 // pred_check_branch
              %417 = sbr.rel target = $region64
            $region63: #{bert_encoder_forward.8} parent=55 // pred_region
              loop: start=0, step=1, limit=1
              $region65: #{bert_encoder_forward.8} parent=63 // loop_pre_header
                _
              $region66: #{bert_encoder_forward.8} parent=63 // loop_header
                %s420 = sphi 0, %s424
                %p421 = scmp.ge.s32.totalorder %s420, 1
                %s425 = sphi %s403, %s403
                %s426 = sphi %s411, %s411
              $region67: #{bert_encoder_forward.8} parent=63 // loop_header_branch
                %423 = sbr.rel (%p421) target = $region71
              $region68: #{bert_encoder_forward.8} parent=63 // loop_body
                %v427 = vld [vmem:[%s425] sm:$0xff]
                %428 = vst [vmem:[%s426] sm:$0xff] %v427
                %v429 = vld [vmem:[%s425 + $0x8] sm:$0xff]
                %430 = vst [vmem:[%s426 + $0x18] sm:$0xff] %v429
                %v431 = vld [vmem:[%s425 + $0x10] sm:$0xff]
                %432 = vst [vmem:[%s426 + $0x30] sm:$0xff] %v431
                %v433 = vld [vmem:[%s425 + $0x18] sm:$0xff]
                %434 = vst [vmem:[%s426 + $0x48] sm:$0xff] %v433
              $region69: #{bert_encoder_forward.8} parent=63 // loop_footer
                %s424 = sadd.s32 1, %s420
              $region70: #{bert_encoder_forward.8} parent=63 // loop_footer_branch
                %419 = sbr.rel target = $region66
              $region71: #{bert_encoder_forward.8} parent=63 // loop_exit
                _
            $region64: #{bert_encoder_forward.8} parent=55 // pred_fallthru
              _
          $region56: #{bert_encoder_forward.8} parent=51 // pred_fallthru
            _
          %455 = vnop
        $region52: #{bert_encoder_forward.8} parent=31 // pred_fallthru
          _
      $region32: #{bert_encoder_forward.8} parent=5 // pred_fallthru
        _
      %p456 = scmp.le.s32.totalorder 2, %s13
      // Predicated region
      $region87: #{bert_encoder_forward.8} parent=5 // pred_check
        %p457 = pneg %p456
      $region88: #{bert_encoder_forward.8} parent=5 // pred_check_branch
        %459 = sbr.rel (%p457) target = $region90
      $region89: #{bert_encoder_forward.8} parent=5 // pred_region
        %s460 = ssub.s32 %s13, 2
        // Predicated region
        $region91: #{bert_encoder_forward.8} parent=89 // pred_check
          %p461 = pneg %p145
        $region92: #{bert_encoder_forward.8} parent=89 // pred_check_branch
          %463 = sbr.rel (%p461) target = $region94
        $region93: #{bert_encoder_forward.8} parent=89 // pred_region
          %s464 = sand.u32 %s130, 1
          %s465 = sand.u32 %s130, 1
          %s466 = smul.addr %s465, 32
          %s467 = scalar_lea.vmem [#allocation7], %s466
        $region94: #{bert_encoder_forward.8} parent=89 // pred_fallthru
          _
      $region90: #{bert_encoder_forward.8} parent=5 // pred_fallthru
        _
    $region6: #{bert_encoder_forward.8} parent=1 // loop_footer
      %s17 = sadd.s32 1, %s13
    $region7: #{bert_encoder_forward.8} parent=1 // loop_footer_branch
      %12 = sbr.rel target = $region3
    $region8: #{bert_encoder_forward.8} parent=1 // loop_exit
      _
    %468 = vsyncpa [#allocation4], 1
    %s469 = scalar_lea.sflag [#allocation4], 1
    %470 = vsyncpa %s469, 1
    %471 = vsyncpa [#allocation6], 1
    %s472 = scalar_lea.sflag [#allocation6], 1
    %473 = vsyncpa %s472, 1

// kernel: bert_encoder_forward.10
$region0: #{bert_encoder_forward.10}
  #allocation0 [shape = 'u32[]', space=smem, size = 0x4, offset = 0x4, fixed_abs, tag = 'smem constant byte address 0x4 - core index']
  #allocation1 [shape = 'u32[144,128]{1,0:T(1,128)}', space=vmem, size = 0x12000, scoped, tag = 'internal scratch']
  %s0 = inlined_call_operand.vmem [shape: f32[32,128], index: 0, kind: input, shape index: {}]
  %s1 = inlined_call_operand.hbm [shape: f32[128,128], index: 1, kind: input, shape index: {}]
  %s2 = inlined_call_operand.vmem [shape: f32[1,128], index: 2, kind: input, shape index: {}]
  %s3 = inlined_call_operand.hbm [shape: f32[32,128], index: 3, kind: input, shape index: {}]
  %s4 = inlined_call_operand.vmem [shape: f32[1,128], index: 4, kind: input, shape index: {}]
  %s5 = inlined_call_operand.vmem [shape: f32[1,128], index: 5, kind: input, shape index: {}]
  %s6 = inlined_call_operand.vmem [shape: f32[32,128], index: 6, kind: output, shape index: {}]
  %s7 = sld [smem:[#allocation0]]
  $region65: #{bert_encoder_forward.10} parent=0
    _
  %s9 = ssub.s32 1, %s7
  %s10 = scalar_select 0, %s9, %s7
  $region1: #{bert_encoder_forward.10} parent=0
    #allocation2 [shape = 'u8[65536]{0}', space=vmem, size = 0x10000, scoped, tag = 'input window, operand 1, single buffered']
    #allocation3 [shape = 's32[2]{0}', space=sflag, size = 0x8, scoped, tag = 'scoped memory for bert_encoder_forward.10']
    #allocation4 [shape = 'u8[8192]{0}', space=vmem, size = 0x2000, scoped, tag = 'input window, operand 3']
    #allocation5 [shape = 's32[2]{0}', space=sflag, size = 0x8, scoped, tag = 'scoped memory for bert_encoder_forward.10']
    %11 = vsyncpa [#allocation3], 0
    %12 = vsyncpa [#allocation5], 0
    %s13 = scalar_lea.sflag [#allocation5], 1
    %14 = vsyncpa %s13, 0
    loop: start=0, step=1, limit=6
    $region2: #{bert_encoder_forward.10} parent=1 // loop_pre_header
      _
    $region3: #{bert_encoder_forward.10} parent=1 // loop_header
      %s16 = sphi 0, %s20
      %p17 = scmp.ge.s32.totalorder %s16, 6
      %s26 = sphi 0, %s28
      %s29 = sphi 0, %s26
      %s30 = sphi 0, %s29
      %s46 = sphi 0, %s30
      %s50 = sphi 0, %s50
      %s52 = sphi 0, %s50
      %s53 = sphi 0, %s52
      %s67 = sphi 0, %s53
      %s71 = sphi 0, %s71
      %s73 = sphi 0, %s71
      %s74 = sphi 0, %s73
      %s88 = sphi 0, %s74
      %s94 = sphi 0, %s96
      %s97 = sphi 0, %s94
      %s98 = sphi 0, %s97
      %s114 = sphi 0, %s98
      %s118 = sphi 0, %s118
      %s120 = sphi 0, %s118
      %s121 = sphi 0, %s120
      %s135 = sphi 0, %s121
      %s139 = sphi 0, %s139
      %s141 = sphi 0, %s139
      %s142 = sphi 0, %s141
      %s156 = sphi 0, %s142
      %s162 = sphi 0, %s164
      %s165 = sphi 0, %s162
      %s166 = sphi 0, %s165
      %s182 = sphi 0, %s166
    $region4: #{bert_encoder_forward.10} parent=1 // loop_header_branch
      %19 = sbr.rel (%p17) target = $region8
    $region5: #{bert_encoder_forward.10} parent=1 // loop_body
      %s21 = ssub.s32 %s16, 1
      %s22 = ssub.s32 %s16, 2
      %s23 = sadd.s32 %s16, 1
      %s24 = ssub.s32 %s16, %s23
      %p25 = scmp.eq.s32.totalorder %s24, 0
      %s27 = sadd.s32 %s26, 1
      %s28 = scalar_select %p25, %s26, %s27
      %p31 = pneg %p25
      %p32 = scmp.eq.s32.totalorder %s16, 3
      %p33 = por %p31, %p32
      %p34 = scmp.ne.s32.totalorder %s26, %s29
      %p35 = scmp.eq.s32.totalorder %s16, 0
      %p36 = por %p34, %p35
      %p37 = scmp.ne.s32.totalorder %s26, %s29
      %p38 = scmp.eq.s32.totalorder %s21, 3
      %p39 = por %p37, %p38
      %p40 = scmp.ne.s32.totalorder %s29, %s30
      %p41 = scmp.eq.s32.totalorder %s21, 0
      %p42 = por %p40, %p41
      %p43 = scmp.ne.s32.totalorder %s29, %s30
      %p44 = scmp.eq.s32.totalorder %s22, 3
      %p45 = por %p43, %p44
      %p47 = scmp.ne.s32.totalorder %s30, %s46
      %p48 = scmp.eq.s32.totalorder %s22, 0
      %p49 = por %p47, %p48
      %s51 = sadd.s32 %s50, 1
      %p54 = scmp.eq.s32.totalorder %s16, 3
      %p55 = scmp.ne.s32.totalorder %s50, %s52
      %p56 = scmp.eq.s32.totalorder %s16, 0
      %p57 = por %p55, %p56
      %p58 = scmp.ne.s32.totalorder %s50, %s52
      %p59 = scmp.eq.s32.totalorder %s21, 3
      %p60 = por %p58, %p59
      %p61 = scmp.ne.s32.totalorder %s52, %s53
      %p62 = scmp.eq.s32.totalorder %s21, 0
      %p63 = por %p61, %p62
      %p64 = scmp.ne.s32.totalorder %s52, %s53
      %p65 = scmp.eq.s32.totalorder %s22, 3
      %p66 = por %p64, %p65
      %p68 = scmp.ne.s32.totalorder %s53, %s67
      %p69 = scmp.eq.s32.totalorder %s22, 0
      %p70 = por %p68, %p69
      %s72 = sadd.s32 %s71, 1
      %p75 = scmp.eq.s32.totalorder %s16, 3
      %p76 = scmp.ne.s32.totalorder %s71, %s73
      %p77 = scmp.eq.s32.totalorder %s16, 0
      %p78 = por %p76, %p77
      %p79 = scmp.ne.s32.totalorder %s71, %s73
      %p80 = scmp.eq.s32.totalorder %s21, 3
      %p81 = por %p79, %p80
      %p82 = scmp.ne.s32.totalorder %s73, %s74
      %p83 = scmp.eq.s32.totalorder %s21, 0
      %p84 = por %p82, %p83
      %p85 = scmp.ne.s32.totalorder %s73, %s74
      %p86 = scmp.eq.s32.totalorder %s22, 3
      %p87 = por %p85, %p86
      %p89 = scmp.ne.s32.totalorder %s74, %s88
      %p90 = scmp.eq.s32.totalorder %s22, 0
      %p91 = por %p89, %p90
      %s92 = ssub.s32 %s16, %s23
      %p93 = scmp.eq.s32.totalorder %s92, 0
      %s95 = sadd.s32 %s94, 1
      %s96 = scalar_select %p93, %s94, %s95
      %p99 = pneg %p93
      %p100 = scmp.eq.s32.totalorder %s16, 3
      %p101 = por %p99, %p100
      %p102 = scmp.ne.s32.totalorder %s94, %s97
      %p103 = scmp.eq.s32.totalorder %s16, 0
      %p104 = por %p102, %p103
      %p105 = scmp.ne.s32.totalorder %s94, %s97
      %p106 = scmp.eq.s32.totalorder %s21, 3
      %p107 = por %p105, %p106
      %p108 = scmp.ne.s32.totalorder %s97, %s98
      %p109 = scmp.eq.s32.totalorder %s21, 0
      %p110 = por %p108, %p109
      %p111 = scmp.ne.s32.totalorder %s97, %s98
      %p112 = scmp.eq.s32.totalorder %s22, 3
      %p113 = por %p111, %p112
      %p115 = scmp.ne.s32.totalorder %s98, %s114
      %p116 = scmp.eq.s32.totalorder %s22, 0
      %p117 = por %p115, %p116
      %s119 = sadd.s32 %s118, 1
      %p122 = scmp.eq.s32.totalorder %s16, 3
      %p123 = scmp.ne.s32.totalorder %s118, %s120
      %p124 = scmp.eq.s32.totalorder %s16, 0
      %p125 = por %p123, %p124
      %p126 = scmp.ne.s32.totalorder %s118, %s120
      %p127 = scmp.eq.s32.totalorder %s21, 3
      %p128 = por %p126, %p127
      %p129 = scmp.ne.s32.totalorder %s120, %s121
      %p130 = scmp.eq.s32.totalorder %s21, 0
      %p131 = por %p129, %p130
      %p132 = scmp.ne.s32.totalorder %s120, %s121
      %p133 = scmp.eq.s32.totalorder %s22, 3
      %p134 = por %p132, %p133
      %p136 = scmp.ne.s32.totalorder %s121, %s135
      %p137 = scmp.eq.s32.totalorder %s22, 0
      %p138 = por %p136, %p137
      %s140 = sadd.s32 %s139, 1
      %p143 = scmp.eq.s32.totalorder %s16, 3
      %p144 = scmp.ne.s32.totalorder %s139, %s141
      %p145 = scmp.eq.s32.totalorder %s16, 0
      %p146 = por %p144, %p145
      %p147 = scmp.ne.s32.totalorder %s139, %s141
      %p148 = scmp.eq.s32.totalorder %s21, 3
      %p149 = por %p147, %p148
      %p150 = scmp.ne.s32.totalorder %s141, %s142
      %p151 = scmp.eq.s32.totalorder %s21, 0
      %p152 = por %p150, %p151
      %p153 = scmp.ne.s32.totalorder %s141, %s142
      %p154 = scmp.eq.s32.totalorder %s22, 3
      %p155 = por %p153, %p154
      %p157 = scmp.ne.s32.totalorder %s142, %s156
      %p158 = scmp.eq.s32.totalorder %s22, 0
      %p159 = por %p157, %p158
      %s160 = ssub.s32 %s16, %s23
      %p161 = scmp.eq.s32.totalorder %s160, 0
      %s163 = sadd.s32 %s162, 1
      %s164 = scalar_select %p161, %s162, %s163
      %p167 = pneg %p161
      %p168 = scmp.eq.s32.totalorder %s16, 3
      %p169 = por %p167, %p168
      %p170 = scmp.ne.s32.totalorder %s162, %s165
      %p171 = scmp.eq.s32.totalorder %s16, 0
      %p172 = por %p170, %p171
      %p173 = scmp.ne.s32.totalorder %s162, %s165
      %p174 = scmp.eq.s32.totalorder %s21, 3
      %p175 = por %p173, %p174
      %p176 = scmp.ne.s32.totalorder %s165, %s166
      %p177 = scmp.eq.s32.totalorder %s21, 0
      %p178 = por %p176, %p177
      %p179 = scmp.ne.s32.totalorder %s165, %s166
      %p180 = scmp.eq.s32.totalorder %s22, 3
      %p181 = por %p179, %p180
      %p183 = scmp.ne.s32.totalorder %s166, %s182
      %p184 = scmp.eq.s32.totalorder %s22, 0
      %p185 = por %p183, %p184
      %p186 = scmp.le.s32.totalorder 1, %s16
      %p187 = scmp.lt.s32.totalorder %s16, 5
      %p188 = pnand %p186, %p187
      %p189 = pneg %p188
      // Predicated region
      $region9: #{bert_encoder_forward.10} parent=5 // pred_check
        _
      $region10: #{bert_encoder_forward.10} parent=5 // pred_check_branch
        %191 = sbr.rel (%p188) target = $region12
      $region11: #{bert_encoder_forward.10} parent=5 // pred_region
        %s192 = ssub.s32 %s16, 1
        // Predicated region
        $region13: #{bert_encoder_forward.10} parent=11 // pred_check
          %p193 = pneg %p63
        $region14: #{bert_encoder_forward.10} parent=11 // pred_check_branch
          %195 = sbr.rel (%p193) target = $region16
        $region15: #{bert_encoder_forward.10} parent=11 // pred_region
          %s197 = ssub.s32 2048, 2048
          %198 = vsyncadd [#allocation3], %s197
          %s199 = sshll.u32 [#allocation2], 4
          %s200 = int_to_ptr.vmem [resolvable:$true] %s199
          %205 = dma.hbm_to_vmem [thread:$0]  %s1, 2048, %s200, [#allocation3], 128, 128, 8
        $region16: #{bert_encoder_forward.10} parent=11 // pred_fallthru
          _
        // Predicated region
        $region17: #{bert_encoder_forward.10} parent=11 // pred_check
          %p206 = pneg %p84
        $region18: #{bert_encoder_forward.10} parent=11 // pred_check_branch
          %208 = sbr.rel (%p206) target = $region20
        $region19: #{bert_encoder_forward.10} parent=11 // pred_region
          _
        $region20: #{bert_encoder_forward.10} parent=11 // pred_fallthru
          _
        // Predicated region
        $region21: #{bert_encoder_forward.10} parent=11 // pred_check
          %p209 = pneg %p131
        $region22: #{bert_encoder_forward.10} parent=11 // pred_check_branch
          %211 = sbr.rel (%p209) target = $region24
        $region23: #{bert_encoder_forward.10} parent=11 // pred_region
          _
        $region24: #{bert_encoder_forward.10} parent=11 // pred_fallthru
          _
        // Predicated region
        $region25: #{bert_encoder_forward.10} parent=11 // pred_check
          %p212 = pneg %p152
        $region26: #{bert_encoder_forward.10} parent=11 // pred_check_branch
          %214 = sbr.rel (%p212) target = $region28
        $region27: #{bert_encoder_forward.10} parent=11 // pred_region
          _
        $region28: #{bert_encoder_forward.10} parent=11 // pred_fallthru
          _
      $region12: #{bert_encoder_forward.10} parent=5 // pred_fallthru
        _
      %p215 = scmp.lt.s32.totalorder %s16, 4
      // Predicated region
      $region29: #{bert_encoder_forward.10} parent=5 // pred_check
        %p216 = pneg %p215
      $region30: #{bert_encoder_forward.10} parent=5 // pred_check_branch
        %218 = sbr.rel (%p216) target = $region32
      $region31: #{bert_encoder_forward.10} parent=5 // pred_region
        // Predicated region
        $region33: #{bert_encoder_forward.10} parent=31 // pred_check
          %p219 = pneg %p36
        $region34: #{bert_encoder_forward.10} parent=31 // pred_check_branch
          %221 = sbr.rel (%p219) target = $region36
        $region35: #{bert_encoder_forward.10} parent=31 // pred_region
          %p222 = scmp.lt.s32.totalorder %s16, 3
          %s223 = scalar_select %p222, %s16, 3
          %s224 = smul.addr %s223, 8
          %s225 = scalar_lea.vmem %s0, %s224
        $region36: #{bert_encoder_forward.10} parent=31 // pred_fallthru
          _
        // Predicated region
        $region37: #{bert_encoder_forward.10} parent=31 // pred_check
          %p226 = pneg %p104
        $region38: #{bert_encoder_forward.10} parent=31 // pred_check_branch
          %228 = sbr.rel (%p226) target = $region40
        $region39: #{bert_encoder_forward.10} parent=31 // pred_region
          %s229 = sand.u32 %s94, 1
          %s230 = scalar_lea.sflag [#allocation5], %s229
          %s231 = sand.u32 %s94, 1
          %s232 = smul.addr %s231, 8
          %s233 = scalar_lea.vmem [#allocation4], %s232
          %s235 = ssub.s32 128, 128
          %236 = vsyncadd %s230, %s235
          %s237 = smul.addr %s16, 128
          %s238 = scalar_lea.hbm %s3, %s237
          %s240 = sshll.u32 %s233, 4
          %s241 = int_to_ptr.vmem [resolvable:$true] %s240
          %243 = dma.hbm_to_vmem [thread:$0]  %s238, 128, %s241, %s230
        $region40: #{bert_encoder_forward.10} parent=31 // pred_fallthru
          _
      $region32: #{bert_encoder_forward.10} parent=5 // pred_fallthru
        _
      %p244 = scmp.le.s32.totalorder 1, %s16
      %p245 = scmp.lt.s32.totalorder %s16, 5
      %p246 = pnand %p244, %p245
      %p247 = pneg %p246
      // Predicated region
      $region41: #{bert_encoder_forward.10} parent=5 // pred_check
        _
      $region42: #{bert_encoder_forward.10} parent=5 // pred_check_branch
        %249 = sbr.rel (%p246) target = $region44
      $region43: #{bert_encoder_forward.10} parent=5 // pred_region
        %s250 = ssub.s32 %s16, 1
        // Predicated region
        $region45: #{bert_encoder_forward.10} parent=43 // pred_check
          %p251 = pneg %p63
        $region46: #{bert_encoder_forward.10} parent=43 // pred_check_branch
          %253 = sbr.rel (%p251) target = $region48
        $region47: #{bert_encoder_forward.10} parent=43 // pred_region
          %254 = dma.done [#allocation3], 2048
        $region48: #{bert_encoder_forward.10} parent=43 // pred_fallthru
          _
        %s255 = sand.u32 %s97, 1
        %s256 = scalar_lea.sflag [#allocation5], %s255
        %s257 = sand.u32 %s97, 1
        %s258 = smul.addr %s257, 8
        %s259 = scalar_lea.vmem [#allocation4], %s258
        // Predicated region
        $region49: #{bert_encoder_forward.10} parent=43 // pred_check
          %p260 = pneg %p110
        $region50: #{bert_encoder_forward.10} parent=43 // pred_check_branch
          %262 = sbr.rel (%p260) target = $region52
        $region51: #{bert_encoder_forward.10} parent=43 // pred_region
          %263 = dma.done %s256, 128
        $region52: #{bert_encoder_forward.10} parent=43 // pred_fallthru
          _
        %p264 = scmp.lt.s32.totalorder %s21, 3
        %s265 = scalar_select %p264, %s21, 3
        %s266 = smul.addr %s265, 8
        %s267 = scalar_lea.vmem %s0, %s266
        %p268 = pneg %p42
        %p269 = pneg %p39
        %p270 = pneg %p63
        %p271 = pneg %p60
        %p272 = pneg %p84
        %p273 = pneg %p81
        %s274 = sand.u32 %s97, 1
        %s275 = scalar_lea.sflag [#allocation5], %s274
        %s276 = sand.u32 %s97, 1
        %s277 = smul.addr %s276, 8
        %s278 = scalar_lea.vmem [#allocation4], %s277
        %p279 = pneg %p110
        %p280 = pneg %p107
        %p281 = pneg %p131
        %p282 = pneg %p128
        %p283 = pneg %p152
        %p284 = pneg %p149
        %p285 = pneg %p178
        %p286 = pneg %p175
        %p287 = scmp.lt.s32.totalorder %s21, 3
        %s288 = scalar_select %p287, %s21, 3
        %s289 = smul.addr %s288, 8
        %s290 = scalar_lea.vmem %s6, %s289
        %p291 = scmp.lt.s32.totalorder %s21, 3
        %s292 = scalar_select %p291, %s21, 3
        %s293 = smul.addr %s292, 8
        %s294 = scalar_lea.vmem %s0, %s293
        %p295 = scmp.lt.s32.totalorder %s21, 3
        %s296 = scalar_select %p295, %s21, 3
        %s297 = smul.addr %s296, 8
        %s298 = scalar_lea.vmem %s6, %s297
        %v299 = vld [vmem:[%s294] sm:$0xff]
        %v300 = vld [vmem:[#allocation2] sm:$0xff]
        %v301 = vld [vmem:[#allocation2 + $0x8] sm:$0xff]
        %v302 = vld [vmem:[#allocation2 + $0x10] sm:$0xff]
        %v303 = vld [vmem:[#allocation2 + $0x18] sm:$0xff]
        %v304 = vld [vmem:[#allocation2 + $0x20] sm:$0xff]
        %v305 = vld [vmem:[#allocation2 + $0x28] sm:$0xff]
        %v306 = vld [vmem:[#allocation2 + $0x30] sm:$0xff]
        %v307 = vld [vmem:[#allocation2 + $0x38] sm:$0xff]
        %v308 = vld [vmem:[#allocation2 + $0x40] sm:$0xff]
        %v309 = vld [vmem:[#allocation2 + $0x48] sm:$0xff]
        %v310 = vld [vmem:[#allocation2 + $0x50] sm:$0xff]
        %v311 = vld [vmem:[#allocation2 + $0x58] sm:$0xff]
        %v312 = vld [vmem:[#allocation2 + $0x60] sm:$0xff]
        %v313 = vld [vmem:[#allocation2 + $0x68] sm:$0xff]
        %v314 = vld [vmem:[#allocation2 + $0x70] sm:$0xff]
        %v315 = vld [vmem:[#allocation2 + $0x78] sm:$0xff]
        %v316 = vld [vmem:[%s2] sm:$0x1]
        %v318 = vlaneseq
        %v319 = vshrl.u32 %v318, 7
        %v320 = vsub.s32 0, %v319
        %v321 = vrot.slane %v316, %v320
        %323 = vmatprep.subr.mxu0 0.0
        %324 = vmatpush1.msra.mxu0 %v300
        %325 = vmatprep.subr.mxu0 0.0
        %326 = vmatpush1.msra.mxu0 %v301
        %327 = vmatprep.subr.mxu0 0.0
        %328 = vmatpush1.msra.mxu0 %v302
        %329 = vmatprep.subr.mxu0 0.0
        %330 = vmatpush1.msra.mxu0 %v303
        %331 = vmatprep.subr.mxu0 0.0
        %332 = vmatpush1.msra.mxu0 %v304
        %333 = vmatprep.subr.mxu0 0.0
        %334 = vmatpush1.msra.mxu0 %v305
        %335 = vmatprep.subr.mxu0 0.0
        %336 = vmatpush1.msra.mxu0 %v306
        %337 = vmatprep.subr.mxu0 0.0
        %338 = vmatpush1.msra.mxu0 %v307
        %339 = vmatprep.subr.mxu0 0.0
        %340 = vmatpush1.msra.mxu0 %v308
        %341 = vmatprep.subr.mxu0 0.0
        %342 = vmatpush1.msra.mxu0 %v309
        %343 = vmatprep.subr.mxu0 0.0
        %344 = vmatpush1.msra.mxu0 %v310
        %345 = vmatprep.subr.mxu0 0.0
        %346 = vmatpush1.msra.mxu0 %v311
        %347 = vmatprep.subr.mxu0 0.0
        %348 = vmatpush1.msra.mxu0 %v312
        %349 = vmatprep.subr.mxu0 0.0
        %350 = vmatpush1.msra.mxu0 %v313
        %351 = vmatprep.subr.mxu0 0.0
        %352 = vmatpush1.msra.mxu0 %v314
        %353 = vmatprep.subr.mxu0 0.0
        %354 = vmatpush1.msra.mxu0 %v315
        %355 = vmatprep.subr.mxu0 0.0
        %356 = vmatpush1.msra.mxu0 0.0
        %357 = vmatprep.subr.mxu0 0.0
        %358 = vmatpush1.msra.mxu0 0.0
        %359 = vmatprep.subr.mxu0 0.0
        %360 = vmatpush1.msra.mxu0 0.0
        %361 = vmatprep.subr.mxu0 0.0
        %362 = vmatpush1.msra.mxu0 0.0
        %363 = vmatprep.subr.mxu0 0.0
        %364 = vmatpush1.msra.mxu0 0.0
        %365 = vmatprep.subr.mxu0 0.0
        %366 = vmatpush1.msra.mxu0 0.0
        %367 = vmatprep.subr.mxu0 0.0
        %368 = vmatpush1.msra.mxu0 0.0
        %369 = vmatprep.subr.mxu0 0.0
        %370 = vmatpush1.msra.mxu0 0.0
        %371 = vmatprep.subr.mxu0 0.0
        %372 = vmatpush1.msra.mxu0 0.0
        %373 = vmatprep.subr.mxu0 0.0
        %374 = vmatpush1.msra.mxu0 0.0
        %375 = vmatprep.subr.mxu0 0.0
        %376 = vmatpush1.msra.mxu0 0.0
        %377 = vmatprep.subr.mxu0 0.0
        %378 = vmatpush1.msra.mxu0 0.0
        %379 = vmatprep.subr.mxu0 0.0
        %380 = vmatpush1.msra.mxu0 0.0
        %381 = vmatprep.subr.mxu0 0.0
        %382 = vmatpush1.msra.mxu0 0.0
        %383 = vmatprep.subr.mxu0 0.0
        %384 = vmatpush1.msra.mxu0 0.0
        %385 = vmatprep.subr.mxu0 0.0
        %386 = vmatpush1.msra.mxu0 0.0
        %387 = vmatprep.mubr.f32.mxu0 0.0
        %388 = vmatmul.mubr.f32.gmra.mrb[0].mxu0 %v299
        %v389 = vpop.f32.mrb[0].mxu0
        %v390 = vadd.f32 %v321, %v389
        %v391 = vpop.f32.mrb[0].mxu0
        %392 = vdwg.mxu0
        %v393 = vld [vmem:[%s259] sm:$0xff]
        %v394 = vadd.f32 %v390, %v393
        %395 = vadd.xlane.f32.xlu0 %v394
        %v396 = vpop.xlane.xlu0 %395
        %v397 = vrcp.pop 128.0
        %v398 = vmul.f32 %v396, %v397
        %v399 = vsub.f32 %v394, %v398
        %v400 = vmul.f32 %v399, %v399
        %401 = vadd.xlane.f32.xlu0 %v400
        %v402 = vpop.xlane.xlu0 %401
        %v403 = vmul.f32 %v402, %v397
        %v404 = vadd.f32 %v403, 1e-12
        %v405 = vrsqrt.pop %v404
        %v406 = vmul.f32 %v399, %v405
        %v407 = vld [vmem:[%s4] sm:$0x1]
        %v409 = vlaneseq
        %v410 = vshrl.u32 %v409, 7
        %v411 = vsub.s32 0, %v410
        %v412 = vrot.slane %v407, %v411
        %v414 = vmul.f32 %v406, %v412
        %v415 = vld [vmem:[%s5] sm:$0x1]
        %v417 = vlaneseq
        %v418 = vshrl.u32 %v417, 7
        %v419 = vsub.s32 0, %v418
        %v420 = vrot.slane %v415, %v419
        %v422 = vadd.f32 %v414, %v420
        %423 = vst [vmem:[%s298] sm:$0xff] %v422
        %p424 = scmp.lt.s32.totalorder %s21, 3
        %s425 = scalar_select %p424, %s21, 3
        %s426 = smul.addr %s425, 8
        %s427 = scalar_lea.vmem %s6, %s426
        // Predicated region
        $region53: #{bert_encoder_forward.10} parent=43 // pred_check
          %p428 = pneg %p175
        $region54: #{bert_encoder_forward.10} parent=43 // pred_check_branch
          %430 = sbr.rel (%p428) target = $region56
        $region55: #{bert_encoder_forward.10} parent=43 // pred_region
          _
        $region56: #{bert_encoder_forward.10} parent=43 // pred_fallthru
          _
      $region44: #{bert_encoder_forward.10} parent=5 // pred_fallthru
        _
      %p431 = scmp.le.s32.totalorder 2, %s16
      // Predicated region
      $region57: #{bert_encoder_forward.10} parent=5 // pred_check
        %p432 = pneg %p431
      $region58: #{bert_encoder_forward.10} parent=5 // pred_check_branch
        %434 = sbr.rel (%p432) target = $region60
      $region59: #{bert_encoder_forward.10} parent=5 // pred_region
        %s435 = ssub.s32 %s16, 2
        // Predicated region
        $region61: #{bert_encoder_forward.10} parent=59 // pred_check
          %p436 = pneg %p181
        $region62: #{bert_encoder_forward.10} parent=59 // pred_check_branch
          %438 = sbr.rel (%p436) target = $region64
        $region63: #{bert_encoder_forward.10} parent=59 // pred_region
          %p439 = scmp.lt.s32.totalorder %s22, 3
          %s440 = scalar_select %p439, %s22, 3
          %s441 = smul.addr %s440, 8
          %s442 = scalar_lea.vmem %s6, %s441
        $region64: #{bert_encoder_forward.10} parent=59 // pred_fallthru
          _
      $region60: #{bert_encoder_forward.10} parent=5 // pred_fallthru
        _
    $region6: #{bert_encoder_forward.10} parent=1 // loop_footer
      %s20 = sadd.s32 1, %s16
    $region7: #{bert_encoder_forward.10} parent=1 // loop_footer_branch
      %15 = sbr.rel target = $region3
    $region8: #{bert_encoder_forward.10} parent=1 // loop_exit
      _
    %443 = vsyncpa [#allocation3], 1
    %s444 = scalar_lea.sflag [#allocation3], 1
    %445 = vsyncpa %s444, 1
    %446 = vsyncpa [#allocation5], 1
    %s447 = scalar_lea.sflag [#allocation5], 1
    %448 = vsyncpa %s447, 1

// kernel: bert_encoder_forward.11
$region0: #{bert_encoder_forward.11}
  #allocation0 [shape = 'u32[]', space=smem, size = 0x4, offset = 0x4, fixed_abs, tag = 'smem constant byte address 0x4 - core index']
  #allocation1 [shape = 'u32[144,128]{1,0:T(1,128)}', space=vmem, size = 0x12000, scoped, tag = 'internal scratch']
  #allocation2 [shape = 'f32[8,128]{1,0:T(8,128)}', space=vmem, size = 0x1000, scoped, tag = 'scratch operand']
  %s0 = inlined_call_operand.vmem [shape: f32[32,128], index: 0, kind: input, shape index: {}]
  %s1 = inlined_call_operand.vmem [shape: f32[128,512], index: 1, kind: input, shape index: {}]
  %s2 = inlined_call_operand.vmem [shape: f32[1,512], index: 2, kind: input, shape index: {}]
  %s3 = inlined_call_operand.vmem [shape: f32[512,128], index: 3, kind: input, shape index: {}]
  %s4 = inlined_call_operand.vmem [shape: f32[1,128], index: 4, kind: input, shape index: {}]
  %s5 = inlined_call_operand.vmem [shape: f32[1,128], index: 5, kind: input, shape index: {}]
  %s6 = inlined_call_operand.vmem [shape: f32[1,128], index: 6, kind: input, shape index: {}]
  %s7 = inlined_call_operand.vmem [shape: f32[32,128], index: 7, kind: output, shape index: {}]
  %s8 = sld [smem:[#allocation0]]
  $region69: #{bert_encoder_forward.11} parent=0
    _
  %s10 = ssub.s32 1, %s8
  %s11 = scalar_select 0, %s10, %s8
  loop: start=0, step=1, limit=6
  $region2: #{bert_encoder_forward.11} parent=0 // loop_pre_header
    _
  $region3: #{bert_encoder_forward.11} parent=0 // loop_header
    %s13 = sphi 0, %s17
    %p14 = scmp.ge.s32.totalorder %s13, 6
    %s20 = sphi 0, %s32
    %s21 = sphi 0, %s28
    %s22 = sphi 0, %s20
    %s23 = sphi 0, %s21
    %s24 = sphi 0, %s22
    %s25 = sphi 0, %s23
    %s35 = sphi 0, %s37
    %s38 = sphi 0, %s35
    %s39 = sphi 0, %s38
    %s55 = sphi 0, %s39
    %s61 = sphi 0, %s63
    %s64 = sphi 0, %s61
    %s65 = sphi 0, %s64
    %s81 = sphi 0, %s65
    %s87 = sphi 0, %s89
    %s90 = sphi 0, %s87
    %s91 = sphi 0, %s90
    %s107 = sphi 0, %s91
    %s113 = sphi 0, %s115
    %s116 = sphi 0, %s113
    %s117 = sphi 0, %s116
    %s133 = sphi 0, %s117
    %s137 = sphi 0, %s137
    %s139 = sphi 0, %s137
    %s140 = sphi 0, %s139
    %s154 = sphi 0, %s140
    %s158 = sphi 0, %s158
    %s160 = sphi 0, %s158
    %s161 = sphi 0, %s160
    %s175 = sphi 0, %s161
    %s179 = sphi 0, %s179
    %s181 = sphi 0, %s179
    %s182 = sphi 0, %s181
    %s196 = sphi 0, %s182
    %s202 = sphi 0, %s204
    %s205 = sphi 0, %s202
    %s206 = sphi 0, %s205
    %s222 = sphi 0, %s206
  $region4: #{bert_encoder_forward.11} parent=0 // loop_header_branch
    %16 = sbr.rel (%p14) target = $region8
  $region5: #{bert_encoder_forward.11} parent=0 // loop_body
    %s18 = ssub.s32 %s13, 1
    %s19 = ssub.s32 %s13, 2
    %s26 = sadd.s32 1, %s21
    %p27 = scmp.ge.s32.totalorder %s26, 1
    %s28 = scalar_select %p27, 0, %s26
    %s29 = sadd.s32 1, %s20
    %s30 = scalar_select %p27, %s29, %s20
    %p31 = scmp.ge.s32.totalorder %s30, 4
    %s32 = scalar_select %p31, 0, %s30
    %s33 = ssub.s32 %s20, %s32
    %p34 = scmp.eq.s32.totalorder %s33, 0
    %s36 = sadd.s32 %s35, 1
    %s37 = scalar_select %p34, %s35, %s36
    %p40 = pneg %p34
    %p41 = scmp.eq.s32.totalorder %s13, 3
    %p42 = por %p40, %p41
    %p43 = scmp.ne.s32.totalorder %s35, %s38
    %p44 = scmp.eq.s32.totalorder %s13, 0
    %p45 = por %p43, %p44
    %p46 = scmp.ne.s32.totalorder %s35, %s38
    %p47 = scmp.eq.s32.totalorder %s18, 3
    %p48 = por %p46, %p47
    %p49 = scmp.ne.s32.totalorder %s38, %s39
    %p50 = scmp.eq.s32.totalorder %s18, 0
    %p51 = por %p49, %p50
    %p52 = scmp.ne.s32.totalorder %s38, %s39
    %p53 = scmp.eq.s32.totalorder %s19, 3
    %p54 = por %p52, %p53
    %p56 = scmp.ne.s32.totalorder %s39, %s55
    %p57 = scmp.eq.s32.totalorder %s19, 0
    %p58 = por %p56, %p57
    %s59 = ssub.s32 %s21, %s28
    %p60 = scmp.eq.s32.totalorder %s59, 0
    %s62 = sadd.s32 %s61, 1
    %s63 = scalar_select %p60, %s61, %s62
    %p66 = pneg %p60
    %p67 = scmp.eq.s32.totalorder %s13, 3
    %p68 = por %p66, %p67
    %p69 = scmp.ne.s32.totalorder %s61, %s64
    %p70 = scmp.eq.s32.totalorder %s13, 0
    %p71 = por %p69, %p70
    %p72 = scmp.ne.s32.totalorder %s61, %s64
    %p73 = scmp.eq.s32.totalorder %s18, 3
    %p74 = por %p72, %p73
    %p75 = scmp.ne.s32.totalorder %s64, %s65
    %p76 = scmp.eq.s32.totalorder %s18, 0
    %p77 = por %p75, %p76
    %p78 = scmp.ne.s32.totalorder %s64, %s65
    %p79 = scmp.eq.s32.totalorder %s19, 3
    %p80 = por %p78, %p79
    %p82 = scmp.ne.s32.totalorder %s65, %s81
    %p83 = scmp.eq.s32.totalorder %s19, 0
    %p84 = por %p82, %p83
    %s85 = ssub.s32 %s21, %s28
    %p86 = scmp.eq.s32.totalorder %s85, 0
    %s88 = sadd.s32 %s87, 1
    %s89 = scalar_select %p86, %s87, %s88
    %p92 = pneg %p86
    %p93 = scmp.eq.s32.totalorder %s13, 3
    %p94 = por %p92, %p93
    %p95 = scmp.ne.s32.totalorder %s87, %s90
    %p96 = scmp.eq.s32.totalorder %s13, 0
    %p97 = por %p95, %p96
    %p98 = scmp.ne.s32.totalorder %s87, %s90
    %p99 = scmp.eq.s32.totalorder %s18, 3
    %p100 = por %p98, %p99
    %p101 = scmp.ne.s32.totalorder %s90, %s91
    %p102 = scmp.eq.s32.totalorder %s18, 0
    %p103 = por %p101, %p102
    %p104 = scmp.ne.s32.totalorder %s90, %s91
    %p105 = scmp.eq.s32.totalorder %s19, 3
    %p106 = por %p104, %p105
    %p108 = scmp.ne.s32.totalorder %s91, %s107
    %p109 = scmp.eq.s32.totalorder %s19, 0
    %p110 = por %p108, %p109
    %s111 = ssub.s32 %s21, %s28
    %p112 = scmp.eq.s32.totalorder %s111, 0
    %s114 = sadd.s32 %s113, 1
    %s115 = scalar_select %p112, %s113, %s114
    %p118 = pneg %p112
    %p119 = scmp.eq.s32.totalorder %s13, 3
    %p120 = por %p118, %p119
    %p121 = scmp.ne.s32.totalorder %s113, %s116
    %p122 = scmp.eq.s32.totalorder %s13, 0
    %p123 = por %p121, %p122
    %p124 = scmp.ne.s32.totalorder %s113, %s116
    %p125 = scmp.eq.s32.totalorder %s18, 3
    %p126 = por %p124, %p125
    %p127 = scmp.ne.s32.totalorder %s116, %s117
    %p128 = scmp.eq.s32.totalorder %s18, 0
    %p129 = por %p127, %p128
    %p130 = scmp.ne.s32.totalorder %s116, %s117
    %p131 = scmp.eq.s32.totalorder %s19, 3
    %p132 = por %p130, %p131
    %p134 = scmp.ne.s32.totalorder %s117, %s133
    %p135 = scmp.eq.s32.totalorder %s19, 0
    %p136 = por %p134, %p135
    %s138 = sadd.s32 %s137, 1
    %p141 = scmp.eq.s32.totalorder %s13, 3
    %p142 = scmp.ne.s32.totalorder %s137, %s139
    %p143 = scmp.eq.s32.totalorder %s13, 0
    %p144 = por %p142, %p143
    %p145 = scmp.ne.s32.totalorder %s137, %s139
    %p146 = scmp.eq.s32.totalorder %s18, 3
    %p147 = por %p145, %p146
    %p148 = scmp.ne.s32.totalorder %s139, %s140
    %p149 = scmp.eq.s32.totalorder %s18, 0
    %p150 = por %p148, %p149
    %p151 = scmp.ne.s32.totalorder %s139, %s140
    %p152 = scmp.eq.s32.totalorder %s19, 3
    %p153 = por %p151, %p152
    %p155 = scmp.ne.s32.totalorder %s140, %s154
    %p156 = scmp.eq.s32.totalorder %s19, 0
    %p157 = por %p155, %p156
    %s159 = sadd.s32 %s158, 1
    %p162 = scmp.eq.s32.totalorder %s13, 3
    %p163 = scmp.ne.s32.totalorder %s158, %s160
    %p164 = scmp.eq.s32.totalorder %s13, 0
    %p165 = por %p163, %p164
    %p166 = scmp.ne.s32.totalorder %s158, %s160
    %p167 = scmp.eq.s32.totalorder %s18, 3
    %p168 = por %p166, %p167
    %p169 = scmp.ne.s32.totalorder %s160, %s161
    %p170 = scmp.eq.s32.totalorder %s18, 0
    %p171 = por %p169, %p170
    %p172 = scmp.ne.s32.totalorder %s160, %s161
    %p173 = scmp.eq.s32.totalorder %s19, 3
    %p174 = por %p172, %p173
    %p176 = scmp.ne.s32.totalorder %s161, %s175
    %p177 = scmp.eq.s32.totalorder %s19, 0
    %p178 = por %p176, %p177
    %s180 = sadd.s32 %s179, 1
    %p183 = scmp.eq.s32.totalorder %s13, 3
    %p184 = scmp.ne.s32.totalorder %s179, %s181
    %p185 = scmp.eq.s32.totalorder %s13, 0
    %p186 = por %p184, %p185
    %p187 = scmp.ne.s32.totalorder %s179, %s181
    %p188 = scmp.eq.s32.totalorder %s18, 3
    %p189 = por %p187, %p188
    %p190 = scmp.ne.s32.totalorder %s181, %s182
    %p191 = scmp.eq.s32.totalorder %s18, 0
    %p192 = por %p190, %p191
    %p193 = scmp.ne.s32.totalorder %s181, %s182
    %p194 = scmp.eq.s32.totalorder %s19, 3
    %p195 = por %p193, %p194
    %p197 = scmp.ne.s32.totalorder %s182, %s196
    %p198 = scmp.eq.s32.totalorder %s19, 0
    %p199 = por %p197, %p198
    %s200 = ssub.s32 %s20, %s32
    %p201 = scmp.eq.s32.totalorder %s200, 0
    %s203 = sadd.s32 %s202, 1
    %s204 = scalar_select %p201, %s202, %s203
    %p207 = pneg %p201
    %p208 = scmp.eq.s32.totalorder %s13, 3
    %p209 = por %p207, %p208
    %p210 = scmp.ne.s32.totalorder %s202, %s205
    %p211 = scmp.eq.s32.totalorder %s13, 0
    %p212 = por %p210, %p211
    %p213 = scmp.ne.s32.totalorder %s202, %s205
    %p214 = scmp.eq.s32.totalorder %s18, 3
    %p215 = por %p213, %p214
    %p216 = scmp.ne.s32.totalorder %s205, %s206
    %p217 = scmp.eq.s32.totalorder %s18, 0
    %p218 = por %p216, %p217
    %p219 = scmp.ne.s32.totalorder %s205, %s206
    %p220 = scmp.eq.s32.totalorder %s19, 3
    %p221 = por %p219, %p220
    %p223 = scmp.ne.s32.totalorder %s206, %s222
    %p224 = scmp.eq.s32.totalorder %s19, 0
    %p225 = por %p223, %p224
    %p226 = scmp.le.s32.totalorder 1, %s13
    %p227 = scmp.lt.s32.totalorder %s13, 5
    %p228 = pnand %p226, %p227
    %p229 = pneg %p228
    // Predicated region
    $region9: #{bert_encoder_forward.11} parent=5 // pred_check
      _
    $region10: #{bert_encoder_forward.11} parent=5 // pred_check_branch
      %231 = sbr.rel (%p228) target = $region12
    $region11: #{bert_encoder_forward.11} parent=5 // pred_region
      %s232 = ssub.s32 %s13, 1
      // Predicated region
      $region13: #{bert_encoder_forward.11} parent=11 // pred_check
        %p233 = pneg %p77
      $region14: #{bert_encoder_forward.11} parent=11 // pred_check_branch
        %235 = sbr.rel (%p233) target = $region16
      $region15: #{bert_encoder_forward.11} parent=11 // pred_region
        %s236 = smul.u32 4, %s23
        %p237 = scmp.lt.s32.totalorder %s236, 3
        %s238 = scalar_select %p237, %s236, 3
        %s239 = smul.addr %s238, 8
        %s240 = scalar_lea.vmem %s1, %s239
        %s241 = smul.u32 4, %s23
      $region16: #{bert_encoder_forward.11} parent=11 // pred_fallthru
        _
      // Predicated region
      $region17: #{bert_encoder_forward.11} parent=11 // pred_check
        %p242 = pneg %p103
      $region18: #{bert_encoder_forward.11} parent=11 // pred_check_branch
        %244 = sbr.rel (%p242) target = $region20
      $region19: #{bert_encoder_forward.11} parent=11 // pred_region
        %s245 = smul.u32 4, %s23
        %p246 = scmp.lt.s32.totalorder %s245, 3
        %s247 = scalar_select %p246, %s245, 3
        %s248 = scalar_lea.vmem %s2, %s247
        %s249 = smul.u32 4, %s23
      $region20: #{bert_encoder_forward.11} parent=11 // pred_fallthru
        _
      // Predicated region
      $region21: #{bert_encoder_forward.11} parent=11 // pred_check
        %p250 = pneg %p129
      $region22: #{bert_encoder_forward.11} parent=11 // pred_check_branch
        %252 = sbr.rel (%p250) target = $region24
      $region23: #{bert_encoder_forward.11} parent=11 // pred_region
        %s253 = smul.u32 64, %s23
        %p254 = scmp.lt.s32.totalorder %s253, 63
        %s255 = scalar_select %p254, %s253, 63
        %s256 = smul.addr %s255, 8
        %s257 = scalar_lea.vmem %s3, %s256
        %s258 = smul.u32 64, %s23
      $region24: #{bert_encoder_forward.11} parent=11 // pred_fallthru
        _
      // Predicated region
      $region25: #{bert_encoder_forward.11} parent=11 // pred_check
        %p259 = pneg %p150
      $region26: #{bert_encoder_forward.11} parent=11 // pred_check_branch
        %261 = sbr.rel (%p259) target = $region28
      $region27: #{bert_encoder_forward.11} parent=11 // pred_region
        _
      $region28: #{bert_encoder_forward.11} parent=11 // pred_fallthru
        _
      // Predicated region
      $region29: #{bert_encoder_forward.11} parent=11 // pred_check
        %p262 = pneg %p171
      $region30: #{bert_encoder_forward.11} parent=11 // pred_check_branch
        %264 = sbr.rel (%p262) target = $region32
      $region31: #{bert_encoder_forward.11} parent=11 // pred_region
        _
      $region32: #{bert_encoder_forward.11} parent=11 // pred_fallthru
        _
      // Predicated region
      $region33: #{bert_encoder_forward.11} parent=11 // pred_check
        %p265 = pneg %p192
      $region34: #{bert_encoder_forward.11} parent=11 // pred_check_branch
        %267 = sbr.rel (%p265) target = $region36
      $region35: #{bert_encoder_forward.11} parent=11 // pred_region
        _
      $region36: #{bert_encoder_forward.11} parent=11 // pred_fallthru
        _
    $region12: #{bert_encoder_forward.11} parent=5 // pred_fallthru
      _
    %p268 = scmp.lt.s32.totalorder %s13, 4
    // Predicated region
    $region37: #{bert_encoder_forward.11} parent=5 // pred_check
      %p269 = pneg %p268
    $region38: #{bert_encoder_forward.11} parent=5 // pred_check_branch
      %271 = sbr.rel (%p269) target = $region40
    $region39: #{bert_encoder_forward.11} parent=5 // pred_region
      // Predicated region
      $region41: #{bert_encoder_forward.11} parent=39 // pred_check
        %p272 = pneg %p45
      $region42: #{bert_encoder_forward.11} parent=39 // pred_check_branch
        %274 = sbr.rel (%p272) target = $region44
      $region43: #{bert_encoder_forward.11} parent=39 // pred_region
        %p275 = scmp.lt.s32.totalorder %s20, 3
        %s276 = scalar_select %p275, %s20, 3
        %s277 = smul.addr %s276, 8
        %s278 = scalar_lea.vmem %s0, %s277
      $region44: #{bert_encoder_forward.11} parent=39 // pred_fallthru
        _
    $region40: #{bert_encoder_forward.11} parent=5 // pred_fallthru
      _
    %p279 = scmp.le.s32.totalorder 1, %s13
    %p280 = scmp.lt.s32.totalorder %s13, 5
    %p281 = pnand %p279, %p280
    %p282 = pneg %p281
    // Predicated region
    $region45: #{bert_encoder_forward.11} parent=5 // pred_check
      _
    $region46: #{bert_encoder_forward.11} parent=5 // pred_check_branch
      %284 = sbr.rel (%p281) target = $region48
    $region47: #{bert_encoder_forward.11} parent=5 // pred_region
      %s285 = ssub.s32 %s13, 1
      %p286 = scmp.lt.s32.totalorder %s22, 3
      %s287 = scalar_select %p286, %s22, 3
      %s288 = smul.addr %s287, 8
      %s289 = scalar_lea.vmem %s0, %s288
      %p290 = pneg %p51
      %p291 = pneg %p48
      %s292 = smul.u32 4, %s23
      %p293 = scmp.lt.s32.totalorder %s292, 3
      %s294 = scalar_select %p293, %s292, 3
      %s295 = smul.addr %s294, 8
      %s296 = scalar_lea.vmem %s1, %s295
      %p297 = pneg %p77
      %p298 = pneg %p74
      %s299 = smul.u32 4, %s23
      %p300 = scmp.lt.s32.totalorder %s299, 3
      %s301 = scalar_select %p300, %s299, 3
      %s302 = scalar_lea.vmem %s2, %s301
      %p303 = pneg %p103
      %p304 = pneg %p100
      %s305 = smul.u32 64, %s23
      %p306 = scmp.lt.s32.totalorder %s305, 63
      %s307 = scalar_select %p306, %s305, 63
      %s308 = smul.addr %s307, 8
      %s309 = scalar_lea.vmem %s3, %s308
      %p310 = pneg %p129
      %p311 = pneg %p126
      %p312 = pneg %p150
      %p313 = pneg %p147
      %p314 = pneg %p171
      %p315 = pneg %p168
      %p316 = pneg %p192
      %p317 = pneg %p189
      %p318 = pneg %p218
      %p319 = pneg %p215
      %p320 = scmp.lt.s32.totalorder %s22, 3
      %s321 = scalar_select %p320, %s22, 3
      %s322 = smul.addr %s321, 8
      %s323 = scalar_lea.vmem %s7, %s322
      %p324 = scmp.lt.s32.totalorder %s22, 3
      %s325 = scalar_select %p324, %s22, 3
      %s326 = smul.addr %s325, 8
      %s327 = scalar_lea.vmem %s0, %s326
      %s328 = smul.u32 4, %s23
      %p329 = scmp.lt.s32.totalorder %s328, 3
      %s330 = scalar_select %p329, %s328, 3
      %s331 = smul.addr %s330, 8
      %s332 = scalar_lea.vmem %s1, %s331
      %s333 = smul.u32 4, %s23
      %s334 = smul.u32 4, %s23
      %p335 = scmp.lt.s32.totalorder %s334, 3
      %s336 = scalar_select %p335, %s334, 3
      %s337 = scalar_lea.vmem %s2, %s336
      %s338 = smul.u32 4, %s23
      %s339 = smul.u32 64, %s23
      %p340 = scmp.lt.s32.totalorder %s339, 63
      %s341 = scalar_select %p340, %s339, 63
      %s342 = smul.addr %s341, 8
      %s343 = scalar_lea.vmem %s3, %s342
      %s344 = smul.u32 64, %s23
      %p345 = scmp.lt.s32.totalorder %s22, 3
      %s346 = scalar_select %p345, %s22, 3
      %s347 = smul.addr %s346, 8
      %s348 = scalar_lea.vmem %s7, %s347
      %p349 = scmp.eq.s32.totalorder %s23, 0
      // Predicated region
      $region49: #{bert_encoder_forward.11} parent=47 // pred_check
        %p350 = pneg %p349
      $region50: #{bert_encoder_forward.11} parent=47 // pred_check_branch
        %352 = sbr.rel (%p350) target = $region52
      $region51: #{bert_encoder_forward.11} parent=47 // pred_region
        %353 = vst [vmem:[#allocation2] sm:$0xff] 0.0
      $region52: #{bert_encoder_forward.11} parent=47 // pred_fallthru
        _
      %v354 = vld [vmem:[%s327] sm:$0xff]
      %v355 = vld [vmem:[%s332] sm:$0xff]
      %v356 = vld [vmem:[%s332 + $0x8] sm:$0xff]
      %v357 = vld [vmem:[%s332 + $0x10] sm:$0xff]
      %v358 = vld [vmem:[%s332 + $0x18] sm:$0xff]
      %v359 = vld [vmem:[%s332 + $0x20] sm:$0xff]
      %v360 = vld [vmem:[%s332 + $0x28] sm:$0xff]
      %v361 = vld [vmem:[%s332 + $0x30] sm:$0xff]
      %v362 = vld [vmem:[%s332 + $0x38] sm:$0xff]
      %v363 = vld [vmem:[%s332 + $0x40] sm:$0xff]
      %v364 = vld [vmem:[%s332 + $0x48] sm:$0xff]
      %v365 = vld [vmem:[%s332 + $0x50] sm:$0xff]
      %v366 = vld [vmem:[%s332 + $0x58] sm:$0xff]
      %v367 = vld [vmem:[%s332 + $0x60] sm:$0xff]
      %v368 = vld [vmem:[%s332 + $0x68] sm:$0xff]
      %v369 = vld [vmem:[%s332 + $0x70] sm:$0xff]
      %v370 = vld [vmem:[%s332 + $0x78] sm:$0xff]
      %v371 = vld [vmem:[%s332 + $0x80] sm:$0xff]
      %v372 = vld [vmem:[%s332 + $0x88] sm:$0xff]
      %v373 = vld [vmem:[%s332 + $0x90] sm:$0xff]
      %v374 = vld [vmem:[%s332 + $0x98] sm:$0xff]
      %v375 = vld [vmem:[%s332 + $0xa0] sm:$0xff]
      %v376 = vld [vmem:[%s332 + $0xa8] sm:$0xff]
      %v377 = vld [vmem:[%s332 + $0xb0] sm:$0xff]
      %v378 = vld [vmem:[%s332 + $0xb8] sm:$0xff]
      %v379 = vld [vmem:[%s332 + $0xc0] sm:$0xff]
      %v380 = vld [vmem:[%s332 + $0xc8] sm:$0xff]
      %v381 = vld [vmem:[%s332 + $0xd0] sm:$0xff]
      %v382 = vld [vmem:[%s332 + $0xd8] sm:$0xff]
      %v383 = vld [vmem:[%s332 + $0xe0] sm:$0xff]
      %v384 = vld [vmem:[%s332 + $0xe8] sm:$0xff]
      %v385 = vld [vmem:[%s332 + $0xf0] sm:$0xff]
      %v386 = vld [vmem:[%s332 + $0xf8] sm:$0xff]
      %v387 = vld [vmem:[%s332 + $0x100] sm:$0xff]
      %v388 = vld [vmem:[%s332 + $0x108] sm:$0xff]
      %v389 = vld [vmem:[%s332 + $0x110] sm:$0xff]
      %v390 = vld [vmem:[%s332 + $0x118] sm:$0xff]
      %v391 = vld [vmem:[%s332 + $0x120] sm:$0xff]
      %v392 = vld [vmem:[%s332 + $0x128] sm:$0xff]
      %v393 = vld [vmem:[%s332 + $0x130] sm:$0xff]
      %v394 = vld [vmem:[%s332 + $0x138] sm:$0xff]
      %v395 = vld [vmem:[%s332 + $0x140] sm:$0xff]
      %v396 = vld [vmem:[%s332 + $0x148] sm:$0xff]
      %v397 = vld [vmem:[%s332 + $0x150] sm:$0xff]
      %v398 = vld [vmem:[%s332 + $0x158] sm:$0xff]
      %v399 = vld [vmem:[%s332 + $0x160] sm:$0xff]
      %v400 = vld [vmem:[%s332 + $0x168] sm:$0xff]
      %v401 = vld [vmem:[%s332 + $0x170] sm:$0xff]
      %v402 = vld [vmem:[%s332 + $0x178] sm:$0xff]
      %v403 = vld [vmem:[%s332 + $0x180] sm:$0xff]
      %v404 = vld [vmem:[%s332 + $0x188] sm:$0xff]
      %v405 = vld [vmem:[%s332 + $0x190] sm:$0xff]
      %v406 = vld [vmem:[%s332 + $0x198] sm:$0xff]
      %v407 = vld [vmem:[%s332 + $0x1a0] sm:$0xff]
      %v408 = vld [vmem:[%s332 + $0x1a8] sm:$0xff]
      %v409 = vld [vmem:[%s332 + $0x1b0] sm:$0xff]
      %v410 = vld [vmem:[%s332 + $0x1b8] sm:$0xff]
      %v411 = vld [vmem:[%s332 + $0x1c0] sm:$0xff]
      %v412 = vld [vmem:[%s332 + $0x1c8] sm:$0xff]
      %v413 = vld [vmem:[%s332 + $0x1d0] sm:$0xff]
      %v414 = vld [vmem:[%s332 + $0x1d8] sm:$0xff]
      %v415 = vld [vmem:[%s332 + $0x1e0] sm:$0xff]
      %v416 = vld [vmem:[%s332 + $0x1e8] sm:$0xff]
      %v417 = vld [vmem:[%s332 + $0x1f0] sm:$0xff]
      %v418 = vld [vmem:[%s332 + $0x1f8] sm:$0xff]
      %v419 = vld [vmem:[%s337] sm:$0xf]
      %v421 = vlaneseq
      %v422 = vshrl.u32 %v421, 7
      %v423 = vsub.s32 0, %v422
      %v424 = vrot.slane %v419, %v423
      %v425 = vlaneseq
      %v426 = vshrl.u32 %v425, 7
      %v427 = vsub.s32 1, %v426
      %v428 = vrot.slane %v419, %v427
      %v429 = vlaneseq
      %v430 = vshrl.u32 %v429, 7
      %v431 = vsub.s32 2, %v430
      %v432 = vrot.slane %v419, %v431
      %v433 = vlaneseq
      %v434 = vshrl.u32 %v433, 7
      %v435 = vsub.s32 3, %v434
      %v436 = vrot.slane %v419, %v435
      %441 = vmatprep.subr.mxu0 %v356
      %442 = vmatpush1.msra.mxu0 %v355
      %443 = vmatprep.subr.mxu0 %v360
      %444 = vmatpush1.msra.mxu0 %v359
      %445 = vmatprep.subr.mxu0 %v364
      %446 = vmatpush1.msra.mxu0 %v363
      %447 = vmatprep.subr.mxu0 %v368
      %448 = vmatpush1.msra.mxu0 %v367
      %449 = vmatprep.subr.mxu0 %v372
      %450 = vmatpush1.msra.mxu0 %v371
      %451 = vmatprep.subr.mxu0 %v376
      %452 = vmatpush1.msra.mxu0 %v375
      %453 = vmatprep.subr.mxu0 %v380
      %454 = vmatpush1.msra.mxu0 %v379
      %455 = vmatprep.subr.mxu0 %v384
      %456 = vmatpush1.msra.mxu0 %v383
      %457 = vmatprep.subr.mxu0 %v388
      %458 = vmatpush1.msra.mxu0 %v387
      %459 = vmatprep.subr.mxu0 %v392
      %460 = vmatpush1.msra.mxu0 %v391
      %461 = vmatprep.subr.mxu0 %v396
      %462 = vmatpush1.msra.mxu0 %v395
      %463 = vmatprep.subr.mxu0 %v400
      %464 = vmatpush1.msra.mxu0 %v399
      %465 = vmatprep.subr.mxu0 %v404
      %466 = vmatpush1.msra.mxu0 %v403
      %467 = vmatprep.subr.mxu0 %v408
      %468 = vmatpush1.msra.mxu0 %v407
      %469 = vmatprep.subr.mxu0 %v412
      %470 = vmatpush1.msra.mxu0 %v411
      %471 = vmatprep.subr.mxu0 %v416
      %472 = vmatpush1.msra.mxu0 %v415
      %473 = vmatprep.subr.mxu0 0.0
      %474 = vmatpush1.msra.mxu0 0.0
      %475 = vmatprep.subr.mxu0 0.0
      %476 = vmatpush1.msra.mxu0 0.0
      %477 = vmatprep.subr.mxu0 0.0
      %478 = vmatpush1.msra.mxu0 0.0
      %479 = vmatprep.subr.mxu0 0.0
      %480 = vmatpush1.msra.mxu0 0.0
      %481 = vmatprep.subr.mxu0 0.0
      %482 = vmatpush1.msra.mxu0 0.0
      %483 = vmatprep.subr.mxu0 0.0
      %484 = vmatpush1.msra.mxu0 0.0
      %485 = vmatprep.subr.mxu0 0.0
      %486 = vmatpush1.msra.mxu0 0.0
      %487 = vmatprep.subr.mxu0 0.0
      %488 = vmatpush1.msra.mxu0 0.0
      %489 = vmatprep.subr.mxu0 0.0
      %490 = vmatpush1.msra.mxu0 0.0
      %491 = vmatprep.subr.mxu0 0.0
      %492 = vmatpush1.msra.mxu0 0.0
      %493 = vmatprep.subr.mxu0 0.0
      %494 = vmatpush1.msra.mxu0 0.0
      %495 = vmatprep.subr.mxu0 0.0
      %496 = vmatpush1.msra.mxu0 0.0
      %497 = vmatprep.subr.mxu0 0.0
      %498 = vmatpush1.msra.mxu0 0.0
      %499 = vmatprep.subr.mxu0 0.0
      %500 = vmatpush1.msra.mxu0 0.0
      %501 = vmatprep.subr.mxu0 0.0
      %502 = vmatpush1.msra.mxu0 0.0
      %503 = vmatprep.subr.mxu0 0.0
      %504 = vmatpush1.msra.mxu0 0.0
      %505 = vmatprep.mubr.f32.mxu0 0.0
      %506 = vmatmul.mubr.f32.gmra.mrb[0].mxu0 %v354
      %v507 = vpop.f32.mrb[0].mxu0
      %v508 = vadd.f32 %v424, %v507
      %v509 = vpop.f32.mrb[0].mxu0
      %v510 = vadd.f32 %v428, %v509
      %511 = vdwg.mxu0
      %512 = vmatprep.subr.mxu0 %v358
      %513 = vmatpush1.msra.mxu0 %v357
      %514 = vmatprep.subr.mxu0 %v362
      %515 = vmatpush1.msra.mxu0 %v361
      %516 = vmatprep.subr.mxu0 %v366
      %517 = vmatpush1.msra.mxu0 %v365
      %518 = vmatprep.subr.mxu0 %v370
      %519 = vmatpush1.msra.mxu0 %v369
      %520 = vmatprep.subr.mxu0 %v374
      %521 = vmatpush1.msra.mxu0 %v373
      %522 = vmatprep.subr.mxu0 %v378
      %523 = vmatpush1.msra.mxu0 %v377
      %524 = vmatprep.subr.mxu0 %v382
      %525 = vmatpush1.msra.mxu0 %v381
      %526 = vmatprep.subr.mxu0 %v386
      %527 = vmatpush1.msra.mxu0 %v385
      %528 = vmatprep.subr.mxu0 %v390
      %529 = vmatpush1.msra.mxu0 %v389
      %530 = vmatprep.subr.mxu0 %v394
      %531 = vmatpush1.msra.mxu0 %v393
      %532 = vmatprep.subr.mxu0 %v398
      %533 = vmatpush1.msra.mxu0 %v397
      %534 = vmatprep.subr.mxu0 %v402
      %535 = vmatpush1.msra.mxu0 %v401
      %536 = vmatprep.subr.mxu0 %v406
      %537 = vmatpush1.msra.mxu0 %v405
      %538 = vmatprep.subr.mxu0 %v410
      %539 = vmatpush1.msra.mxu0 %v409
      %540 = vmatprep.subr.mxu0 %v414
      %541 = vmatpush1.msra.mxu0 %v413
      %542 = vmatprep.subr.mxu0 %v418
      %543 = vmatpush1.msra.mxu0 %v417
      %544 = vmatprep.subr.mxu0 0.0
      %545 = vmatpush1.msra.mxu0 0.0
      %546 = vmatprep.subr.mxu0 0.0
      %547 = vmatpush1.msra.mxu0 0.0
      %548 = vmatprep.subr.mxu0 0.0
      %549 = vmatpush1.msra.mxu0 0.0
      %550 = vmatprep.subr.mxu0 0.0
      %551 = vmatpush1.msra.mxu0 0.0
      %552 = vmatprep.subr.mxu0 0.0
      %553 = vmatpush1.msra.mxu0 0.0
      %554 = vmatprep.subr.mxu0 0.0
      %555 = vmatpush1.msra.mxu0 0.0
      %556 = vmatprep.subr.mxu0 0.0
      %557 = vmatpush1.msra.mxu0 0.0
      %558 = vmatprep.subr.mxu0 0.0
      %559 = vmatpush1.msra.mxu0 0.0
      %560 = vmatprep.subr.mxu0 0.0
      %561 = vmatpush1.msra.mxu0 0.0
      %562 = vmatprep.subr.mxu0 0.0
      %563 = vmatpush1.msra.mxu0 0.0
      %564 = vmatprep.subr.mxu0 0.0
      %565 = vmatpush1.msra.mxu0 0.0
      %566 = vmatprep.subr.mxu0 0.0
      %567 = vmatpush1.msra.mxu0 0.0
      %568 = vmatprep.subr.mxu0 0.0
      %569 = vmatpush1.msra.mxu0 0.0
      %570 = vmatprep.subr.mxu0 0.0
      %571 = vmatpush1.msra.mxu0 0.0
      %572 = vmatprep.subr.mxu0 0.0
      %573 = vmatpush1.msra.mxu0 0.0
      %574 = vmatprep.subr.mxu0 0.0
      %575 = vmatpush1.msra.mxu0 0.0
      %576 = vmatprep.mubr.f32.mxu0 0.0
      %577 = vmatmul.mubr.f32.gmra.mrb[0].mxu0 %v354
      %v578 = vpop.f32.mrb[0].mxu0
      %v579 = vadd.f32 %v432, %v578
      %v580 = vpop.f32.mrb[0].mxu0
      %v581 = vadd.f32 %v436, %v580
      %582 = vdwg.mxu0
      %v583 = vmul.f32 %v508, 0.5
      %v584 = vmul.f32 %v510, 0.5
      %v585 = vmul.f32 %v579, 0.5
      %v586 = vmul.f32 %v581, 0.5
      %v587 = vmul.f32 %v508, 0.70710677
      %v588 = vmul.f32 %v510, 0.70710677
      %v589 = vmul.f32 %v579, 0.70710677
      %v590 = vmul.f32 %v581, 0.70710677
      %v591 = verf.f32.pop %v587
      %v592 = verf.f32.pop %v588
      %v593 = verf.f32.pop %v589
      %v594 = verf.f32.pop %v590
      %v595 = vadd.f32 %v591, 1.0
      %v596 = vadd.f32 %v592, 1.0
      %v597 = vadd.f32 %v593, 1.0
      %v598 = vadd.f32 %v594, 1.0
      %v599 = vmul.f32 %v583, %v595
      %v600 = vmul.f32 %v584, %v596
      %v601 = vmul.f32 %v585, %v597
      %v602 = vmul.f32 %v586, %v598
      %v603 = vld [vmem:[#allocation2] sm:$0xff]
      %v604 = vld [vmem:[%s343] sm:$0xff]
      %v605 = vld [vmem:[%s343 + $0x8] sm:$0xff]
      %v606 = vld [vmem:[%s343 + $0x10] sm:$0xff]
      %v607 = vld [vmem:[%s343 + $0x18] sm:$0xff]
      %v608 = vld [vmem:[%s343 + $0x20] sm:$0xff]
      %v609 = vld [vmem:[%s343 + $0x28] sm:$0xff]
      %v610 = vld [vmem:[%s343 + $0x30] sm:$0xff]
      %v611 = vld [vmem:[%s343 + $0x38] sm:$0xff]
      %v612 = vld [vmem:[%s343 + $0x40] sm:$0xff]
      %v613 = vld [vmem:[%s343 + $0x48] sm:$0xff]
      %v614 = vld [vmem:[%s343 + $0x50] sm:$0xff]
      %v615 = vld [vmem:[%s343 + $0x58] sm:$0xff]
      %v616 = vld [vmem:[%s343 + $0x60] sm:$0xff]
      %v617 = vld [vmem:[%s343 + $0x68] sm:$0xff]
      %v618 = vld [vmem:[%s343 + $0x70] sm:$0xff]
      %v619 = vld [vmem:[%s343 + $0x78] sm:$0xff]
      %v620 = vld [vmem:[%s343 + $0x80] sm:$0xff]
      %v621 = vld [vmem:[%s343 + $0x88] sm:$0xff]
      %v622 = vld [vmem:[%s343 + $0x90] sm:$0xff]
      %v623 = vld [vmem:[%s343 + $0x98] sm:$0xff]
      %v624 = vld [vmem:[%s343 + $0xa0] sm:$0xff]
      %v625 = vld [vmem:[%s343 + $0xa8] sm:$0xff]
      %v626 = vld [vmem:[%s343 + $0xb0] sm:$0xff]
      %v627 = vld [vmem:[%s343 + $0xb8] sm:$0xff]
      %v628 = vld [vmem:[%s343 + $0xc0] sm:$0xff]
      %v629 = vld [vmem:[%s343 + $0xc8] sm:$0xff]
      %v630 = vld [vmem:[%s343 + $0xd0] sm:$0xff]
      %v631 = vld [vmem:[%s343 + $0xd8] sm:$0xff]
      %v632 = vld [vmem:[%s343 + $0xe0] sm:$0xff]
      %v633 = vld [vmem:[%s343 + $0xe8] sm:$0xff]
      %v634 = vld [vmem:[%s343 + $0xf0] sm:$0xff]
      %v635 = vld [vmem:[%s343 + $0xf8] sm:$0xff]
      %v636 = vld [vmem:[%s343 + $0x100] sm:$0xff]
      %v637 = vld [vmem:[%s343 + $0x108] sm:$0xff]
      %v638 = vld [vmem:[%s343 + $0x110] sm:$0xff]
      %v639 = vld [vmem:[%s343 + $0x118] sm:$0xff]
      %v640 = vld [vmem:[%s343 + $0x120] sm:$0xff]
      %v641 = vld [vmem:[%s343 + $0x128] sm:$0xff]
      %v642 = vld [vmem:[%s343 + $0x130] sm:$0xff]
      %v643 = vld [vmem:[%s343 + $0x138] sm:$0xff]
      %v644 = vld [vmem:[%s343 + $0x140] sm:$0xff]
      %v645 = vld [vmem:[%s343 + $0x148] sm:$0xff]
      %v646 = vld [vmem:[%s343 + $0x150] sm:$0xff]
      %v647 = vld [vmem:[%s343 + $0x158] sm:$0xff]
      %v648 = vld [vmem:[%s343 + $0x160] sm:$0xff]
      %v649 = vld [vmem:[%s343 + $0x168] sm:$0xff]
      %v650 = vld [vmem:[%s343 + $0x170] sm:$0xff]
      %v651 = vld [vmem:[%s343 + $0x178] sm:$0xff]
      %v652 = vld [vmem:[%s343 + $0x180] sm:$0xff]
      %v653 = vld [vmem:[%s343 + $0x188] sm:$0xff]
      %v654 = vld [vmem:[%s343 + $0x190] sm:$0xff]
      %v655 = vld [vmem:[%s343 + $0x198] sm:$0xff]
      %v656 = vld [vmem:[%s343 + $0x1a0] sm:$0xff]
      %v657 = vld [vmem:[%s343 + $0x1a8] sm:$0xff]
      %v658 = vld [vmem:[%s343 + $0x1b0] sm:$0xff]
      %v659 = vld [vmem:[%s343 + $0x1b8] sm:$0xff]
      %v660 = vld [vmem:[%s343 + $0x1c0] sm:$0xff]
      %v661 = vld [vmem:[%s343 + $0x1c8] sm:$0xff]
      %v662 = vld [vmem:[%s343 + $0x1d0] sm:$0xff]
      %v663 = vld [vmem:[%s343 + $0x1d8] sm:$0xff]
      %v664 = vld [vmem:[%s343 + $0x1e0] sm:$0xff]
      %v665 = vld [vmem:[%s343 + $0x1e8] sm:$0xff]
      %v666 = vld [vmem:[%s343 + $0x1f0] sm:$0xff]
      %v667 = vld [vmem:[%s343 + $0x1f8] sm:$0xff]
      %668 = vmatprep.subr.mxu0 0.0
      %669 = vmatpush1.msra.mxu0 %v604
      %670 = vmatprep.subr.mxu0 0.0
      %671 = vmatpush1.msra.mxu0 %v605
      %672 = vmatprep.subr.mxu0 0.0
      %673 = vmatpush1.msra.mxu0 %v606
      %674 = vmatprep.subr.mxu0 0.0
      %675 = vmatpush1.msra.mxu0 %v607
      %676 = vmatprep.subr.mxu0 0.0
      %677 = vmatpush1.msra.mxu0 %v608
      %678 = vmatprep.subr.mxu0 0.0
      %679 = vmatpush1.msra.mxu0 %v609
      %680 = vmatprep.subr.mxu0 0.0
      %681 = vmatpush1.msra.mxu0 %v610
      %682 = vmatprep.subr.mxu0 0.0
      %683 = vmatpush1.msra.mxu0 %v611
      %684 = vmatprep.subr.mxu0 0.0
      %685 = vmatpush1.msra.mxu0 %v612
      %686 = vmatprep.subr.mxu0 0.0
      %687 = vmatpush1.msra.mxu0 %v613
      %688 = vmatprep.subr.mxu0 0.0
      %689 = vmatpush1.msra.mxu0 %v614
      %690 = vmatprep.subr.mxu0 0.0
      %691 = vmatpush1.msra.mxu0 %v615
      %692 = vmatprep.subr.mxu0 0.0
      %693 = vmatpush1.msra.mxu0 %v616
      %694 = vmatprep.subr.mxu0 0.0
      %695 = vmatpush1.msra.mxu0 %v617
      %696 = vmatprep.subr.mxu0 0.0
      %697 = vmatpush1.msra.mxu0 %v618
      %698 = vmatprep.subr.mxu0 0.0
      %699 = vmatpush1.msra.mxu0 %v619
      %700 = vmatprep.subr.mxu0 0.0
      %701 = vmatpush1.msra.mxu0 %v620
      %702 = vmatprep.subr.mxu0 0.0
      %703 = vmatpush1.msra.mxu0 %v621
      %704 = vmatprep.subr.mxu0 0.0
      %705 = vmatpush1.msra.mxu0 %v622
      %706 = vmatprep.subr.mxu0 0.0
      %707 = vmatpush1.msra.mxu0 %v623
      %708 = vmatprep.subr.mxu0 0.0
      %709 = vmatpush1.msra.mxu0 %v624
      %710 = vmatprep.subr.mxu0 0.0
      %711 = vmatpush1.msra.mxu0 %v625
      %712 = vmatprep.subr.mxu0 0.0
      %713 = vmatpush1.msra.mxu0 %v626
      %714 = vmatprep.subr.mxu0 0.0
      %715 = vmatpush1.msra.mxu0 %v627
      %716 = vmatprep.subr.mxu0 0.0
      %717 = vmatpush1.msra.mxu0 %v628
      %718 = vmatprep.subr.mxu0 0.0
      %719 = vmatpush1.msra.mxu0 %v629
      %720 = vmatprep.subr.mxu0 0.0
      %721 = vmatpush1.msra.mxu0 %v630
      %722 = vmatprep.subr.mxu0 0.0
      %723 = vmatpush1.msra.mxu0 %v631
      %724 = vmatprep.subr.mxu0 0.0
      %725 = vmatpush1.msra.mxu0 %v632
      %726 = vmatprep.subr.mxu0 0.0
      %727 = vmatpush1.msra.mxu0 %v633
      %728 = vmatprep.subr.mxu0 0.0
      %729 = vmatpush1.msra.mxu0 %v634
      %730 = vmatprep.subr.mxu0 0.0
      %731 = vmatpush1.msra.mxu0 %v635
      %732 = vmatprep.mubr.f32.mxu0 %v600
      %733 = vmatmul.mubr.f32.gmra.mrb[0].mxu0 %v599
      %v734 = vpop.f32.mrb[0].mxu0
      %v735 = vadd.f32 0.0, %v734
      %v736 = vpop.f32.mrb[0].mxu0
      %737 = vdwg.mxu0
      %738 = vmatprep.subr.mxu0 0.0
      %739 = vmatpush1.msra.mxu0 %v636
      %740 = vmatprep.subr.mxu0 0.0
      %741 = vmatpush1.msra.mxu0 %v637
      %742 = vmatprep.subr.mxu0 0.0
      %743 = vmatpush1.msra.mxu0 %v638
      %744 = vmatprep.subr.mxu0 0.0
      %745 = vmatpush1.msra.mxu0 %v639
      %746 = vmatprep.subr.mxu0 0.0
      %747 = vmatpush1.msra.mxu0 %v640
      %748 = vmatprep.subr.mxu0 0.0
      %749 = vmatpush1.msra.mxu0 %v641
      %750 = vmatprep.subr.mxu0 0.0
      %751 = vmatpush1.msra.mxu0 %v642
      %752 = vmatprep.subr.mxu0 0.0
      %753 = vmatpush1.msra.mxu0 %v643
      %754 = vmatprep.subr.mxu0 0.0
      %755 = vmatpush1.msra.mxu0 %v644
      %756 = vmatprep.subr.mxu0 0.0
      %757 = vmatpush1.msra.mxu0 %v645
      %758 = vmatprep.subr.mxu0 0.0
      %759 = vmatpush1.msra.mxu0 %v646
      %760 = vmatprep.subr.mxu0 0.0
      %761 = vmatpush1.msra.mxu0 %v647
      %762 = vmatprep.subr.mxu0 0.0
      %763 = vmatpush1.msra.mxu0 %v648
      %764 = vmatprep.subr.mxu0 0.0
      %765 = vmatpush1.msra.mxu0 %v649
      %766 = vmatprep.subr.mxu0 0.0
      %767 = vmatpush1.msra.mxu0 %v650
      %768 = vmatprep.subr.mxu0 0.0
      %769 = vmatpush1.msra.mxu0 %v651
      %770 = vmatprep.subr.mxu0 0.0
      %771 = vmatpush1.msra.mxu0 %v652
      %772 = vmatprep.subr.mxu0 0.0
      %773 = vmatpush1.msra.mxu0 %v653
      %774 = vmatprep.subr.mxu0 0.0
      %775 = vmatpush1.msra.mxu0 %v654
      %776 = vmatprep.subr.mxu0 0.0
      %777 = vmatpush1.msra.mxu0 %v655
      %778 = vmatprep.subr.mxu0 0.0
      %779 = vmatpush1.msra.mxu0 %v656
      %780 = vmatprep.subr.mxu0 0.0
      %781 = vmatpush1.msra.mxu0 %v657
      %782 = vmatprep.subr.mxu0 0.0
      %783 = vmatpush1.msra.mxu0 %v658
      %784 = vmatprep.subr.mxu0 0.0
      %785 = vmatpush1.msra.mxu0 %v659
      %786 = vmatprep.subr.mxu0 0.0
      %787 = vmatpush1.msra.mxu0 %v660
      %788 = vmatprep.subr.mxu0 0.0
      %789 = vmatpush1.msra.mxu0 %v661
      %790 = vmatprep.subr.mxu0 0.0
      %791 = vmatpush1.msra.mxu0 %v662
      %792 = vmatprep.subr.mxu0 0.0
      %793 = vmatpush1.msra.mxu0 %v663
      %794 = vmatprep.subr.mxu0 0.0
      %795 = vmatpush1.msra.mxu0 %v664
      %796 = vmatprep.subr.mxu0 0.0
      %797 = vmatpush1.msra.mxu0 %v665
      %798 = vmatprep.subr.mxu0 0.0
      %799 = vmatpush1.msra.mxu0 %v666
      %800 = vmatprep.subr.mxu0 0.0
      %801 = vmatpush1.msra.mxu0 %v667
      %802 = vmatprep.mubr.f32.mxu0 %v602
      %803 = vmatmul.mubr.f32.gmra.mrb[0].mxu0 %v601
      %v804 = vpop.f32.mrb[0].mxu0
      %v805 = vadd.f32 %v735, %v804
      %v806 = vpop.f32.mrb[0].mxu0
      %807 = vdwg.mxu0
      %v808 = vadd.f32 %v603, %v805
      %809 = vst [vmem:[#allocation2] sm:$0xff] %v808
      // Predicated region
      $region53: #{bert_encoder_forward.11} parent=47 // pred_check
        %p810 = pneg %p349
      $region54: #{bert_encoder_forward.11} parent=47 // pred_check_branch
        %812 = sbr.rel (%p810) target = $region56
      $region55: #{bert_encoder_forward.11} parent=47 // pred_region
        %v813 = vld [vmem:[#allocation2] sm:$0xff]
        %v814 = vld [vmem:[%s4] sm:$0x1]
        %v816 = vlaneseq
        %v817 = vshrl.u32 %v816, 7
        %v818 = vsub.s32 0, %v817
        %v819 = vrot.slane %v814, %v818
        %v821 = vadd.f32 %v813, %v819
        %v822 = vld [vmem:[%s327] sm:$0xff]
        %v823 = vadd.f32 %v821, %v822
        %824 = vadd.xlane.f32.xlu0 %v823
        %v825 = vpop.xlane.xlu0 %824
        %v826 = vrcp.pop 128.0
        %v827 = vmul.f32 %v825, %v826
        %v828 = vsub.f32 %v823, %v827
        %v829 = vmul.f32 %v828, %v828
        %830 = vadd.xlane.f32.xlu0 %v829
        %v831 = vpop.xlane.xlu0 %830
        %v832 = vmul.f32 %v831, %v826
        %v833 = vadd.f32 %v832, 1e-12
        %v834 = vrsqrt.pop %v833
        %v835 = vmul.f32 %v828, %v834
        %v836 = vld [vmem:[%s5] sm:$0x1]
        %v838 = vlaneseq
        %v839 = vshrl.u32 %v838, 7
        %v840 = vsub.s32 0, %v839
        %v841 = vrot.slane %v836, %v840
        %v843 = vmul.f32 %v835, %v841
        %v844 = vld [vmem:[%s6] sm:$0x1]
        %v846 = vlaneseq
        %v847 = vshrl.u32 %v846, 7
        %v848 = vsub.s32 0, %v847
        %v849 = vrot.slane %v844, %v848
        %v851 = vadd.f32 %v843, %v849
        %852 = vst [vmem:[%s348] sm:$0xff] %v851
      $region56: #{bert_encoder_forward.11} parent=47 // pred_fallthru
        _
      %p853 = scmp.lt.s32.totalorder %s22, 3
      %s854 = scalar_select %p853, %s22, 3
      %s855 = smul.addr %s854, 8
      %s856 = scalar_lea.vmem %s7, %s855
      // Predicated region
      $region57: #{bert_encoder_forward.11} parent=47 // pred_check
        %p857 = pneg %p215
      $region58: #{bert_encoder_forward.11} parent=47 // pred_check_branch
        %859 = sbr.rel (%p857) target = $region60
      $region59: #{bert_encoder_forward.11} parent=47 // pred_region
        _
      $region60: #{bert_encoder_forward.11} parent=47 // pred_fallthru
        _
    $region48: #{bert_encoder_forward.11} parent=5 // pred_fallthru
      _
    %p860 = scmp.le.s32.totalorder 2, %s13
    // Predicated region
    $region61: #{bert_encoder_forward.11} parent=5 // pred_check
      %p861 = pneg %p860
    $region62: #{bert_encoder_forward.11} parent=5 // pred_check_branch
      %863 = sbr.rel (%p861) target = $region64
    $region63: #{bert_encoder_forward.11} parent=5 // pred_region
      %s864 = ssub.s32 %s13, 2
      // Predicated region
      $region65: #{bert_encoder_forward.11} parent=63 // pred_check
        %p865 = pneg %p221
      $region66: #{bert_encoder_forward.11} parent=63 // pred_check_branch
        %867 = sbr.rel (%p865) target = $region68
      $region67: #{bert_encoder_forward.11} parent=63 // pred_region
        %p868 = scmp.lt.s32.totalorder %s24, 3
        %s869 = scalar_select %p868, %s24, 3
        %s870 = smul.addr %s869, 8
        %s871 = scalar_lea.vmem %s7, %s870
      $region68: #{bert_encoder_forward.11} parent=63 // pred_fallthru
        _
    $region64: #{bert_encoder_forward.11} parent=5 // pred_fallthru
      _
  $region6: #{bert_encoder_forward.11} parent=0 // loop_footer
    %s17 = sadd.s32 1, %s13
  $region7: #{bert_encoder_forward.11} parent=0 // loop_footer_branch
    %12 = sbr.rel target = $region3
  $region8: #{bert_encoder_forward.11} parent=0 // loop_exit
    _

// kernel: bert_encoder_forward.9
$region0: #{bert_encoder_forward.9}
  #allocation0 [shape = 'u32[]', space=smem, size = 0x4, offset = 0x4, fixed_abs, tag = 'smem constant byte address 0x4 - core index']
  #allocation1 [shape = 'u32[144,128]{1,0:T(1,128)}', space=vmem, size = 0x12000, scoped, tag = 'internal scratch']
  #allocation2 [shape = 'f32[2,16,1]{2,1,0:T(8,128)}', space=vmem, size = 0x4000, scoped, tag = 'scratch operand']
  #allocation3 [shape = 'f32[2,16,1]{2,1,0:T(8,128)}', space=vmem, size = 0x4000, scoped, tag = 'scratch operand']
  #allocation4 [shape = 'f32[2,16,64]{2,1,0:T(8,128)}', space=vmem, size = 0x4000, scoped, tag = 'scratch operand']
  %s0 = inlined_call_operand.vmem [shape: f32[32,384], index: 0, kind: input, shape index: {}, may-alias: {0,1,2}]
  %s1 = inlined_call_operand.vmem [shape: f32[32,384], index: 1, kind: input, shape index: {}, may-alias: {0,1,2}]
  %s2 = inlined_call_operand.vmem [shape: f32[32,384], index: 2, kind: input, shape index: {}, may-alias: {0,1,2}]
  %s3 = inlined_call_operand.vmem [shape: f32[32,128], index: 3, kind: output, shape index: {}]
  %s4 = sld [smem:[#allocation0]]
  $region167: #{bert_encoder_forward.9} parent=0
    _
  %s6 = ssub.s32 1, %s4
  %s7 = scalar_select 0, %s6, %s4
  $region1: #{bert_encoder_forward.9} parent=0
    #allocation5 [shape = 'u8[16384]{0}', space=vmem, size = 0x4000, scoped, tag = 'input window, operand 0']
    #allocation6 [shape = 'u8[16384]{0}', space=vmem, size = 0x4000, scoped, tag = 'input window, operand 1']
    #allocation7 [shape = 'u8[16384]{0}', space=vmem, size = 0x4000, scoped, tag = 'input window, operand 2']
    loop: start=0, step=1, limit=4
    $region2: #{bert_encoder_forward.9} parent=1 // loop_pre_header
      _
    $region3: #{bert_encoder_forward.9} parent=1 // loop_header
      %s9 = sphi 0, %s13
      %p10 = scmp.ge.s32.totalorder %s9, 4
      %s16 = sphi 0, %s35
      %s17 = sphi 0, %s31
      %s18 = sphi 0, %s27
      %s19 = sphi 0, %s16
      %s20 = sphi 0, %s17
      %s21 = sphi 0, %s18
      %s22 = sphi 0, %s19
      %s23 = sphi 0, %s20
      %s24 = sphi 0, %s21
      %s40 = sphi 0, %s42
      %s43 = sphi 0, %s40
      %s44 = sphi 0, %s43
      %s60 = sphi 0, %s44
      %s72 = sphi 0, %s74
      %s75 = sphi 0, %s72
      %s76 = sphi 0, %s75
      %s92 = sphi 0, %s76
      %s104 = sphi 0, %s106
      %s107 = sphi 0, %s104
      %s108 = sphi 0, %s107
      %s124 = sphi 0, %s108
      %s132 = sphi 0, %s134
      %s135 = sphi 0, %s132
      %s136 = sphi 0, %s135
      %s152 = sphi 0, %s136
    $region4: #{bert_encoder_forward.9} parent=1 // loop_header_branch
      %12 = sbr.rel (%p10) target = $region8
    $region5: #{bert_encoder_forward.9} parent=1 // loop_body
      %s14 = ssub.s32 %s9, 1
      %s15 = ssub.s32 %s9, 2
      %s25 = sadd.s32 1, %s18
      %p26 = scmp.ge.s32.totalorder %s25, 1
      %s27 = scalar_select %p26, 0, %s25
      %s28 = sadd.s32 1, %s17
      %s29 = scalar_select %p26, %s28, %s17
      %p30 = scmp.ge.s32.totalorder %s29, 1
      %s31 = scalar_select %p30, 0, %s29
      %s32 = sadd.s32 1, %s16
      %s33 = scalar_select %p30, %s32, %s16
      %p34 = scmp.ge.s32.totalorder %s33, 2
      %s35 = scalar_select %p34, 0, %s33
      %s36 = ssub.s32 %s16, %s35
      %s37 = ssub.s32 %s17, %s31
      %s38 = sor.u32 %s36, %s37
      %p39 = scmp.eq.s32.totalorder %s38, 0
      %s41 = sadd.s32 %s40, 1
      %s42 = scalar_select %p39, %s40, %s41
      %p45 = pneg %p39
      %p46 = scmp.eq.s32.totalorder %s9, 1
      %p47 = por %p45, %p46
      %p48 = scmp.ne.s32.totalorder %s40, %s43
      %p49 = scmp.eq.s32.totalorder %s9, 0
      %p50 = por %p48, %p49
      %p51 = scmp.ne.s32.totalorder %s40, %s43
      %p52 = scmp.eq.s32.totalorder %s14, 1
      %p53 = por %p51, %p52
      %p54 = scmp.ne.s32.totalorder %s43, %s44
      %p55 = scmp.eq.s32.totalorder %s14, 0
      %p56 = por %p54, %p55
      %p57 = scmp.ne.s32.totalorder %s43, %s44
      %p58 = scmp.eq.s32.totalorder %s15, 1
      %p59 = por %p57, %p58
      %p61 = scmp.ne.s32.totalorder %s44, %s60
      %p62 = scmp.eq.s32.totalorder %s15, 0
      %p63 = por %p61, %p62
      %s64 = sadd.s32 %s16, %s18
      %s65 = sadd.s32 %s17, 1
      %s66 = sadd.s32 %s35, %s27
      %s67 = sadd.s32 %s31, 1
      %s68 = ssub.s32 %s64, %s66
      %s69 = ssub.s32 %s65, %s67
      %s70 = sor.u32 %s68, %s69
      %p71 = scmp.eq.s32.totalorder %s70, 0
      %s73 = sadd.s32 %s72, 1
      %s74 = scalar_select %p71, %s72, %s73
      %p77 = pneg %p71
      %p78 = scmp.eq.s32.totalorder %s9, 1
      %p79 = por %p77, %p78
      %p80 = scmp.ne.s32.totalorder %s72, %s75
      %p81 = scmp.eq.s32.totalorder %s9, 0
      %p82 = por %p80, %p81
      %p83 = scmp.ne.s32.totalorder %s72, %s75
      %p84 = scmp.eq.s32.totalorder %s14, 1
      %p85 = por %p83, %p84
      %p86 = scmp.ne.s32.totalorder %s75, %s76
      %p87 = scmp.eq.s32.totalorder %s14, 0
      %p88 = por %p86, %p87
      %p89 = scmp.ne.s32.totalorder %s75, %s76
      %p90 = scmp.eq.s32.totalorder %s15, 1
      %p91 = por %p89, %p90
      %p93 = scmp.ne.s32.totalorder %s76, %s92
      %p94 = scmp.eq.s32.totalorder %s15, 0
      %p95 = por %p93, %p94
      %s96 = sadd.s32 %s16, %s18
      %s97 = sadd.s32 %s17, 2
      %s98 = sadd.s32 %s35, %s27
      %s99 = sadd.s32 %s31, 2
      %s100 = ssub.s32 %s96, %s98
      %s101 = ssub.s32 %s97, %s99
      %s102 = sor.u32 %s100, %s101
      %p103 = scmp.eq.s32.totalorder %s102, 0
      %s105 = sadd.s32 %s104, 1
      %s106 = scalar_select %p103, %s104, %s105
      %p109 = pneg %p103
      %p110 = scmp.eq.s32.totalorder %s9, 1
      %p111 = por %p109, %p110
      %p112 = scmp.ne.s32.totalorder %s104, %s107
      %p113 = scmp.eq.s32.totalorder %s9, 0
      %p114 = por %p112, %p113
      %p115 = scmp.ne.s32.totalorder %s104, %s107
      %p116 = scmp.eq.s32.totalorder %s14, 1
      %p117 = por %p115, %p116
      %p118 = scmp.ne.s32.totalorder %s107, %s108
      %p119 = scmp.eq.s32.totalorder %s14, 0
      %p120 = por %p118, %p119
      %p121 = scmp.ne.s32.totalorder %s107, %s108
      %p122 = scmp.eq.s32.totalorder %s15, 1
      %p123 = por %p121, %p122
      %p125 = scmp.ne.s32.totalorder %s108, %s124
      %p126 = scmp.eq.s32.totalorder %s15, 0
      %p127 = por %p125, %p126
      %s128 = ssub.s32 %s16, %s35
      %s129 = ssub.s32 %s17, %s31
      %s130 = sor.u32 %s128, %s129
      %p131 = scmp.eq.s32.totalorder %s130, 0
      %s133 = sadd.s32 %s132, 1
      %s134 = scalar_select %p131, %s132, %s133
      %p137 = pneg %p131
      %p138 = scmp.eq.s32.totalorder %s9, 1
      %p139 = por %p137, %p138
      %p140 = scmp.ne.s32.totalorder %s132, %s135
      %p141 = scmp.eq.s32.totalorder %s9, 0
      %p142 = por %p140, %p141
      %p143 = scmp.ne.s32.totalorder %s132, %s135
      %p144 = scmp.eq.s32.totalorder %s14, 1
      %p145 = por %p143, %p144
      %p146 = scmp.ne.s32.totalorder %s135, %s136
      %p147 = scmp.eq.s32.totalorder %s14, 0
      %p148 = por %p146, %p147
      %p149 = scmp.ne.s32.totalorder %s135, %s136
      %p150 = scmp.eq.s32.totalorder %s15, 1
      %p151 = por %p149, %p150
      %p153 = scmp.ne.s32.totalorder %s136, %s152
      %p154 = scmp.eq.s32.totalorder %s15, 0
      %p155 = por %p153, %p154
      %p156 = scmp.le.s32.totalorder 1, %s9
      %p157 = scmp.lt.s32.totalorder %s9, 3
      %p158 = pnand %p156, %p157
      %p159 = pneg %p158
      // Predicated region
      $region9: #{bert_encoder_forward.9} parent=5 // pred_check
        _
      $region10: #{bert_encoder_forward.9} parent=5 // pred_check_branch
        %161 = sbr.rel (%p158) target = $region12
      $region11: #{bert_encoder_forward.9} parent=5 // pred_region
        %s162 = ssub.s32 %s9, 1
      $region12: #{bert_encoder_forward.9} parent=5 // pred_fallthru
        _
      %p163 = scmp.lt.s32.totalorder %s9, 2
      // Predicated region
      $region13: #{bert_encoder_forward.9} parent=5 // pred_check
        %p164 = pneg %p163
      $region14: #{bert_encoder_forward.9} parent=5 // pred_check_branch
        %166 = sbr.rel (%p164) target = $region16
      $region15: #{bert_encoder_forward.9} parent=5 // pred_region
        // Predicated region
        $region17: #{bert_encoder_forward.9} parent=15 // pred_check
          %p167 = pneg %p50
        $region18: #{bert_encoder_forward.9} parent=15 // pred_check_branch
          %169 = sbr.rel (%p167) target = $region20
        $region19: #{bert_encoder_forward.9} parent=15 // pred_region
          %s170 = sand.u32 %s40, 1
          %s171 = sand.u32 %s40, 1
          %s172 = smul.addr %s171, 16
          %s173 = scalar_lea.vmem [#allocation5], %s172
          %s174 = smul.u32 2, %s16
          %s175 = smul.addr %s174, 3
          %s176 = sadd.s32 %s17, %s175
          %s177 = smul.addr %s176, 8
          %s178 = scalar_lea.vmem %s0, %s177
          // Predicated region
          $region21: #{bert_encoder_forward.9} parent=19 // pred_check
            _
          $region22: #{bert_encoder_forward.9} parent=19 // pred_check_branch
            %180 = sbr.rel (0) target = $region24
          $region23: #{bert_encoder_forward.9} parent=19 // pred_region
            // Predicated region
            $region25: #{bert_encoder_forward.9} parent=23 // pred_check
              _
            $region26: #{bert_encoder_forward.9} parent=23 // pred_check_branch
              %182 = sbr.rel (0) target = $region28
            $region27: #{bert_encoder_forward.9} parent=23 // pred_region
              // Predicated region
              $region40: #{bert_encoder_forward.9} parent=27 // pred_check
                _
              $region41: #{bert_encoder_forward.9} parent=27 // pred_check_branch
                %199 = sbr.rel (0) target = $region43
              $region42: #{bert_encoder_forward.9} parent=27 // pred_region
                loop: start=0, step=1, limit=1
                $region44: #{bert_encoder_forward.9} parent=42 // loop_pre_header
                  _
                $region45: #{bert_encoder_forward.9} parent=42 // loop_header
                  %s201 = sphi 0, %s205
                  %p202 = scmp.ge.s32.totalorder %s201, 1
                  %s206 = sphi %s178, %s178
                  %s207 = sphi %s173, %s173
                $region46: #{bert_encoder_forward.9} parent=42 // loop_header_branch
                  %204 = sbr.rel (%p202) target = $region50
                $region47: #{bert_encoder_forward.9} parent=42 // loop_body
                  %v208 = vld [vmem:[%s206] sm:$0xff]
                  %209 = vst [vmem:[%s207] sm:$0xff] %v208
                  %v210 = vld [vmem:[%s206 + $0x18] sm:$0xff]
                  %211 = vst [vmem:[%s207 + $0x8] sm:$0xff] %v210
                $region48: #{bert_encoder_forward.9} parent=42 // loop_footer
                  %s205 = sadd.s32 1, %s201
                $region49: #{bert_encoder_forward.9} parent=42 // loop_footer_branch
                  %200 = sbr.rel target = $region45
                $region50: #{bert_encoder_forward.9} parent=42 // loop_exit
                  _
              $region43: #{bert_encoder_forward.9} parent=27 // pred_fallthru
                _
              // Predicated region
              $region51: #{bert_encoder_forward.9} parent=27 // pred_check
                _
              $region52: #{bert_encoder_forward.9} parent=27 // pred_check_branch
                %213 = sbr.rel target = $region54
              $region53: #{bert_encoder_forward.9} parent=27 // pred_region
                _
              $region54: #{bert_encoder_forward.9} parent=27 // pred_fallthru
                _
            $region28: #{bert_encoder_forward.9} parent=23 // pred_fallthru
              _
            // Predicated region
            $region29: #{bert_encoder_forward.9} parent=23 // pred_check
              _
            $region30: #{bert_encoder_forward.9} parent=23 // pred_check_branch
              %184 = sbr.rel target = $region32
            $region31: #{bert_encoder_forward.9} parent=23 // pred_region
              loop: start=0, step=1, limit=1
              $region33: #{bert_encoder_forward.9} parent=31 // loop_pre_header
                _
              $region34: #{bert_encoder_forward.9} parent=31 // loop_header
                %s187 = sphi 0, %s191
                %p188 = scmp.ge.s32.totalorder %s187, 1
                %s192 = sphi %s178, %s178
                %s193 = sphi %s173, %s173
              $region35: #{bert_encoder_forward.9} parent=31 // loop_header_branch
                %190 = sbr.rel (%p188) target = $region39
              $region36: #{bert_encoder_forward.9} parent=31 // loop_body
                %v194 = vld [vmem:[%s192] sm:$0xff]
                %195 = vst [vmem:[%s193] sm:$0xff] %v194
                %v196 = vld [vmem:[%s192 + $0x18] sm:$0xff]
                %197 = vst [vmem:[%s193 + $0x8] sm:$0xff] %v196
              $region37: #{bert_encoder_forward.9} parent=31 // loop_footer
                %s191 = sadd.s32 1, %s187
              $region38: #{bert_encoder_forward.9} parent=31 // loop_footer_branch
                %186 = sbr.rel target = $region34
              $region39: #{bert_encoder_forward.9} parent=31 // loop_exit
                _
            $region32: #{bert_encoder_forward.9} parent=23 // pred_fallthru
              _
          $region24: #{bert_encoder_forward.9} parent=19 // pred_fallthru
            _
          %214 = vnop
        $region20: #{bert_encoder_forward.9} parent=15 // pred_fallthru
          _
        // Predicated region
        $region55: #{bert_encoder_forward.9} parent=15 // pred_check
          %p215 = pneg %p82
        $region56: #{bert_encoder_forward.9} parent=15 // pred_check_branch
          %217 = sbr.rel (%p215) target = $region58
        $region57: #{bert_encoder_forward.9} parent=15 // pred_region
          %s218 = sand.u32 %s72, 1
          %s219 = sand.u32 %s72, 1
          %s220 = smul.addr %s219, 16
          %s221 = scalar_lea.vmem [#allocation6], %s220
          %s222 = sadd.s32 %s16, %s18
          %s223 = sadd.s32 %s17, 1
          %s224 = smul.u32 2, %s222
          %s225 = smul.addr %s224, 3
          %s226 = sadd.s32 %s223, %s225
          %s227 = smul.addr %s226, 8
          %s228 = scalar_lea.vmem %s1, %s227
          // Predicated region
          $region59: #{bert_encoder_forward.9} parent=57 // pred_check
            _
          $region60: #{bert_encoder_forward.9} parent=57 // pred_check_branch
            %230 = sbr.rel (0) target = $region62
          $region61: #{bert_encoder_forward.9} parent=57 // pred_region
            // Predicated region
            $region63: #{bert_encoder_forward.9} parent=61 // pred_check
              _
            $region64: #{bert_encoder_forward.9} parent=61 // pred_check_branch
              %232 = sbr.rel (0) target = $region66
            $region65: #{bert_encoder_forward.9} parent=61 // pred_region
              // Predicated region
              $region78: #{bert_encoder_forward.9} parent=65 // pred_check
                _
              $region79: #{bert_encoder_forward.9} parent=65 // pred_check_branch
                %249 = sbr.rel (0) target = $region81
              $region80: #{bert_encoder_forward.9} parent=65 // pred_region
                loop: start=0, step=1, limit=1
                $region82: #{bert_encoder_forward.9} parent=80 // loop_pre_header
                  _
                $region83: #{bert_encoder_forward.9} parent=80 // loop_header
                  %s251 = sphi 0, %s255
                  %p252 = scmp.ge.s32.totalorder %s251, 1
                  %s256 = sphi %s228, %s228
                  %s257 = sphi %s221, %s221
                $region84: #{bert_encoder_forward.9} parent=80 // loop_header_branch
                  %254 = sbr.rel (%p252) target = $region88
                $region85: #{bert_encoder_forward.9} parent=80 // loop_body
                  %v258 = vld [vmem:[%s256] sm:$0xff]
                  %259 = vst [vmem:[%s257] sm:$0xff] %v258
                  %v260 = vld [vmem:[%s256 + $0x18] sm:$0xff]
                  %261 = vst [vmem:[%s257 + $0x8] sm:$0xff] %v260
                $region86: #{bert_encoder_forward.9} parent=80 // loop_footer
                  %s255 = sadd.s32 1, %s251
                $region87: #{bert_encoder_forward.9} parent=80 // loop_footer_branch
                  %250 = sbr.rel target = $region83
                $region88: #{bert_encoder_forward.9} parent=80 // loop_exit
                  _
              $region81: #{bert_encoder_forward.9} parent=65 // pred_fallthru
                _
              // Predicated region
              $region89: #{bert_encoder_forward.9} parent=65 // pred_check
                _
              $region90: #{bert_encoder_forward.9} parent=65 // pred_check_branch
                %263 = sbr.rel target = $region92
              $region91: #{bert_encoder_forward.9} parent=65 // pred_region
                _
              $region92: #{bert_encoder_forward.9} parent=65 // pred_fallthru
                _
            $region66: #{bert_encoder_forward.9} parent=61 // pred_fallthru
              _
            // Predicated region
            $region67: #{bert_encoder_forward.9} parent=61 // pred_check
              _
            $region68: #{bert_encoder_forward.9} parent=61 // pred_check_branch
              %234 = sbr.rel target = $region70
            $region69: #{bert_encoder_forward.9} parent=61 // pred_region
              loop: start=0, step=1, limit=1
              $region71: #{bert_encoder_forward.9} parent=69 // loop_pre_header
                _
              $region72: #{bert_encoder_forward.9} parent=69 // loop_header
                %s237 = sphi 0, %s241
                %p238 = scmp.ge.s32.totalorder %s237, 1
                %s242 = sphi %s228, %s228
                %s243 = sphi %s221, %s221
              $region73: #{bert_encoder_forward.9} parent=69 // loop_header_branch
                %240 = sbr.rel (%p238) target = $region77
              $region74: #{bert_encoder_forward.9} parent=69 // loop_body
                %v244 = vld [vmem:[%s242] sm:$0xff]
                %245 = vst [vmem:[%s243] sm:$0xff] %v244
                %v246 = vld [vmem:[%s242 + $0x18] sm:$0xff]
                %247 = vst [vmem:[%s243 + $0x8] sm:$0xff] %v246
              $region75: #{bert_encoder_forward.9} parent=69 // loop_footer
                %s241 = sadd.s32 1, %s237
              $region76: #{bert_encoder_forward.9} parent=69 // loop_footer_branch
                %236 = sbr.rel target = $region72
              $region77: #{bert_encoder_forward.9} parent=69 // loop_exit
                _
            $region70: #{bert_encoder_forward.9} parent=61 // pred_fallthru
              _
          $region62: #{bert_encoder_forward.9} parent=57 // pred_fallthru
            _
          %264 = vnop
        $region58: #{bert_encoder_forward.9} parent=15 // pred_fallthru
          _
        // Predicated region
        $region93: #{bert_encoder_forward.9} parent=15 // pred_check
          %p265 = pneg %p114
        $region94: #{bert_encoder_forward.9} parent=15 // pred_check_branch
          %267 = sbr.rel (%p265) target = $region96
        $region95: #{bert_encoder_forward.9} parent=15 // pred_region
          %s268 = sand.u32 %s104, 1
          %s269 = sand.u32 %s104, 1
          %s270 = smul.addr %s269, 16
          %s271 = scalar_lea.vmem [#allocation7], %s270
          %s272 = sadd.s32 %s16, %s18
          %s273 = sadd.s32 %s17, 2
          %s274 = smul.u32 2, %s272
          %s275 = smul.addr %s274, 3
          %s276 = sadd.s32 %s273, %s275
          %s277 = smul.addr %s276, 8
          %s278 = scalar_lea.vmem %s2, %s277
          // Predicated region
          $region97: #{bert_encoder_forward.9} parent=95 // pred_check
            _
          $region98: #{bert_encoder_forward.9} parent=95 // pred_check_branch
            %280 = sbr.rel (0) target = $region100
          $region99: #{bert_encoder_forward.9} parent=95 // pred_region
            // Predicated region
            $region101: #{bert_encoder_forward.9} parent=99 // pred_check
              _
            $region102: #{bert_encoder_forward.9} parent=99 // pred_check_branch
              %282 = sbr.rel (0) target = $region104
            $region103: #{bert_encoder_forward.9} parent=99 // pred_region
              // Predicated region
              $region116: #{bert_encoder_forward.9} parent=103 // pred_check
                _
              $region117: #{bert_encoder_forward.9} parent=103 // pred_check_branch
                %299 = sbr.rel (0) target = $region119
              $region118: #{bert_encoder_forward.9} parent=103 // pred_region
                loop: start=0, step=1, limit=1
                $region120: #{bert_encoder_forward.9} parent=118 // loop_pre_header
                  _
                $region121: #{bert_encoder_forward.9} parent=118 // loop_header
                  %s301 = sphi 0, %s305
                  %p302 = scmp.ge.s32.totalorder %s301, 1
                  %s306 = sphi %s278, %s278
                  %s307 = sphi %s271, %s271
                $region122: #{bert_encoder_forward.9} parent=118 // loop_header_branch
                  %304 = sbr.rel (%p302) target = $region126
                $region123: #{bert_encoder_forward.9} parent=118 // loop_body
                  %v308 = vld [vmem:[%s306] sm:$0xff]
                  %309 = vst [vmem:[%s307] sm:$0xff] %v308
                  %v310 = vld [vmem:[%s306 + $0x18] sm:$0xff]
                  %311 = vst [vmem:[%s307 + $0x8] sm:$0xff] %v310
                $region124: #{bert_encoder_forward.9} parent=118 // loop_footer
                  %s305 = sadd.s32 1, %s301
                $region125: #{bert_encoder_forward.9} parent=118 // loop_footer_branch
                  %300 = sbr.rel target = $region121
                $region126: #{bert_encoder_forward.9} parent=118 // loop_exit
                  _
              $region119: #{bert_encoder_forward.9} parent=103 // pred_fallthru
                _
              // Predicated region
              $region127: #{bert_encoder_forward.9} parent=103 // pred_check
                _
              $region128: #{bert_encoder_forward.9} parent=103 // pred_check_branch
                %313 = sbr.rel target = $region130
              $region129: #{bert_encoder_forward.9} parent=103 // pred_region
                _
              $region130: #{bert_encoder_forward.9} parent=103 // pred_fallthru
                _
            $region104: #{bert_encoder_forward.9} parent=99 // pred_fallthru
              _
            // Predicated region
            $region105: #{bert_encoder_forward.9} parent=99 // pred_check
              _
            $region106: #{bert_encoder_forward.9} parent=99 // pred_check_branch
              %284 = sbr.rel target = $region108
            $region107: #{bert_encoder_forward.9} parent=99 // pred_region
              loop: start=0, step=1, limit=1
              $region109: #{bert_encoder_forward.9} parent=107 // loop_pre_header
                _
              $region110: #{bert_encoder_forward.9} parent=107 // loop_header
                %s287 = sphi 0, %s291
                %p288 = scmp.ge.s32.totalorder %s287, 1
                %s292 = sphi %s278, %s278
                %s293 = sphi %s271, %s271
              $region111: #{bert_encoder_forward.9} parent=107 // loop_header_branch
                %290 = sbr.rel (%p288) target = $region115
              $region112: #{bert_encoder_forward.9} parent=107 // loop_body
                %v294 = vld [vmem:[%s292] sm:$0xff]
                %295 = vst [vmem:[%s293] sm:$0xff] %v294
                %v296 = vld [vmem:[%s292 + $0x18] sm:$0xff]
                %297 = vst [vmem:[%s293 + $0x8] sm:$0xff] %v296
              $region113: #{bert_encoder_forward.9} parent=107 // loop_footer
                %s291 = sadd.s32 1, %s287
              $region114: #{bert_encoder_forward.9} parent=107 // loop_footer_branch
                %286 = sbr.rel target = $region110
              $region115: #{bert_encoder_forward.9} parent=107 // loop_exit
                _
            $region108: #{bert_encoder_forward.9} parent=99 // pred_fallthru
              _
          $region100: #{bert_encoder_forward.9} parent=95 // pred_fallthru
            _
          %314 = vnop
        $region96: #{bert_encoder_forward.9} parent=15 // pred_fallthru
          _
      $region16: #{bert_encoder_forward.9} parent=5 // pred_fallthru
        _
      %p315 = scmp.le.s32.totalorder 1, %s9
      %p316 = scmp.lt.s32.totalorder %s9, 3
      %p317 = pnand %p315, %p316
      %p318 = pneg %p317
      // Predicated region
      $region131: #{bert_encoder_forward.9} parent=5 // pred_check
        _
      $region132: #{bert_encoder_forward.9} parent=5 // pred_check_branch
        %320 = sbr.rel (%p317) target = $region134
      $region133: #{bert_encoder_forward.9} parent=5 // pred_region
        %s321 = ssub.s32 %s9, 1
        %s322 = sand.u32 %s43, 1
        %s323 = sand.u32 %s43, 1
        %s324 = smul.addr %s323, 16
        %s325 = scalar_lea.vmem [#allocation5], %s324
        // Predicated region
        $region135: #{bert_encoder_forward.9} parent=133 // pred_check
          %p326 = pneg %p56
        $region136: #{bert_encoder_forward.9} parent=133 // pred_check_branch
          %328 = sbr.rel (%p326) target = $region138
        $region137: #{bert_encoder_forward.9} parent=133 // pred_region
          _
        $region138: #{bert_encoder_forward.9} parent=133 // pred_fallthru
          _
        %s329 = sand.u32 %s75, 1
        %s330 = sand.u32 %s75, 1
        %s331 = smul.addr %s330, 16
        %s332 = scalar_lea.vmem [#allocation6], %s331
        // Predicated region
        $region139: #{bert_encoder_forward.9} parent=133 // pred_check
          %p333 = pneg %p88
        $region140: #{bert_encoder_forward.9} parent=133 // pred_check_branch
          %335 = sbr.rel (%p333) target = $region142
        $region141: #{bert_encoder_forward.9} parent=133 // pred_region
          _
        $region142: #{bert_encoder_forward.9} parent=133 // pred_fallthru
          _
        %s336 = sand.u32 %s107, 1
        %s337 = sand.u32 %s107, 1
        %s338 = smul.addr %s337, 16
        %s339 = scalar_lea.vmem [#allocation7], %s338
        // Predicated region
        $region143: #{bert_encoder_forward.9} parent=133 // pred_check
          %p340 = pneg %p120
        $region144: #{bert_encoder_forward.9} parent=133 // pred_check_branch
          %342 = sbr.rel (%p340) target = $region146
        $region145: #{bert_encoder_forward.9} parent=133 // pred_region
          _
        $region146: #{bert_encoder_forward.9} parent=133 // pred_fallthru
          _
        %s343 = sand.u32 %s43, 1
        %s344 = sand.u32 %s43, 1
        %s345 = smul.addr %s344, 16
        %s346 = scalar_lea.vmem [#allocation5], %s345
        %p347 = pneg %p56
        %p348 = pneg %p53
        %s349 = sand.u32 %s75, 1
        %s350 = sand.u32 %s75, 1
        %s351 = smul.addr %s350, 16
        %s352 = scalar_lea.vmem [#allocation6], %s351
        %p353 = pneg %p88
        %p354 = pneg %p85
        %s355 = sand.u32 %s107, 1
        %s356 = sand.u32 %s107, 1
        %s357 = smul.addr %s356, 16
        %s358 = scalar_lea.vmem [#allocation7], %s357
        %p359 = pneg %p120
        %p360 = pneg %p117
        %p361 = pneg %p148
        %p362 = pneg %p145
        %s363 = smul.u32 2, %s19
        %p364 = scmp.lt.s32.totalorder %s363, 3
        %s365 = scalar_select %p364, %s363, 3
        %p366 = scmp.lt.s32.totalorder %s20, 0
        %s367 = scalar_select %p366, %s20, 0
        %s368 = sadd.s32 %s367, %s365
        %s369 = smul.addr %s368, 8
        %s370 = scalar_lea.vmem %s3, %s369
        %s371 = smul.u32 2, %s19
        %s372 = sadd.s32 %s19, %s21
        %s373 = sadd.s32 %s20, 1
        %s374 = smul.u32 2, %s372
        %s375 = sadd.s32 %s19, %s21
        %s376 = sadd.s32 %s20, 2
        %s377 = smul.u32 2, %s375
        %s378 = smul.u32 2, %s19
        %p379 = scmp.lt.s32.totalorder %s378, 3
        %s380 = scalar_select %p379, %s378, 3
        %p381 = scmp.lt.s32.totalorder %s20, 0
        %s382 = scalar_select %p381, %s20, 0
        %s383 = sadd.s32 %s382, %s380
        %s384 = smul.addr %s383, 8
        %s385 = scalar_lea.vmem %s3, %s384
        %s386 = smul.u32 2, %s19
        %p387 = scmp.eq.s32.totalorder %s21, 0
        // Predicated region
        $region147: #{bert_encoder_forward.9} parent=133 // pred_check
          %p388 = pneg %p387
        $region148: #{bert_encoder_forward.9} parent=133 // pred_check_branch
          %390 = sbr.rel (%p388) target = $region150
        $region149: #{bert_encoder_forward.9} parent=133 // pred_region
          %vm391 = vcmask 7168
          %392 = vst.msk [vmem:[#allocation2] sm:$0xff] %vm391, -1e+30
          %393 = vst.msk [vmem:[#allocation2 + $0x8] sm:$0xff] %vm391, -1e+30
          %394 = vst.msk [vmem:[#allocation2 + $0x10] sm:$0xff] %vm391, -1e+30
          %395 = vst.msk [vmem:[#allocation2 + $0x18] sm:$0xff] %vm391, -1e+30
          %396 = vst.msk [vmem:[#allocation3] sm:$0xff] %vm391, 0.0
          %397 = vst.msk [vmem:[#allocation3 + $0x8] sm:$0xff] %vm391, 0.0
          %398 = vst.msk [vmem:[#allocation3 + $0x10] sm:$0xff] %vm391, 0.0
          %399 = vst.msk [vmem:[#allocation3 + $0x18] sm:$0xff] %vm391, 0.0
          %vm400 = vcmask 523264
          %401 = vst.msk [vmem:[#allocation4] sm:$0xff] %vm400, 0.0
          %402 = vst.msk [vmem:[#allocation4 + $0x8] sm:$0xff] %vm400, 0.0
          %403 = vst.msk [vmem:[#allocation4 + $0x10] sm:$0xff] %vm400, 0.0
          %404 = vst.msk [vmem:[#allocation4 + $0x18] sm:$0xff] %vm400, 0.0
        $region150: #{bert_encoder_forward.9} parent=133 // pred_fallthru
          _
        %v405 = vld [vmem:[%s325] sm:$0xff]
        %v406 = vld [vmem:[%s325 + $0x8] sm:$0xff]
        %v407 = vmul.f32 %v405, 0.125
        %v408 = vmul.f32 %v406, 0.125
        %v409 = vld [vmem:[%s332] sm:$0xff]
        %v410 = vld [vmem:[%s332 + $0x8] sm:$0xff]
        %v411 = vld [vmem:[%s339] sm:$0xff]
        %v412 = vld [vmem:[%s339 + $0x8] sm:$0xff]
        %vm413 = vcmask 523264
        %v415 = vsel %vm413, %v407, 0
        %v418 = vsel %vm413, %v408, 0
        %v421 = vsel %vm413, %v409, 0
        %v424 = vsel %vm413, %v410, 0
        %426 = vmatprep.subr.mxu0 0.0
        %427 = vmatpush1.xpose.msra.mxu0 %v421
        %428 = vmatprep.subr.mxu0 0.0
        %429 = vmatpush1.xpose.msra.mxu0 %v424
        %430 = vmatprep.subr.mxu0 0.0
        %431 = vmatpush1.xpose.msra.mxu0 0.0
        %432 = vmatprep.subr.mxu0 0.0
        %433 = vmatpush1.xpose.msra.mxu0 0.0
        %434 = vmatprep.subr.mxu0 0.0
        %435 = vmatpush1.xpose.msra.mxu0 0.0
        %436 = vmatprep.subr.mxu0 0.0
        %437 = vmatpush1.xpose.msra.mxu0 0.0
        %438 = vmatprep.subr.mxu0 0.0
        %439 = vmatpush1.xpose.msra.mxu0 0.0
        %440 = vmatprep.subr.mxu0 0.0
        %441 = vmatpush1.xpose.msra.mxu0 0.0
        %442 = vmatprep.subr.mxu0 0.0
        %443 = vmatpush1.xpose.msra.mxu0 0.0
        %444 = vmatprep.subr.mxu0 0.0
        %445 = vmatpush1.xpose.msra.mxu0 0.0
        %446 = vmatprep.subr.mxu0 0.0
        %447 = vmatpush1.xpose.msra.mxu0 0.0
        %448 = vmatprep.subr.mxu0 0.0
        %449 = vmatpush1.xpose.msra.mxu0 0.0
        %450 = vmatprep.subr.mxu0 0.0
        %451 = vmatpush1.xpose.msra.mxu0 0.0
        %452 = vmatprep.subr.mxu0 0.0
        %453 = vmatpush1.xpose.msra.mxu0 0.0
        %454 = vmatprep.subr.mxu0 0.0
        %455 = vmatpush1.xpose.msra.mxu0 0.0
        %456 = vmatprep.subr.mxu0 0.0
        %457 = vmatpush1.xpose.msra.mxu0 0.0
        %458 = vmatprep.subr.mxu0 0.0
        %459 = vmatpush1.xpose.msra.mxu0 0.0
        %460 = vmatprep.subr.mxu0 0.0
        %461 = vmatpush1.xpose.msra.mxu0 0.0
        %462 = vmatprep.subr.mxu0 0.0
        %463 = vmatpush1.xpose.msra.mxu0 0.0
        %464 = vmatprep.subr.mxu0 0.0
        %465 = vmatpush1.xpose.msra.mxu0 0.0
        %466 = vmatprep.subr.mxu0 0.0
        %467 = vmatpush1.xpose.msra.mxu0 0.0
        %468 = vmatprep.subr.mxu0 0.0
        %469 = vmatpush1.xpose.msra.mxu0 0.0
        %470 = vmatprep.subr.mxu0 0.0
        %471 = vmatpush1.xpose.msra.mxu0 0.0
        %472 = vmatprep.subr.mxu0 0.0
        %473 = vmatpush1.xpose.msra.mxu0 0.0
        %474 = vmatprep.subr.mxu0 0.0
        %475 = vmatpush1.xpose.msra.mxu0 0.0
        %476 = vmatprep.subr.mxu0 0.0
        %477 = vmatpush1.xpose.msra.mxu0 0.0
        %478 = vmatprep.subr.mxu0 0.0
        %479 = vmatpush1.xpose.msra.mxu0 0.0
        %480 = vmatprep.subr.mxu0 0.0
        %481 = vmatpush1.xpose.msra.mxu0 0.0
        %482 = vmatprep.subr.mxu0 0.0
        %483 = vmatpush1.xpose.msra.mxu0 0.0
        %484 = vmatprep.subr.mxu0 0.0
        %485 = vmatpush1.xpose.msra.mxu0 0.0
        %486 = vmatprep.subr.mxu0 0.0
        %487 = vmatpush1.xpose.msra.mxu0 0.0
        %488 = vmatprep.subr.mxu0 0.0
        %489 = vmatpush1.xpose.msra.mxu0 0.0
        %490 = vmatprep.mubr.f32.mxu0 0.0
        %491 = vmatmul.mubr.f32.gmra.mrb[0].mxu0 %v415
        %v492 = vpop.f32.mrb[0].mxu0
        %v493 = vadd.f32 0.0, %v492
        %v494 = vpop.f32.mrb[0].mxu0
        %495 = vmatprep.mubr.f32.mxu0 0.0
        %496 = vmatmul.mubr.f32.gmra.mrb[0].mxu0 %v418
        %v497 = vpop.f32.mrb[0].mxu0
        %v498 = vadd.f32 0.0, %v497
        %v499 = vpop.f32.mrb[0].mxu0
        %500 = vdwg.mxu0
        %v501 = vld [vmem:[#allocation2] sm:$0xff]
        %v502 = vld [vmem:[#allocation2 + $0x8] sm:$0xff]
        %vm503 = vcmask 130048
        %v504 = vsel %vm503, %v493, -inf
        %505 = vmax.xlane.f32.xlu0 %v504
        %v506 = vpop.xlane.xlu0 %505
        %v507 = vsel %vm503, %v498, -inf
        %508 = vmax.xlane.f32.xlu0 %v507
        %v509 = vpop.xlane.xlu0 %508
        %v510 = vmax.f32 %v501, %v506
        %v511 = vmax.f32 %v502, %v509
        %v512 = vsub.f32 %v501, %v510
        %v513 = vsub.f32 %v502, %v511
        %v514 = vmul.f32 %v512, 1.442695
        %v515 = vpow.pop %v514
        %v516 = vmul.f32 %v513, 1.442695
        %v517 = vpow.pop %v516
        %519 = vset.pattern.permute.xlu0 0
        %520 = vperm.xlu0 %519, %v510
        %v521 = vpop.permute.xlu0 %520
        %524 = vset.pattern.permute.xlu0 0
        %525 = vperm.xlu0 %524, %v511
        %v526 = vpop.permute.xlu0 %525
        %v528 = vsub.f32 %v493, %v521
        %v529 = vsub.f32 %v498, %v526
        %v530 = vmul.f32 %v528, 1.442695
        %v531 = vpow.pop %v530
        %v532 = vmul.f32 %v529, 1.442695
        %v533 = vpow.pop %v532
        %v534 = vld [vmem:[#allocation3] sm:$0xff]
        %v535 = vld [vmem:[#allocation3 + $0x8] sm:$0xff]
        %v536 = vmul.f32 %v515, %v534
        %v537 = vmul.f32 %v517, %v535
        %v538 = vsel %vm503, %v531, 0.0
        %539 = vadd.xlane.f32.xlu0 %v538
        %v540 = vpop.xlane.xlu0 %539
        %v541 = vsel %vm503, %v533, 0.0
        %542 = vadd.xlane.f32.xlu0 %v541
        %v543 = vpop.xlane.xlu0 %542
        %v544 = vadd.f32 %v536, %v540
        %v545 = vadd.f32 %v537, %v543
        %vm546 = vcmask 7168
        %547 = vst.msk [vmem:[#allocation3] sm:$0xff] %vm546, %v544
        %548 = vst.msk [vmem:[#allocation3 + $0x8] sm:$0xff] %vm546, %v545
        %v549 = vld [vmem:[#allocation4] sm:$0xff]
        %v550 = vld [vmem:[#allocation4 + $0x8] sm:$0xff]
        %552 = vset.pattern.permute.xlu0 0
        %553 = vperm.xlu0 %552, %v515
        %v554 = vpop.permute.xlu0 %553
        %557 = vset.pattern.permute.xlu0 0
        %558 = vperm.xlu0 %557, %v517
        %v559 = vpop.permute.xlu0 %558
        %v561 = vmul.f32 %v554, %v549
        %v562 = vmul.f32 %v559, %v550
        %v564 = vsel %vm503, %v531, 0
        %v567 = vsel %vm503, %v533, 0
        %569 = vmatprep.subr.mxu0 0.0
        %570 = vmatpush1.msra.mxu0 %v411
        %571 = vmatprep.subr.mxu0 0.0
        %572 = vmatpush1.msra.mxu0 %v412
        %573 = vmatprep.subr.mxu0 0.0
        %574 = vmatpush1.msra.mxu0 0.0
        %575 = vmatprep.subr.mxu0 0.0
        %576 = vmatpush1.msra.mxu0 0.0
        %577 = vmatprep.subr.mxu0 0.0
        %578 = vmatpush1.msra.mxu0 0.0
        %579 = vmatprep.subr.mxu0 0.0
        %580 = vmatpush1.msra.mxu0 0.0
        %581 = vmatprep.subr.mxu0 0.0
        %582 = vmatpush1.msra.mxu0 0.0
        %583 = vmatprep.subr.mxu0 0.0
        %584 = vmatpush1.msra.mxu0 0.0
        %585 = vmatprep.subr.mxu0 0.0
        %586 = vmatpush1.msra.mxu0 0.0
        %587 = vmatprep.subr.mxu0 0.0
        %588 = vmatpush1.msra.mxu0 0.0
        %589 = vmatprep.subr.mxu0 0.0
        %590 = vmatpush1.msra.mxu0 0.0
        %591 = vmatprep.subr.mxu0 0.0
        %592 = vmatpush1.msra.mxu0 0.0
        %593 = vmatprep.subr.mxu0 0.0
        %594 = vmatpush1.msra.mxu0 0.0
        %595 = vmatprep.subr.mxu0 0.0
        %596 = vmatpush1.msra.mxu0 0.0
        %597 = vmatprep.subr.mxu0 0.0
        %598 = vmatpush1.msra.mxu0 0.0
        %599 = vmatprep.subr.mxu0 0.0
        %600 = vmatpush1.msra.mxu0 0.0
        %601 = vmatprep.subr.mxu0 0.0
        %602 = vmatpush1.msra.mxu0 0.0
        %603 = vmatprep.subr.mxu0 0.0
        %604 = vmatpush1.msra.mxu0 0.0
        %605 = vmatprep.subr.mxu0 0.0
        %606 = vmatpush1.msra.mxu0 0.0
        %607 = vmatprep.subr.mxu0 0.0
        %608 = vmatpush1.msra.mxu0 0.0
        %609 = vmatprep.subr.mxu0 0.0
        %610 = vmatpush1.msra.mxu0 0.0
        %611 = vmatprep.subr.mxu0 0.0
        %612 = vmatpush1.msra.mxu0 0.0
        %613 = vmatprep.subr.mxu0 0.0
        %614 = vmatpush1.msra.mxu0 0.0
        %615 = vmatprep.subr.mxu0 0.0
        %616 = vmatpush1.msra.mxu0 0.0
        %617 = vmatprep.subr.mxu0 0.0
        %618 = vmatpush1.msra.mxu0 0.0
        %619 = vmatprep.subr.mxu0 0.0
        %620 = vmatpush1.msra.mxu0 0.0
        %621 = vmatprep.subr.mxu0 0.0
        %622 = vmatpush1.msra.mxu0 0.0
        %623 = vmatprep.subr.mxu0 0.0
        %624 = vmatpush1.msra.mxu0 0.0
        %625 = vmatprep.subr.mxu0 0.0
        %626 = vmatpush1.msra.mxu0 0.0
        %627 = vmatprep.subr.mxu0 0.0
        %628 = vmatpush1.msra.mxu0 0.0
        %629 = vmatprep.subr.mxu0 0.0
        %630 = vmatpush1.msra.mxu0 0.0
        %631 = vmatprep.subr.mxu0 0.0
        %632 = vmatpush1.msra.mxu0 0.0
        %633 = vmatprep.mubr.f32.mxu0 0.0
        %634 = vmatmul.mubr.f32.gmra.mrb[0].mxu0 %v564
        %v635 = vpop.f32.mrb[0].mxu0
        %v636 = vadd.f32 0.0, %v635
        %v637 = vpop.f32.mrb[0].mxu0
        %638 = vmatprep.mubr.f32.mxu0 0.0
        %639 = vmatmul.mubr.f32.gmra.mrb[0].mxu0 %v567
        %v640 = vpop.f32.mrb[0].mxu0
        %v641 = vadd.f32 0.0, %v640
        %v642 = vpop.f32.mrb[0].mxu0
        %643 = vdwg.mxu0
        %v644 = vadd.f32 %v561, %v636
        %v645 = vadd.f32 %v562, %v641
        %646 = vst.msk [vmem:[#allocation4] sm:$0xff] %vm413, %v644
        %647 = vst.msk [vmem:[#allocation4 + $0x8] sm:$0xff] %vm413, %v645
        %648 = vst.msk [vmem:[#allocation2] sm:$0xff] %vm546, %v510
        %649 = vst.msk [vmem:[#allocation2 + $0x8] sm:$0xff] %vm546, %v511
        %v650 = vld [vmem:[%s325] sm:$0xff]
        %v651 = vld [vmem:[%s325 + $0x8] sm:$0xff]
        %v652 = vmul.f32 %v650, 0.125
        %v653 = vmul.f32 %v651, 0.125
        %v654 = vld [vmem:[%s332] sm:$0xff]
        %v655 = vld [vmem:[%s332 + $0x8] sm:$0xff]
        %v656 = vld [vmem:[%s339] sm:$0xff]
        %v657 = vld [vmem:[%s339 + $0x8] sm:$0xff]
        %660 = vrot.lane.b32.xlu0 %v652, 64
        %v661 = vpop.permute.xlu0 %660
        %662 = vrot.lane.b32.xlu0 %v653, 64
        %v663 = vpop.permute.xlu0 %662
        %666 = vrot.lane.b32.xlu0 %v654, 64
        %v667 = vpop.permute.xlu0 %666
        %668 = vrot.lane.b32.xlu0 %v655, 64
        %v669 = vpop.permute.xlu0 %668
        %v670 = vsel %vm413, %v661, 0
        %v672 = vsel %vm413, %v663, 0
        %v674 = vsel %vm413, %v667, 0
        %v676 = vsel %vm413, %v669, 0
        %678 = vmatprep.subr.mxu0 0.0
        %679 = vmatpush1.xpose.msra.mxu0 %v674
        %680 = vmatprep.subr.mxu0 0.0
        %681 = vmatpush1.xpose.msra.mxu0 %v676
        %682 = vmatprep.subr.mxu0 0.0
        %683 = vmatpush1.xpose.msra.mxu0 0.0
        %684 = vmatprep.subr.mxu0 0.0
        %685 = vmatpush1.xpose.msra.mxu0 0.0
        %686 = vmatprep.subr.mxu0 0.0
        %687 = vmatpush1.xpose.msra.mxu0 0.0
        %688 = vmatprep.subr.mxu0 0.0
        %689 = vmatpush1.xpose.msra.mxu0 0.0
        %690 = vmatprep.subr.mxu0 0.0
        %691 = vmatpush1.xpose.msra.mxu0 0.0
        %692 = vmatprep.subr.mxu0 0.0
        %693 = vmatpush1.xpose.msra.mxu0 0.0
        %694 = vmatprep.subr.mxu0 0.0
        %695 = vmatpush1.xpose.msra.mxu0 0.0
        %696 = vmatprep.subr.mxu0 0.0
        %697 = vmatpush1.xpose.msra.mxu0 0.0
        %698 = vmatprep.subr.mxu0 0.0
        %699 = vmatpush1.xpose.msra.mxu0 0.0
        %700 = vmatprep.subr.mxu0 0.0
        %701 = vmatpush1.xpose.msra.mxu0 0.0
        %702 = vmatprep.subr.mxu0 0.0
        %703 = vmatpush1.xpose.msra.mxu0 0.0
        %704 = vmatprep.subr.mxu0 0.0
        %705 = vmatpush1.xpose.msra.mxu0 0.0
        %706 = vmatprep.subr.mxu0 0.0
        %707 = vmatpush1.xpose.msra.mxu0 0.0
        %708 = vmatprep.subr.mxu0 0.0
        %709 = vmatpush1.xpose.msra.mxu0 0.0
        %710 = vmatprep.subr.mxu0 0.0
        %711 = vmatpush1.xpose.msra.mxu0 0.0
        %712 = vmatprep.subr.mxu0 0.0
        %713 = vmatpush1.xpose.msra.mxu0 0.0
        %714 = vmatprep.subr.mxu0 0.0
        %715 = vmatpush1.xpose.msra.mxu0 0.0
        %716 = vmatprep.subr.mxu0 0.0
        %717 = vmatpush1.xpose.msra.mxu0 0.0
        %718 = vmatprep.subr.mxu0 0.0
        %719 = vmatpush1.xpose.msra.mxu0 0.0
        %720 = vmatprep.subr.mxu0 0.0
        %721 = vmatpush1.xpose.msra.mxu0 0.0
        %722 = vmatprep.subr.mxu0 0.0
        %723 = vmatpush1.xpose.msra.mxu0 0.0
        %724 = vmatprep.subr.mxu0 0.0
        %725 = vmatpush1.xpose.msra.mxu0 0.0
        %726 = vmatprep.subr.mxu0 0.0
        %727 = vmatpush1.xpose.msra.mxu0 0.0
        %728 = vmatprep.subr.mxu0 0.0
        %729 = vmatpush1.xpose.msra.mxu0 0.0
        %730 = vmatprep.subr.mxu0 0.0
        %731 = vmatpush1.xpose.msra.mxu0 0.0
        %732 = vmatprep.subr.mxu0 0.0
        %733 = vmatpush1.xpose.msra.mxu0 0.0
        %734 = vmatprep.subr.mxu0 0.0
        %735 = vmatpush1.xpose.msra.mxu0 0.0
        %736 = vmatprep.subr.mxu0 0.0
        %737 = vmatpush1.xpose.msra.mxu0 0.0
        %738 = vmatprep.subr.mxu0 0.0
        %739 = vmatpush1.xpose.msra.mxu0 0.0
        %740 = vmatprep.subr.mxu0 0.0
        %741 = vmatpush1.xpose.msra.mxu0 0.0
        %742 = vmatprep.mubr.f32.mxu0 0.0
        %743 = vmatmul.mubr.f32.gmra.mrb[0].mxu0 %v670
        %v744 = vpop.f32.mrb[0].mxu0
        %v745 = vadd.f32 0.0, %v744
        %v746 = vpop.f32.mrb[0].mxu0
        %747 = vmatprep.mubr.f32.mxu0 0.0
        %748 = vmatmul.mubr.f32.gmra.mrb[0].mxu0 %v672
        %v749 = vpop.f32.mrb[0].mxu0
        %v750 = vadd.f32 0.0, %v749
        %v751 = vpop.f32.mrb[0].mxu0
        %752 = vdwg.mxu0
        %s753 = scalar_lea.vmem [#allocation2], 16
        %v754 = vld [vmem:[%s753] sm:$0xff]
        %v755 = vld [vmem:[%s753 + $0x8] sm:$0xff]
        %v756 = vsel %vm503, %v745, -inf
        %757 = vmax.xlane.f32.xlu0 %v756
        %v758 = vpop.xlane.xlu0 %757
        %v759 = vsel %vm503, %v750, -inf
        %760 = vmax.xlane.f32.xlu0 %v759
        %v761 = vpop.xlane.xlu0 %760
        %v762 = vmax.f32 %v754, %v758
        %v763 = vmax.f32 %v755, %v761
        %v764 = vsub.f32 %v754, %v762
        %v765 = vsub.f32 %v755, %v763
        %v766 = vmul.f32 %v764, 1.442695
        %v767 = vpow.pop %v766
        %v768 = vmul.f32 %v765, 1.442695
        %v769 = vpow.pop %v768
        %771 = vset.pattern.permute.xlu0 0
        %772 = vperm.xlu0 %771, %v762
        %v773 = vpop.permute.xlu0 %772
        %776 = vset.pattern.permute.xlu0 0
        %777 = vperm.xlu0 %776, %v763
        %v778 = vpop.permute.xlu0 %777
        %v780 = vsub.f32 %v745, %v773
        %v781 = vsub.f32 %v750, %v778
        %v782 = vmul.f32 %v780, 1.442695
        %v783 = vpow.pop %v782
        %v784 = vmul.f32 %v781, 1.442695
        %v785 = vpow.pop %v784
        %s786 = scalar_lea.vmem [#allocation3], 16
        %v787 = vld [vmem:[%s786] sm:$0xff]
        %v788 = vld [vmem:[%s786 + $0x8] sm:$0xff]
        %v789 = vmul.f32 %v767, %v787
        %v790 = vmul.f32 %v769, %v788
        %v791 = vsel %vm503, %v783, 0.0
        %792 = vadd.xlane.f32.xlu0 %v791
        %v793 = vpop.xlane.xlu0 %792
        %v794 = vsel %vm503, %v785, 0.0
        %795 = vadd.xlane.f32.xlu0 %v794
        %v796 = vpop.xlane.xlu0 %795
        %v797 = vadd.f32 %v789, %v793
        %v798 = vadd.f32 %v790, %v796
        %799 = vst.msk [vmem:[%s786] sm:$0xff] %vm546, %v797
        %800 = vst.msk [vmem:[%s786 + $0x8] sm:$0xff] %vm546, %v798
        %s801 = scalar_lea.vmem [#allocation4], 16
        %v802 = vld [vmem:[%s801] sm:$0xff]
        %v803 = vld [vmem:[%s801 + $0x8] sm:$0xff]
        %805 = vset.pattern.permute.xlu0 0
        %806 = vperm.xlu0 %805, %v767
        %v807 = vpop.permute.xlu0 %806
        %810 = vset.pattern.permute.xlu0 0
        %811 = vperm.xlu0 %810, %v769
        %v812 = vpop.permute.xlu0 %811
        %v814 = vmul.f32 %v807, %v802
        %v815 = vmul.f32 %v812, %v803
        %818 = vrot.lane.b32.xlu0 %v656, 64
        %v819 = vpop.permute.xlu0 %818
        %820 = vrot.lane.b32.xlu0 %v657, 64
        %v821 = vpop.permute.xlu0 %820
        %v825 = vsel %vm503, %v783, 0
        %v828 = vsel %vm503, %v785, 0
        %830 = vmatprep.subr.mxu0 0.0
        %831 = vmatpush1.msra.mxu0 %v819
        %832 = vmatprep.subr.mxu0 0.0
        %833 = vmatpush1.msra.mxu0 %v821
        %834 = vmatprep.subr.mxu0 0.0
        %835 = vmatpush1.msra.mxu0 0.0
        %836 = vmatprep.subr.mxu0 0.0
        %837 = vmatpush1.msra.mxu0 0.0
        %838 = vmatprep.subr.mxu0 0.0
        %839 = vmatpush1.msra.mxu0 0.0
        %840 = vmatprep.subr.mxu0 0.0
        %841 = vmatpush1.msra.mxu0 0.0
        %842 = vmatprep.subr.mxu0 0.0
        %843 = vmatpush1.msra.mxu0 0.0
        %844 = vmatprep.subr.mxu0 0.0
        %845 = vmatpush1.msra.mxu0 0.0
        %846 = vmatprep.subr.mxu0 0.0
        %847 = vmatpush1.msra.mxu0 0.0
        %848 = vmatprep.subr.mxu0 0.0
        %849 = vmatpush1.msra.mxu0 0.0
        %850 = vmatprep.subr.mxu0 0.0
        %851 = vmatpush1.msra.mxu0 0.0
        %852 = vmatprep.subr.mxu0 0.0
        %853 = vmatpush1.msra.mxu0 0.0
        %854 = vmatprep.subr.mxu0 0.0
        %855 = vmatpush1.msra.mxu0 0.0
        %856 = vmatprep.subr.mxu0 0.0
        %857 = vmatpush1.msra.mxu0 0.0
        %858 = vmatprep.subr.mxu0 0.0
        %859 = vmatpush1.msra.mxu0 0.0
        %860 = vmatprep.subr.mxu0 0.0
        %861 = vmatpush1.msra.mxu0 0.0
        %862 = vmatprep.subr.mxu0 0.0
        %863 = vmatpush1.msra.mxu0 0.0
        %864 = vmatprep.subr.mxu0 0.0
        %865 = vmatpush1.msra.mxu0 0.0
        %866 = vmatprep.subr.mxu0 0.0
        %867 = vmatpush1.msra.mxu0 0.0
        %868 = vmatprep.subr.mxu0 0.0
        %869 = vmatpush1.msra.mxu0 0.0
        %870 = vmatprep.subr.mxu0 0.0
        %871 = vmatpush1.msra.mxu0 0.0
        %872 = vmatprep.subr.mxu0 0.0
        %873 = vmatpush1.msra.mxu0 0.0
        %874 = vmatprep.subr.mxu0 0.0
        %875 = vmatpush1.msra.mxu0 0.0
        %876 = vmatprep.subr.mxu0 0.0
        %877 = vmatpush1.msra.mxu0 0.0
        %878 = vmatprep.subr.mxu0 0.0
        %879 = vmatpush1.msra.mxu0 0.0
        %880 = vmatprep.subr.mxu0 0.0
        %881 = vmatpush1.msra.mxu0 0.0
        %882 = vmatprep.subr.mxu0 0.0
        %883 = vmatpush1.msra.mxu0 0.0
        %884 = vmatprep.subr.mxu0 0.0
        %885 = vmatpush1.msra.mxu0 0.0
        %886 = vmatprep.subr.mxu0 0.0
        %887 = vmatpush1.msra.mxu0 0.0
        %888 = vmatprep.subr.mxu0 0.0
        %889 = vmatpush1.msra.mxu0 0.0
        %890 = vmatprep.subr.mxu0 0.0
        %891 = vmatpush1.msra.mxu0 0.0
        %892 = vmatprep.subr.mxu0 0.0
        %893 = vmatpush1.msra.mxu0 0.0
        %894 = vmatprep.mubr.f32.mxu0 0.0
        %895 = vmatmul.mubr.f32.gmra.mrb[0].mxu0 %v825
        %v896 = vpop.f32.mrb[0].mxu0
        %v897 = vadd.f32 0.0, %v896
        %v898 = vpop.f32.mrb[0].mxu0
        %899 = vmatprep.mubr.f32.mxu0 0.0
        %900 = vmatmul.mubr.f32.gmra.mrb[0].mxu0 %v828
        %v901 = vpop.f32.mrb[0].mxu0
        %v902 = vadd.f32 0.0, %v901
        %v903 = vpop.f32.mrb[0].mxu0
        %904 = vdwg.mxu0
        %v905 = vadd.f32 %v814, %v897
        %v906 = vadd.f32 %v815, %v902
        %907 = vst.msk [vmem:[%s801] sm:$0xff] %vm413, %v905
        %908 = vst.msk [vmem:[%s801 + $0x8] sm:$0xff] %vm413, %v906
        %909 = vst.msk [vmem:[%s753] sm:$0xff] %vm546, %v762
        %910 = vst.msk [vmem:[%s753 + $0x8] sm:$0xff] %vm546, %v763
        // Predicated region
        $region151: #{bert_encoder_forward.9} parent=133 // pred_check
          %p911 = pneg %p387
        $region152: #{bert_encoder_forward.9} parent=133 // pred_check_branch
          %913 = sbr.rel (%p911) target = $region154
        $region153: #{bert_encoder_forward.9} parent=133 // pred_region
          %v914 = vld [vmem:[#allocation3] sm:$0xff]
          %v915 = vld [vmem:[#allocation3 + $0x8] sm:$0xff]
          %v916 = vrcp.pop %v914
          %v917 = vrcp.pop %v915
          %v918 = vld [vmem:[#allocation4] sm:$0xff]
          %v919 = vld [vmem:[#allocation4 + $0x8] sm:$0xff]
          %921 = vset.pattern.permute.xlu0 0
          %922 = vperm.xlu0 %921, %v916
          %v923 = vpop.permute.xlu0 %922
          %926 = vset.pattern.permute.xlu0 0
          %927 = vperm.xlu0 %926, %v917
          %v928 = vpop.permute.xlu0 %927
          %v930 = vmul.f32 %v918, %v923
          %v931 = vmul.f32 %v919, %v928
          %932 = vst.msk [vmem:[%s385] sm:$0xff] %vm413, %v930
          %933 = vst.msk [vmem:[%s385 + $0x8] sm:$0xff] %vm413, %v931
          %v934 = vld [vmem:[%s786] sm:$0xff]
          %v935 = vld [vmem:[%s786 + $0x8] sm:$0xff]
          %v936 = vrcp.pop %v934
          %v937 = vrcp.pop %v935
          %v938 = vld [vmem:[%s801] sm:$0xff]
          %v939 = vld [vmem:[%s801 + $0x8] sm:$0xff]
          %941 = vset.pattern.permute.xlu0 0
          %942 = vperm.xlu0 %941, %v936
          %v943 = vpop.permute.xlu0 %942
          %946 = vset.pattern.permute.xlu0 0
          %947 = vperm.xlu0 %946, %v937
          %v948 = vpop.permute.xlu0 %947
          %v950 = vmul.f32 %v938, %v943
          %v951 = vmul.f32 %v939, %v948
          %954 = vrot.lane.b32.xlu0 %v950, 64
          %v955 = vpop.permute.xlu0 %954
          %956 = vrot.lane.b32.xlu0 %v951, 64
          %v957 = vpop.permute.xlu0 %956
          %vm960 = vcmask 1048064
          %961 = vst.msk [vmem:[%s385] sm:$0xff] %vm960, %v955
          %962 = vst.msk [vmem:[%s385 + $0x8] sm:$0xff] %vm960, %v957
        $region154: #{bert_encoder_forward.9} parent=133 // pred_fallthru
          _
        %s963 = smul.u32 2, %s19
        %p964 = scmp.lt.s32.totalorder %s963, 3
        %s965 = scalar_select %p964, %s963, 3
        %p966 = scmp.lt.s32.totalorder %s20, 0
        %s967 = scalar_select %p966, %s20, 0
        %s968 = sadd.s32 %s967, %s965
        %s969 = smul.addr %s968, 8
        %s970 = scalar_lea.vmem %s3, %s969
        // Predicated region
        $region155: #{bert_encoder_forward.9} parent=133 // pred_check
          %p971 = pneg %p145
        $region156: #{bert_encoder_forward.9} parent=133 // pred_check_branch
          %973 = sbr.rel (%p971) target = $region158
        $region157: #{bert_encoder_forward.9} parent=133 // pred_region
          %s974 = smul.u32 2, %s19
        $region158: #{bert_encoder_forward.9} parent=133 // pred_fallthru
          _
      $region134: #{bert_encoder_forward.9} parent=5 // pred_fallthru
        _
      %p975 = scmp.le.s32.totalorder 2, %s9
      // Predicated region
      $region159: #{bert_encoder_forward.9} parent=5 // pred_check
        %p976 = pneg %p975
      $region160: #{bert_encoder_forward.9} parent=5 // pred_check_branch
        %978 = sbr.rel (%p976) target = $region162
      $region161: #{bert_encoder_forward.9} parent=5 // pred_region
        %s979 = ssub.s32 %s9, 2
        // Predicated region
        $region163: #{bert_encoder_forward.9} parent=161 // pred_check
          %p980 = pneg %p151
        $region164: #{bert_encoder_forward.9} parent=161 // pred_check_branch
          %982 = sbr.rel (%p980) target = $region166
        $region165: #{bert_encoder_forward.9} parent=161 // pred_region
          %s983 = smul.u32 2, %s22
          %p984 = scmp.lt.s32.totalorder %s983, 3
          %s985 = scalar_select %p984, %s983, 3
          %p986 = scmp.lt.s32.totalorder %s23, 0
          %s987 = scalar_select %p986, %s23, 0
          %s988 = sadd.s32 %s987, %s985
          %s989 = smul.addr %s988, 8
          %s990 = scalar_lea.vmem %s3, %s989
        $region166: #{bert_encoder_forward.9} parent=161 // pred_fallthru
          _
      $region162: #{bert_encoder_forward.9} parent=5 // pred_fallthru
        _
    $region6: #{bert_encoder_forward.9} parent=1 // loop_footer
      %s13 = sadd.s32 1, %s9
    $region7: #{bert_encoder_forward.9} parent=1 // loop_footer_branch
      %8 = sbr.rel target = $region3
    $region8: #{bert_encoder_forward.9} parent=1 // loop_exit
      _

// kernel: bert_encoder_forward.12
$region0: #{bert_encoder_forward.12}
  #allocation0 [shape = 'u32[]', space=smem, size = 0x4, offset = 0x4, fixed_abs, tag = 'smem constant byte address 0x4 - core index']
  #allocation1 [shape = 'u32[144,128]{1,0:T(1,128)}', space=vmem, size = 0x12000, scoped, tag = 'internal scratch']
  #allocation2 [shape = 'f32[32,128]{1,0:T(8,128)}', space=vmem, size = 0x4000, scoped, tag = 'scratch operand']
  %s0 = inlined_call_operand.vmem [shape: f32[32,128], index: 0, kind: input, shape index: {}]
  %s1 = inlined_call_operand.vmem [shape: f32[128,384], index: 1, kind: input, shape index: {}]
  %s2 = inlined_call_operand.vmem [shape: f32[1,384], index: 2, kind: input, shape index: {}]
  %s3 = inlined_call_operand.vmem [shape: f32[32,384], index: 3, kind: output, shape index: {}]
  %s4 = sld [smem:[#allocation0]]
  $region125: #{bert_encoder_forward.12} parent=0
    _
  %s6 = ssub.s32 1, %s4
  %s7 = scalar_select 0, %s6, %s4
  $region1: #{bert_encoder_forward.12} parent=0
    #allocation3 [shape = 'u8[131072]{0}', space=vmem, size = 0x20000, scoped, tag = 'input window, operand 1']
    #allocation4 [shape = 'u8[32768]{0}', space=vmem, size = 0x8000, scoped, tag = 'output window, operand 0']
    loop: start=0, step=1, limit=5
    $region2: #{bert_encoder_forward.12} parent=1 // loop_pre_header
      _
    $region3: #{bert_encoder_forward.12} parent=1 // loop_header
      %s9 = sphi 0, %s13
      %p10 = scmp.ge.s32.totalorder %s9, 5
      %s16 = sphi 0, %s35
      %s17 = sphi 0, %s31
      %s18 = sphi 0, %s27
      %s19 = sphi 0, %s16
      %s20 = sphi 0, %s17
      %s21 = sphi 0, %s18
      %s22 = sphi 0, %s19
      %s23 = sphi 0, %s20
      %s24 = sphi 0, %s21
      %s40 = sphi 0, %s42
      %s43 = sphi 0, %s40
      %s44 = sphi 0, %s43
      %s60 = sphi 0, %s44
      %s68 = sphi 0, %s70
      %s71 = sphi 0, %s68
      %s72 = sphi 0, %s71
      %s88 = sphi 0, %s72
      %s94 = sphi 0, %s96
      %s97 = sphi 0, %s94
      %s98 = sphi 0, %s97
      %s114 = sphi 0, %s98
      %s122 = sphi 0, %s124
      %s125 = sphi 0, %s122
      %s126 = sphi 0, %s125
      %s142 = sphi 0, %s126
    $region4: #{bert_encoder_forward.12} parent=1 // loop_header_branch
      %12 = sbr.rel (%p10) target = $region8
    $region5: #{bert_encoder_forward.12} parent=1 // loop_body
      %s14 = ssub.s32 %s9, 1
      %s15 = ssub.s32 %s9, 2
      %s25 = sadd.s32 1, %s18
      %p26 = scmp.ge.s32.totalorder %s25, 1
      %s27 = scalar_select %p26, 0, %s25
      %s28 = sadd.s32 1, %s17
      %s29 = scalar_select %p26, %s28, %s17
      %p30 = scmp.ge.s32.totalorder %s29, 3
      %s31 = scalar_select %p30, 0, %s29
      %s32 = sadd.s32 1, %s16
      %s33 = scalar_select %p30, %s32, %s16
      %p34 = scmp.ge.s32.totalorder %s33, 1
      %s35 = scalar_select %p34, 0, %s33
      %s36 = ssub.s32 %s16, %s35
      %s37 = ssub.s32 %s18, %s27
      %s38 = sor.u32 %s36, %s37
      %p39 = scmp.eq.s32.totalorder %s38, 0
      %s41 = sadd.s32 %s40, 1
      %s42 = scalar_select %p39, %s40, %s41
      %p45 = pneg %p39
      %p46 = scmp.eq.s32.totalorder %s9, 2
      %p47 = por %p45, %p46
      %p48 = scmp.ne.s32.totalorder %s40, %s43
      %p49 = scmp.eq.s32.totalorder %s9, 0
      %p50 = por %p48, %p49
      %p51 = scmp.ne.s32.totalorder %s40, %s43
      %p52 = scmp.eq.s32.totalorder %s14, 2
      %p53 = por %p51, %p52
      %p54 = scmp.ne.s32.totalorder %s43, %s44
      %p55 = scmp.eq.s32.totalorder %s14, 0
      %p56 = por %p54, %p55
      %p57 = scmp.ne.s32.totalorder %s43, %s44
      %p58 = scmp.eq.s32.totalorder %s15, 2
      %p59 = por %p57, %p58
      %p61 = scmp.ne.s32.totalorder %s44, %s60
      %p62 = scmp.eq.s32.totalorder %s15, 0
      %p63 = por %p61, %p62
      %s64 = ssub.s32 %s18, %s27
      %s65 = ssub.s32 %s17, %s31
      %s66 = sor.u32 %s64, %s65
      %p67 = scmp.eq.s32.totalorder %s66, 0
      %s69 = sadd.s32 %s68, 1
      %s70 = scalar_select %p67, %s68, %s69
      %p73 = pneg %p67
      %p74 = scmp.eq.s32.totalorder %s9, 2
      %p75 = por %p73, %p74
      %p76 = scmp.ne.s32.totalorder %s68, %s71
      %p77 = scmp.eq.s32.totalorder %s9, 0
      %p78 = por %p76, %p77
      %p79 = scmp.ne.s32.totalorder %s68, %s71
      %p80 = scmp.eq.s32.totalorder %s14, 2
      %p81 = por %p79, %p80
      %p82 = scmp.ne.s32.totalorder %s71, %s72
      %p83 = scmp.eq.s32.totalorder %s14, 0
      %p84 = por %p82, %p83
      %p85 = scmp.ne.s32.totalorder %s71, %s72
      %p86 = scmp.eq.s32.totalorder %s15, 2
      %p87 = por %p85, %p86
      %p89 = scmp.ne.s32.totalorder %s72, %s88
      %p90 = scmp.eq.s32.totalorder %s15, 0
      %p91 = por %p89, %p90
      %s92 = ssub.s32 %s17, %s31
      %p93 = scmp.eq.s32.totalorder %s92, 0
      %s95 = sadd.s32 %s94, 1
      %s96 = scalar_select %p93, %s94, %s95
      %p99 = pneg %p93
      %p100 = scmp.eq.s32.totalorder %s9, 2
      %p101 = por %p99, %p100
      %p102 = scmp.ne.s32.totalorder %s94, %s97
      %p103 = scmp.eq.s32.totalorder %s9, 0
      %p104 = por %p102, %p103
      %p105 = scmp.ne.s32.totalorder %s94, %s97
      %p106 = scmp.eq.s32.totalorder %s14, 2
      %p107 = por %p105, %p106
      %p108 = scmp.ne.s32.totalorder %s97, %s98
      %p109 = scmp.eq.s32.totalorder %s14, 0
      %p110 = por %p108, %p109
      %p111 = scmp.ne.s32.totalorder %s97, %s98
      %p112 = scmp.eq.s32.totalorder %s15, 2
      %p113 = por %p111, %p112
      %p115 = scmp.ne.s32.totalorder %s98, %s114
      %p116 = scmp.eq.s32.totalorder %s15, 0
      %p117 = por %p115, %p116
      %s118 = ssub.s32 %s16, %s35
      %s119 = ssub.s32 %s17, %s31
      %s120 = sor.u32 %s118, %s119
      %p121 = scmp.eq.s32.totalorder %s120, 0
      %s123 = sadd.s32 %s122, 1
      %s124 = scalar_select %p121, %s122, %s123
      %p127 = pneg %p121
      %p128 = scmp.eq.s32.totalorder %s9, 2
      %p129 = por %p127, %p128
      %p130 = scmp.ne.s32.totalorder %s122, %s125
      %p131 = scmp.eq.s32.totalorder %s9, 0
      %p132 = por %p130, %p131
      %p133 = scmp.ne.s32.totalorder %s122, %s125
      %p134 = scmp.eq.s32.totalorder %s14, 2
      %p135 = por %p133, %p134
      %p136 = scmp.ne.s32.totalorder %s125, %s126
      %p137 = scmp.eq.s32.totalorder %s14, 0
      %p138 = por %p136, %p137
      %p139 = scmp.ne.s32.totalorder %s125, %s126
      %p140 = scmp.eq.s32.totalorder %s15, 2
      %p141 = por %p139, %p140
      %p143 = scmp.ne.s32.totalorder %s126, %s142
      %p144 = scmp.eq.s32.totalorder %s15, 0
      %p145 = por %p143, %p144
      %p146 = scmp.le.s32.totalorder 1, %s9
      %p147 = scmp.lt.s32.totalorder %s9, 4
      %p148 = pnand %p146, %p147
      %p149 = pneg %p148
      // Predicated region
      $region9: #{bert_encoder_forward.12} parent=5 // pred_check
        _
      $region10: #{bert_encoder_forward.12} parent=5 // pred_check_branch
        %151 = sbr.rel (%p148) target = $region12
      $region11: #{bert_encoder_forward.12} parent=5 // pred_region
        %s152 = ssub.s32 %s9, 1
        // Predicated region
        $region13: #{bert_encoder_forward.12} parent=11 // pred_check
          %p153 = pneg %p56
        $region14: #{bert_encoder_forward.12} parent=11 // pred_check_branch
          %155 = sbr.rel (%p153) target = $region16
        $region15: #{bert_encoder_forward.12} parent=11 // pred_region
          %s156 = smul.u32 4, %s19
          %p157 = scmp.lt.s32.totalorder %s156, 3
          %s158 = scalar_select %p157, %s156, 3
          %p159 = scmp.lt.s32.totalorder %s21, 0
          %s160 = scalar_select %p159, %s21, 0
          %s161 = sadd.s32 %s160, %s158
          %s162 = smul.addr %s161, 8
          %s163 = scalar_lea.vmem %s0, %s162
          %s164 = smul.u32 4, %s19
        $region16: #{bert_encoder_forward.12} parent=11 // pred_fallthru
          _
      $region12: #{bert_encoder_forward.12} parent=5 // pred_fallthru
        _
      %p165 = scmp.lt.s32.totalorder %s9, 3
      // Predicated region
      $region17: #{bert_encoder_forward.12} parent=5 // pred_check
        %p166 = pneg %p165
      $region18: #{bert_encoder_forward.12} parent=5 // pred_check_branch
        %168 = sbr.rel (%p166) target = $region20
      $region19: #{bert_encoder_forward.12} parent=5 // pred_region
        // Predicated region
        $region21: #{bert_encoder_forward.12} parent=19 // pred_check
          %p169 = pneg %p78
        $region22: #{bert_encoder_forward.12} parent=19 // pred_check_branch
          %171 = sbr.rel (%p169) target = $region24
        $region23: #{bert_encoder_forward.12} parent=19 // pred_region
          %s172 = sand.u32 %s68, 1
          %s173 = sand.u32 %s68, 1
          %s174 = smul.addr %s173, 128
          %s175 = scalar_lea.vmem [#allocation3], %s174
          %s176 = smul.u32 16, %s18
          %s177 = smul.addr %s176, 3
          %s178 = sadd.s32 %s17, %s177
          %s179 = smul.addr %s178, 8
          %s180 = scalar_lea.vmem %s1, %s179
          // Predicated region
          $region25: #{bert_encoder_forward.12} parent=23 // pred_check
            _
          $region26: #{bert_encoder_forward.12} parent=23 // pred_check_branch
            %182 = sbr.rel (0) target = $region28
          $region27: #{bert_encoder_forward.12} parent=23 // pred_region
            // Predicated region
            $region29: #{bert_encoder_forward.12} parent=27 // pred_check
              _
            $region30: #{bert_encoder_forward.12} parent=27 // pred_check_branch
              %184 = sbr.rel (0) target = $region32
            $region31: #{bert_encoder_forward.12} parent=27 // pred_region
              // Predicated region
              $region44: #{bert_encoder_forward.12} parent=31 // pred_check
                _
              $region45: #{bert_encoder_forward.12} parent=31 // pred_check_branch
                %229 = sbr.rel (0) target = $region47
              $region46: #{bert_encoder_forward.12} parent=31 // pred_region
                loop: start=0, step=1, limit=1
                $region48: #{bert_encoder_forward.12} parent=46 // loop_pre_header
                  _
                $region49: #{bert_encoder_forward.12} parent=46 // loop_header
                  %s231 = sphi 0, %s235
                  %p232 = scmp.ge.s32.totalorder %s231, 1
                  %s236 = sphi %s180, %s180
                  %s237 = sphi %s175, %s175
                $region50: #{bert_encoder_forward.12} parent=46 // loop_header_branch
                  %234 = sbr.rel (%p232) target = $region54
                $region51: #{bert_encoder_forward.12} parent=46 // loop_body
                  %v238 = vld [vmem:[%s236] sm:$0xff]
                  %239 = vst [vmem:[%s237] sm:$0xff] %v238
                  %v240 = vld [vmem:[%s236 + $0x18] sm:$0xff]
                  %241 = vst [vmem:[%s237 + $0x8] sm:$0xff] %v240
                  %v242 = vld [vmem:[%s236 + $0x30] sm:$0xff]
                  %243 = vst [vmem:[%s237 + $0x10] sm:$0xff] %v242
                  %v244 = vld [vmem:[%s236 + $0x48] sm:$0xff]
                  %245 = vst [vmem:[%s237 + $0x18] sm:$0xff] %v244
                  %v246 = vld [vmem:[%s236 + $0x60] sm:$0xff]
                  %247 = vst [vmem:[%s237 + $0x20] sm:$0xff] %v246
                  %v248 = vld [vmem:[%s236 + $0x78] sm:$0xff]
                  %249 = vst [vmem:[%s237 + $0x28] sm:$0xff] %v248
                  %v250 = vld [vmem:[%s236 + $0x90] sm:$0xff]
                  %251 = vst [vmem:[%s237 + $0x30] sm:$0xff] %v250
                  %v252 = vld [vmem:[%s236 + $0xa8] sm:$0xff]
                  %253 = vst [vmem:[%s237 + $0x38] sm:$0xff] %v252
                  %v254 = vld [vmem:[%s236 + $0xc0] sm:$0xff]
                  %255 = vst [vmem:[%s237 + $0x40] sm:$0xff] %v254
                  %v256 = vld [vmem:[%s236 + $0xd8] sm:$0xff]
                  %257 = vst [vmem:[%s237 + $0x48] sm:$0xff] %v256
                  %v258 = vld [vmem:[%s236 + $0xf0] sm:$0xff]
                  %259 = vst [vmem:[%s237 + $0x50] sm:$0xff] %v258
                  %v260 = vld [vmem:[%s236 + $0x108] sm:$0xff]
                  %261 = vst [vmem:[%s237 + $0x58] sm:$0xff] %v260
                  %v262 = vld [vmem:[%s236 + $0x120] sm:$0xff]
                  %263 = vst [vmem:[%s237 + $0x60] sm:$0xff] %v262
                  %v264 = vld [vmem:[%s236 + $0x138] sm:$0xff]
                  %265 = vst [vmem:[%s237 + $0x68] sm:$0xff] %v264
                  %v266 = vld [vmem:[%s236 + $0x150] sm:$0xff]
                  %267 = vst [vmem:[%s237 + $0x70] sm:$0xff] %v266
                  %v268 = vld [vmem:[%s236 + $0x168] sm:$0xff]
                  %269 = vst [vmem:[%s237 + $0x78] sm:$0xff] %v268
                $region52: #{bert_encoder_forward.12} parent=46 // loop_footer
                  %s235 = sadd.s32 1, %s231
                $region53: #{bert_encoder_forward.12} parent=46 // loop_footer_branch
                  %230 = sbr.rel target = $region49
                $region54: #{bert_encoder_forward.12} parent=46 // loop_exit
                  _
              $region47: #{bert_encoder_forward.12} parent=31 // pred_fallthru
                _
              // Predicated region
              $region55: #{bert_encoder_forward.12} parent=31 // pred_check
                _
              $region56: #{bert_encoder_forward.12} parent=31 // pred_check_branch
                %271 = sbr.rel target = $region58
              $region57: #{bert_encoder_forward.12} parent=31 // pred_region
                _
              $region58: #{bert_encoder_forward.12} parent=31 // pred_fallthru
                _
            $region32: #{bert_encoder_forward.12} parent=27 // pred_fallthru
              _
            // Predicated region
            $region33: #{bert_encoder_forward.12} parent=27 // pred_check
              _
            $region34: #{bert_encoder_forward.12} parent=27 // pred_check_branch
              %186 = sbr.rel target = $region36
            $region35: #{bert_encoder_forward.12} parent=27 // pred_region
              loop: start=0, step=1, limit=1
              $region37: #{bert_encoder_forward.12} parent=35 // loop_pre_header
                _
              $region38: #{bert_encoder_forward.12} parent=35 // loop_header
                %s189 = sphi 0, %s193
                %p190 = scmp.ge.s32.totalorder %s189, 1
                %s194 = sphi %s180, %s180
                %s195 = sphi %s175, %s175
              $region39: #{bert_encoder_forward.12} parent=35 // loop_header_branch
                %192 = sbr.rel (%p190) target = $region43
              $region40: #{bert_encoder_forward.12} parent=35 // loop_body
                %v196 = vld [vmem:[%s194] sm:$0xff]
                %197 = vst [vmem:[%s195] sm:$0xff] %v196
                %v198 = vld [vmem:[%s194 + $0x18] sm:$0xff]
                %199 = vst [vmem:[%s195 + $0x8] sm:$0xff] %v198
                %v200 = vld [vmem:[%s194 + $0x30] sm:$0xff]
                %201 = vst [vmem:[%s195 + $0x10] sm:$0xff] %v200
                %v202 = vld [vmem:[%s194 + $0x48] sm:$0xff]
                %203 = vst [vmem:[%s195 + $0x18] sm:$0xff] %v202
                %v204 = vld [vmem:[%s194 + $0x60] sm:$0xff]
                %205 = vst [vmem:[%s195 + $0x20] sm:$0xff] %v204
                %v206 = vld [vmem:[%s194 + $0x78] sm:$0xff]
                %207 = vst [vmem:[%s195 + $0x28] sm:$0xff] %v206
                %v208 = vld [vmem:[%s194 + $0x90] sm:$0xff]
                %209 = vst [vmem:[%s195 + $0x30] sm:$0xff] %v208
                %v210 = vld [vmem:[%s194 + $0xa8] sm:$0xff]
                %211 = vst [vmem:[%s195 + $0x38] sm:$0xff] %v210
                %v212 = vld [vmem:[%s194 + $0xc0] sm:$0xff]
                %213 = vst [vmem:[%s195 + $0x40] sm:$0xff] %v212
                %v214 = vld [vmem:[%s194 + $0xd8] sm:$0xff]
                %215 = vst [vmem:[%s195 + $0x48] sm:$0xff] %v214
                %v216 = vld [vmem:[%s194 + $0xf0] sm:$0xff]
                %217 = vst [vmem:[%s195 + $0x50] sm:$0xff] %v216
                %v218 = vld [vmem:[%s194 + $0x108] sm:$0xff]
                %219 = vst [vmem:[%s195 + $0x58] sm:$0xff] %v218
                %v220 = vld [vmem:[%s194 + $0x120] sm:$0xff]
                %221 = vst [vmem:[%s195 + $0x60] sm:$0xff] %v220
                %v222 = vld [vmem:[%s194 + $0x138] sm:$0xff]
                %223 = vst [vmem:[%s195 + $0x68] sm:$0xff] %v222
                %v224 = vld [vmem:[%s194 + $0x150] sm:$0xff]
                %225 = vst [vmem:[%s195 + $0x70] sm:$0xff] %v224
                %v226 = vld [vmem:[%s194 + $0x168] sm:$0xff]
                %227 = vst [vmem:[%s195 + $0x78] sm:$0xff] %v226
              $region41: #{bert_encoder_forward.12} parent=35 // loop_footer
                %s193 = sadd.s32 1, %s189
              $region42: #{bert_encoder_forward.12} parent=35 // loop_footer_branch
                %188 = sbr.rel target = $region38
              $region43: #{bert_encoder_forward.12} parent=35 // loop_exit
                _
            $region36: #{bert_encoder_forward.12} parent=27 // pred_fallthru
              _
          $region28: #{bert_encoder_forward.12} parent=23 // pred_fallthru
            _
          %272 = vnop
        $region24: #{bert_encoder_forward.12} parent=19 // pred_fallthru
          _
        // Predicated region
        $region59: #{bert_encoder_forward.12} parent=19 // pred_check
          %p273 = pneg %p104
        $region60: #{bert_encoder_forward.12} parent=19 // pred_check_branch
          %275 = sbr.rel (%p273) target = $region62
        $region61: #{bert_encoder_forward.12} parent=19 // pred_region
          %p276 = scmp.lt.s32.totalorder %s17, 2
          %s277 = scalar_select %p276, %s17, 2
          %s278 = scalar_lea.vmem %s2, %s277
        $region62: #{bert_encoder_forward.12} parent=19 // pred_fallthru
          _
      $region20: #{bert_encoder_forward.12} parent=5 // pred_fallthru
        _
      %p279 = scmp.le.s32.totalorder 1, %s9
      %p280 = scmp.lt.s32.totalorder %s9, 4
      %p281 = pnand %p279, %p280
      %p282 = pneg %p281
      // Predicated region
      $region63: #{bert_encoder_forward.12} parent=5 // pred_check
        _
      $region64: #{bert_encoder_forward.12} parent=5 // pred_check_branch
        %284 = sbr.rel (%p281) target = $region66
      $region65: #{bert_encoder_forward.12} parent=5 // pred_region
        %s285 = ssub.s32 %s9, 1
        %s286 = sand.u32 %s71, 1
        %s287 = sand.u32 %s71, 1
        %s288 = smul.addr %s287, 128
        %s289 = scalar_lea.vmem [#allocation3], %s288
        // Predicated region
        $region67: #{bert_encoder_forward.12} parent=65 // pred_check
          %p290 = pneg %p84
        $region68: #{bert_encoder_forward.12} parent=65 // pred_check_branch
          %292 = sbr.rel (%p290) target = $region70
        $region69: #{bert_encoder_forward.12} parent=65 // pred_region
          _
        $region70: #{bert_encoder_forward.12} parent=65 // pred_fallthru
          _
        %s293 = smul.u32 4, %s19
        %p294 = scmp.lt.s32.totalorder %s293, 3
        %s295 = scalar_select %p294, %s293, 3
        %p296 = scmp.lt.s32.totalorder %s21, 0
        %s297 = scalar_select %p296, %s21, 0
        %s298 = sadd.s32 %s297, %s295
        %s299 = smul.addr %s298, 8
        %s300 = scalar_lea.vmem %s0, %s299
        %p301 = pneg %p56
        %p302 = pneg %p53
        %s303 = sand.u32 %s71, 1
        %s304 = sand.u32 %s71, 1
        %s305 = smul.addr %s304, 128
        %s306 = scalar_lea.vmem [#allocation3], %s305
        %p307 = pneg %p84
        %p308 = pneg %p81
        %p309 = scmp.lt.s32.totalorder %s20, 2
        %s310 = scalar_select %p309, %s20, 2
        %s311 = scalar_lea.vmem %s2, %s310
        %p312 = pneg %p110
        %p313 = pneg %p107
        %p314 = pneg %p138
        %p315 = pneg %p135
        %s316 = sand.u32 %s125, 1
        %s317 = sand.u32 %s125, 1
        %s318 = smul.addr %s317, 32
        %s319 = scalar_lea.vmem [#allocation4], %s318
        %s320 = smul.u32 4, %s19
        %p321 = scmp.lt.s32.totalorder %s320, 3
        %s322 = scalar_select %p321, %s320, 3
        %p323 = scmp.lt.s32.totalorder %s21, 0
        %s324 = scalar_select %p323, %s21, 0
        %s325 = sadd.s32 %s324, %s322
        %s326 = smul.addr %s325, 8
        %s327 = scalar_lea.vmem %s0, %s326
        %s328 = smul.u32 4, %s19
        %s329 = smul.u32 16, %s21
        %p330 = scmp.lt.s32.totalorder %s20, 2
        %s331 = scalar_select %p330, %s20, 2
        %s332 = scalar_lea.vmem %s2, %s331
        %s333 = smul.u32 4, %s19
        %p334 = scmp.eq.s32.totalorder %s21, 0
        // Predicated region
        $region71: #{bert_encoder_forward.12} parent=65 // pred_check
          %p335 = pneg %p334
        $region72: #{bert_encoder_forward.12} parent=65 // pred_check_branch
          %337 = sbr.rel (%p335) target = $region74
        $region73: #{bert_encoder_forward.12} parent=65 // pred_region
          %338 = vst [vmem:[#allocation2] sm:$0xff] 0.0
          %339 = vst [vmem:[#allocation2 + $0x8] sm:$0xff] 0.0
          %340 = vst [vmem:[#allocation2 + $0x10] sm:$0xff] 0.0
          %341 = vst [vmem:[#allocation2 + $0x18] sm:$0xff] 0.0
        $region74: #{bert_encoder_forward.12} parent=65 // pred_fallthru
          _
        %v342 = vld [vmem:[#allocation2] sm:$0xff]
        %v343 = vld [vmem:[#allocation2 + $0x8] sm:$0xff]
        %v344 = vld [vmem:[#allocation2 + $0x10] sm:$0xff]
        %v345 = vld [vmem:[#allocation2 + $0x18] sm:$0xff]
        %v346 = vld [vmem:[%s327] sm:$0xff]
        %v347 = vld [vmem:[%s327 + $0x8] sm:$0xff]
        %v348 = vld [vmem:[%s327 + $0x10] sm:$0xff]
        %v349 = vld [vmem:[%s327 + $0x18] sm:$0xff]
        %v350 = vld [vmem:[%s289] sm:$0xff]
        %v351 = vld [vmem:[%s289 + $0x8] sm:$0xff]
        %v352 = vld [vmem:[%s289 + $0x10] sm:$0xff]
        %v353 = vld [vmem:[%s289 + $0x18] sm:$0xff]
        %v354 = vld [vmem:[%s289 + $0x20] sm:$0xff]
        %v355 = vld [vmem:[%s289 + $0x28] sm:$0xff]
        %v356 = vld [vmem:[%s289 + $0x30] sm:$0xff]
        %v357 = vld [vmem:[%s289 + $0x38] sm:$0xff]
        %v358 = vld [vmem:[%s289 + $0x40] sm:$0xff]
        %v359 = vld [vmem:[%s289 + $0x48] sm:$0xff]
        %v360 = vld [vmem:[%s289 + $0x50] sm:$0xff]
        %v361 = vld [vmem:[%s289 + $0x58] sm:$0xff]
        %v362 = vld [vmem:[%s289 + $0x60] sm:$0xff]
        %v363 = vld [vmem:[%s289 + $0x68] sm:$0xff]
        %v364 = vld [vmem:[%s289 + $0x70] sm:$0xff]
        %v365 = vld [vmem:[%s289 + $0x78] sm:$0xff]
        %366 = vmatprep.subr.mxu0 0.0
        %367 = vmatpush1.msra.mxu0 %v350
        %368 = vmatprep.subr.mxu0 0.0
        %369 = vmatpush1.msra.mxu0 %v351
        %370 = vmatprep.subr.mxu0 0.0
        %371 = vmatpush1.msra.mxu0 %v352
        %372 = vmatprep.subr.mxu0 0.0
        %373 = vmatpush1.msra.mxu0 %v353
        %374 = vmatprep.subr.mxu0 0.0
        %375 = vmatpush1.msra.mxu0 %v354
        %376 = vmatprep.subr.mxu0 0.0
        %377 = vmatpush1.msra.mxu0 %v355
        %378 = vmatprep.subr.mxu0 0.0
        %379 = vmatpush1.msra.mxu0 %v356
        %380 = vmatprep.subr.mxu0 0.0
        %381 = vmatpush1.msra.mxu0 %v357
        %382 = vmatprep.subr.mxu0 0.0
        %383 = vmatpush1.msra.mxu0 %v358
        %384 = vmatprep.subr.mxu0 0.0
        %385 = vmatpush1.msra.mxu0 %v359
        %386 = vmatprep.subr.mxu0 0.0
        %387 = vmatpush1.msra.mxu0 %v360
        %388 = vmatprep.subr.mxu0 0.0
        %389 = vmatpush1.msra.mxu0 %v361
        %390 = vmatprep.subr.mxu0 0.0
        %391 = vmatpush1.msra.mxu0 %v362
        %392 = vmatprep.subr.mxu0 0.0
        %393 = vmatpush1.msra.mxu0 %v363
        %394 = vmatprep.subr.mxu0 0.0
        %395 = vmatpush1.msra.mxu0 %v364
        %396 = vmatprep.subr.mxu0 0.0
        %397 = vmatpush1.msra.mxu0 %v365
        %398 = vmatprep.subr.mxu0 0.0
        %399 = vmatpush1.msra.mxu0 0.0
        %400 = vmatprep.subr.mxu0 0.0
        %401 = vmatpush1.msra.mxu0 0.0
        %402 = vmatprep.subr.mxu0 0.0
        %403 = vmatpush1.msra.mxu0 0.0
        %404 = vmatprep.subr.mxu0 0.0
        %405 = vmatpush1.msra.mxu0 0.0
        %406 = vmatprep.subr.mxu0 0.0
        %407 = vmatpush1.msra.mxu0 0.0
        %408 = vmatprep.subr.mxu0 0.0
        %409 = vmatpush1.msra.mxu0 0.0
        %410 = vmatprep.subr.mxu0 0.0
        %411 = vmatpush1.msra.mxu0 0.0
        %412 = vmatprep.subr.mxu0 0.0
        %413 = vmatpush1.msra.mxu0 0.0
        %414 = vmatprep.subr.mxu0 0.0
        %415 = vmatpush1.msra.mxu0 0.0
        %416 = vmatprep.subr.mxu0 0.0
        %417 = vmatpush1.msra.mxu0 0.0
        %418 = vmatprep.subr.mxu0 0.0
        %419 = vmatpush1.msra.mxu0 0.0
        %420 = vmatprep.subr.mxu0 0.0
        %421 = vmatpush1.msra.mxu0 0.0
        %422 = vmatprep.subr.mxu0 0.0
        %423 = vmatpush1.msra.mxu0 0.0
        %424 = vmatprep.subr.mxu0 0.0
        %425 = vmatpush1.msra.mxu0 0.0
        %426 = vmatprep.subr.mxu0 0.0
        %427 = vmatpush1.msra.mxu0 0.0
        %428 = vmatprep.subr.mxu0 0.0
        %429 = vmatpush1.msra.mxu0 0.0
        %430 = vmatprep.mubr.f32.mxu0 0.0
        %431 = vmatmul.mubr.f32.gmra.mrb[0].mxu0 %v346
        %v432 = vpop.f32.mrb[0].mxu0
        %v433 = vadd.f32 0.0, %v432
        %v434 = vpop.f32.mrb[0].mxu0
        %435 = vmatprep.mubr.f32.mxu0 0.0
        %436 = vmatmul.mubr.f32.gmra.mrb[0].mxu0 %v347
        %v437 = vpop.f32.mrb[0].mxu0
        %v438 = vadd.f32 0.0, %v437
        %v439 = vpop.f32.mrb[0].mxu0
        %440 = vmatprep.mubr.f32.mxu0 0.0
        %441 = vmatmul.mubr.f32.gmra.mrb[0].mxu0 %v348
        %v442 = vpop.f32.mrb[0].mxu0
        %v443 = vadd.f32 0.0, %v442
        %v444 = vpop.f32.mrb[0].mxu0
        %445 = vmatprep.mubr.f32.mxu0 0.0
        %446 = vmatmul.mubr.f32.gmra.mrb[0].mxu0 %v349
        %v447 = vpop.f32.mrb[0].mxu0
        %v448 = vadd.f32 0.0, %v447
        %v449 = vpop.f32.mrb[0].mxu0
        %450 = vdwg.mxu0
        %v451 = vadd.f32 %v342, %v433
        %v452 = vadd.f32 %v343, %v438
        %v453 = vadd.f32 %v344, %v443
        %v454 = vadd.f32 %v345, %v448
        %455 = vst [vmem:[#allocation2] sm:$0xff] %v451
        %456 = vst [vmem:[#allocation2 + $0x8] sm:$0xff] %v452
        %457 = vst [vmem:[#allocation2 + $0x10] sm:$0xff] %v453
        %458 = vst [vmem:[#allocation2 + $0x18] sm:$0xff] %v454
        // Predicated region
        $region75: #{bert_encoder_forward.12} parent=65 // pred_check
          %p459 = pneg %p334
        $region76: #{bert_encoder_forward.12} parent=65 // pred_check_branch
          %461 = sbr.rel (%p459) target = $region78
        $region77: #{bert_encoder_forward.12} parent=65 // pred_region
          %v462 = vld [vmem:[#allocation2] sm:$0xff]
          %v463 = vld [vmem:[#allocation2 + $0x8] sm:$0xff]
          %v464 = vld [vmem:[#allocation2 + $0x10] sm:$0xff]
          %v465 = vld [vmem:[#allocation2 + $0x18] sm:$0xff]
          %v466 = vld [vmem:[%s332] sm:$0x1]
          %v468 = vlaneseq
          %v469 = vshrl.u32 %v468, 7
          %v470 = vsub.s32 0, %v469
          %v471 = vrot.slane %v466, %v470
          %v473 = vadd.f32 %v462, %v471
          %v474 = vadd.f32 %v463, %v471
          %v475 = vadd.f32 %v464, %v471
          %v476 = vadd.f32 %v465, %v471
          %477 = vst [vmem:[%s319] sm:$0xff] %v473
          %478 = vst [vmem:[%s319 + $0x8] sm:$0xff] %v474
          %479 = vst [vmem:[%s319 + $0x10] sm:$0xff] %v475
          %480 = vst [vmem:[%s319 + $0x18] sm:$0xff] %v476
        $region78: #{bert_encoder_forward.12} parent=65 // pred_fallthru
          _
        %s481 = sand.u32 %s125, 1
        %s482 = sand.u32 %s125, 1
        %s483 = smul.addr %s482, 32
        %s484 = scalar_lea.vmem [#allocation4], %s483
        // Predicated region
        $region79: #{bert_encoder_forward.12} parent=65 // pred_check
          %p485 = pneg %p135
        $region80: #{bert_encoder_forward.12} parent=65 // pred_check_branch
          %487 = sbr.rel (%p485) target = $region82
        $region81: #{bert_encoder_forward.12} parent=65 // pred_region
          %s488 = smul.u32 4, %s19
          %s489 = smul.addr %s488, 3
          %s490 = sadd.s32 %s20, %s489
          %s491 = smul.addr %s490, 8
          %s492 = scalar_lea.vmem %s3, %s491
          // Predicated region
          $region83: #{bert_encoder_forward.12} parent=81 // pred_check
            _
          $region84: #{bert_encoder_forward.12} parent=81 // pred_check_branch
            %494 = sbr.rel (0) target = $region86
          $region85: #{bert_encoder_forward.12} parent=81 // pred_region
            // Predicated region
            $region87: #{bert_encoder_forward.12} parent=85 // pred_check
              _
            $region88: #{bert_encoder_forward.12} parent=85 // pred_check_branch
              %496 = sbr.rel (0) target = $region90
            $region89: #{bert_encoder_forward.12} parent=85 // pred_region
              // Predicated region
              $region102: #{bert_encoder_forward.12} parent=89 // pred_check
                _
              $region103: #{bert_encoder_forward.12} parent=89 // pred_check_branch
                %517 = sbr.rel (0) target = $region105
              $region104: #{bert_encoder_forward.12} parent=89 // pred_region
                loop: start=0, step=1, limit=1
                $region106: #{bert_encoder_forward.12} parent=104 // loop_pre_header
                  _
                $region107: #{bert_encoder_forward.12} parent=104 // loop_header
                  %s519 = sphi 0, %s523
                  %p520 = scmp.ge.s32.totalorder %s519, 1
                  %s524 = sphi %s484, %s484
                  %s525 = sphi %s492, %s492
                $region108: #{bert_encoder_forward.12} parent=104 // loop_header_branch
                  %522 = sbr.rel (%p520) target = $region112
                $region109: #{bert_encoder_forward.12} parent=104 // loop_body
                  %v526 = vld [vmem:[%s524] sm:$0xff]
                  %527 = vst [vmem:[%s525] sm:$0xff] %v526
                  %v528 = vld [vmem:[%s524 + $0x8] sm:$0xff]
                  %529 = vst [vmem:[%s525 + $0x18] sm:$0xff] %v528
                  %v530 = vld [vmem:[%s524 + $0x10] sm:$0xff]
                  %531 = vst [vmem:[%s525 + $0x30] sm:$0xff] %v530
                  %v532 = vld [vmem:[%s524 + $0x18] sm:$0xff]
                  %533 = vst [vmem:[%s525 + $0x48] sm:$0xff] %v532
                $region110: #{bert_encoder_forward.12} parent=104 // loop_footer
                  %s523 = sadd.s32 1, %s519
                $region111: #{bert_encoder_forward.12} parent=104 // loop_footer_branch
                  %518 = sbr.rel target = $region107
                $region112: #{bert_encoder_forward.12} parent=104 // loop_exit
                  _
              $region105: #{bert_encoder_forward.12} parent=89 // pred_fallthru
                _
              // Predicated region
              $region113: #{bert_encoder_forward.12} parent=89 // pred_check
                _
              $region114: #{bert_encoder_forward.12} parent=89 // pred_check_branch
                %535 = sbr.rel target = $region116
              $region115: #{bert_encoder_forward.12} parent=89 // pred_region
                _
              $region116: #{bert_encoder_forward.12} parent=89 // pred_fallthru
                _
            $region90: #{bert_encoder_forward.12} parent=85 // pred_fallthru
              _
            // Predicated region
            $region91: #{bert_encoder_forward.12} parent=85 // pred_check
              _
            $region92: #{bert_encoder_forward.12} parent=85 // pred_check_branch
              %498 = sbr.rel target = $region94
            $region93: #{bert_encoder_forward.12} parent=85 // pred_region
              loop: start=0, step=1, limit=1
              $region95: #{bert_encoder_forward.12} parent=93 // loop_pre_header
                _
              $region96: #{bert_encoder_forward.12} parent=93 // loop_header
                %s501 = sphi 0, %s505
                %p502 = scmp.ge.s32.totalorder %s501, 1
                %s506 = sphi %s484, %s484
                %s507 = sphi %s492, %s492
              $region97: #{bert_encoder_forward.12} parent=93 // loop_header_branch
                %504 = sbr.rel (%p502) target = $region101
              $region98: #{bert_encoder_forward.12} parent=93 // loop_body
                %v508 = vld [vmem:[%s506] sm:$0xff]
                %509 = vst [vmem:[%s507] sm:$0xff] %v508
                %v510 = vld [vmem:[%s506 + $0x8] sm:$0xff]
                %511 = vst [vmem:[%s507 + $0x18] sm:$0xff] %v510
                %v512 = vld [vmem:[%s506 + $0x10] sm:$0xff]
                %513 = vst [vmem:[%s507 + $0x30] sm:$0xff] %v512
                %v514 = vld [vmem:[%s506 + $0x18] sm:$0xff]
                %515 = vst [vmem:[%s507 + $0x48] sm:$0xff] %v514
              $region99: #{bert_encoder_forward.12} parent=93 // loop_footer
                %s505 = sadd.s32 1, %s501
              $region100: #{bert_encoder_forward.12} parent=93 // loop_footer_branch
                %500 = sbr.rel target = $region96
              $region101: #{bert_encoder_forward.12} parent=93 // loop_exit
                _
            $region94: #{bert_encoder_forward.12} parent=85 // pred_fallthru
              _
          $region86: #{bert_encoder_forward.12} parent=81 // pred_fallthru
            _
          %536 = vnop
        $region82: #{bert_encoder_forward.12} parent=65 // pred_fallthru
          _
      $region66: #{bert_encoder_forward.12} parent=5 // pred_fallthru
        _
      %p537 = scmp.le.s32.totalorder 2, %s9
      // Predicated region
      $region117: #{bert_encoder_forward.12} parent=5 // pred_check
        %p538 = pneg %p537
      $region118: #{bert_encoder_forward.12} parent=5 // pred_check_branch
        %540 = sbr.rel (%p538) target = $region120
      $region119: #{bert_encoder_forward.12} parent=5 // pred_region
        %s541 = ssub.s32 %s9, 2
        // Predicated region
        $region121: #{bert_encoder_forward.12} parent=119 // pred_check
          %p542 = pneg %p141
        $region122: #{bert_encoder_forward.12} parent=119 // pred_check_branch
          %544 = sbr.rel (%p542) target = $region124
        $region123: #{bert_encoder_forward.12} parent=119 // pred_region
          %s545 = sand.u32 %s126, 1
          %s546 = sand.u32 %s126, 1
          %s547 = smul.addr %s546, 32
          %s548 = scalar_lea.vmem [#allocation4], %s547
        $region124: #{bert_encoder_forward.12} parent=119 // pred_fallthru
          _
      $region120: #{bert_encoder_forward.12} parent=5 // pred_fallthru
        _
    $region6: #{bert_encoder_forward.12} parent=1 // loop_footer
      %s13 = sadd.s32 1, %s9
    $region7: #{bert_encoder_forward.12} parent=1 // loop_footer_branch
      %8 = sbr.rel target = $region3
    $region8: #{bert_encoder_forward.12} parent=1 // loop_exit
      _

// kernel: bert_encoder_forward.14
$region0: #{bert_encoder_forward.14}
  #allocation0 [shape = 'u32[]', space=smem, size = 0x4, offset = 0x4, fixed_abs, tag = 'smem constant byte address 0x4 - core index']
  #allocation1 [shape = 'u32[144,128]{1,0:T(1,128)}', space=vmem, size = 0x12000, scoped, tag = 'internal scratch']
  %s0 = inlined_call_operand.vmem [shape: f32[32,128], index: 0, kind: input, shape index: {}]
  %s1 = inlined_call_operand.vmem [shape: f32[128,128], index: 1, kind: input, shape index: {}]
  %s2 = inlined_call_operand.vmem [shape: f32[1,128], index: 2, kind: input, shape index: {}]
  %s3 = inlined_call_operand.vmem [shape: f32[32,128], index: 3, kind: input, shape index: {}]
  %s4 = inlined_call_operand.vmem [shape: f32[1,128], index: 4, kind: input, shape index: {}]
  %s5 = inlined_call_operand.vmem [shape: f32[1,128], index: 5, kind: input, shape index: {}]
  %s6 = inlined_call_operand.vmem [shape: f32[32,128], index: 6, kind: output, shape index: {}]
  %s7 = sld [smem:[#allocation0]]
  $region57: #{bert_encoder_forward.14} parent=0
    _
  %s9 = ssub.s32 1, %s7
  %s10 = scalar_select 0, %s9, %s7
  loop: start=0, step=1, limit=6
  $region2: #{bert_encoder_forward.14} parent=0 // loop_pre_header
    _
  $region3: #{bert_encoder_forward.14} parent=0 // loop_header
    %s12 = sphi 0, %s16
    %p13 = scmp.ge.s32.totalorder %s12, 6
    %s22 = sphi 0, %s24
    %s25 = sphi 0, %s22
    %s26 = sphi 0, %s25
    %s42 = sphi 0, %s26
    %s46 = sphi 0, %s46
    %s48 = sphi 0, %s46
    %s49 = sphi 0, %s48
    %s63 = sphi 0, %s49
    %s67 = sphi 0, %s67
    %s69 = sphi 0, %s67
    %s70 = sphi 0, %s69
    %s84 = sphi 0, %s70
    %s90 = sphi 0, %s92
    %s93 = sphi 0, %s90
    %s94 = sphi 0, %s93
    %s110 = sphi 0, %s94
    %s114 = sphi 0, %s114
    %s116 = sphi 0, %s114
    %s117 = sphi 0, %s116
    %s131 = sphi 0, %s117
    %s135 = sphi 0, %s135
    %s137 = sphi 0, %s135
    %s138 = sphi 0, %s137
    %s152 = sphi 0, %s138
    %s158 = sphi 0, %s160
    %s161 = sphi 0, %s158
    %s162 = sphi 0, %s161
    %s178 = sphi 0, %s162
  $region4: #{bert_encoder_forward.14} parent=0 // loop_header_branch
    %15 = sbr.rel (%p13) target = $region8
  $region5: #{bert_encoder_forward.14} parent=0 // loop_body
    %s17 = ssub.s32 %s12, 1
    %s18 = ssub.s32 %s12, 2
    %s19 = sadd.s32 %s12, 1
    %s20 = ssub.s32 %s12, %s19
    %p21 = scmp.eq.s32.totalorder %s20, 0
    %s23 = sadd.s32 %s22, 1
    %s24 = scalar_select %p21, %s22, %s23
    %p27 = pneg %p21
    %p28 = scmp.eq.s32.totalorder %s12, 3
    %p29 = por %p27, %p28
    %p30 = scmp.ne.s32.totalorder %s22, %s25
    %p31 = scmp.eq.s32.totalorder %s12, 0
    %p32 = por %p30, %p31
    %p33 = scmp.ne.s32.totalorder %s22, %s25
    %p34 = scmp.eq.s32.totalorder %s17, 3
    %p35 = por %p33, %p34
    %p36 = scmp.ne.s32.totalorder %s25, %s26
    %p37 = scmp.eq.s32.totalorder %s17, 0
    %p38 = por %p36, %p37
    %p39 = scmp.ne.s32.totalorder %s25, %s26
    %p40 = scmp.eq.s32.totalorder %s18, 3
    %p41 = por %p39, %p40
    %p43 = scmp.ne.s32.totalorder %s26, %s42
    %p44 = scmp.eq.s32.totalorder %s18, 0
    %p45 = por %p43, %p44
    %s47 = sadd.s32 %s46, 1
    %p50 = scmp.eq.s32.totalorder %s12, 3
    %p51 = scmp.ne.s32.totalorder %s46, %s48
    %p52 = scmp.eq.s32.totalorder %s12, 0
    %p53 = por %p51, %p52
    %p54 = scmp.ne.s32.totalorder %s46, %s48
    %p55 = scmp.eq.s32.totalorder %s17, 3
    %p56 = por %p54, %p55
    %p57 = scmp.ne.s32.totalorder %s48, %s49
    %p58 = scmp.eq.s32.totalorder %s17, 0
    %p59 = por %p57, %p58
    %p60 = scmp.ne.s32.totalorder %s48, %s49
    %p61 = scmp.eq.s32.totalorder %s18, 3
    %p62 = por %p60, %p61
    %p64 = scmp.ne.s32.totalorder %s49, %s63
    %p65 = scmp.eq.s32.totalorder %s18, 0
    %p66 = por %p64, %p65
    %s68 = sadd.s32 %s67, 1
    %p71 = scmp.eq.s32.totalorder %s12, 3
    %p72 = scmp.ne.s32.totalorder %s67, %s69
    %p73 = scmp.eq.s32.totalorder %s12, 0
    %p74 = por %p72, %p73
    %p75 = scmp.ne.s32.totalorder %s67, %s69
    %p76 = scmp.eq.s32.totalorder %s17, 3
    %p77 = por %p75, %p76
    %p78 = scmp.ne.s32.totalorder %s69, %s70
    %p79 = scmp.eq.s32.totalorder %s17, 0
    %p80 = por %p78, %p79
    %p81 = scmp.ne.s32.totalorder %s69, %s70
    %p82 = scmp.eq.s32.totalorder %s18, 3
    %p83 = por %p81, %p82
    %p85 = scmp.ne.s32.totalorder %s70, %s84
    %p86 = scmp.eq.s32.totalorder %s18, 0
    %p87 = por %p85, %p86
    %s88 = ssub.s32 %s12, %s19
    %p89 = scmp.eq.s32.totalorder %s88, 0
    %s91 = sadd.s32 %s90, 1
    %s92 = scalar_select %p89, %s90, %s91
    %p95 = pneg %p89
    %p96 = scmp.eq.s32.totalorder %s12, 3
    %p97 = por %p95, %p96
    %p98 = scmp.ne.s32.totalorder %s90, %s93
    %p99 = scmp.eq.s32.totalorder %s12, 0
    %p100 = por %p98, %p99
    %p101 = scmp.ne.s32.totalorder %s90, %s93
    %p102 = scmp.eq.s32.totalorder %s17, 3
    %p103 = por %p101, %p102
    %p104 = scmp.ne.s32.totalorder %s93, %s94
    %p105 = scmp.eq.s32.totalorder %s17, 0
    %p106 = por %p104, %p105
    %p107 = scmp.ne.s32.totalorder %s93, %s94
    %p108 = scmp.eq.s32.totalorder %s18, 3
    %p109 = por %p107, %p108
    %p111 = scmp.ne.s32.totalorder %s94, %s110
    %p112 = scmp.eq.s32.totalorder %s18, 0
    %p113 = por %p111, %p112
    %s115 = sadd.s32 %s114, 1
    %p118 = scmp.eq.s32.totalorder %s12, 3
    %p119 = scmp.ne.s32.totalorder %s114, %s116
    %p120 = scmp.eq.s32.totalorder %s12, 0
    %p121 = por %p119, %p120
    %p122 = scmp.ne.s32.totalorder %s114, %s116
    %p123 = scmp.eq.s32.totalorder %s17, 3
    %p124 = por %p122, %p123
    %p125 = scmp.ne.s32.totalorder %s116, %s117
    %p126 = scmp.eq.s32.totalorder %s17, 0
    %p127 = por %p125, %p126
    %p128 = scmp.ne.s32.totalorder %s116, %s117
    %p129 = scmp.eq.s32.totalorder %s18, 3
    %p130 = por %p128, %p129
    %p132 = scmp.ne.s32.totalorder %s117, %s131
    %p133 = scmp.eq.s32.totalorder %s18, 0
    %p134 = por %p132, %p133
    %s136 = sadd.s32 %s135, 1
    %p139 = scmp.eq.s32.totalorder %s12, 3
    %p140 = scmp.ne.s32.totalorder %s135, %s137
    %p141 = scmp.eq.s32.totalorder %s12, 0
    %p142 = por %p140, %p141
    %p143 = scmp.ne.s32.totalorder %s135, %s137
    %p144 = scmp.eq.s32.totalorder %s17, 3
    %p145 = por %p143, %p144
    %p146 = scmp.ne.s32.totalorder %s137, %s138
    %p147 = scmp.eq.s32.totalorder %s17, 0
    %p148 = por %p146, %p147
    %p149 = scmp.ne.s32.totalorder %s137, %s138
    %p150 = scmp.eq.s32.totalorder %s18, 3
    %p151 = por %p149, %p150
    %p153 = scmp.ne.s32.totalorder %s138, %s152
    %p154 = scmp.eq.s32.totalorder %s18, 0
    %p155 = por %p153, %p154
    %s156 = ssub.s32 %s12, %s19
    %p157 = scmp.eq.s32.totalorder %s156, 0
    %s159 = sadd.s32 %s158, 1
    %s160 = scalar_select %p157, %s158, %s159
    %p163 = pneg %p157
    %p164 = scmp.eq.s32.totalorder %s12, 3
    %p165 = por %p163, %p164
    %p166 = scmp.ne.s32.totalorder %s158, %s161
    %p167 = scmp.eq.s32.totalorder %s12, 0
    %p168 = por %p166, %p167
    %p169 = scmp.ne.s32.totalorder %s158, %s161
    %p170 = scmp.eq.s32.totalorder %s17, 3
    %p171 = por %p169, %p170
    %p172 = scmp.ne.s32.totalorder %s161, %s162
    %p173 = scmp.eq.s32.totalorder %s17, 0
    %p174 = por %p172, %p173
    %p175 = scmp.ne.s32.totalorder %s161, %s162
    %p176 = scmp.eq.s32.totalorder %s18, 3
    %p177 = por %p175, %p176
    %p179 = scmp.ne.s32.totalorder %s162, %s178
    %p180 = scmp.eq.s32.totalorder %s18, 0
    %p181 = por %p179, %p180
    %p182 = scmp.le.s32.totalorder 1, %s12
    %p183 = scmp.lt.s32.totalorder %s12, 5
    %p184 = pnand %p182, %p183
    %p185 = pneg %p184
    // Predicated region
    $region9: #{bert_encoder_forward.14} parent=5 // pred_check
      _
    $region10: #{bert_encoder_forward.14} parent=5 // pred_check_branch
      %187 = sbr.rel (%p184) target = $region12
    $region11: #{bert_encoder_forward.14} parent=5 // pred_region
      %s188 = ssub.s32 %s12, 1
      // Predicated region
      $region13: #{bert_encoder_forward.14} parent=11 // pred_check
        %p189 = pneg %p59
      $region14: #{bert_encoder_forward.14} parent=11 // pred_check_branch
        %191 = sbr.rel (%p189) target = $region16
      $region15: #{bert_encoder_forward.14} parent=11 // pred_region
        _
      $region16: #{bert_encoder_forward.14} parent=11 // pred_fallthru
        _
      // Predicated region
      $region17: #{bert_encoder_forward.14} parent=11 // pred_check
        %p192 = pneg %p80
      $region18: #{bert_encoder_forward.14} parent=11 // pred_check_branch
        %194 = sbr.rel (%p192) target = $region20
      $region19: #{bert_encoder_forward.14} parent=11 // pred_region
        _
      $region20: #{bert_encoder_forward.14} parent=11 // pred_fallthru
        _
      // Predicated region
      $region21: #{bert_encoder_forward.14} parent=11 // pred_check
        %p195 = pneg %p127
      $region22: #{bert_encoder_forward.14} parent=11 // pred_check_branch
        %197 = sbr.rel (%p195) target = $region24
      $region23: #{bert_encoder_forward.14} parent=11 // pred_region
        _
      $region24: #{bert_encoder_forward.14} parent=11 // pred_fallthru
        _
      // Predicated region
      $region25: #{bert_encoder_forward.14} parent=11 // pred_check
        %p198 = pneg %p148
      $region26: #{bert_encoder_forward.14} parent=11 // pred_check_branch
        %200 = sbr.rel (%p198) target = $region28
      $region27: #{bert_encoder_forward.14} parent=11 // pred_region
        _
      $region28: #{bert_encoder_forward.14} parent=11 // pred_fallthru
        _
    $region12: #{bert_encoder_forward.14} parent=5 // pred_fallthru
      _
    %p201 = scmp.lt.s32.totalorder %s12, 4
    // Predicated region
    $region29: #{bert_encoder_forward.14} parent=5 // pred_check
      %p202 = pneg %p201
    $region30: #{bert_encoder_forward.14} parent=5 // pred_check_branch
      %204 = sbr.rel (%p202) target = $region32
    $region31: #{bert_encoder_forward.14} parent=5 // pred_region
      // Predicated region
      $region33: #{bert_encoder_forward.14} parent=31 // pred_check
        %p205 = pneg %p32
      $region34: #{bert_encoder_forward.14} parent=31 // pred_check_branch
        %207 = sbr.rel (%p205) target = $region36
      $region35: #{bert_encoder_forward.14} parent=31 // pred_region
        %p208 = scmp.lt.s32.totalorder %s12, 3
        %s209 = scalar_select %p208, %s12, 3
        %s210 = smul.addr %s209, 8
        %s211 = scalar_lea.vmem %s0, %s210
      $region36: #{bert_encoder_forward.14} parent=31 // pred_fallthru
        _
      // Predicated region
      $region37: #{bert_encoder_forward.14} parent=31 // pred_check
        %p212 = pneg %p100
      $region38: #{bert_encoder_forward.14} parent=31 // pred_check_branch
        %214 = sbr.rel (%p212) target = $region40
      $region39: #{bert_encoder_forward.14} parent=31 // pred_region
        %p215 = scmp.lt.s32.totalorder %s12, 3
        %s216 = scalar_select %p215, %s12, 3
        %s217 = smul.addr %s216, 8
        %s218 = scalar_lea.vmem %s3, %s217
      $region40: #{bert_encoder_forward.14} parent=31 // pred_fallthru
        _
    $region32: #{bert_encoder_forward.14} parent=5 // pred_fallthru
      _
    %p219 = scmp.le.s32.totalorder 1, %s12
    %p220 = scmp.lt.s32.totalorder %s12, 5
    %p221 = pnand %p219, %p220
    %p222 = pneg %p221
    // Predicated region
    $region41: #{bert_encoder_forward.14} parent=5 // pred_check
      _
    $region42: #{bert_encoder_forward.14} parent=5 // pred_check_branch
      %224 = sbr.rel (%p221) target = $region44
    $region43: #{bert_encoder_forward.14} parent=5 // pred_region
      %s225 = ssub.s32 %s12, 1
      %p226 = scmp.lt.s32.totalorder %s17, 3
      %s227 = scalar_select %p226, %s17, 3
      %s228 = smul.addr %s227, 8
      %s229 = scalar_lea.vmem %s0, %s228
      %p230 = pneg %p38
      %p231 = pneg %p35
      %p232 = pneg %p59
      %p233 = pneg %p56
      %p234 = pneg %p80
      %p235 = pneg %p77
      %p236 = scmp.lt.s32.totalorder %s17, 3
      %s237 = scalar_select %p236, %s17, 3
      %s238 = smul.addr %s237, 8
      %s239 = scalar_lea.vmem %s3, %s238
      %p240 = pneg %p106
      %p241 = pneg %p103
      %p242 = pneg %p127
      %p243 = pneg %p124
      %p244 = pneg %p148
      %p245 = pneg %p145
      %p246 = pneg %p174
      %p247 = pneg %p171
      %p248 = scmp.lt.s32.totalorder %s17, 3
      %s249 = scalar_select %p248, %s17, 3
      %s250 = smul.addr %s249, 8
      %s251 = scalar_lea.vmem %s6, %s250
      %p252 = scmp.lt.s32.totalorder %s17, 3
      %s253 = scalar_select %p252, %s17, 3
      %s254 = smul.addr %s253, 8
      %s255 = scalar_lea.vmem %s0, %s254
      %p256 = scmp.lt.s32.totalorder %s17, 3
      %s257 = scalar_select %p256, %s17, 3
      %s258 = smul.addr %s257, 8
      %s259 = scalar_lea.vmem %s3, %s258
      %p260 = scmp.lt.s32.totalorder %s17, 3
      %s261 = scalar_select %p260, %s17, 3
      %s262 = smul.addr %s261, 8
      %s263 = scalar_lea.vmem %s6, %s262
      %v264 = vld [vmem:[%s255] sm:$0xff]
      %v265 = vld [vmem:[%s1] sm:$0xff]
      %v266 = vld [vmem:[%s1 + $0x8] sm:$0xff]
      %v267 = vld [vmem:[%s1 + $0x10] sm:$0xff]
      %v268 = vld [vmem:[%s1 + $0x18] sm:$0xff]
      %v269 = vld [vmem:[%s1 + $0x20] sm:$0xff]
      %v270 = vld [vmem:[%s1 + $0x28] sm:$0xff]
      %v271 = vld [vmem:[%s1 + $0x30] sm:$0xff]
      %v272 = vld [vmem:[%s1 + $0x38] sm:$0xff]
      %v273 = vld [vmem:[%s1 + $0x40] sm:$0xff]
      %v274 = vld [vmem:[%s1 + $0x48] sm:$0xff]
      %v275 = vld [vmem:[%s1 + $0x50] sm:$0xff]
      %v276 = vld [vmem:[%s1 + $0x58] sm:$0xff]
      %v277 = vld [vmem:[%s1 + $0x60] sm:$0xff]
      %v278 = vld [vmem:[%s1 + $0x68] sm:$0xff]
      %v279 = vld [vmem:[%s1 + $0x70] sm:$0xff]
      %v280 = vld [vmem:[%s1 + $0x78] sm:$0xff]
      %v281 = vld [vmem:[%s2] sm:$0x1]
      %v283 = vlaneseq
      %v284 = vshrl.u32 %v283, 7
      %v285 = vsub.s32 0, %v284
      %v286 = vrot.slane %v281, %v285
      %288 = vmatprep.subr.mxu0 0.0
      %289 = vmatpush1.msra.mxu0 %v265
      %290 = vmatprep.subr.mxu0 0.0
      %291 = vmatpush1.msra.mxu0 %v266
      %292 = vmatprep.subr.mxu0 0.0
      %293 = vmatpush1.msra.mxu0 %v267
      %294 = vmatprep.subr.mxu0 0.0
      %295 = vmatpush1.msra.mxu0 %v268
      %296 = vmatprep.subr.mxu0 0.0
      %297 = vmatpush1.msra.mxu0 %v269
      %298 = vmatprep.subr.mxu0 0.0
      %299 = vmatpush1.msra.mxu0 %v270
      %300 = vmatprep.subr.mxu0 0.0
      %301 = vmatpush1.msra.mxu0 %v271
      %302 = vmatprep.subr.mxu0 0.0
      %303 = vmatpush1.msra.mxu0 %v272
      %304 = vmatprep.subr.mxu0 0.0
      %305 = vmatpush1.msra.mxu0 %v273
      %306 = vmatprep.subr.mxu0 0.0
      %307 = vmatpush1.msra.mxu0 %v274
      %308 = vmatprep.subr.mxu0 0.0
      %309 = vmatpush1.msra.mxu0 %v275
      %310 = vmatprep.subr.mxu0 0.0
      %311 = vmatpush1.msra.mxu0 %v276
      %312 = vmatprep.subr.mxu0 0.0
      %313 = vmatpush1.msra.mxu0 %v277
      %314 = vmatprep.subr.mxu0 0.0
      %315 = vmatpush1.msra.mxu0 %v278
      %316 = vmatprep.subr.mxu0 0.0
      %317 = vmatpush1.msra.mxu0 %v279
      %318 = vmatprep.subr.mxu0 0.0
      %319 = vmatpush1.msra.mxu0 %v280
      %320 = vmatprep.subr.mxu0 0.0
      %321 = vmatpush1.msra.mxu0 0.0
      %322 = vmatprep.subr.mxu0 0.0
      %323 = vmatpush1.msra.mxu0 0.0
      %324 = vmatprep.subr.mxu0 0.0
      %325 = vmatpush1.msra.mxu0 0.0
      %326 = vmatprep.subr.mxu0 0.0
      %327 = vmatpush1.msra.mxu0 0.0
      %328 = vmatprep.subr.mxu0 0.0
      %329 = vmatpush1.msra.mxu0 0.0
      %330 = vmatprep.subr.mxu0 0.0
      %331 = vmatpush1.msra.mxu0 0.0
      %332 = vmatprep.subr.mxu0 0.0
      %333 = vmatpush1.msra.mxu0 0.0
      %334 = vmatprep.subr.mxu0 0.0
      %335 = vmatpush1.msra.mxu0 0.0
      %336 = vmatprep.subr.mxu0 0.0
      %337 = vmatpush1.msra.mxu0 0.0
      %338 = vmatprep.subr.mxu0 0.0
      %339 = vmatpush1.msra.mxu0 0.0
      %340 = vmatprep.subr.mxu0 0.0
      %341 = vmatpush1.msra.mxu0 0.0
      %342 = vmatprep.subr.mxu0 0.0
      %343 = vmatpush1.msra.mxu0 0.0
      %344 = vmatprep.subr.mxu0 0.0
      %345 = vmatpush1.msra.mxu0 0.0
      %346 = vmatprep.subr.mxu0 0.0
      %347 = vmatpush1.msra.mxu0 0.0
      %348 = vmatprep.subr.mxu0 0.0
      %349 = vmatpush1.msra.mxu0 0.0
      %350 = vmatprep.subr.mxu0 0.0
      %351 = vmatpush1.msra.mxu0 0.0
      %352 = vmatprep.mubr.f32.mxu0 0.0
      %353 = vmatmul.mubr.f32.gmra.mrb[0].mxu0 %v264
      %v354 = vpop.f32.mrb[0].mxu0
      %v355 = vadd.f32 %v286, %v354
      %v356 = vpop.f32.mrb[0].mxu0
      %357 = vdwg.mxu0
      %v358 = vld [vmem:[%s259] sm:$0xff]
      %v359 = vadd.f32 %v355, %v358
      %360 = vadd.xlane.f32.xlu0 %v359
      %v361 = vpop.xlane.xlu0 %360
      %v362 = vrcp.pop 128.0
      %v363 = vmul.f32 %v361, %v362
      %v364 = vsub.f32 %v359, %v363
      %v365 = vmul.f32 %v364, %v364
      %366 = vadd.xlane.f32.xlu0 %v365
      %v367 = vpop.xlane.xlu0 %366
      %v368 = vmul.f32 %v367, %v362
      %v369 = vadd.f32 %v368, 1e-12
      %v370 = vrsqrt.pop %v369
      %v371 = vmul.f32 %v364, %v370
      %v372 = vld [vmem:[%s4] sm:$0x1]
      %v374 = vlaneseq
      %v375 = vshrl.u32 %v374, 7
      %v376 = vsub.s32 0, %v375
      %v377 = vrot.slane %v372, %v376
      %v379 = vmul.f32 %v371, %v377
      %v380 = vld [vmem:[%s5] sm:$0x1]
      %v382 = vlaneseq
      %v383 = vshrl.u32 %v382, 7
      %v384 = vsub.s32 0, %v383
      %v385 = vrot.slane %v380, %v384
      %v387 = vadd.f32 %v379, %v385
      %388 = vst [vmem:[%s263] sm:$0xff] %v387
      %p389 = scmp.lt.s32.totalorder %s17, 3
      %s390 = scalar_select %p389, %s17, 3
      %s391 = smul.addr %s390, 8
      %s392 = scalar_lea.vmem %s6, %s391
      // Predicated region
      $region45: #{bert_encoder_forward.14} parent=43 // pred_check
        %p393 = pneg %p171
      $region46: #{bert_encoder_forward.14} parent=43 // pred_check_branch
        %395 = sbr.rel (%p393) target = $region48
      $region47: #{bert_encoder_forward.14} parent=43 // pred_region
        _
      $region48: #{bert_encoder_forward.14} parent=43 // pred_fallthru
        _
    $region44: #{bert_encoder_forward.14} parent=5 // pred_fallthru
      _
    %p396 = scmp.le.s32.totalorder 2, %s12
    // Predicated region
    $region49: #{bert_encoder_forward.14} parent=5 // pred_check
      %p397 = pneg %p396
    $region50: #{bert_encoder_forward.14} parent=5 // pred_check_branch
      %399 = sbr.rel (%p397) target = $region52
    $region51: #{bert_encoder_forward.14} parent=5 // pred_region
      %s400 = ssub.s32 %s12, 2
      // Predicated region
      $region53: #{bert_encoder_forward.14} parent=51 // pred_check
        %p401 = pneg %p177
      $region54: #{bert_encoder_forward.14} parent=51 // pred_check_branch
        %403 = sbr.rel (%p401) target = $region56
      $region55: #{bert_encoder_forward.14} parent=51 // pred_region
        %p404 = scmp.lt.s32.totalorder %s18, 3
        %s405 = scalar_select %p404, %s18, 3
        %s406 = smul.addr %s405, 8
        %s407 = scalar_lea.vmem %s6, %s406
      $region56: #{bert_encoder_forward.14} parent=51 // pred_fallthru
        _
    $region52: #{bert_encoder_forward.14} parent=5 // pred_fallthru
      _
  $region6: #{bert_encoder_forward.14} parent=0 // loop_footer
    %s16 = sadd.s32 1, %s12
  $region7: #{bert_encoder_forward.14} parent=0 // loop_footer_branch
    %11 = sbr.rel target = $region3
  $region8: #{bert_encoder_forward.14} parent=0 // loop_exit
    _

// kernel: bert_encoder_forward.15
$region0: #{bert_encoder_forward.15}
  #allocation0 [shape = 'u32[]', space=smem, size = 0x4, offset = 0x4, fixed_abs, tag = 'smem constant byte address 0x4 - core index']
  #allocation1 [shape = 'u32[144,128]{1,0:T(1,128)}', space=vmem, size = 0x12000, scoped, tag = 'internal scratch']
  #allocation2 [shape = 'f32[8,128]{1,0:T(8,128)}', space=vmem, size = 0x1000, scoped, tag = 'scratch operand']
  %s0 = inlined_call_operand.vmem [shape: f32[32,128], index: 0, kind: input, shape index: {}]
  %s1 = inlined_call_operand.vmem [shape: f32[128,512], index: 1, kind: input, shape index: {}]
  %s2 = inlined_call_operand.vmem [shape: f32[1,512], index: 2, kind: input, shape index: {}]
  %s3 = inlined_call_operand.vmem [shape: f32[512,128], index: 3, kind: input, shape index: {}]
  %s4 = inlined_call_operand.vmem [shape: f32[1,128], index: 4, kind: input, shape index: {}]
  %s5 = inlined_call_operand.vmem [shape: f32[1,128], index: 5, kind: input, shape index: {}]
  %s6 = inlined_call_operand.vmem [shape: f32[1,128], index: 6, kind: input, shape index: {}]
  %s7 = inlined_call_operand.hbm [shape: f32[32,128], index: 7, kind: output, shape index: {}]
  %s8 = sld [smem:[#allocation0]]
  $region69: #{bert_encoder_forward.15} parent=0
    _
  %s10 = ssub.s32 1, %s8
  %s11 = scalar_select 0, %s10, %s8
  $region1: #{bert_encoder_forward.15} parent=0
    #allocation3 [shape = 'u8[8192]{0}', space=vmem, size = 0x2000, scoped, tag = 'output window, operand 0']
    #allocation4 [shape = 's32[2]{0}', space=sflag, size = 0x8, scoped, tag = 'scoped memory for bert_encoder_forward.15']
    %12 = vsyncpa [#allocation4], 0
    %s13 = scalar_lea.sflag [#allocation4], 1
    %14 = vsyncpa %s13, 0
    loop: start=0, step=1, limit=6
    $region2: #{bert_encoder_forward.15} parent=1 // loop_pre_header
      _
    $region3: #{bert_encoder_forward.15} parent=1 // loop_header
      %s16 = sphi 0, %s20
      %p17 = scmp.ge.s32.totalorder %s16, 6
      %s23 = sphi 0, %s35
      %s24 = sphi 0, %s31
      %s25 = sphi 0, %s23
      %s26 = sphi 0, %s24
      %s27 = sphi 0, %s25
      %s28 = sphi 0, %s26
      %s38 = sphi 0, %s40
      %s41 = sphi 0, %s38
      %s42 = sphi 0, %s41
      %s58 = sphi 0, %s42
      %s64 = sphi 0, %s66
      %s67 = sphi 0, %s64
      %s68 = sphi 0, %s67
      %s84 = sphi 0, %s68
      %s90 = sphi 0, %s92
      %s93 = sphi 0, %s90
      %s94 = sphi 0, %s93
      %s110 = sphi 0, %s94
      %s116 = sphi 0, %s118
      %s119 = sphi 0, %s116
      %s120 = sphi 0, %s119
      %s136 = sphi 0, %s120
      %s140 = sphi 0, %s140
      %s142 = sphi 0, %s140
      %s143 = sphi 0, %s142
      %s157 = sphi 0, %s143
      %s161 = sphi 0, %s161
      %s163 = sphi 0, %s161
      %s164 = sphi 0, %s163
      %s178 = sphi 0, %s164
      %s182 = sphi 0, %s182
      %s184 = sphi 0, %s182
      %s185 = sphi 0, %s184
      %s199 = sphi 0, %s185
      %s205 = sphi 0, %s207
      %s208 = sphi 0, %s205
      %s209 = sphi 0, %s208
      %s225 = sphi 0, %s209
    $region4: #{bert_encoder_forward.15} parent=1 // loop_header_branch
      %19 = sbr.rel (%p17) target = $region8
    $region5: #{bert_encoder_forward.15} parent=1 // loop_body
      %s21 = ssub.s32 %s16, 1
      %s22 = ssub.s32 %s16, 2
      %s29 = sadd.s32 1, %s24
      %p30 = scmp.ge.s32.totalorder %s29, 1
      %s31 = scalar_select %p30, 0, %s29
      %s32 = sadd.s32 1, %s23
      %s33 = scalar_select %p30, %s32, %s23
      %p34 = scmp.ge.s32.totalorder %s33, 4
      %s35 = scalar_select %p34, 0, %s33
      %s36 = ssub.s32 %s23, %s35
      %p37 = scmp.eq.s32.totalorder %s36, 0
      %s39 = sadd.s32 %s38, 1
      %s40 = scalar_select %p37, %s38, %s39
      %p43 = pneg %p37
      %p44 = scmp.eq.s32.totalorder %s16, 3
      %p45 = por %p43, %p44
      %p46 = scmp.ne.s32.totalorder %s38, %s41
      %p47 = scmp.eq.s32.totalorder %s16, 0
      %p48 = por %p46, %p47
      %p49 = scmp.ne.s32.totalorder %s38, %s41
      %p50 = scmp.eq.s32.totalorder %s21, 3
      %p51 = por %p49, %p50
      %p52 = scmp.ne.s32.totalorder %s41, %s42
      %p53 = scmp.eq.s32.totalorder %s21, 0
      %p54 = por %p52, %p53
      %p55 = scmp.ne.s32.totalorder %s41, %s42
      %p56 = scmp.eq.s32.totalorder %s22, 3
      %p57 = por %p55, %p56
      %p59 = scmp.ne.s32.totalorder %s42, %s58
      %p60 = scmp.eq.s32.totalorder %s22, 0
      %p61 = por %p59, %p60
      %s62 = ssub.s32 %s24, %s31
      %p63 = scmp.eq.s32.totalorder %s62, 0
      %s65 = sadd.s32 %s64, 1
      %s66 = scalar_select %p63, %s64, %s65
      %p69 = pneg %p63
      %p70 = scmp.eq.s32.totalorder %s16, 3
      %p71 = por %p69, %p70
      %p72 = scmp.ne.s32.totalorder %s64, %s67
      %p73 = scmp.eq.s32.totalorder %s16, 0
      %p74 = por %p72, %p73
      %p75 = scmp.ne.s32.totalorder %s64, %s67
      %p76 = scmp.eq.s32.totalorder %s21, 3
      %p77 = por %p75, %p76
      %p78 = scmp.ne.s32.totalorder %s67, %s68
      %p79 = scmp.eq.s32.totalorder %s21, 0
      %p80 = por %p78, %p79
      %p81 = scmp.ne.s32.totalorder %s67, %s68
      %p82 = scmp.eq.s32.totalorder %s22, 3
      %p83 = por %p81, %p82
      %p85 = scmp.ne.s32.totalorder %s68, %s84
      %p86 = scmp.eq.s32.totalorder %s22, 0
      %p87 = por %p85, %p86
      %s88 = ssub.s32 %s24, %s31
      %p89 = scmp.eq.s32.totalorder %s88, 0
      %s91 = sadd.s32 %s90, 1
      %s92 = scalar_select %p89, %s90, %s91
      %p95 = pneg %p89
      %p96 = scmp.eq.s32.totalorder %s16, 3
      %p97 = por %p95, %p96
      %p98 = scmp.ne.s32.totalorder %s90, %s93
      %p99 = scmp.eq.s32.totalorder %s16, 0
      %p100 = por %p98, %p99
      %p101 = scmp.ne.s32.totalorder %s90, %s93
      %p102 = scmp.eq.s32.totalorder %s21, 3
      %p103 = por %p101, %p102
      %p104 = scmp.ne.s32.totalorder %s93, %s94
      %p105 = scmp.eq.s32.totalorder %s21, 0
      %p106 = por %p104, %p105
      %p107 = scmp.ne.s32.totalorder %s93, %s94
      %p108 = scmp.eq.s32.totalorder %s22, 3
      %p109 = por %p107, %p108
      %p111 = scmp.ne.s32.totalorder %s94, %s110
      %p112 = scmp.eq.s32.totalorder %s22, 0
      %p113 = por %p111, %p112
      %s114 = ssub.s32 %s24, %s31
      %p115 = scmp.eq.s32.totalorder %s114, 0
      %s117 = sadd.s32 %s116, 1
      %s118 = scalar_select %p115, %s116, %s117
      %p121 = pneg %p115
      %p122 = scmp.eq.s32.totalorder %s16, 3
      %p123 = por %p121, %p122
      %p124 = scmp.ne.s32.totalorder %s116, %s119
      %p125 = scmp.eq.s32.totalorder %s16, 0
      %p126 = por %p124, %p125
      %p127 = scmp.ne.s32.totalorder %s116, %s119
      %p128 = scmp.eq.s32.totalorder %s21, 3
      %p129 = por %p127, %p128
      %p130 = scmp.ne.s32.totalorder %s119, %s120
      %p131 = scmp.eq.s32.totalorder %s21, 0
      %p132 = por %p130, %p131
      %p133 = scmp.ne.s32.totalorder %s119, %s120
      %p134 = scmp.eq.s32.totalorder %s22, 3
      %p135 = por %p133, %p134
      %p137 = scmp.ne.s32.totalorder %s120, %s136
      %p138 = scmp.eq.s32.totalorder %s22, 0
      %p139 = por %p137, %p138
      %s141 = sadd.s32 %s140, 1
      %p144 = scmp.eq.s32.totalorder %s16, 3
      %p145 = scmp.ne.s32.totalorder %s140, %s142
      %p146 = scmp.eq.s32.totalorder %s16, 0
      %p147 = por %p145, %p146
      %p148 = scmp.ne.s32.totalorder %s140, %s142
      %p149 = scmp.eq.s32.totalorder %s21, 3
      %p150 = por %p148, %p149
      %p151 = scmp.ne.s32.totalorder %s142, %s143
      %p152 = scmp.eq.s32.totalorder %s21, 0
      %p153 = por %p151, %p152
      %p154 = scmp.ne.s32.totalorder %s142, %s143
      %p155 = scmp.eq.s32.totalorder %s22, 3
      %p156 = por %p154, %p155
      %p158 = scmp.ne.s32.totalorder %s143, %s157
      %p159 = scmp.eq.s32.totalorder %s22, 0
      %p160 = por %p158, %p159
      %s162 = sadd.s32 %s161, 1
      %p165 = scmp.eq.s32.totalorder %s16, 3
      %p166 = scmp.ne.s32.totalorder %s161, %s163
      %p167 = scmp.eq.s32.totalorder %s16, 0
      %p168 = por %p166, %p167
      %p169 = scmp.ne.s32.totalorder %s161, %s163
      %p170 = scmp.eq.s32.totalorder %s21, 3
      %p171 = por %p169, %p170
      %p172 = scmp.ne.s32.totalorder %s163, %s164
      %p173 = scmp.eq.s32.totalorder %s21, 0
      %p174 = por %p172, %p173
      %p175 = scmp.ne.s32.totalorder %s163, %s164
      %p176 = scmp.eq.s32.totalorder %s22, 3
      %p177 = por %p175, %p176
      %p179 = scmp.ne.s32.totalorder %s164, %s178
      %p180 = scmp.eq.s32.totalorder %s22, 0
      %p181 = por %p179, %p180
      %s183 = sadd.s32 %s182, 1
      %p186 = scmp.eq.s32.totalorder %s16, 3
      %p187 = scmp.ne.s32.totalorder %s182, %s184
      %p188 = scmp.eq.s32.totalorder %s16, 0
      %p189 = por %p187, %p188
      %p190 = scmp.ne.s32.totalorder %s182, %s184
      %p191 = scmp.eq.s32.totalorder %s21, 3
      %p192 = por %p190, %p191
      %p193 = scmp.ne.s32.totalorder %s184, %s185
      %p194 = scmp.eq.s32.totalorder %s21, 0
      %p195 = por %p193, %p194
      %p196 = scmp.ne.s32.totalorder %s184, %s185
      %p197 = scmp.eq.s32.totalorder %s22, 3
      %p198 = por %p196, %p197
      %p200 = scmp.ne.s32.totalorder %s185, %s199
      %p201 = scmp.eq.s32.totalorder %s22, 0
      %p202 = por %p200, %p201
      %s203 = ssub.s32 %s23, %s35
      %p204 = scmp.eq.s32.totalorder %s203, 0
      %s206 = sadd.s32 %s205, 1
      %s207 = scalar_select %p204, %s205, %s206
      %p210 = pneg %p204
      %p211 = scmp.eq.s32.totalorder %s16, 3
      %p212 = por %p210, %p211
      %p213 = scmp.ne.s32.totalorder %s205, %s208
      %p214 = scmp.eq.s32.totalorder %s16, 0
      %p215 = por %p213, %p214
      %p216 = scmp.ne.s32.totalorder %s205, %s208
      %p217 = scmp.eq.s32.totalorder %s21, 3
      %p218 = por %p216, %p217
      %p219 = scmp.ne.s32.totalorder %s208, %s209
      %p220 = scmp.eq.s32.totalorder %s21, 0
      %p221 = por %p219, %p220
      %p222 = scmp.ne.s32.totalorder %s208, %s209
      %p223 = scmp.eq.s32.totalorder %s22, 3
      %p224 = por %p222, %p223
      %p226 = scmp.ne.s32.totalorder %s209, %s225
      %p227 = scmp.eq.s32.totalorder %s22, 0
      %p228 = por %p226, %p227
      %p229 = scmp.le.s32.totalorder 1, %s16
      %p230 = scmp.lt.s32.totalorder %s16, 5
      %p231 = pnand %p229, %p230
      %p232 = pneg %p231
      // Predicated region
      $region9: #{bert_encoder_forward.15} parent=5 // pred_check
        _
      $region10: #{bert_encoder_forward.15} parent=5 // pred_check_branch
        %234 = sbr.rel (%p231) target = $region12
      $region11: #{bert_encoder_forward.15} parent=5 // pred_region
        %s235 = ssub.s32 %s16, 1
        // Predicated region
        $region13: #{bert_encoder_forward.15} parent=11 // pred_check
          %p236 = pneg %p80
        $region14: #{bert_encoder_forward.15} parent=11 // pred_check_branch
          %238 = sbr.rel (%p236) target = $region16
        $region15: #{bert_encoder_forward.15} parent=11 // pred_region
          %s239 = smul.u32 4, %s26
          %p240 = scmp.lt.s32.totalorder %s239, 3
          %s241 = scalar_select %p240, %s239, 3
          %s242 = smul.addr %s241, 8
          %s243 = scalar_lea.vmem %s1, %s242
          %s244 = smul.u32 4, %s26
        $region16: #{bert_encoder_forward.15} parent=11 // pred_fallthru
          _
        // Predicated region
        $region17: #{bert_encoder_forward.15} parent=11 // pred_check
          %p245 = pneg %p106
        $region18: #{bert_encoder_forward.15} parent=11 // pred_check_branch
          %247 = sbr.rel (%p245) target = $region20
        $region19: #{bert_encoder_forward.15} parent=11 // pred_region
          %s248 = smul.u32 4, %s26
          %p249 = scmp.lt.s32.totalorder %s248, 3
          %s250 = scalar_select %p249, %s248, 3
          %s251 = scalar_lea.vmem %s2, %s250
          %s252 = smul.u32 4, %s26
        $region20: #{bert_encoder_forward.15} parent=11 // pred_fallthru
          _
        // Predicated region
        $region21: #{bert_encoder_forward.15} parent=11 // pred_check
          %p253 = pneg %p132
        $region22: #{bert_encoder_forward.15} parent=11 // pred_check_branch
          %255 = sbr.rel (%p253) target = $region24
        $region23: #{bert_encoder_forward.15} parent=11 // pred_region
          %s256 = smul.u32 64, %s26
          %p257 = scmp.lt.s32.totalorder %s256, 63
          %s258 = scalar_select %p257, %s256, 63
          %s259 = smul.addr %s258, 8
          %s260 = scalar_lea.vmem %s3, %s259
          %s261 = smul.u32 64, %s26
        $region24: #{bert_encoder_forward.15} parent=11 // pred_fallthru
          _
        // Predicated region
        $region25: #{bert_encoder_forward.15} parent=11 // pred_check
          %p262 = pneg %p153
        $region26: #{bert_encoder_forward.15} parent=11 // pred_check_branch
          %264 = sbr.rel (%p262) target = $region28
        $region27: #{bert_encoder_forward.15} parent=11 // pred_region
          _
        $region28: #{bert_encoder_forward.15} parent=11 // pred_fallthru
          _
        // Predicated region
        $region29: #{bert_encoder_forward.15} parent=11 // pred_check
          %p265 = pneg %p174
        $region30: #{bert_encoder_forward.15} parent=11 // pred_check_branch
          %267 = sbr.rel (%p265) target = $region32
        $region31: #{bert_encoder_forward.15} parent=11 // pred_region
          _
        $region32: #{bert_encoder_forward.15} parent=11 // pred_fallthru
          _
        // Predicated region
        $region33: #{bert_encoder_forward.15} parent=11 // pred_check
          %p268 = pneg %p195
        $region34: #{bert_encoder_forward.15} parent=11 // pred_check_branch
          %270 = sbr.rel (%p268) target = $region36
        $region35: #{bert_encoder_forward.15} parent=11 // pred_region
          _
        $region36: #{bert_encoder_forward.15} parent=11 // pred_fallthru
          _
      $region12: #{bert_encoder_forward.15} parent=5 // pred_fallthru
        _
      %p271 = scmp.lt.s32.totalorder %s16, 4
      // Predicated region
      $region37: #{bert_encoder_forward.15} parent=5 // pred_check
        %p272 = pneg %p271
      $region38: #{bert_encoder_forward.15} parent=5 // pred_check_branch
        %274 = sbr.rel (%p272) target = $region40
      $region39: #{bert_encoder_forward.15} parent=5 // pred_region
        // Predicated region
        $region41: #{bert_encoder_forward.15} parent=39 // pred_check
          %p275 = pneg %p48
        $region42: #{bert_encoder_forward.15} parent=39 // pred_check_branch
          %277 = sbr.rel (%p275) target = $region44
        $region43: #{bert_encoder_forward.15} parent=39 // pred_region
          %p278 = scmp.lt.s32.totalorder %s23, 3
          %s279 = scalar_select %p278, %s23, 3
          %s280 = smul.addr %s279, 8
          %s281 = scalar_lea.vmem %s0, %s280
        $region44: #{bert_encoder_forward.15} parent=39 // pred_fallthru
          _
      $region40: #{bert_encoder_forward.15} parent=5 // pred_fallthru
        _
      %p282 = scmp.le.s32.totalorder 1, %s16
      %p283 = scmp.lt.s32.totalorder %s16, 5
      %p284 = pnand %p282, %p283
      %p285 = pneg %p284
      // Predicated region
      $region45: #{bert_encoder_forward.15} parent=5 // pred_check
        _
      $region46: #{bert_encoder_forward.15} parent=5 // pred_check_branch
        %287 = sbr.rel (%p284) target = $region48
      $region47: #{bert_encoder_forward.15} parent=5 // pred_region
        %s288 = ssub.s32 %s16, 1
        %p289 = scmp.lt.s32.totalorder %s25, 3
        %s290 = scalar_select %p289, %s25, 3
        %s291 = smul.addr %s290, 8
        %s292 = scalar_lea.vmem %s0, %s291
        %p293 = pneg %p54
        %p294 = pneg %p51
        %s295 = smul.u32 4, %s26
        %p296 = scmp.lt.s32.totalorder %s295, 3
        %s297 = scalar_select %p296, %s295, 3
        %s298 = smul.addr %s297, 8
        %s299 = scalar_lea.vmem %s1, %s298
        %p300 = pneg %p80
        %p301 = pneg %p77
        %s302 = smul.u32 4, %s26
        %p303 = scmp.lt.s32.totalorder %s302, 3
        %s304 = scalar_select %p303, %s302, 3
        %s305 = scalar_lea.vmem %s2, %s304
        %p306 = pneg %p106
        %p307 = pneg %p103
        %s308 = smul.u32 64, %s26
        %p309 = scmp.lt.s32.totalorder %s308, 63
        %s310 = scalar_select %p309, %s308, 63
        %s311 = smul.addr %s310, 8
        %s312 = scalar_lea.vmem %s3, %s311
        %p313 = pneg %p132
        %p314 = pneg %p129
        %p315 = pneg %p153
        %p316 = pneg %p150
        %p317 = pneg %p174
        %p318 = pneg %p171
        %p319 = pneg %p195
        %p320 = pneg %p192
        %p321 = pneg %p221
        %p322 = pneg %p218
        %s323 = sand.u32 %s208, 1
        %s324 = scalar_lea.sflag [#allocation4], %s323
        %s325 = sand.u32 %s208, 1
        %s326 = smul.addr %s325, 8
        %s327 = scalar_lea.vmem [#allocation3], %s326
        %p328 = scmp.lt.s32.totalorder %s25, 3
        %s329 = scalar_select %p328, %s25, 3
        %s330 = smul.addr %s329, 8
        %s331 = scalar_lea.vmem %s0, %s330
        %s332 = smul.u32 4, %s26
        %p333 = scmp.lt.s32.totalorder %s332, 3
        %s334 = scalar_select %p333, %s332, 3
        %s335 = smul.addr %s334, 8
        %s336 = scalar_lea.vmem %s1, %s335
        %s337 = smul.u32 4, %s26
        %s338 = smul.u32 4, %s26
        %p339 = scmp.lt.s32.totalorder %s338, 3
        %s340 = scalar_select %p339, %s338, 3
        %s341 = scalar_lea.vmem %s2, %s340
        %s342 = smul.u32 4, %s26
        %s343 = smul.u32 64, %s26
        %p344 = scmp.lt.s32.totalorder %s343, 63
        %s345 = scalar_select %p344, %s343, 63
        %s346 = smul.addr %s345, 8
        %s347 = scalar_lea.vmem %s3, %s346
        %s348 = smul.u32 64, %s26
        %p349 = scmp.eq.s32.totalorder %s26, 0
        // Predicated region
        $region49: #{bert_encoder_forward.15} parent=47 // pred_check
          %p350 = pneg %p349
        $region50: #{bert_encoder_forward.15} parent=47 // pred_check_branch
          %352 = sbr.rel (%p350) target = $region52
        $region51: #{bert_encoder_forward.15} parent=47 // pred_region
          %353 = vst [vmem:[#allocation2] sm:$0xff] 0.0
        $region52: #{bert_encoder_forward.15} parent=47 // pred_fallthru
          _
        %v354 = vld [vmem:[%s331] sm:$0xff]
        %v355 = vld [vmem:[%s336] sm:$0xff]
        %v356 = vld [vmem:[%s336 + $0x8] sm:$0xff]
        %v357 = vld [vmem:[%s336 + $0x10] sm:$0xff]
        %v358 = vld [vmem:[%s336 + $0x18] sm:$0xff]
        %v359 = vld [vmem:[%s336 + $0x20] sm:$0xff]
        %v360 = vld [vmem:[%s336 + $0x28] sm:$0xff]
        %v361 = vld [vmem:[%s336 + $0x30] sm:$0xff]
        %v362 = vld [vmem:[%s336 + $0x38] sm:$0xff]
        %v363 = vld [vmem:[%s336 + $0x40] sm:$0xff]
        %v364 = vld [vmem:[%s336 + $0x48] sm:$0xff]
        %v365 = vld [vmem:[%s336 + $0x50] sm:$0xff]
        %v366 = vld [vmem:[%s336 + $0x58] sm:$0xff]
        %v367 = vld [vmem:[%s336 + $0x60] sm:$0xff]
        %v368 = vld [vmem:[%s336 + $0x68] sm:$0xff]
        %v369 = vld [vmem:[%s336 + $0x70] sm:$0xff]
        %v370 = vld [vmem:[%s336 + $0x78] sm:$0xff]
        %v371 = vld [vmem:[%s336 + $0x80] sm:$0xff]
        %v372 = vld [vmem:[%s336 + $0x88] sm:$0xff]
        %v373 = vld [vmem:[%s336 + $0x90] sm:$0xff]
        %v374 = vld [vmem:[%s336 + $0x98] sm:$0xff]
        %v375 = vld [vmem:[%s336 + $0xa0] sm:$0xff]
        %v376 = vld [vmem:[%s336 + $0xa8] sm:$0xff]
        %v377 = vld [vmem:[%s336 + $0xb0] sm:$0xff]
        %v378 = vld [vmem:[%s336 + $0xb8] sm:$0xff]
        %v379 = vld [vmem:[%s336 + $0xc0] sm:$0xff]
        %v380 = vld [vmem:[%s336 + $0xc8] sm:$0xff]
        %v381 = vld [vmem:[%s336 + $0xd0] sm:$0xff]
        %v382 = vld [vmem:[%s336 + $0xd8] sm:$0xff]
        %v383 = vld [vmem:[%s336 + $0xe0] sm:$0xff]
        %v384 = vld [vmem:[%s336 + $0xe8] sm:$0xff]
        %v385 = vld [vmem:[%s336 + $0xf0] sm:$0xff]
        %v386 = vld [vmem:[%s336 + $0xf8] sm:$0xff]
        %v387 = vld [vmem:[%s336 + $0x100] sm:$0xff]
        %v388 = vld [vmem:[%s336 + $0x108] sm:$0xff]
        %v389 = vld [vmem:[%s336 + $0x110] sm:$0xff]
        %v390 = vld [vmem:[%s336 + $0x118] sm:$0xff]
        %v391 = vld [vmem:[%s336 + $0x120] sm:$0xff]
        %v392 = vld [vmem:[%s336 + $0x128] sm:$0xff]
        %v393 = vld [vmem:[%s336 + $0x130] sm:$0xff]
        %v394 = vld [vmem:[%s336 + $0x138] sm:$0xff]
        %v395 = vld [vmem:[%s336 + $0x140] sm:$0xff]
        %v396 = vld [vmem:[%s336 + $0x148] sm:$0xff]
        %v397 = vld [vmem:[%s336 + $0x150] sm:$0xff]
        %v398 = vld [vmem:[%s336 + $0x158] sm:$0xff]
        %v399 = vld [vmem:[%s336 + $0x160] sm:$0xff]
        %v400 = vld [vmem:[%s336 + $0x168] sm:$0xff]
        %v401 = vld [vmem:[%s336 + $0x170] sm:$0xff]
        %v402 = vld [vmem:[%s336 + $0x178] sm:$0xff]
        %v403 = vld [vmem:[%s336 + $0x180] sm:$0xff]
        %v404 = vld [vmem:[%s336 + $0x188] sm:$0xff]
        %v405 = vld [vmem:[%s336 + $0x190] sm:$0xff]
        %v406 = vld [vmem:[%s336 + $0x198] sm:$0xff]
        %v407 = vld [vmem:[%s336 + $0x1a0] sm:$0xff]
        %v408 = vld [vmem:[%s336 + $0x1a8] sm:$0xff]
        %v409 = vld [vmem:[%s336 + $0x1b0] sm:$0xff]
        %v410 = vld [vmem:[%s336 + $0x1b8] sm:$0xff]
        %v411 = vld [vmem:[%s336 + $0x1c0] sm:$0xff]
        %v412 = vld [vmem:[%s336 + $0x1c8] sm:$0xff]
        %v413 = vld [vmem:[%s336 + $0x1d0] sm:$0xff]
        %v414 = vld [vmem:[%s336 + $0x1d8] sm:$0xff]
        %v415 = vld [vmem:[%s336 + $0x1e0] sm:$0xff]
        %v416 = vld [vmem:[%s336 + $0x1e8] sm:$0xff]
        %v417 = vld [vmem:[%s336 + $0x1f0] sm:$0xff]
        %v418 = vld [vmem:[%s336 + $0x1f8] sm:$0xff]
        %v419 = vld [vmem:[%s341] sm:$0xf]
        %v421 = vlaneseq
        %v422 = vshrl.u32 %v421, 7
        %v423 = vsub.s32 0, %v422
        %v424 = vrot.slane %v419, %v423
        %v425 = vlaneseq
        %v426 = vshrl.u32 %v425, 7
        %v427 = vsub.s32 1, %v426
        %v428 = vrot.slane %v419, %v427
        %v429 = vlaneseq
        %v430 = vshrl.u32 %v429, 7
        %v431 = vsub.s32 2, %v430
        %v432 = vrot.slane %v419, %v431
        %v433 = vlaneseq
        %v434 = vshrl.u32 %v433, 7
        %v435 = vsub.s32 3, %v434
        %v436 = vrot.slane %v419, %v435
        %441 = vmatprep.subr.mxu0 %v356
        %442 = vmatpush1.msra.mxu0 %v355
        %443 = vmatprep.subr.mxu0 %v360
        %444 = vmatpush1.msra.mxu0 %v359
        %445 = vmatprep.subr.mxu0 %v364
        %446 = vmatpush1.msra.mxu0 %v363
        %447 = vmatprep.subr.mxu0 %v368
        %448 = vmatpush1.msra.mxu0 %v367
        %449 = vmatprep.subr.mxu0 %v372
        %450 = vmatpush1.msra.mxu0 %v371
        %451 = vmatprep.subr.mxu0 %v376
        %452 = vmatpush1.msra.mxu0 %v375
        %453 = vmatprep.subr.mxu0 %v380
        %454 = vmatpush1.msra.mxu0 %v379
        %455 = vmatprep.subr.mxu0 %v384
        %456 = vmatpush1.msra.mxu0 %v383
        %457 = vmatprep.subr.mxu0 %v388
        %458 = vmatpush1.msra.mxu0 %v387
        %459 = vmatprep.subr.mxu0 %v392
        %460 = vmatpush1.msra.mxu0 %v391
        %461 = vmatprep.subr.mxu0 %v396
        %462 = vmatpush1.msra.mxu0 %v395
        %463 = vmatprep.subr.mxu0 %v400
        %464 = vmatpush1.msra.mxu0 %v399
        %465 = vmatprep.subr.mxu0 %v404
        %466 = vmatpush1.msra.mxu0 %v403
        %467 = vmatprep.subr.mxu0 %v408
        %468 = vmatpush1.msra.mxu0 %v407
        %469 = vmatprep.subr.mxu0 %v412
        %470 = vmatpush1.msra.mxu0 %v411
        %471 = vmatprep.subr.mxu0 %v416
        %472 = vmatpush1.msra.mxu0 %v415
        %473 = vmatprep.subr.mxu0 0.0
        %474 = vmatpush1.msra.mxu0 0.0
        %475 = vmatprep.subr.mxu0 0.0
        %476 = vmatpush1.msra.mxu0 0.0
        %477 = vmatprep.subr.mxu0 0.0
        %478 = vmatpush1.msra.mxu0 0.0
        %479 = vmatprep.subr.mxu0 0.0
        %480 = vmatpush1.msra.mxu0 0.0
        %481 = vmatprep.subr.mxu0 0.0
        %482 = vmatpush1.msra.mxu0 0.0
        %483 = vmatprep.subr.mxu0 0.0
        %484 = vmatpush1.msra.mxu0 0.0
        %485 = vmatprep.subr.mxu0 0.0
        %486 = vmatpush1.msra.mxu0 0.0
        %487 = vmatprep.subr.mxu0 0.0
        %488 = vmatpush1.msra.mxu0 0.0
        %489 = vmatprep.subr.mxu0 0.0
        %490 = vmatpush1.msra.mxu0 0.0
        %491 = vmatprep.subr.mxu0 0.0
        %492 = vmatpush1.msra.mxu0 0.0
        %493 = vmatprep.subr.mxu0 0.0
        %494 = vmatpush1.msra.mxu0 0.0
        %495 = vmatprep.subr.mxu0 0.0
        %496 = vmatpush1.msra.mxu0 0.0
        %497 = vmatprep.subr.mxu0 0.0
        %498 = vmatpush1.msra.mxu0 0.0
        %499 = vmatprep.subr.mxu0 0.0
        %500 = vmatpush1.msra.mxu0 0.0
        %501 = vmatprep.subr.mxu0 0.0
        %502 = vmatpush1.msra.mxu0 0.0
        %503 = vmatprep.subr.mxu0 0.0
        %504 = vmatpush1.msra.mxu0 0.0
        %505 = vmatprep.mubr.f32.mxu0 0.0
        %506 = vmatmul.mubr.f32.gmra.mrb[0].mxu0 %v354
        %v507 = vpop.f32.mrb[0].mxu0
        %v508 = vadd.f32 %v424, %v507
        %v509 = vpop.f32.mrb[0].mxu0
        %v510 = vadd.f32 %v428, %v509
        %511 = vdwg.mxu0
        %512 = vmatprep.subr.mxu0 %v358
        %513 = vmatpush1.msra.mxu0 %v357
        %514 = vmatprep.subr.mxu0 %v362
        %515 = vmatpush1.msra.mxu0 %v361
        %516 = vmatprep.subr.mxu0 %v366
        %517 = vmatpush1.msra.mxu0 %v365
        %518 = vmatprep.subr.mxu0 %v370
        %519 = vmatpush1.msra.mxu0 %v369
        %520 = vmatprep.subr.mxu0 %v374
        %521 = vmatpush1.msra.mxu0 %v373
        %522 = vmatprep.subr.mxu0 %v378
        %523 = vmatpush1.msra.mxu0 %v377
        %524 = vmatprep.subr.mxu0 %v382
        %525 = vmatpush1.msra.mxu0 %v381
        %526 = vmatprep.subr.mxu0 %v386
        %527 = vmatpush1.msra.mxu0 %v385
        %528 = vmatprep.subr.mxu0 %v390
        %529 = vmatpush1.msra.mxu0 %v389
        %530 = vmatprep.subr.mxu0 %v394
        %531 = vmatpush1.msra.mxu0 %v393
        %532 = vmatprep.subr.mxu0 %v398
        %533 = vmatpush1.msra.mxu0 %v397
        %534 = vmatprep.subr.mxu0 %v402
        %535 = vmatpush1.msra.mxu0 %v401
        %536 = vmatprep.subr.mxu0 %v406
        %537 = vmatpush1.msra.mxu0 %v405
        %538 = vmatprep.subr.mxu0 %v410
        %539 = vmatpush1.msra.mxu0 %v409
        %540 = vmatprep.subr.mxu0 %v414
        %541 = vmatpush1.msra.mxu0 %v413
        %542 = vmatprep.subr.mxu0 %v418
        %543 = vmatpush1.msra.mxu0 %v417
        %544 = vmatprep.subr.mxu0 0.0
        %545 = vmatpush1.msra.mxu0 0.0
        %546 = vmatprep.subr.mxu0 0.0
        %547 = vmatpush1.msra.mxu0 0.0
        %548 = vmatprep.subr.mxu0 0.0
        %549 = vmatpush1.msra.mxu0 0.0
        %550 = vmatprep.subr.mxu0 0.0
        %551 = vmatpush1.msra.mxu0 0.0
        %552 = vmatprep.subr.mxu0 0.0
        %553 = vmatpush1.msra.mxu0 0.0
        %554 = vmatprep.subr.mxu0 0.0
        %555 = vmatpush1.msra.mxu0 0.0
        %556 = vmatprep.subr.mxu0 0.0
        %557 = vmatpush1.msra.mxu0 0.0
        %558 = vmatprep.subr.mxu0 0.0
        %559 = vmatpush1.msra.mxu0 0.0
        %560 = vmatprep.subr.mxu0 0.0
        %561 = vmatpush1.msra.mxu0 0.0
        %562 = vmatprep.subr.mxu0 0.0
        %563 = vmatpush1.msra.mxu0 0.0
        %564 = vmatprep.subr.mxu0 0.0
        %565 = vmatpush1.msra.mxu0 0.0
        %566 = vmatprep.subr.mxu0 0.0
        %567 = vmatpush1.msra.mxu0 0.0
        %568 = vmatprep.subr.mxu0 0.0
        %569 = vmatpush1.msra.mxu0 0.0
        %570 = vmatprep.subr.mxu0 0.0
        %571 = vmatpush1.msra.mxu0 0.0
        %572 = vmatprep.subr.mxu0 0.0
        %573 = vmatpush1.msra.mxu0 0.0
        %574 = vmatprep.subr.mxu0 0.0
        %575 = vmatpush1.msra.mxu0 0.0
        %576 = vmatprep.mubr.f32.mxu0 0.0
        %577 = vmatmul.mubr.f32.gmra.mrb[0].mxu0 %v354
        %v578 = vpop.f32.mrb[0].mxu0
        %v579 = vadd.f32 %v432, %v578
        %v580 = vpop.f32.mrb[0].mxu0
        %v581 = vadd.f32 %v436, %v580
        %582 = vdwg.mxu0
        %v583 = vmul.f32 %v508, 0.5
        %v584 = vmul.f32 %v510, 0.5
        %v585 = vmul.f32 %v579, 0.5
        %v586 = vmul.f32 %v581, 0.5
        %v587 = vmul.f32 %v508, 0.70710677
        %v588 = vmul.f32 %v510, 0.70710677
        %v589 = vmul.f32 %v579, 0.70710677
        %v590 = vmul.f32 %v581, 0.70710677
        %v591 = verf.f32.pop %v587
        %v592 = verf.f32.pop %v588
        %v593 = verf.f32.pop %v589
        %v594 = verf.f32.pop %v590
        %v595 = vadd.f32 %v591, 1.0
        %v596 = vadd.f32 %v592, 1.0
        %v597 = vadd.f32 %v593, 1.0
        %v598 = vadd.f32 %v594, 1.0
        %v599 = vmul.f32 %v583, %v595
        %v600 = vmul.f32 %v584, %v596
        %v601 = vmul.f32 %v585, %v597
        %v602 = vmul.f32 %v586, %v598
        %v603 = vld [vmem:[#allocation2] sm:$0xff]
        %v604 = vld [vmem:[%s347] sm:$0xff]
        %v605 = vld [vmem:[%s347 + $0x8] sm:$0xff]
        %v606 = vld [vmem:[%s347 + $0x10] sm:$0xff]
        %v607 = vld [vmem:[%s347 + $0x18] sm:$0xff]
        %v608 = vld [vmem:[%s347 + $0x20] sm:$0xff]
        %v609 = vld [vmem:[%s347 + $0x28] sm:$0xff]
        %v610 = vld [vmem:[%s347 + $0x30] sm:$0xff]
        %v611 = vld [vmem:[%s347 + $0x38] sm:$0xff]
        %v612 = vld [vmem:[%s347 + $0x40] sm:$0xff]
        %v613 = vld [vmem:[%s347 + $0x48] sm:$0xff]
        %v614 = vld [vmem:[%s347 + $0x50] sm:$0xff]
        %v615 = vld [vmem:[%s347 + $0x58] sm:$0xff]
        %v616 = vld [vmem:[%s347 + $0x60] sm:$0xff]
        %v617 = vld [vmem:[%s347 + $0x68] sm:$0xff]
        %v618 = vld [vmem:[%s347 + $0x70] sm:$0xff]
        %v619 = vld [vmem:[%s347 + $0x78] sm:$0xff]
        %v620 = vld [vmem:[%s347 + $0x80] sm:$0xff]
        %v621 = vld [vmem:[%s347 + $0x88] sm:$0xff]
        %v622 = vld [vmem:[%s347 + $0x90] sm:$0xff]
        %v623 = vld [vmem:[%s347 + $0x98] sm:$0xff]
        %v624 = vld [vmem:[%s347 + $0xa0] sm:$0xff]
        %v625 = vld [vmem:[%s347 + $0xa8] sm:$0xff]
        %v626 = vld [vmem:[%s347 + $0xb0] sm:$0xff]
        %v627 = vld [vmem:[%s347 + $0xb8] sm:$0xff]
        %v628 = vld [vmem:[%s347 + $0xc0] sm:$0xff]
        %v629 = vld [vmem:[%s347 + $0xc8] sm:$0xff]
        %v630 = vld [vmem:[%s347 + $0xd0] sm:$0xff]
        %v631 = vld [vmem:[%s347 + $0xd8] sm:$0xff]
        %v632 = vld [vmem:[%s347 + $0xe0] sm:$0xff]
        %v633 = vld [vmem:[%s347 + $0xe8] sm:$0xff]
        %v634 = vld [vmem:[%s347 + $0xf0] sm:$0xff]
        %v635 = vld [vmem:[%s347 + $0xf8] sm:$0xff]
        %v636 = vld [vmem:[%s347 + $0x100] sm:$0xff]
        %v637 = vld [vmem:[%s347 + $0x108] sm:$0xff]
        %v638 = vld [vmem:[%s347 + $0x110] sm:$0xff]
        %v639 = vld [vmem:[%s347 + $0x118] sm:$0xff]
        %v640 = vld [vmem:[%s347 + $0x120] sm:$0xff]
        %v641 = vld [vmem:[%s347 + $0x128] sm:$0xff]
        %v642 = vld [vmem:[%s347 + $0x130] sm:$0xff]
        %v643 = vld [vmem:[%s347 + $0x138] sm:$0xff]
        %v644 = vld [vmem:[%s347 + $0x140] sm:$0xff]
        %v645 = vld [vmem:[%s347 + $0x148] sm:$0xff]
        %v646 = vld [vmem:[%s347 + $0x150] sm:$0xff]
        %v647 = vld [vmem:[%s347 + $0x158] sm:$0xff]
        %v648 = vld [vmem:[%s347 + $0x160] sm:$0xff]
        %v649 = vld [vmem:[%s347 + $0x168] sm:$0xff]
        %v650 = vld [vmem:[%s347 + $0x170] sm:$0xff]
        %v651 = vld [vmem:[%s347 + $0x178] sm:$0xff]
        %v652 = vld [vmem:[%s347 + $0x180] sm:$0xff]
        %v653 = vld [vmem:[%s347 + $0x188] sm:$0xff]
        %v654 = vld [vmem:[%s347 + $0x190] sm:$0xff]
        %v655 = vld [vmem:[%s347 + $0x198] sm:$0xff]
        %v656 = vld [vmem:[%s347 + $0x1a0] sm:$0xff]
        %v657 = vld [vmem:[%s347 + $0x1a8] sm:$0xff]
        %v658 = vld [vmem:[%s347 + $0x1b0] sm:$0xff]
        %v659 = vld [vmem:[%s347 + $0x1b8] sm:$0xff]
        %v660 = vld [vmem:[%s347 + $0x1c0] sm:$0xff]
        %v661 = vld [vmem:[%s347 + $0x1c8] sm:$0xff]
        %v662 = vld [vmem:[%s347 + $0x1d0] sm:$0xff]
        %v663 = vld [vmem:[%s347 + $0x1d8] sm:$0xff]
        %v664 = vld [vmem:[%s347 + $0x1e0] sm:$0xff]
        %v665 = vld [vmem:[%s347 + $0x1e8] sm:$0xff]
        %v666 = vld [vmem:[%s347 + $0x1f0] sm:$0xff]
        %v667 = vld [vmem:[%s347 + $0x1f8] sm:$0xff]
        %668 = vmatprep.subr.mxu0 0.0
        %669 = vmatpush1.msra.mxu0 %v604
        %670 = vmatprep.subr.mxu0 0.0
        %671 = vmatpush1.msra.mxu0 %v605
        %672 = vmatprep.subr.mxu0 0.0
        %673 = vmatpush1.msra.mxu0 %v606
        %674 = vmatprep.subr.mxu0 0.0
        %675 = vmatpush1.msra.mxu0 %v607
        %676 = vmatprep.subr.mxu0 0.0
        %677 = vmatpush1.msra.mxu0 %v608
        %678 = vmatprep.subr.mxu0 0.0
        %679 = vmatpush1.msra.mxu0 %v609
        %680 = vmatprep.subr.mxu0 0.0
        %681 = vmatpush1.msra.mxu0 %v610
        %682 = vmatprep.subr.mxu0 0.0
        %683 = vmatpush1.msra.mxu0 %v611
        %684 = vmatprep.subr.mxu0 0.0
        %685 = vmatpush1.msra.mxu0 %v612
        %686 = vmatprep.subr.mxu0 0.0
        %687 = vmatpush1.msra.mxu0 %v613
        %688 = vmatprep.subr.mxu0 0.0
        %689 = vmatpush1.msra.mxu0 %v614
        %690 = vmatprep.subr.mxu0 0.0
        %691 = vmatpush1.msra.mxu0 %v615
        %692 = vmatprep.subr.mxu0 0.0
        %693 = vmatpush1.msra.mxu0 %v616
        %694 = vmatprep.subr.mxu0 0.0
        %695 = vmatpush1.msra.mxu0 %v617
        %696 = vmatprep.subr.mxu0 0.0
        %697 = vmatpush1.msra.mxu0 %v618
        %698 = vmatprep.subr.mxu0 0.0
        %699 = vmatpush1.msra.mxu0 %v619
        %700 = vmatprep.subr.mxu0 0.0
        %701 = vmatpush1.msra.mxu0 %v620
        %702 = vmatprep.subr.mxu0 0.0
        %703 = vmatpush1.msra.mxu0 %v621
        %704 = vmatprep.subr.mxu0 0.0
        %705 = vmatpush1.msra.mxu0 %v622
        %706 = vmatprep.subr.mxu0 0.0
        %707 = vmatpush1.msra.mxu0 %v623
        %708 = vmatprep.subr.mxu0 0.0
        %709 = vmatpush1.msra.mxu0 %v624
        %710 = vmatprep.subr.mxu0 0.0
        %711 = vmatpush1.msra.mxu0 %v625
        %712 = vmatprep.subr.mxu0 0.0
        %713 = vmatpush1.msra.mxu0 %v626
        %714 = vmatprep.subr.mxu0 0.0
        %715 = vmatpush1.msra.mxu0 %v627
        %716 = vmatprep.subr.mxu0 0.0
        %717 = vmatpush1.msra.mxu0 %v628
        %718 = vmatprep.subr.mxu0 0.0
        %719 = vmatpush1.msra.mxu0 %v629
        %720 = vmatprep.subr.mxu0 0.0
        %721 = vmatpush1.msra.mxu0 %v630
        %722 = vmatprep.subr.mxu0 0.0
        %723 = vmatpush1.msra.mxu0 %v631
        %724 = vmatprep.subr.mxu0 0.0
        %725 = vmatpush1.msra.mxu0 %v632
        %726 = vmatprep.subr.mxu0 0.0
        %727 = vmatpush1.msra.mxu0 %v633
        %728 = vmatprep.subr.mxu0 0.0
        %729 = vmatpush1.msra.mxu0 %v634
        %730 = vmatprep.subr.mxu0 0.0
        %731 = vmatpush1.msra.mxu0 %v635
        %732 = vmatprep.mubr.f32.mxu0 %v600
        %733 = vmatmul.mubr.f32.gmra.mrb[0].mxu0 %v599
        %v734 = vpop.f32.mrb[0].mxu0
        %v735 = vadd.f32 0.0, %v734
        %v736 = vpop.f32.mrb[0].mxu0
        %737 = vdwg.mxu0
        %738 = vmatprep.subr.mxu0 0.0
        %739 = vmatpush1.msra.mxu0 %v636
        %740 = vmatprep.subr.mxu0 0.0
        %741 = vmatpush1.msra.mxu0 %v637
        %742 = vmatprep.subr.mxu0 0.0
        %743 = vmatpush1.msra.mxu0 %v638
        %744 = vmatprep.subr.mxu0 0.0
        %745 = vmatpush1.msra.mxu0 %v639
        %746 = vmatprep.subr.mxu0 0.0
        %747 = vmatpush1.msra.mxu0 %v640
        %748 = vmatprep.subr.mxu0 0.0
        %749 = vmatpush1.msra.mxu0 %v641
        %750 = vmatprep.subr.mxu0 0.0
        %751 = vmatpush1.msra.mxu0 %v642
        %752 = vmatprep.subr.mxu0 0.0
        %753 = vmatpush1.msra.mxu0 %v643
        %754 = vmatprep.subr.mxu0 0.0
        %755 = vmatpush1.msra.mxu0 %v644
        %756 = vmatprep.subr.mxu0 0.0
        %757 = vmatpush1.msra.mxu0 %v645
        %758 = vmatprep.subr.mxu0 0.0
        %759 = vmatpush1.msra.mxu0 %v646
        %760 = vmatprep.subr.mxu0 0.0
        %761 = vmatpush1.msra.mxu0 %v647
        %762 = vmatprep.subr.mxu0 0.0
        %763 = vmatpush1.msra.mxu0 %v648
        %764 = vmatprep.subr.mxu0 0.0
        %765 = vmatpush1.msra.mxu0 %v649
        %766 = vmatprep.subr.mxu0 0.0
        %767 = vmatpush1.msra.mxu0 %v650
        %768 = vmatprep.subr.mxu0 0.0
        %769 = vmatpush1.msra.mxu0 %v651
        %770 = vmatprep.subr.mxu0 0.0
        %771 = vmatpush1.msra.mxu0 %v652
        %772 = vmatprep.subr.mxu0 0.0
        %773 = vmatpush1.msra.mxu0 %v653
        %774 = vmatprep.subr.mxu0 0.0
        %775 = vmatpush1.msra.mxu0 %v654
        %776 = vmatprep.subr.mxu0 0.0
        %777 = vmatpush1.msra.mxu0 %v655
        %778 = vmatprep.subr.mxu0 0.0
        %779 = vmatpush1.msra.mxu0 %v656
        %780 = vmatprep.subr.mxu0 0.0
        %781 = vmatpush1.msra.mxu0 %v657
        %782 = vmatprep.subr.mxu0 0.0
        %783 = vmatpush1.msra.mxu0 %v658
        %784 = vmatprep.subr.mxu0 0.0
        %785 = vmatpush1.msra.mxu0 %v659
        %786 = vmatprep.subr.mxu0 0.0
        %787 = vmatpush1.msra.mxu0 %v660
        %788 = vmatprep.subr.mxu0 0.0
        %789 = vmatpush1.msra.mxu0 %v661
        %790 = vmatprep.subr.mxu0 0.0
        %791 = vmatpush1.msra.mxu0 %v662
        %792 = vmatprep.subr.mxu0 0.0
        %793 = vmatpush1.msra.mxu0 %v663
        %794 = vmatprep.subr.mxu0 0.0
        %795 = vmatpush1.msra.mxu0 %v664
        %796 = vmatprep.subr.mxu0 0.0
        %797 = vmatpush1.msra.mxu0 %v665
        %798 = vmatprep.subr.mxu0 0.0
        %799 = vmatpush1.msra.mxu0 %v666
        %800 = vmatprep.subr.mxu0 0.0
        %801 = vmatpush1.msra.mxu0 %v667
        %802 = vmatprep.mubr.f32.mxu0 %v602
        %803 = vmatmul.mubr.f32.gmra.mrb[0].mxu0 %v601
        %v804 = vpop.f32.mrb[0].mxu0
        %v805 = vadd.f32 %v735, %v804
        %v806 = vpop.f32.mrb[0].mxu0
        %807 = vdwg.mxu0
        %v808 = vadd.f32 %v603, %v805
        %809 = vst [vmem:[#allocation2] sm:$0xff] %v808
        // Predicated region
        $region53: #{bert_encoder_forward.15} parent=47 // pred_check
          %p810 = pneg %p349
        $region54: #{bert_encoder_forward.15} parent=47 // pred_check_branch
          %812 = sbr.rel (%p810) target = $region56
        $region55: #{bert_encoder_forward.15} parent=47 // pred_region
          %v813 = vld [vmem:[#allocation2] sm:$0xff]
          %v814 = vld [vmem:[%s4] sm:$0x1]
          %v816 = vlaneseq
          %v817 = vshrl.u32 %v816, 7
          %v818 = vsub.s32 0, %v817
          %v819 = vrot.slane %v814, %v818
          %v821 = vadd.f32 %v813, %v819
          %v822 = vld [vmem:[%s331] sm:$0xff]
          %v823 = vadd.f32 %v821, %v822
          %824 = vadd.xlane.f32.xlu0 %v823
          %v825 = vpop.xlane.xlu0 %824
          %v826 = vrcp.pop 128.0
          %v827 = vmul.f32 %v825, %v826
          %v828 = vsub.f32 %v823, %v827
          %v829 = vmul.f32 %v828, %v828
          %830 = vadd.xlane.f32.xlu0 %v829
          %v831 = vpop.xlane.xlu0 %830
          %v832 = vmul.f32 %v831, %v826
          %v833 = vadd.f32 %v832, 1e-12
          %v834 = vrsqrt.pop %v833
          %v835 = vmul.f32 %v828, %v834
          %v836 = vld [vmem:[%s5] sm:$0x1]
          %v838 = vlaneseq
          %v839 = vshrl.u32 %v838, 7
          %v840 = vsub.s32 0, %v839
          %v841 = vrot.slane %v836, %v840
          %v843 = vmul.f32 %v835, %v841
          %v844 = vld [vmem:[%s6] sm:$0x1]
          %v846 = vlaneseq
          %v847 = vshrl.u32 %v846, 7
          %v848 = vsub.s32 0, %v847
          %v849 = vrot.slane %v844, %v848
          %v851 = vadd.f32 %v843, %v849
          %852 = vst [vmem:[%s327] sm:$0xff] %v851
        $region56: #{bert_encoder_forward.15} parent=47 // pred_fallthru
          _
        %s853 = sand.u32 %s208, 1
        %s854 = scalar_lea.sflag [#allocation4], %s853
        %s855 = sand.u32 %s208, 1
        %s856 = smul.addr %s855, 8
        %s857 = scalar_lea.vmem [#allocation3], %s856
        // Predicated region
        $region57: #{bert_encoder_forward.15} parent=47 // pred_check
          %p858 = pneg %p218
        $region58: #{bert_encoder_forward.15} parent=47 // pred_check_branch
          %860 = sbr.rel (%p858) target = $region60
        $region59: #{bert_encoder_forward.15} parent=47 // pred_region
          %s862 = ssub.s32 128, 128
          %863 = vsyncadd %s854, %s862
          %s864 = smul.addr %s25, 128
          %s865 = scalar_lea.hbm %s7, %s864
          %s867 = sshll.u32 %s857, 4
          %s868 = int_to_ptr.vmem [resolvable:$true] %s867
          %870 = dma.vmem_to_hbm [thread:$0]  %s868, 128, %s865, %s854
        $region60: #{bert_encoder_forward.15} parent=47 // pred_fallthru
          _
      $region48: #{bert_encoder_forward.15} parent=5 // pred_fallthru
        _
      %p871 = scmp.le.s32.totalorder 2, %s16
      // Predicated region
      $region61: #{bert_encoder_forward.15} parent=5 // pred_check
        %p872 = pneg %p871
      $region62: #{bert_encoder_forward.15} parent=5 // pred_check_branch
        %874 = sbr.rel (%p872) target = $region64
      $region63: #{bert_encoder_forward.15} parent=5 // pred_region
        %s875 = ssub.s32 %s16, 2
        // Predicated region
        $region65: #{bert_encoder_forward.15} parent=63 // pred_check
          %p876 = pneg %p224
        $region66: #{bert_encoder_forward.15} parent=63 // pred_check_branch
          %878 = sbr.rel (%p876) target = $region68
        $region67: #{bert_encoder_forward.15} parent=63 // pred_region
          %s879 = sand.u32 %s209, 1
          %s880 = scalar_lea.sflag [#allocation4], %s879
          %s881 = sand.u32 %s209, 1
          %s882 = smul.addr %s881, 8
          %s883 = scalar_lea.vmem [#allocation3], %s882
          %884 = dma.done %s880, 128
        $region68: #{bert_encoder_forward.15} parent=63 // pred_fallthru
          _
      $region64: #{bert_encoder_forward.15} parent=5 // pred_fallthru
        _
    $region6: #{bert_encoder_forward.15} parent=1 // loop_footer
      %s20 = sadd.s32 1, %s16
    $region7: #{bert_encoder_forward.15} parent=1 // loop_footer_branch
      %15 = sbr.rel target = $region3
    $region8: #{bert_encoder_forward.15} parent=1 // loop_exit
      _
    %885 = vsyncpa [#allocation4], 1
    %s886 = scalar_lea.sflag [#allocation4], 1
    %887 = vsyncpa %s886, 1

</llo_original>
